<compile_context>
chip_gen: v7x
topology: tpu7x:2x2x1
jax: 0.10.0
libtpu: 0.0.40
codegen_flags: <defaults>
</compile_context>

<pallas_src>
import functools
import math

import jax
import jax.numpy as jnp
from jax import lax
from jax.experimental import pallas as pl
from jax.experimental.pallas import tpu as pltpu


def _layernorm(x, gamma, beta, eps=1e-5):
    mean = jnp.mean(x, axis=-1, keepdims=True)
    var = jnp.mean((x - mean) ** 2, axis=-1, keepdims=True)
    return (x - mean) * lax.rsqrt(var + eps) * gamma + beta


# ---------------------------------------------------------------------------
# One transformer layer on a (TQ, C) query/residual tile.  x_kv is the full
# (N, C) token slab used to build K/V (LayerNorm is token-wise, so tile-local
# LN on the query tile is exact).  The attention scale is pre-folded into
# wq/bq (see prepare_params), so there is no `* scale` here.
# Shared by the Pallas kernel body and the pure-JAX reference (identical
# dtypes / op order; only the softmax reciprocal differs).
# ---------------------------------------------------------------------------
def _layer_math(x_q, x_kv, ln1_g, ln1_b, wq, bq, wkv, bkv, ln2_g, ln2_b,
                w1, b1, w2, b2, *, heads, compute_dtype, approx_recip):
    f32 = jnp.float32
    tq, c = x_q.shape
    n_kv = x_kv.shape[0]
    dh = c // heads                       # head dim used by the torch reshape

    # ---- PreNorm + Attention + residual ----------------------------------
    xn_q = _layernorm(x_q, ln1_g, ln1_b)                           # f32
    xn_kv = _layernorm(x_kv, ln1_g, ln1_b)                         # f32

    q = jnp.dot(xn_q.astype(compute_dtype), wq,
                preferred_element_type=f32) + bq                   # (TQ, C) f32
    kv = jnp.dot(xn_kv.astype(compute_dtype), wkv,
                 preferred_element_type=f32) + bkv                 # (N, 2C) f32
    k = kv[:, :c]
    v = kv[:, c:]

    # Head split/merge: single reshape+transpose (layout plumbing only).
    q3 = q.reshape(tq, heads, dh).transpose(1, 0, 2).astype(compute_dtype)
    k3 = k.reshape(n_kv, heads, dh).transpose(1, 0, 2).astype(compute_dtype)
    v3 = v.reshape(n_kv, heads, dh).transpose(1, 0, 2).astype(compute_dtype)

    # All heads in one batched MXU einsum (scale already folded into wq/bq).
    dots = jnp.einsum('hqd,hkd->hqk', q3, k3,
                      preferred_element_type=f32)                  # (H, TQ, N) f32
    dots = dots - jnp.max(dots, axis=-1, keepdims=True)
    e = jnp.exp(dots)
    denom = jnp.sum(e, axis=-1, keepdims=True)
    inv = pl.reciprocal(denom, approx=True) if approx_recip else 1.0 / denom
    attn = e * inv                                                 # softmax (f32)
    o3 = jnp.einsum('hqk,hkd->hqd', attn.astype(compute_dtype), v3,
                    preferred_element_type=f32)                    # (H, TQ, dh)
    attn_out = o3.transpose(1, 0, 2).reshape(tq, c)                # 'h q d -> q (h d)'
    x = attn_out + x_q                                             # residual

    # ---- PreNorm + FeedForward + residual ---------------------------------
    xn2 = _layernorm(x, ln2_g, ln2_b)
    h1 = jnp.dot(xn2.astype(compute_dtype), w1,
                 preferred_element_type=f32) + b1                  # (TQ, mlp) f32
    h1 = 0.5 * h1 * (1.0 + lax.erf(h1 * (1.0 / math.sqrt(2.0))))   # exact GELU
    y = jnp.dot(h1.astype(compute_dtype), w2,
                preferred_element_type=f32) + b2                   # (TQ, C) f32
    return y + x                                                   # residual


# ---------------------------------------------------------------------------
# Fused per-layer kernel: one grid step = one (batch, query-tile) slab.
# ---------------------------------------------------------------------------
def layer_kernel(xq_ref, xkv_ref, ln1g_ref, ln1b_ref, wq_ref, bq_ref,
                 wkv_ref, bkv_ref, ln2g_ref, ln2b_ref, w1_ref, b1_ref,
                 w2_ref, b2_ref, o_ref, *, heads, compute_dtype):
    out = _layer_math(
        xq_ref[0], xkv_ref[0],
        ln1g_ref[0], ln1b_ref[0], wq_ref[...], bq_ref[0],
        wkv_ref[...], bkv_ref[0], ln2g_ref[0], ln2b_ref[0],
        w1_ref[...], b1_ref[0], w2_ref[...], b2_ref[0],
        heads=heads, compute_dtype=compute_dtype, approx_recip=True)
    o_ref[0] = out.astype(o_ref.dtype)


def _vmem_limit_bytes():
    # ~3/4 of physical VMEM: ~48 MiB on v7x (64 MiB phys), ~96 MiB on v5e/v6e
    # (128 MiB phys).  The 16/32 MiB scoped defaults are too small for real
    # ViT sizes with resident weights.
    try:
        cap = pltpu.get_tpu_info().vmem_capacity_bytes
    except Exception:
        cap = 64 * 1024 * 1024
    return int(cap) * 3 // 4


def transformer_layer(x, p, *, heads, compute_dtype, q_tile=256,
                      single_buffer_weights=True):
    B, N, C = x.shape
    H = p["w1"].shape[1]
    # Query tile must divide N (multiple of 8 for sublane alignment).
    tq = q_tile if (q_tile < N and N % q_tile == 0) else N
    num_q = N // tq

    def _resident(shape):
        # Constant index map -> block stays resident in VMEM across all grid
        # steps; single-buffer it so it is not duplicated by the pipeline.
        idx = lambda b, qi: (0,) * len(shape)
        if single_buffer_weights:
            return pl.BlockSpec(shape, idx, pipeline_mode=pl.Buffered(1))
        return pl.BlockSpec(shape, idx)

    kern = functools.partial(layer_kernel, heads=heads,
                             compute_dtype=compute_dtype)
    return pl.pallas_call(
        kern,
        out_shape=jax.ShapeDtypeStruct((B, N, C), x.dtype),
        grid=(B, num_q),
        in_specs=[
            pl.BlockSpec((1, tq, C), lambda b, qi: (b, qi, 0)),   # query/residual tile
            pl.BlockSpec((1, N, C), lambda b, qi: (b, 0, 0)),     # full slab for K/V
            _resident((1, C)), _resident((1, C)),                 # LN1 gamma/beta
            _resident((C, C)), _resident((1, C)),                 # Wq (scale folded) / bq
            _resident((C, 2 * C)), _resident((1, 2 * C)),         # fused KV W / b
            _resident((1, C)), _resident((1, C)),                 # LN2 gamma/beta
            _resident((C, H)), _resident((1, H)),                 # FFN up W / b
            _resident((H, C)), _resident((1, C)),                 # FFN down W / b
        ],
        out_specs=pl.BlockSpec((1, tq, C), lambda b, qi: (b, qi, 0)),
        compiler_params=pltpu.CompilerParams(
            dimension_semantics=("parallel", "parallel"),  # batch x q-tiles across TCs
            vmem_limit_bytes=_vmem_limit_bytes(),
        ),
    )(x, x, p["ln1_g"], p["ln1_b"], p["wq"], p["bq"], p["wkv"], p["bkv"],
      p["ln2_g"], p["ln2_b"], p["w1"], p["b1"], p["w2"], p["b2"])


def transformer_forward(x, layers, *, heads, compute_dtype=jnp.bfloat16,
                        q_tile=256, single_buffer_weights=True):
    for p in layers:
        x = transformer_layer(x, p, heads=heads, compute_dtype=compute_dtype,
                              q_tile=q_tile,
                              single_buffer_weights=single_buffer_weights)
    return x


# ---------------------------------------------------------------------------
# Pure-JAX reference (same math / casts, exact divide in softmax)
# ---------------------------------------------------------------------------
def _ref_forward(x, layers, *, heads, compute_dtype):
    for p in layers:
        fn = functools.partial(
            _layer_math,
            ln1_g=p["ln1_g"][0], ln1_b=p["ln1_b"][0],
            wq=p["wq"], bq=p["bq"][0], wkv=p["wkv"], bkv=p["bkv"][0],
            ln2_g=p["ln2_g"][0], ln2_b=p["ln2_b"][0],
            w1=p["w1"], b1=p["b1"][0], w2=p["w2"], b2=p["b2"][0],
            heads=heads, compute_dtype=compute_dtype, approx_recip=False)
        x = jax.vmap(lambda xb: fn(xb, xb))(x)
    return x


# ---------------------------------------------------------------------------
# Deterministic parameter init (mirrors the torch module's per-Linear params)
# and preparation: KV fusion, attention scale folded into Wq/bq (in f32,
# BEFORE the bf16 cast), bf16 weight cast for the MXU.
# ---------------------------------------------------------------------------
def init_params(key, dim, depth, mlp_dim):
    layers = []
    for d in range(depth):
        ks = jax.random.split(jax.random.fold_in(key, d), 10)
        layers.append({
            "ln1_g": jnp.ones((1, dim), jnp.float32),
            "ln1_b": jnp.zeros((1, dim), jnp.float32),
            "wq": 0.05 * jax.random.normal(ks[0], (dim, dim), jnp.float32),
            "bq": 0.05 * jax.random.normal(ks[1], (1, dim), jnp.float32),
            "wk": 0.05 * jax.random.normal(ks[2], (dim, dim), jnp.float32),
            "bk": 0.05 * jax.random.normal(ks[3], (1, dim), jnp.float32),
            "wv": 0.05 * jax.random.normal(ks[4], (dim, dim), jnp.float32),
            "bv": 0.05 * jax.random.normal(ks[5], (1, dim), jnp.float32),
            "ln2_g": jnp.ones((1, dim), jnp.float32),
            "ln2_b": jnp.zeros((1, dim), jnp.float32),
            "w1": 0.05 * jax.random.normal(ks[6], (dim, mlp_dim), jnp.float32),
            "b1": 0.05 * jax.random.normal(ks[7], (1, mlp_dim), jnp.float32),
            "w2": 0.05 * jax.random.normal(ks[8], (mlp_dim, dim), jnp.float32),
            "b2": 0.05 * jax.random.normal(ks[9], (1, dim), jnp.float32),
        })
    return layers


def prepare_params(layers, dim_head, compute_dtype):
    scale = jnp.float32(dim_head ** (-0.5))
    prepared = []
    for p in layers:
        prepared.append({
            "ln1_g": p["ln1_g"], "ln1_b": p["ln1_b"],
            # Scale folded in f32 before the bf16 cast (review correctness note).
            "wq": (p["wq"] * scale).astype(compute_dtype),
            "bq": p["bq"] * scale,
            "wkv": jnp.concatenate([p["wk"], p["wv"]],
                                   axis=1).astype(compute_dtype),
            "bkv": jnp.concatenate([p["bk"], p["bv"]], axis=1),
            "ln2_g": p["ln2_g"], "ln2_b": p["ln2_b"],
            "w1": p["w1"].astype(compute_dtype), "b1": p["b1"],
            "w2": p["w2"].astype(compute_dtype), "b2": p["b2"],
        })
    return prepared


if __name__ == "__main__":
    # Small config: dim=32, depth=2, heads=4, dim_head=8 (= dim//heads), mlp_dim=64
    B, N, dim = 2, 8, 32
    depth, heads, dim_head, mlp_dim = 2, 4, 8, 64
    compute_dtype = jnp.bfloat16

    key = jax.random.PRNGKey(0)
    kx, kp = jax.random.split(key)
    x = jax.random.normal(kx, (B, N, dim), jnp.float32)
    params = prepare_params(init_params(kp, dim, depth, mlp_dim),
                            dim_head, compute_dtype)

    def build_fwd(single_buffer_weights):
        return jax.jit(functools.partial(
            transformer_forward, heads=heads, compute_dtype=compute_dtype,
            q_tile=256, single_buffer_weights=single_buffer_weights))

    try:
        out = jax.block_until_ready(build_fwd(True)(x, params))
    except Exception:
        # Safety net: identical kernel without the single-buffer pipeline hint
        # (pl.Buffered(1)); everything else unchanged.
        out = jax.block_until_ready(build_fwd(False)(x, params))

    ref = _ref_forward(x, params, heads=heads, compute_dtype=compute_dtype)
    assert out.shape == (B, N, dim)
    # Tolerance covers the EUP approx reciprocal in the kernel softmax; the
    # bf16-operand / f32-accumulate matmuls use identical casts in the reference.
    assert jnp.allclose(out, ref, atol=5e-3, rtol=5e-3), "mismatch vs. JAX reference"

    print("KERNEL_OK")
</pallas_src>

<mosaic_0001>
module attributes {stable_mosaic.version = 11 : i64} {
  func.func @layer_kernel(%arg0: i32, %arg1: i32, %arg2: memref<1x8x32xf32, #tpu.memory_space<vmem>>, %arg3: memref<1x8x32xf32, #tpu.memory_space<vmem>>, %arg4: memref<1x32xf32, #tpu.memory_space<vmem>>, %arg5: memref<1x32xf32, #tpu.memory_space<vmem>>, %arg6: memref<32x32xbf16, #tpu.memory_space<vmem>>, %arg7: memref<1x32xf32, #tpu.memory_space<vmem>>, %arg8: memref<32x64xbf16, #tpu.memory_space<vmem>>, %arg9: memref<1x64xf32, #tpu.memory_space<vmem>>, %arg10: memref<1x32xf32, #tpu.memory_space<vmem>>, %arg11: memref<1x32xf32, #tpu.memory_space<vmem>>, %arg12: memref<32x64xbf16, #tpu.memory_space<vmem>>, %arg13: memref<1x64xf32, #tpu.memory_space<vmem>>, %arg14: memref<64x32xbf16, #tpu.memory_space<vmem>>, %arg15: memref<1x32xf32, #tpu.memory_space<vmem>>, %arg16: memref<1x8x32xf32, #tpu.memory_space<vmem>>) attributes {dimension_semantics = [#tpu.dimension_semantics<parallel>, #tpu.dimension_semantics<parallel>], iteration_bounds = array<i64: 2, 1>, scalar_prefetch = 0 : i64, scratch_operands = 0 : i64, tpu.core_type = #tpu.core_type<tc>, window_params = [{transform_indices = @transform_0, window_bounds = array<i64: 1, 8, 32>}, {transform_indices = @transform_1, window_bounds = array<i64: 1, 8, 32>}, {pipeline_mode = #tpu.pipeline_mode<synchronous>, transform_indices = @transform_2, window_bounds = array<i64: 1, 32>}, {pipeline_mode = #tpu.pipeline_mode<synchronous>, transform_indices = @transform_3, window_bounds = array<i64: 1, 32>}, {pipeline_mode = #tpu.pipeline_mode<synchronous>, transform_indices = @transform_4, window_bounds = array<i64: 32, 32>}, {pipeline_mode = #tpu.pipeline_mode<synchronous>, transform_indices = @transform_5, window_bounds = array<i64: 1, 32>}, {pipeline_mode = #tpu.pipeline_mode<synchronous>, transform_indices = @transform_6, window_bounds = array<i64: 32, 64>}, {pipeline_mode = #tpu.pipeline_mode<synchronous>, transform_indices = @transform_7, window_bounds = array<i64: 1, 64>}, {pipeline_mode = #tpu.pipeline_mode<synchronous>, transform_indices = @transform_8, window_bounds = array<i64: 1, 32>}, {pipeline_mode = #tpu.pipeline_mode<synchronous>, transform_indices = @transform_9, window_bounds = array<i64: 1, 32>}, {pipeline_mode = #tpu.pipeline_mode<synchronous>, transform_indices = @transform_10, window_bounds = array<i64: 32, 64>}, {pipeline_mode = #tpu.pipeline_mode<synchronous>, transform_indices = @transform_11, window_bounds = array<i64: 1, 64>}, {pipeline_mode = #tpu.pipeline_mode<synchronous>, transform_indices = @transform_12, window_bounds = array<i64: 64, 32>}, {pipeline_mode = #tpu.pipeline_mode<synchronous>, transform_indices = @transform_13, window_bounds = array<i64: 1, 32>}, {transform_indices = @transform_14, window_bounds = array<i64: 1, 8, 32>}]} {
    %c0 = arith.constant 0 : index
    %c0_0 = arith.constant 0 : index
    %c0_1 = arith.constant 0 : index
    %0 = vector.load %arg2[%c0, %c0_0, %c0_1] : memref<1x8x32xf32, #tpu.memory_space<vmem>>, vector<1x8x32xf32>
    %1 = vector.shape_cast %0 : vector<1x8x32xf32> to vector<8x32xf32>
    %c0_2 = arith.constant 0 : index
    %c0_3 = arith.constant 0 : index
    %c0_4 = arith.constant 0 : index
    %2 = vector.load %arg3[%c0_2, %c0_3, %c0_4] : memref<1x8x32xf32, #tpu.memory_space<vmem>>, vector<1x8x32xf32>
    %3 = vector.shape_cast %2 : vector<1x8x32xf32> to vector<8x32xf32>
    %c0_5 = arith.constant 0 : index
    %c0_6 = arith.constant 0 : index
    %4 = vector.load %arg4[%c0_5, %c0_6] : memref<1x32xf32, #tpu.memory_space<vmem>>, vector<1x32xf32>
    %5 = vector.shape_cast %4 : vector<1x32xf32> to vector<32xf32>
    %c0_7 = arith.constant 0 : index
    %c0_8 = arith.constant 0 : index
    %6 = vector.load %arg5[%c0_7, %c0_8] : memref<1x32xf32, #tpu.memory_space<vmem>>, vector<1x32xf32>
    %7 = vector.shape_cast %6 : vector<1x32xf32> to vector<32xf32>
    %c0_9 = arith.constant 0 : index
    %c0_10 = arith.constant 0 : index
    %8 = vector.load %arg6[%c0_9, %c0_10] : memref<32x32xbf16, #tpu.memory_space<vmem>>, vector<32x32xbf16>
    %c0_11 = arith.constant 0 : index
    %c0_12 = arith.constant 0 : index
    %9 = vector.load %arg7[%c0_11, %c0_12] : memref<1x32xf32, #tpu.memory_space<vmem>>, vector<1x32xf32>
    %10 = vector.shape_cast %9 : vector<1x32xf32> to vector<32xf32>
    %c0_13 = arith.constant 0 : index
    %c0_14 = arith.constant 0 : index
    %11 = vector.load %arg8[%c0_13, %c0_14] : memref<32x64xbf16, #tpu.memory_space<vmem>>, vector<32x64xbf16>
    %c0_15 = arith.constant 0 : index
    %c0_16 = arith.constant 0 : index
    %12 = vector.load %arg9[%c0_15, %c0_16] : memref<1x64xf32, #tpu.memory_space<vmem>>, vector<1x64xf32>
    %13 = vector.shape_cast %12 : vector<1x64xf32> to vector<64xf32>
    %c0_17 = arith.constant 0 : index
    %c0_18 = arith.constant 0 : index
    %14 = vector.load %arg10[%c0_17, %c0_18] : memref<1x32xf32, #tpu.memory_space<vmem>>, vector<1x32xf32>
    %15 = vector.shape_cast %14 : vector<1x32xf32> to vector<32xf32>
    %c0_19 = arith.constant 0 : index
    %c0_20 = arith.constant 0 : index
    %16 = vector.load %arg11[%c0_19, %c0_20] : memref<1x32xf32, #tpu.memory_space<vmem>>, vector<1x32xf32>
    %17 = vector.shape_cast %16 : vector<1x32xf32> to vector<32xf32>
    %c0_21 = arith.constant 0 : index
    %c0_22 = arith.constant 0 : index
    %18 = vector.load %arg12[%c0_21, %c0_22] : memref<32x64xbf16, #tpu.memory_space<vmem>>, vector<32x64xbf16>
    %c0_23 = arith.constant 0 : index
    %c0_24 = arith.constant 0 : index
    %19 = vector.load %arg13[%c0_23, %c0_24] : memref<1x64xf32, #tpu.memory_space<vmem>>, vector<1x64xf32>
    %20 = vector.shape_cast %19 : vector<1x64xf32> to vector<64xf32>
    %c0_25 = arith.constant 0 : index
    %c0_26 = arith.constant 0 : index
    %21 = vector.load %arg14[%c0_25, %c0_26] : memref<64x32xbf16, #tpu.memory_space<vmem>>, vector<64x32xbf16>
    %c0_27 = arith.constant 0 : index
    %c0_28 = arith.constant 0 : index
    %22 = vector.load %arg15[%c0_27, %c0_28] : memref<1x32xf32, #tpu.memory_space<vmem>>, vector<1x32xf32>
    %23 = vector.shape_cast %22 : vector<1x32xf32> to vector<32xf32>
    %cst = arith.constant dense<0.000000e+00> : vector<8xf32>
    %24 = vector.multi_reduction <add>, %1, %cst [1] : vector<8x32xf32> to vector<8xf32>
    %25 = vector.shape_cast %24 : vector<8xf32> to vector<8x1xf32>
    %cst_29 = arith.constant 3.200000e+01 : f32
    %26 = vector.broadcast %cst_29 : f32 to vector<8x1xf32>
    %27 = arith.divf %25, %26 : vector<8x1xf32>
    %28 = vector.broadcast %27 : vector<8x1xf32> to vector<8x32xf32>
    %29 = arith.subf %1, %28 : vector<8x32xf32>
    %30 = arith.mulf %29, %29 : vector<8x32xf32>
    %cst_30 = arith.constant dense<0.000000e+00> : vector<8xf32>
    %31 = vector.multi_reduction <add>, %30, %cst_30 [1] : vector<8x32xf32> to vector<8xf32>
    %32 = vector.shape_cast %31 : vector<8xf32> to vector<8x1xf32>
    %cst_31 = arith.constant 3.200000e+01 : f32
    %33 = vector.broadcast %cst_31 : f32 to vector<8x1xf32>
    %34 = arith.divf %32, %33 : vector<8x1xf32>
    %35 = vector.broadcast %27 : vector<8x1xf32> to vector<8x32xf32>
    %36 = arith.subf %1, %35 : vector<8x32xf32>
    %cst_32 = arith.constant 9.99999974E-6 : f32
    %37 = vector.broadcast %cst_32 : f32 to vector<8x1xf32>
    %38 = arith.addf %34, %37 : vector<8x1xf32>
    %39 = math.rsqrt %38 : vector<8x1xf32>
    %40 = vector.broadcast %39 : vector<8x1xf32> to vector<8x32xf32>
    %41 = arith.mulf %36, %40 : vector<8x32xf32>
    %42 = vector.shape_cast %5 : vector<32xf32> to vector<1x32xf32>
    %43 = vector.broadcast %42 : vector<1x32xf32> to vector<8x32xf32>
    %44 = arith.mulf %41, %43 : vector<8x32xf32>
    %45 = vector.shape_cast %7 : vector<32xf32> to vector<1x32xf32>
    %46 = vector.broadcast %45 : vector<1x32xf32> to vector<8x32xf32>
    %47 = arith.addf %44, %46 : vector<8x32xf32>
    %cst_33 = arith.constant dense<0.000000e+00> : vector<8xf32>
    %48 = vector.multi_reduction <add>, %3, %cst_33 [1] : vector<8x32xf32> to vector<8xf32>
    %49 = vector.shape_cast %48 : vector<8xf32> to vector<8x1xf32>
    %cst_34 = arith.constant 3.200000e+01 : f32
    %50 = vector.broadcast %cst_34 : f32 to vector<8x1xf32>
    %51 = arith.divf %49, %50 : vector<8x1xf32>
    %52 = vector.broadcast %51 : vector<8x1xf32> to vector<8x32xf32>
    %53 = arith.subf %3, %52 : vector<8x32xf32>
    %54 = arith.mulf %53, %53 : vector<8x32xf32>
    %cst_35 = arith.constant dense<0.000000e+00> : vector<8xf32>
    %55 = vector.multi_reduction <add>, %54, %cst_35 [1] : vector<8x32xf32> to vector<8xf32>
    %56 = vector.shape_cast %55 : vector<8xf32> to vector<8x1xf32>
    %cst_36 = arith.constant 3.200000e+01 : f32
    %57 = vector.broadcast %cst_36 : f32 to vector<8x1xf32>
    %58 = arith.divf %56, %57 : vector<8x1xf32>
    %59 = vector.broadcast %51 : vector<8x1xf32> to vector<8x32xf32>
    %60 = arith.subf %3, %59 : vector<8x32xf32>
    %cst_37 = arith.constant 9.99999974E-6 : f32
    %61 = vector.broadcast %cst_37 : f32 to vector<8x1xf32>
    %62 = arith.addf %58, %61 : vector<8x1xf32>
    %63 = math.rsqrt %62 : vector<8x1xf32>
    %64 = vector.broadcast %63 : vector<8x1xf32> to vector<8x32xf32>
    %65 = arith.mulf %60, %64 : vector<8x32xf32>
    %66 = vector.shape_cast %5 : vector<32xf32> to vector<1x32xf32>
    %67 = vector.broadcast %66 : vector<1x32xf32> to vector<8x32xf32>
    %68 = arith.mulf %65, %67 : vector<8x32xf32>
    %69 = vector.shape_cast %7 : vector<32xf32> to vector<1x32xf32>
    %70 = vector.broadcast %69 : vector<1x32xf32> to vector<8x32xf32>
    %71 = arith.addf %68, %70 : vector<8x32xf32>
    %72 = arith.truncf %47 : vector<8x32xf32> to vector<8x32xbf16>
    %cst_38 = arith.constant dense<0.000000e+00> : vector<8x32xf32>
    %73 = tpu.matmul %72, %8, %cst_38 {dimension_numbers = #tpu.dot_dimension_numbers<[1], [0], [0], [1], [0, 0, 1, 1], [], []>} : vector<8x32xbf16>, vector<32x32xbf16>, vector<8x32xf32> -> vector<8x32xf32>
    %74 = vector.shape_cast %10 : vector<32xf32> to vector<1x32xf32>
    %75 = vector.broadcast %74 : vector<1x32xf32> to vector<8x32xf32>
    %76 = arith.addf %73, %75 : vector<8x32xf32>
    %77 = arith.truncf %71 : vector<8x32xf32> to vector<8x32xbf16>
    %cst_39 = arith.constant dense<0.000000e+00> : vector<8x64xf32>
    %78 = tpu.matmul %77, %11, %cst_39 {dimension_numbers = #tpu.dot_dimension_numbers<[1], [0], [0], [1], [0, 0, 1, 1], [], []>} : vector<8x32xbf16>, vector<32x64xbf16>, vector<8x64xf32> -> vector<8x64xf32>
    %79 = vector.shape_cast %13 : vector<64xf32> to vector<1x64xf32>
    %80 = vector.broadcast %79 : vector<1x64xf32> to vector<8x64xf32>
    %81 = arith.addf %78, %80 : vector<8x64xf32>
    %82 = vector.extract_strided_slice %81 {offsets = [0, 0], sizes = [8, 32], strides = [1, 1]} : vector<8x64xf32> to vector<8x32xf32>
    %83 = vector.extract_strided_slice %81 {offsets = [0, 32], sizes = [8, 32], strides = [1, 1]} : vector<8x64xf32> to vector<8x32xf32>
    %84 = vector.shape_cast %76 : vector<8x32xf32> to vector<8x4x8xf32>
    %85 = tpu.transpose %84, [1, 0, 2] : vector<8x4x8xf32> -> vector<4x8x8xf32>
    %86 = arith.truncf %85 : vector<4x8x8xf32> to vector<4x8x8xbf16>
    %87 = vector.shape_cast %82 : vector<8x32xf32> to vector<8x4x8xf32>
    %88 = tpu.transpose %87, [1, 0, 2] : vector<8x4x8xf32> -> vector<4x8x8xf32>
    %89 = arith.truncf %88 : vector<4x8x8xf32> to vector<4x8x8xbf16>
    %90 = vector.shape_cast %83 : vector<8x32xf32> to vector<8x4x8xf32>
    %91 = tpu.transpose %90, [1, 0, 2] : vector<8x4x8xf32> -> vector<4x8x8xf32>
    %92 = arith.truncf %91 : vector<4x8x8xf32> to vector<4x8x8xbf16>
    "tpu.trace_start"() <{level = 10 : i32, message = "hqd,hkd->hqk"}> : () -> ()
    %cst_40 = arith.constant dense<0.000000e+00> : vector<4x8x8xf32>
    %93 = tpu.matmul %86, %89, %cst_40 {dimension_numbers = #tpu.dot_dimension_numbers<[2], [2], [1], [1], [0, 0, 0, 1, 1, 1], [0], [0]>} : vector<4x8x8xbf16>, vector<4x8x8xbf16>, vector<4x8x8xf32> -> vector<4x8x8xf32>
    "tpu.trace_stop"() : () -> ()
    %cst_41 = arith.constant dense<0xFF800000> : vector<4x8xf32>
    %94 = vector.multi_reduction <maximumf>, %93, %cst_41 [2] : vector<4x8x8xf32> to vector<4x8xf32>
    %95 = vector.shape_cast %94 : vector<4x8xf32> to vector<4x8x1xf32>
    %96 = vector.broadcast %95 : vector<4x8x1xf32> to vector<4x8x8xf32>
    %97 = arith.subf %93, %96 : vector<4x8x8xf32>
    %98 = math.exp %97 : vector<4x8x8xf32>
    %cst_42 = arith.constant dense<0.000000e+00> : vector<4x8xf32>
    %99 = vector.multi_reduction <add>, %98, %cst_42 [2] : vector<4x8x8xf32> to vector<4x8xf32>
    %100 = vector.shape_cast %99 : vector<4x8xf32> to vector<4x8x1xf32>
    %101 = tpu.reciprocal %100 {approx = true} : vector<4x8x1xf32> -> vector<4x8x1xf32>
    %102 = vector.broadcast %101 : vector<4x8x1xf32> to vector<4x8x8xf32>
    %103 = arith.mulf %98, %102 : vector<4x8x8xf32>
    %104 = arith.truncf %103 : vector<4x8x8xf32> to vector<4x8x8xbf16>
    "tpu.trace_start"() <{level = 10 : i32, message = "hqk,hkd->hqd"}> : () -> ()
    %cst_43 = arith.constant dense<0.000000e+00> : vector<4x8x8xf32>
    %105 = tpu.matmul %104, %92, %cst_43 {dimension_numbers = #tpu.dot_dimension_numbers<[2], [1], [1], [2], [0, 0, 0, 1, 1, 2], [0], [0]>} : vector<4x8x8xbf16>, vector<4x8x8xbf16>, vector<4x8x8xf32> -> vector<4x8x8xf32>
    "tpu.trace_stop"() : () -> ()
    %106 = tpu.transpose %105, [1, 0, 2] : vector<4x8x8xf32> -> vector<8x4x8xf32>
    %107 = vector.shape_cast %106 : vector<8x4x8xf32> to vector<8x32xf32>
    %108 = arith.addf %107, %1 : vector<8x32xf32>
    %cst_44 = arith.constant dense<0.000000e+00> : vector<8xf32>
    %109 = vector.multi_reduction <add>, %108, %cst_44 [1] : vector<8x32xf32> to vector<8xf32>
    %110 = vector.shape_cast %109 : vector<8xf32> to vector<8x1xf32>
    %cst_45 = arith.constant 3.200000e+01 : f32
    %111 = vector.broadcast %cst_45 : f32 to vector<8x1xf32>
    %112 = arith.divf %110, %111 : vector<8x1xf32>
    %113 = vector.broadcast %112 : vector<8x1xf32> to vector<8x32xf32>
    %114 = arith.subf %108, %113 : vector<8x32xf32>
    %115 = arith.mulf %114, %114 : vector<8x32xf32>
    %cst_46 = arith.constant dense<0.000000e+00> : vector<8xf32>
    %116 = vector.multi_reduction <add>, %115, %cst_46 [1] : vector<8x32xf32> to vector<8xf32>
    %117 = vector.shape_cast %116 : vector<8xf32> to vector<8x1xf32>
    %cst_47 = arith.constant 3.200000e+01 : f32
    %118 = vector.broadcast %cst_47 : f32 to vector<8x1xf32>
    %119 = arith.divf %117, %118 : vector<8x1xf32>
    %120 = vector.broadcast %112 : vector<8x1xf32> to vector<8x32xf32>
    %121 = arith.subf %108, %120 : vector<8x32xf32>
    %cst_48 = arith.constant 9.99999974E-6 : f32
    %122 = vector.broadcast %cst_48 : f32 to vector<8x1xf32>
    %123 = arith.addf %119, %122 : vector<8x1xf32>
    %124 = math.rsqrt %123 : vector<8x1xf32>
    %125 = vector.broadcast %124 : vector<8x1xf32> to vector<8x32xf32>
    %126 = arith.mulf %121, %125 : vector<8x32xf32>
    %127 = vector.shape_cast %15 : vector<32xf32> to vector<1x32xf32>
    %128 = vector.broadcast %127 : vector<1x32xf32> to vector<8x32xf32>
    %129 = arith.mulf %126, %128 : vector<8x32xf32>
    %130 = vector.shape_cast %17 : vector<32xf32> to vector<1x32xf32>
    %131 = vector.broadcast %130 : vector<1x32xf32> to vector<8x32xf32>
    %132 = arith.addf %129, %131 : vector<8x32xf32>
    %133 = arith.truncf %132 : vector<8x32xf32> to vector<8x32xbf16>
    %cst_49 = arith.constant dense<0.000000e+00> : vector<8x64xf32>
    %134 = tpu.matmul %133, %18, %cst_49 {dimension_numbers = #tpu.dot_dimension_numbers<[1], [0], [0], [1], [0, 0, 1, 1], [], []>} : vector<8x32xbf16>, vector<32x64xbf16>, vector<8x64xf32> -> vector<8x64xf32>
    %135 = vector.shape_cast %20 : vector<64xf32> to vector<1x64xf32>
    %136 = vector.broadcast %135 : vector<1x64xf32> to vector<8x64xf32>
    %137 = arith.addf %134, %136 : vector<8x64xf32>
    %cst_50 = arith.constant 5.000000e-01 : f32
    %138 = vector.broadcast %cst_50 : f32 to vector<8x64xf32>
    %139 = arith.mulf %138, %137 : vector<8x64xf32>
    %cst_51 = arith.constant 0.707106769 : f32
    %140 = vector.broadcast %cst_51 : f32 to vector<8x64xf32>
    %141 = arith.mulf %137, %140 : vector<8x64xf32>
    %142 = math.erf %141 : vector<8x64xf32>
    %cst_52 = arith.constant 1.000000e+00 : f32
    %143 = vector.broadcast %cst_52 : f32 to vector<8x64xf32>
    %144 = arith.addf %143, %142 : vector<8x64xf32>
    %145 = arith.mulf %139, %144 : vector<8x64xf32>
    %146 = arith.truncf %145 : vector<8x64xf32> to vector<8x64xbf16>
    %cst_53 = arith.constant dense<0.000000e+00> : vector<8x32xf32>
    %147 = tpu.matmul %146, %21, %cst_53 {dimension_numbers = #tpu.dot_dimension_numbers<[1], [0], [0], [1], [0, 0, 1, 1], [], []>} : vector<8x64xbf16>, vector<64x32xbf16>, vector<8x32xf32> -> vector<8x32xf32>
    %148 = vector.shape_cast %23 : vector<32xf32> to vector<1x32xf32>
    %149 = vector.broadcast %148 : vector<1x32xf32> to vector<8x32xf32>
    %150 = arith.addf %147, %149 : vector<8x32xf32>
    %151 = arith.addf %150, %108 : vector<8x32xf32>
    %c0_54 = arith.constant 0 : index
    %c0_55 = arith.constant 0 : index
    %c0_56 = arith.constant 0 : index
    %152 = vector.load %arg16[%c0_54, %c0_55, %c0_56] : memref<1x8x32xf32, #tpu.memory_space<vmem>>, vector<1x8x32xf32>
    %153 = vector.shape_cast %152 : vector<1x8x32xf32> to vector<8x32xf32>
    %154 = vector.shape_cast %151 : vector<8x32xf32> to vector<1x8x32xf32>
    tpu.vector_store %arg16[%c0_54, %c0_55, %c0_56], %154 {strides = array<i32>} : memref<1x8x32xf32, #tpu.memory_space<vmem>>, vector<1x8x32xf32>,
    return
  }
  func.func @transform_0(%arg0: i32, %arg1: i32) -> (i32, i32, i32) {
    %c0_i32 = arith.constant 0 : i32
    %c0_i32_0 = arith.constant 0 : i32
    return %arg0, %arg1, %c0_i32 : i32, i32, i32
  }
  func.func @transform_1(%arg0: i32, %arg1: i32) -> (i32, i32, i32) {
    %c0_i32 = arith.constant 0 : i32
    %c0_i32_0 = arith.constant 0 : i32
    %c0_i32_1 = arith.constant 0 : i32
    return %arg0, %c0_i32, %c0_i32_0 : i32, i32, i32
  }
  func.func @transform_2(%arg0: i32, %arg1: i32) -> (i32, i32) {
    %c0_i32 = arith.constant 0 : i32
    %c0_i32_0 = arith.constant 0 : i32
    %c0_i32_1 = arith.constant 0 : i32
    return %c0_i32, %c0_i32_0 : i32, i32
  }
  func.func @transform_3(%arg0: i32, %arg1: i32) -> (i32, i32) {
    %c0_i32 = arith.constant 0 : i32
    %c0_i32_0 = arith.constant 0 : i32
    %c0_i32_1 = arith.constant 0 : i32
    return %c0_i32, %c0_i32_0 : i32, i32
  }
  func.func @transform_4(%arg0: i32, %arg1: i32) -> (i32, i32) {
    %c0_i32 = arith.constant 0 : i32
    %c0_i32_0 = arith.constant 0 : i32
    %c0_i32_1 = arith.constant 0 : i32
    return %c0_i32, %c0_i32_0 : i32, i32
  }
  func.func @transform_5(%arg0: i32, %arg1: i32) -> (i32, i32) {
    %c0_i32 = arith.constant 0 : i32
    %c0_i32_0 = arith.constant 0 : i32
    %c0_i32_1 = arith.constant 0 : i32
    return %c0_i32, %c0_i32_0 : i32, i32
  }
  func.func @transform_6(%arg0: i32, %arg1: i32) -> (i32, i32) {
    %c0_i32 = arith.constant 0 : i32
    %c0_i32_0 = arith.constant 0 : i32
    %c0_i32_1 = arith.constant 0 : i32
    return %c0_i32, %c0_i32_0 : i32, i32
  }
  func.func @transform_7(%arg0: i32, %arg1: i32) -> (i32, i32) {
    %c0_i32 = arith.constant 0 : i32
    %c0_i32_0 = arith.constant 0 : i32
    %c0_i32_1 = arith.constant 0 : i32
    return %c0_i32, %c0_i32_0 : i32, i32
  }
  func.func @transform_8(%arg0: i32, %arg1: i32) -> (i32, i32) {
    %c0_i32 = arith.constant 0 : i32
    %c0_i32_0 = arith.constant 0 : i32
    %c0_i32_1 = arith.constant 0 : i32
    return %c0_i32, %c0_i32_0 : i32, i32
  }
  func.func @transform_9(%arg0: i32, %arg1: i32) -> (i32, i32) {
    %c0_i32 = arith.constant 0 : i32
    %c0_i32_0 = arith.constant 0 : i32
    %c0_i32_1 = arith.constant 0 : i32
    return %c0_i32, %c0_i32_0 : i32, i32
  }
  func.func @transform_10(%arg0: i32, %arg1: i32) -> (i32, i32) {
    %c0_i32 = arith.constant 0 : i32
    %c0_i32_0 = arith.constant 0 : i32
    %c0_i32_1 = arith.constant 0 : i32
    return %c0_i32, %c0_i32_0 : i32, i32
  }
  func.func @transform_11(%arg0: i32, %arg1: i32) -> (i32, i32) {
    %c0_i32 = arith.constant 0 : i32
    %c0_i32_0 = arith.constant 0 : i32
    %c0_i32_1 = arith.constant 0 : i32
    return %c0_i32, %c0_i32_0 : i32, i32
  }
  func.func @transform_12(%arg0: i32, %arg1: i32) -> (i32, i32) {
    %c0_i32 = arith.constant 0 : i32
    %c0_i32_0 = arith.constant 0 : i32
    %c0_i32_1 = arith.constant 0 : i32
    return %c0_i32, %c0_i32_0 : i32, i32
  }
  func.func @transform_13(%arg0: i32, %arg1: i32) -> (i32, i32) {
    %c0_i32 = arith.constant 0 : i32
    %c0_i32_0 = arith.constant 0 : i32
    %c0_i32_1 = arith.constant 0 : i32
    return %c0_i32, %c0_i32_0 : i32, i32
  }
  func.func @transform_14(%arg0: i32, %arg1: i32) -> (i32, i32, i32) {
    %c0_i32 = arith.constant 0 : i32
    %c0_i32_0 = arith.constant 0 : i32
    return %arg0, %arg1, %c0_i32 : i32, i32, i32
  }
}

module attributes {stable_mosaic.version = 11 : i64} {
  func.func @layer_kernel(%arg0: i32, %arg1: i32, %arg2: memref<1x8x32xf32, #tpu.memory_space<vmem>>, %arg3: memref<1x8x32xf32, #tpu.memory_space<vmem>>, %arg4: memref<1x32xf32, #tpu.memory_space<vmem>>, %arg5: memref<1x32xf32, #tpu.memory_space<vmem>>, %arg6: memref<32x32xbf16, #tpu.memory_space<vmem>>, %arg7: memref<1x32xf32, #tpu.memory_space<vmem>>, %arg8: memref<32x64xbf16, #tpu.memory_space<vmem>>, %arg9: memref<1x64xf32, #tpu.memory_space<vmem>>, %arg10: memref<1x32xf32, #tpu.memory_space<vmem>>, %arg11: memref<1x32xf32, #tpu.memory_space<vmem>>, %arg12: memref<32x64xbf16, #tpu.memory_space<vmem>>, %arg13: memref<1x64xf32, #tpu.memory_space<vmem>>, %arg14: memref<64x32xbf16, #tpu.memory_space<vmem>>, %arg15: memref<1x32xf32, #tpu.memory_space<vmem>>, %arg16: memref<1x8x32xf32, #tpu.memory_space<vmem>>) attributes {dimension_semantics = [#tpu.dimension_semantics<parallel>, #tpu.dimension_semantics<parallel>], iteration_bounds = array<i64: 2, 1>, scalar_prefetch = 0 : i64, scratch_operands = 0 : i64, tpu.core_type = #tpu.core_type<tc>, window_params = [{transform_indices = @transform_0, window_bounds = array<i64: 1, 8, 32>}, {transform_indices = @transform_1, window_bounds = array<i64: 1, 8, 32>}, {pipeline_mode = #tpu.pipeline_mode<synchronous>, transform_indices = @transform_2, window_bounds = array<i64: 1, 32>}, {pipeline_mode = #tpu.pipeline_mode<synchronous>, transform_indices = @transform_3, window_bounds = array<i64: 1, 32>}, {pipeline_mode = #tpu.pipeline_mode<synchronous>, transform_indices = @transform_4, window_bounds = array<i64: 32, 32>}, {pipeline_mode = #tpu.pipeline_mode<synchronous>, transform_indices = @transform_5, window_bounds = array<i64: 1, 32>}, {pipeline_mode = #tpu.pipeline_mode<synchronous>, transform_indices = @transform_6, window_bounds = array<i64: 32, 64>}, {pipeline_mode = #tpu.pipeline_mode<synchronous>, transform_indices = @transform_7, window_bounds = array<i64: 1, 64>}, {pipeline_mode = #tpu.pipeline_mode<synchronous>, transform_indices = @transform_8, window_bounds = array<i64: 1, 32>}, {pipeline_mode = #tpu.pipeline_mode<synchronous>, transform_indices = @transform_9, window_bounds = array<i64: 1, 32>}, {pipeline_mode = #tpu.pipeline_mode<synchronous>, transform_indices = @transform_10, window_bounds = array<i64: 32, 64>}, {pipeline_mode = #tpu.pipeline_mode<synchronous>, transform_indices = @transform_11, window_bounds = array<i64: 1, 64>}, {pipeline_mode = #tpu.pipeline_mode<synchronous>, transform_indices = @transform_12, window_bounds = array<i64: 64, 32>}, {pipeline_mode = #tpu.pipeline_mode<synchronous>, transform_indices = @transform_13, window_bounds = array<i64: 1, 32>}, {transform_indices = @transform_14, window_bounds = array<i64: 1, 8, 32>}]} {
    %c0 = arith.constant 0 : index
    %c0_0 = arith.constant 0 : index
    %c0_1 = arith.constant 0 : index
    %0 = vector.load %arg2[%c0, %c0_0, %c0_1] : memref<1x8x32xf32, #tpu.memory_space<vmem>>, vector<1x8x32xf32>
    %1 = vector.shape_cast %0 : vector<1x8x32xf32> to vector<8x32xf32>
    %c0_2 = arith.constant 0 : index
    %c0_3 = arith.constant 0 : index
    %c0_4 = arith.constant 0 : index
    %2 = vector.load %arg3[%c0_2, %c0_3, %c0_4] : memref<1x8x32xf32, #tpu.memory_space<vmem>>, vector<1x8x32xf32>
    %3 = vector.shape_cast %2 : vector<1x8x32xf32> to vector<8x32xf32>
    %c0_5 = arith.constant 0 : index
    %c0_6 = arith.constant 0 : index
    %4 = vector.load %arg4[%c0_5, %c0_6] : memref<1x32xf32, #tpu.memory_space<vmem>>, vector<1x32xf32>
    %5 = vector.shape_cast %4 : vector<1x32xf32> to vector<32xf32>
    %c0_7 = arith.constant 0 : index
    %c0_8 = arith.constant 0 : index
    %6 = vector.load %arg5[%c0_7, %c0_8] : memref<1x32xf32, #tpu.memory_space<vmem>>, vector<1x32xf32>
    %7 = vector.shape_cast %6 : vector<1x32xf32> to vector<32xf32>
    %c0_9 = arith.constant 0 : index
    %c0_10 = arith.constant 0 : index
    %8 = vector.load %arg6[%c0_9, %c0_10] : memref<32x32xbf16, #tpu.memory_space<vmem>>, vector<32x32xbf16>
    %c0_11 = arith.constant 0 : index
    %c0_12 = arith.constant 0 : index
    %9 = vector.load %arg7[%c0_11, %c0_12] : memref<1x32xf32, #tpu.memory_space<vmem>>, vector<1x32xf32>
    %10 = vector.shape_cast %9 : vector<1x32xf32> to vector<32xf32>
    %c0_13 = arith.constant 0 : index
    %c0_14 = arith.constant 0 : index
    %11 = vector.load %arg8[%c0_13, %c0_14] : memref<32x64xbf16, #tpu.memory_space<vmem>>, vector<32x64xbf16>
    %c0_15 = arith.constant 0 : index
    %c0_16 = arith.constant 0 : index
    %12 = vector.load %arg9[%c0_15, %c0_16] : memref<1x64xf32, #tpu.memory_space<vmem>>, vector<1x64xf32>
    %13 = vector.shape_cast %12 : vector<1x64xf32> to vector<64xf32>
    %c0_17 = arith.constant 0 : index
    %c0_18 = arith.constant 0 : index
    %14 = vector.load %arg10[%c0_17, %c0_18] : memref<1x32xf32, #tpu.memory_space<vmem>>, vector<1x32xf32>
    %15 = vector.shape_cast %14 : vector<1x32xf32> to vector<32xf32>
    %c0_19 = arith.constant 0 : index
    %c0_20 = arith.constant 0 : index
    %16 = vector.load %arg11[%c0_19, %c0_20] : memref<1x32xf32, #tpu.memory_space<vmem>>, vector<1x32xf32>
    %17 = vector.shape_cast %16 : vector<1x32xf32> to vector<32xf32>
    %c0_21 = arith.constant 0 : index
    %c0_22 = arith.constant 0 : index
    %18 = vector.load %arg12[%c0_21, %c0_22] : memref<32x64xbf16, #tpu.memory_space<vmem>>, vector<32x64xbf16>
    %c0_23 = arith.constant 0 : index
    %c0_24 = arith.constant 0 : index
    %19 = vector.load %arg13[%c0_23, %c0_24] : memref<1x64xf32, #tpu.memory_space<vmem>>, vector<1x64xf32>
    %20 = vector.shape_cast %19 : vector<1x64xf32> to vector<64xf32>
    %c0_25 = arith.constant 0 : index
    %c0_26 = arith.constant 0 : index
    %21 = vector.load %arg14[%c0_25, %c0_26] : memref<64x32xbf16, #tpu.memory_space<vmem>>, vector<64x32xbf16>
    %c0_27 = arith.constant 0 : index
    %c0_28 = arith.constant 0 : index
    %22 = vector.load %arg15[%c0_27, %c0_28] : memref<1x32xf32, #tpu.memory_space<vmem>>, vector<1x32xf32>
    %23 = vector.shape_cast %22 : vector<1x32xf32> to vector<32xf32>
    %cst = arith.constant dense<0.000000e+00> : vector<8xf32>
    %24 = vector.multi_reduction <add>, %1, %cst [1] : vector<8x32xf32> to vector<8xf32>
    %25 = vector.shape_cast %24 : vector<8xf32> to vector<8x1xf32>
    %cst_29 = arith.constant 3.200000e+01 : f32
    %26 = vector.broadcast %cst_29 : f32 to vector<8x1xf32>
    %27 = arith.divf %25, %26 : vector<8x1xf32>
    %28 = vector.broadcast %27 : vector<8x1xf32> to vector<8x32xf32>
    %29 = arith.subf %1, %28 : vector<8x32xf32>
    %30 = arith.mulf %29, %29 : vector<8x32xf32>
    %cst_30 = arith.constant dense<0.000000e+00> : vector<8xf32>
    %31 = vector.multi_reduction <add>, %30, %cst_30 [1] : vector<8x32xf32> to vector<8xf32>
    %32 = vector.shape_cast %31 : vector<8xf32> to vector<8x1xf32>
    %cst_31 = arith.constant 3.200000e+01 : f32
    %33 = vector.broadcast %cst_31 : f32 to vector<8x1xf32>
    %34 = arith.divf %32, %33 : vector<8x1xf32>
    %35 = vector.broadcast %27 : vector<8x1xf32> to vector<8x32xf32>
    %36 = arith.subf %1, %35 : vector<8x32xf32>
    %cst_32 = arith.constant 9.99999974E-6 : f32
    %37 = vector.broadcast %cst_32 : f32 to vector<8x1xf32>
    %38 = arith.addf %34, %37 : vector<8x1xf32>
    %39 = math.rsqrt %38 : vector<8x1xf32>
    %40 = vector.broadcast %39 : vector<8x1xf32> to vector<8x32xf32>
    %41 = arith.mulf %36, %40 : vector<8x32xf32>
    %42 = vector.shape_cast %5 : vector<32xf32> to vector<1x32xf32>
    %43 = vector.broadcast %42 : vector<1x32xf32> to vector<8x32xf32>
    %44 = arith.mulf %41, %43 : vector<8x32xf32>
    %45 = vector.shape_cast %7 : vector<32xf32> to vector<1x32xf32>
    %46 = vector.broadcast %45 : vector<1x32xf32> to vector<8x32xf32>
    %47 = arith.addf %44, %46 : vector<8x32xf32>
    %cst_33 = arith.constant dense<0.000000e+00> : vector<8xf32>
    %48 = vector.multi_reduction <add>, %3, %cst_33 [1] : vector<8x32xf32> to vector<8xf32>
    %49 = vector.shape_cast %48 : vector<8xf32> to vector<8x1xf32>
    %cst_34 = arith.constant 3.200000e+01 : f32
    %50 = vector.broadcast %cst_34 : f32 to vector<8x1xf32>
    %51 = arith.divf %49, %50 : vector<8x1xf32>
    %52 = vector.broadcast %51 : vector<8x1xf32> to vector<8x32xf32>
    %53 = arith.subf %3, %52 : vector<8x32xf32>
    %54 = arith.mulf %53, %53 : vector<8x32xf32>
    %cst_35 = arith.constant dense<0.000000e+00> : vector<8xf32>
    %55 = vector.multi_reduction <add>, %54, %cst_35 [1] : vector<8x32xf32> to vector<8xf32>
    %56 = vector.shape_cast %55 : vector<8xf32> to vector<8x1xf32>
    %cst_36 = arith.constant 3.200000e+01 : f32
    %57 = vector.broadcast %cst_36 : f32 to vector<8x1xf32>
    %58 = arith.divf %56, %57 : vector<8x1xf32>
    %59 = vector.broadcast %51 : vector<8x1xf32> to vector<8x32xf32>
    %60 = arith.subf %3, %59 : vector<8x32xf32>
    %cst_37 = arith.constant 9.99999974E-6 : f32
    %61 = vector.broadcast %cst_37 : f32 to vector<8x1xf32>
    %62 = arith.addf %58, %61 : vector<8x1xf32>
    %63 = math.rsqrt %62 : vector<8x1xf32>
    %64 = vector.broadcast %63 : vector<8x1xf32> to vector<8x32xf32>
    %65 = arith.mulf %60, %64 : vector<8x32xf32>
    %66 = vector.shape_cast %5 : vector<32xf32> to vector<1x32xf32>
    %67 = vector.broadcast %66 : vector<1x32xf32> to vector<8x32xf32>
    %68 = arith.mulf %65, %67 : vector<8x32xf32>
    %69 = vector.shape_cast %7 : vector<32xf32> to vector<1x32xf32>
    %70 = vector.broadcast %69 : vector<1x32xf32> to vector<8x32xf32>
    %71 = arith.addf %68, %70 : vector<8x32xf32>
    %72 = arith.truncf %47 : vector<8x32xf32> to vector<8x32xbf16>
    %cst_38 = arith.constant dense<0.000000e+00> : vector<8x32xf32>
    %73 = tpu.matmul %72, %8, %cst_38 {dimension_numbers = #tpu.dot_dimension_numbers<[1], [0], [0], [1], [0, 0, 1, 1], [], []>} : vector<8x32xbf16>, vector<32x32xbf16>, vector<8x32xf32> -> vector<8x32xf32>
    %74 = vector.shape_cast %10 : vector<32xf32> to vector<1x32xf32>
    %75 = vector.broadcast %74 : vector<1x32xf32> to vector<8x32xf32>
    %76 = arith.addf %73, %75 : vector<8x32xf32>
    %77 = arith.truncf %71 : vector<8x32xf32> to vector<8x32xbf16>
    %cst_39 = arith.constant dense<0.000000e+00> : vector<8x64xf32>
    %78 = tpu.matmul %77, %11, %cst_39 {dimension_numbers = #tpu.dot_dimension_numbers<[1], [0], [0], [1], [0, 0, 1, 1], [], []>} : vector<8x32xbf16>, vector<32x64xbf16>, vector<8x64xf32> -> vector<8x64xf32>
    %79 = vector.shape_cast %13 : vector<64xf32> to vector<1x64xf32>
    %80 = vector.broadcast %79 : vector<1x64xf32> to vector<8x64xf32>
    %81 = arith.addf %78, %80 : vector<8x64xf32>
    %82 = vector.extract_strided_slice %81 {offsets = [0, 0], sizes = [8, 32], strides = [1, 1]} : vector<8x64xf32> to vector<8x32xf32>
    %83 = vector.extract_strided_slice %81 {offsets = [0, 32], sizes = [8, 32], strides = [1, 1]} : vector<8x64xf32> to vector<8x32xf32>
    %84 = vector.shape_cast %76 : vector<8x32xf32> to vector<8x4x8xf32>
    %85 = tpu.transpose %84, [1, 0, 2] : vector<8x4x8xf32> -> vector<4x8x8xf32>
    %86 = arith.truncf %85 : vector<4x8x8xf32> to vector<4x8x8xbf16>
    %87 = vector.shape_cast %82 : vector<8x32xf32> to vector<8x4x8xf32>
    %88 = tpu.transpose %87, [1, 0, 2] : vector<8x4x8xf32> -> vector<4x8x8xf32>
    %89 = arith.truncf %88 : vector<4x8x8xf32> to vector<4x8x8xbf16>
    %90 = vector.shape_cast %83 : vector<8x32xf32> to vector<8x4x8xf32>
    %91 = tpu.transpose %90, [1, 0, 2] : vector<8x4x8xf32> -> vector<4x8x8xf32>
    %92 = arith.truncf %91 : vector<4x8x8xf32> to vector<4x8x8xbf16>
    "tpu.trace_start"() <{level = 10 : i32, message = "hqd,hkd->hqk"}> : () -> ()
    %cst_40 = arith.constant dense<0.000000e+00> : vector<4x8x8xf32>
    %93 = tpu.matmul %86, %89, %cst_40 {dimension_numbers = #tpu.dot_dimension_numbers<[2], [2], [1], [1], [0, 0, 0, 1, 1, 1], [0], [0]>} : vector<4x8x8xbf16>, vector<4x8x8xbf16>, vector<4x8x8xf32> -> vector<4x8x8xf32>
    "tpu.trace_stop"() : () -> ()
    %cst_41 = arith.constant dense<0xFF800000> : vector<4x8xf32>
    %94 = vector.multi_reduction <maximumf>, %93, %cst_41 [2] : vector<4x8x8xf32> to vector<4x8xf32>
    %95 = vector.shape_cast %94 : vector<4x8xf32> to vector<4x8x1xf32>
    %96 = vector.broadcast %95 : vector<4x8x1xf32> to vector<4x8x8xf32>
    %97 = arith.subf %93, %96 : vector<4x8x8xf32>
    %98 = math.exp %97 : vector<4x8x8xf32>
    %cst_42 = arith.constant dense<0.000000e+00> : vector<4x8xf32>
    %99 = vector.multi_reduction <add>, %98, %cst_42 [2] : vector<4x8x8xf32> to vector<4x8xf32>
    %100 = vector.shape_cast %99 : vector<4x8xf32> to vector<4x8x1xf32>
    %101 = tpu.reciprocal %100 {approx = true} : vector<4x8x1xf32> -> vector<4x8x1xf32>
    %102 = vector.broadcast %101 : vector<4x8x1xf32> to vector<4x8x8xf32>
    %103 = arith.mulf %98, %102 : vector<4x8x8xf32>
    %104 = arith.truncf %103 : vector<4x8x8xf32> to vector<4x8x8xbf16>
    "tpu.trace_start"() <{level = 10 : i32, message = "hqk,hkd->hqd"}> : () -> ()
    %cst_43 = arith.constant dense<0.000000e+00> : vector<4x8x8xf32>
    %105 = tpu.matmul %104, %92, %cst_43 {dimension_numbers = #tpu.dot_dimension_numbers<[2], [1], [1], [2], [0, 0, 0, 1, 1, 2], [0], [0]>} : vector<4x8x8xbf16>, vector<4x8x8xbf16>, vector<4x8x8xf32> -> vector<4x8x8xf32>
    "tpu.trace_stop"() : () -> ()
    %106 = tpu.transpose %105, [1, 0, 2] : vector<4x8x8xf32> -> vector<8x4x8xf32>
    %107 = vector.shape_cast %106 : vector<8x4x8xf32> to vector<8x32xf32>
    %108 = arith.addf %107, %1 : vector<8x32xf32>
    %cst_44 = arith.constant dense<0.000000e+00> : vector<8xf32>
    %109 = vector.multi_reduction <add>, %108, %cst_44 [1] : vector<8x32xf32> to vector<8xf32>
    %110 = vector.shape_cast %109 : vector<8xf32> to vector<8x1xf32>
    %cst_45 = arith.constant 3.200000e+01 : f32
    %111 = vector.broadcast %cst_45 : f32 to vector<8x1xf32>
    %112 = arith.divf %110, %111 : vector<8x1xf32>
    %113 = vector.broadcast %112 : vector<8x1xf32> to vector<8x32xf32>
    %114 = arith.subf %108, %113 : vector<8x32xf32>
    %115 = arith.mulf %114, %114 : vector<8x32xf32>
    %cst_46 = arith.constant dense<0.000000e+00> : vector<8xf32>
    %116 = vector.multi_reduction <add>, %115, %cst_46 [1] : vector<8x32xf32> to vector<8xf32>
    %117 = vector.shape_cast %116 : vector<8xf32> to vector<8x1xf32>
    %cst_47 = arith.constant 3.200000e+01 : f32
    %118 = vector.broadcast %cst_47 : f32 to vector<8x1xf32>
    %119 = arith.divf %117, %118 : vector<8x1xf32>
    %120 = vector.broadcast %112 : vector<8x1xf32> to vector<8x32xf32>
    %121 = arith.subf %108, %120 : vector<8x32xf32>
    %cst_48 = arith.constant 9.99999974E-6 : f32
    %122 = vector.broadcast %cst_48 : f32 to vector<8x1xf32>
    %123 = arith.addf %119, %122 : vector<8x1xf32>
    %124 = math.rsqrt %123 : vector<8x1xf32>
    %125 = vector.broadcast %124 : vector<8x1xf32> to vector<8x32xf32>
    %126 = arith.mulf %121, %125 : vector<8x32xf32>
    %127 = vector.shape_cast %15 : vector<32xf32> to vector<1x32xf32>
    %128 = vector.broadcast %127 : vector<1x32xf32> to vector<8x32xf32>
    %129 = arith.mulf %126, %128 : vector<8x32xf32>
    %130 = vector.shape_cast %17 : vector<32xf32> to vector<1x32xf32>
    %131 = vector.broadcast %130 : vector<1x32xf32> to vector<8x32xf32>
    %132 = arith.addf %129, %131 : vector<8x32xf32>
    %133 = arith.truncf %132 : vector<8x32xf32> to vector<8x32xbf16>
    %cst_49 = arith.constant dense<0.000000e+00> : vector<8x64xf32>
    %134 = tpu.matmul %133, %18, %cst_49 {dimension_numbers = #tpu.dot_dimension_numbers<[1], [0], [0], [1], [0, 0, 1, 1], [], []>} : vector<8x32xbf16>, vector<32x64xbf16>, vector<8x64xf32> -> vector<8x64xf32>
    %135 = vector.shape_cast %20 : vector<64xf32> to vector<1x64xf32>
    %136 = vector.broadcast %135 : vector<1x64xf32> to vector<8x64xf32>
    %137 = arith.addf %134, %136 : vector<8x64xf32>
    %cst_50 = arith.constant 5.000000e-01 : f32
    %138 = vector.broadcast %cst_50 : f32 to vector<8x64xf32>
    %139 = arith.mulf %138, %137 : vector<8x64xf32>
    %cst_51 = arith.constant 0.707106769 : f32
    %140 = vector.broadcast %cst_51 : f32 to vector<8x64xf32>
    %141 = arith.mulf %137, %140 : vector<8x64xf32>
    %142 = math.erf %141 : vector<8x64xf32>
    %cst_52 = arith.constant 1.000000e+00 : f32
    %143 = vector.broadcast %cst_52 : f32 to vector<8x64xf32>
    %144 = arith.addf %143, %142 : vector<8x64xf32>
    %145 = arith.mulf %139, %144 : vector<8x64xf32>
    %146 = arith.truncf %145 : vector<8x64xf32> to vector<8x64xbf16>
    %cst_53 = arith.constant dense<0.000000e+00> : vector<8x32xf32>
    %147 = tpu.matmul %146, %21, %cst_53 {dimension_numbers = #tpu.dot_dimension_numbers<[1], [0], [0], [1], [0, 0, 1, 1], [], []>} : vector<8x64xbf16>, vector<64x32xbf16>, vector<8x32xf32> -> vector<8x32xf32>
    %148 = vector.shape_cast %23 : vector<32xf32> to vector<1x32xf32>
    %149 = vector.broadcast %148 : vector<1x32xf32> to vector<8x32xf32>
    %150 = arith.addf %147, %149 : vector<8x32xf32>
    %151 = arith.addf %150, %108 : vector<8x32xf32>
    %c0_54 = arith.constant 0 : index
    %c0_55 = arith.constant 0 : index
    %c0_56 = arith.constant 0 : index
    %152 = vector.load %arg16[%c0_54, %c0_55, %c0_56] : memref<1x8x32xf32, #tpu.memory_space<vmem>>, vector<1x8x32xf32>
    %153 = vector.shape_cast %152 : vector<1x8x32xf32> to vector<8x32xf32>
    %154 = vector.shape_cast %151 : vector<8x32xf32> to vector<1x8x32xf32>
    tpu.vector_store %arg16[%c0_54, %c0_55, %c0_56], %154 {strides = array<i32>} : memref<1x8x32xf32, #tpu.memory_space<vmem>>, vector<1x8x32xf32>,
    return
  }
  func.func @transform_0(%arg0: i32, %arg1: i32) -> (i32, i32, i32) {
    %c0_i32 = arith.constant 0 : i32
    %c0_i32_0 = arith.constant 0 : i32
    return %arg0, %arg1, %c0_i32 : i32, i32, i32
  }
  func.func @transform_1(%arg0: i32, %arg1: i32) -> (i32, i32, i32) {
    %c0_i32 = arith.constant 0 : i32
    %c0_i32_0 = arith.constant 0 : i32
    %c0_i32_1 = arith.constant 0 : i32
    return %arg0, %c0_i32, %c0_i32_0 : i32, i32, i32
  }
  func.func @transform_2(%arg0: i32, %arg1: i32) -> (i32, i32) {
    %c0_i32 = arith.constant 0 : i32
    %c0_i32_0 = arith.constant 0 : i32
    %c0_i32_1 = arith.constant 0 : i32
    return %c0_i32, %c0_i32_0 : i32, i32
  }
  func.func @transform_3(%arg0: i32, %arg1: i32) -> (i32, i32) {
    %c0_i32 = arith.constant 0 : i32
    %c0_i32_0 = arith.constant 0 : i32
    %c0_i32_1 = arith.constant 0 : i32
    return %c0_i32, %c0_i32_0 : i32, i32
  }
  func.func @transform_4(%arg0: i32, %arg1: i32) -> (i32, i32) {
    %c0_i32 = arith.constant 0 : i32
    %c0_i32_0 = arith.constant 0 : i32
    %c0_i32_1 = arith.constant 0 : i32
    return %c0_i32, %c0_i32_0 : i32, i32
  }
  func.func @transform_5(%arg0: i32, %arg1: i32) -> (i32, i32) {
    %c0_i32 = arith.constant 0 : i32
    %c0_i32_0 = arith.constant 0 : i32
    %c0_i32_1 = arith.constant 0 : i32
    return %c0_i32, %c0_i32_0 : i32, i32
  }
  func.func @transform_6(%arg0: i32, %arg1: i32) -> (i32, i32) {
    %c0_i32 = arith.constant 0 : i32
    %c0_i32_0 = arith.constant 0 : i32
    %c0_i32_1 = arith.constant 0 : i32
    return %c0_i32, %c0_i32_0 : i32, i32
  }
  func.func @transform_7(%arg0: i32, %arg1: i32) -> (i32, i32) {
    %c0_i32 = arith.constant 0 : i32
    %c0_i32_0 = arith.constant 0 : i32
    %c0_i32_1 = arith.constant 0 : i32
    return %c0_i32, %c0_i32_0 : i32, i32
  }
  func.func @transform_8(%arg0: i32, %arg1: i32) -> (i32, i32) {
    %c0_i32 = arith.constant 0 : i32
    %c0_i32_0 = arith.constant 0 : i32
    %c0_i32_1 = arith.constant 0 : i32
    return %c0_i32, %c0_i32_0 : i32, i32
  }
  func.func @transform_9(%arg0: i32, %arg1: i32) -> (i32, i32) {
    %c0_i32 = arith.constant 0 : i32
    %c0_i32_0 = arith.constant 0 : i32
    %c0_i32_1 = arith.constant 0 : i32
    return %c0_i32, %c0_i32_0 : i32, i32
  }
  func.func @transform_10(%arg0: i32, %arg1: i32) -> (i32, i32) {
    %c0_i32 = arith.constant 0 : i32
    %c0_i32_0 = arith.constant 0 : i32
    %c0_i32_1 = arith.constant 0 : i32
    return %c0_i32, %c0_i32_0 : i32, i32
  }
  func.func @transform_11(%arg0: i32, %arg1: i32) -> (i32, i32) {
    %c0_i32 = arith.constant 0 : i32
    %c0_i32_0 = arith.constant 0 : i32
    %c0_i32_1 = arith.constant 0 : i32
    return %c0_i32, %c0_i32_0 : i32, i32
  }
  func.func @transform_12(%arg0: i32, %arg1: i32) -> (i32, i32) {
    %c0_i32 = arith.constant 0 : i32
    %c0_i32_0 = arith.constant 0 : i32
    %c0_i32_1 = arith.constant 0 : i32
    return %c0_i32, %c0_i32_0 : i32, i32
  }
  func.func @transform_13(%arg0: i32, %arg1: i32) -> (i32, i32) {
    %c0_i32 = arith.constant 0 : i32
    %c0_i32_0 = arith.constant 0 : i32
    %c0_i32_1 = arith.constant 0 : i32
    return %c0_i32, %c0_i32_0 : i32, i32
  }
  func.func @transform_14(%arg0: i32, %arg1: i32) -> (i32, i32, i32) {
    %c0_i32 = arith.constant 0 : i32
    %c0_i32_0 = arith.constant 0 : i32
    return %arg0, %arg1, %c0_i32 : i32, i32, i32
  }
}

module attributes {stable_mosaic.version = 11 : i64} {
  func.func @layer_kernel(%arg0: i32, %arg1: i32, %arg2: memref<1x8x32xf32, #tpu.memory_space<vmem>>, %arg3: memref<1x8x32xf32, #tpu.memory_space<vmem>>, %arg4: memref<1x32xf32, #tpu.memory_space<vmem>>, %arg5: memref<1x32xf32, #tpu.memory_space<vmem>>, %arg6: memref<32x32xbf16, #tpu.memory_space<vmem>>, %arg7: memref<1x32xf32, #tpu.memory_space<vmem>>, %arg8: memref<32x64xbf16, #tpu.memory_space<vmem>>, %arg9: memref<1x64xf32, #tpu.memory_space<vmem>>, %arg10: memref<1x32xf32, #tpu.memory_space<vmem>>, %arg11: memref<1x32xf32, #tpu.memory_space<vmem>>, %arg12: memref<32x64xbf16, #tpu.memory_space<vmem>>, %arg13: memref<1x64xf32, #tpu.memory_space<vmem>>, %arg14: memref<64x32xbf16, #tpu.memory_space<vmem>>, %arg15: memref<1x32xf32, #tpu.memory_space<vmem>>, %arg16: memref<1x8x32xf32, #tpu.memory_space<vmem>>) attributes {dimension_semantics = [#tpu.dimension_semantics<parallel>, #tpu.dimension_semantics<parallel>], iteration_bounds = array<i64: 2, 1>, scalar_prefetch = 0 : i64, scratch_operands = 0 : i64, tpu.core_type = #tpu.core_type<tc>, window_params = [{transform_indices = @transform_0, window_bounds = array<i64: 1, 8, 32>}, {transform_indices = @transform_1, window_bounds = array<i64: 1, 8, 32>}, {pipeline_mode = #tpu.pipeline_mode<synchronous>, transform_indices = @transform_2, window_bounds = array<i64: 1, 32>}, {pipeline_mode = #tpu.pipeline_mode<synchronous>, transform_indices = @transform_3, window_bounds = array<i64: 1, 32>}, {pipeline_mode = #tpu.pipeline_mode<synchronous>, transform_indices = @transform_4, window_bounds = array<i64: 32, 32>}, {pipeline_mode = #tpu.pipeline_mode<synchronous>, transform_indices = @transform_5, window_bounds = array<i64: 1, 32>}, {pipeline_mode = #tpu.pipeline_mode<synchronous>, transform_indices = @transform_6, window_bounds = array<i64: 32, 64>}, {pipeline_mode = #tpu.pipeline_mode<synchronous>, transform_indices = @transform_7, window_bounds = array<i64: 1, 64>}, {pipeline_mode = #tpu.pipeline_mode<synchronous>, transform_indices = @transform_8, window_bounds = array<i64: 1, 32>}, {pipeline_mode = #tpu.pipeline_mode<synchronous>, transform_indices = @transform_9, window_bounds = array<i64: 1, 32>}, {pipeline_mode = #tpu.pipeline_mode<synchronous>, transform_indices = @transform_10, window_bounds = array<i64: 32, 64>}, {pipeline_mode = #tpu.pipeline_mode<synchronous>, transform_indices = @transform_11, window_bounds = array<i64: 1, 64>}, {pipeline_mode = #tpu.pipeline_mode<synchronous>, transform_indices = @transform_12, window_bounds = array<i64: 64, 32>}, {pipeline_mode = #tpu.pipeline_mode<synchronous>, transform_indices = @transform_13, window_bounds = array<i64: 1, 32>}, {transform_indices = @transform_14, window_bounds = array<i64: 1, 8, 32>}]} {
    %c0 = arith.constant 0 : index
    %c0_0 = arith.constant 0 : index
    %c0_1 = arith.constant 0 : index
    %0 = vector.load %arg2[%c0, %c0_0, %c0_1] : memref<1x8x32xf32, #tpu.memory_space<vmem>>, vector<1x8x32xf32>
    %1 = vector.shape_cast %0 : vector<1x8x32xf32> to vector<8x32xf32>
    %c0_2 = arith.constant 0 : index
    %c0_3 = arith.constant 0 : index
    %c0_4 = arith.constant 0 : index
    %2 = vector.load %arg3[%c0_2, %c0_3, %c0_4] : memref<1x8x32xf32, #tpu.memory_space<vmem>>, vector<1x8x32xf32>
    %3 = vector.shape_cast %2 : vector<1x8x32xf32> to vector<8x32xf32>
    %c0_5 = arith.constant 0 : index
    %c0_6 = arith.constant 0 : index
    %4 = vector.load %arg4[%c0_5, %c0_6] : memref<1x32xf32, #tpu.memory_space<vmem>>, vector<1x32xf32>
    %5 = vector.shape_cast %4 : vector<1x32xf32> to vector<32xf32>
    %c0_7 = arith.constant 0 : index
    %c0_8 = arith.constant 0 : index
    %6 = vector.load %arg5[%c0_7, %c0_8] : memref<1x32xf32, #tpu.memory_space<vmem>>, vector<1x32xf32>
    %7 = vector.shape_cast %6 : vector<1x32xf32> to vector<32xf32>
    %c0_9 = arith.constant 0 : index
    %c0_10 = arith.constant 0 : index
    %8 = vector.load %arg6[%c0_9, %c0_10] : memref<32x32xbf16, #tpu.memory_space<vmem>>, vector<32x32xbf16>
    %c0_11 = arith.constant 0 : index
    %c0_12 = arith.constant 0 : index
    %9 = vector.load %arg7[%c0_11, %c0_12] : memref<1x32xf32, #tpu.memory_space<vmem>>, vector<1x32xf32>
    %10 = vector.shape_cast %9 : vector<1x32xf32> to vector<32xf32>
    %c0_13 = arith.constant 0 : index
    %c0_14 = arith.constant 0 : index
    %11 = vector.load %arg8[%c0_13, %c0_14] : memref<32x64xbf16, #tpu.memory_space<vmem>>, vector<32x64xbf16>
    %c0_15 = arith.constant 0 : index
    %c0_16 = arith.constant 0 : index
    %12 = vector.load %arg9[%c0_15, %c0_16] : memref<1x64xf32, #tpu.memory_space<vmem>>, vector<1x64xf32>
    %13 = vector.shape_cast %12 : vector<1x64xf32> to vector<64xf32>
    %c0_17 = arith.constant 0 : index
    %c0_18 = arith.constant 0 : index
    %14 = vector.load %arg10[%c0_17, %c0_18] : memref<1x32xf32, #tpu.memory_space<vmem>>, vector<1x32xf32>
    %15 = vector.shape_cast %14 : vector<1x32xf32> to vector<32xf32>
    %c0_19 = arith.constant 0 : index
    %c0_20 = arith.constant 0 : index
    %16 = vector.load %arg11[%c0_19, %c0_20] : memref<1x32xf32, #tpu.memory_space<vmem>>, vector<1x32xf32>
    %17 = vector.shape_cast %16 : vector<1x32xf32> to vector<32xf32>
    %c0_21 = arith.constant 0 : index
    %c0_22 = arith.constant 0 : index
    %18 = vector.load %arg12[%c0_21, %c0_22] : memref<32x64xbf16, #tpu.memory_space<vmem>>, vector<32x64xbf16>
    %c0_23 = arith.constant 0 : index
    %c0_24 = arith.constant 0 : index
    %19 = vector.load %arg13[%c0_23, %c0_24] : memref<1x64xf32, #tpu.memory_space<vmem>>, vector<1x64xf32>
    %20 = vector.shape_cast %19 : vector<1x64xf32> to vector<64xf32>
    %c0_25 = arith.constant 0 : index
    %c0_26 = arith.constant 0 : index
    %21 = vector.load %arg14[%c0_25, %c0_26] : memref<64x32xbf16, #tpu.memory_space<vmem>>, vector<64x32xbf16>
    %c0_27 = arith.constant 0 : index
    %c0_28 = arith.constant 0 : index
    %22 = vector.load %arg15[%c0_27, %c0_28] : memref<1x32xf32, #tpu.memory_space<vmem>>, vector<1x32xf32>
    %23 = vector.shape_cast %22 : vector<1x32xf32> to vector<32xf32>
    %cst = arith.constant dense<0.000000e+00> : vector<8xf32>
    %24 = vector.multi_reduction <add>, %1, %cst [1] : vector<8x32xf32> to vector<8xf32>
    %25 = vector.shape_cast %24 : vector<8xf32> to vector<8x1xf32>
    %cst_29 = arith.constant 3.200000e+01 : f32
    %26 = vector.broadcast %cst_29 : f32 to vector<8x1xf32>
    %27 = arith.divf %25, %26 : vector<8x1xf32>
    %28 = vector.broadcast %27 : vector<8x1xf32> to vector<8x32xf32>
    %29 = arith.subf %1, %28 : vector<8x32xf32>
    %30 = arith.mulf %29, %29 : vector<8x32xf32>
    %cst_30 = arith.constant dense<0.000000e+00> : vector<8xf32>
    %31 = vector.multi_reduction <add>, %30, %cst_30 [1] : vector<8x32xf32> to vector<8xf32>
    %32 = vector.shape_cast %31 : vector<8xf32> to vector<8x1xf32>
    %cst_31 = arith.constant 3.200000e+01 : f32
    %33 = vector.broadcast %cst_31 : f32 to vector<8x1xf32>
    %34 = arith.divf %32, %33 : vector<8x1xf32>
    %35 = vector.broadcast %27 : vector<8x1xf32> to vector<8x32xf32>
    %36 = arith.subf %1, %35 : vector<8x32xf32>
    %cst_32 = arith.constant 9.99999974E-6 : f32
    %37 = vector.broadcast %cst_32 : f32 to vector<8x1xf32>
    %38 = arith.addf %34, %37 : vector<8x1xf32>
    %39 = math.rsqrt %38 : vector<8x1xf32>
    %40 = vector.broadcast %39 : vector<8x1xf32> to vector<8x32xf32>
    %41 = arith.mulf %36, %40 : vector<8x32xf32>
    %42 = vector.shape_cast %5 : vector<32xf32> to vector<1x32xf32>
    %43 = vector.broadcast %42 : vector<1x32xf32> to vector<8x32xf32>
    %44 = arith.mulf %41, %43 : vector<8x32xf32>
    %45 = vector.shape_cast %7 : vector<32xf32> to vector<1x32xf32>
    %46 = vector.broadcast %45 : vector<1x32xf32> to vector<8x32xf32>
    %47 = arith.addf %44, %46 : vector<8x32xf32>
    %cst_33 = arith.constant dense<0.000000e+00> : vector<8xf32>
    %48 = vector.multi_reduction <add>, %3, %cst_33 [1] : vector<8x32xf32> to vector<8xf32>
    %49 = vector.shape_cast %48 : vector<8xf32> to vector<8x1xf32>
    %cst_34 = arith.constant 3.200000e+01 : f32
    %50 = vector.broadcast %cst_34 : f32 to vector<8x1xf32>
    %51 = arith.divf %49, %50 : vector<8x1xf32>
    %52 = vector.broadcast %51 : vector<8x1xf32> to vector<8x32xf32>
    %53 = arith.subf %3, %52 : vector<8x32xf32>
    %54 = arith.mulf %53, %53 : vector<8x32xf32>
    %cst_35 = arith.constant dense<0.000000e+00> : vector<8xf32>
    %55 = vector.multi_reduction <add>, %54, %cst_35 [1] : vector<8x32xf32> to vector<8xf32>
    %56 = vector.shape_cast %55 : vector<8xf32> to vector<8x1xf32>
    %cst_36 = arith.constant 3.200000e+01 : f32
    %57 = vector.broadcast %cst_36 : f32 to vector<8x1xf32>
    %58 = arith.divf %56, %57 : vector<8x1xf32>
    %59 = vector.broadcast %51 : vector<8x1xf32> to vector<8x32xf32>
    %60 = arith.subf %3, %59 : vector<8x32xf32>
    %cst_37 = arith.constant 9.99999974E-6 : f32
    %61 = vector.broadcast %cst_37 : f32 to vector<8x1xf32>
    %62 = arith.addf %58, %61 : vector<8x1xf32>
    %63 = math.rsqrt %62 : vector<8x1xf32>
    %64 = vector.broadcast %63 : vector<8x1xf32> to vector<8x32xf32>
    %65 = arith.mulf %60, %64 : vector<8x32xf32>
    %66 = vector.shape_cast %5 : vector<32xf32> to vector<1x32xf32>
    %67 = vector.broadcast %66 : vector<1x32xf32> to vector<8x32xf32>
    %68 = arith.mulf %65, %67 : vector<8x32xf32>
    %69 = vector.shape_cast %7 : vector<32xf32> to vector<1x32xf32>
    %70 = vector.broadcast %69 : vector<1x32xf32> to vector<8x32xf32>
    %71 = arith.addf %68, %70 : vector<8x32xf32>
    %72 = arith.truncf %47 : vector<8x32xf32> to vector<8x32xbf16>
    %cst_38 = arith.constant dense<0.000000e+00> : vector<8x32xf32>
    %73 = tpu.matmul %72, %8, %cst_38 {dimension_numbers = #tpu.dot_dimension_numbers<[1], [0], [0], [1], [0, 0, 1, 1], [], []>} : vector<8x32xbf16>, vector<32x32xbf16>, vector<8x32xf32> -> vector<8x32xf32>
    %74 = vector.shape_cast %10 : vector<32xf32> to vector<1x32xf32>
    %75 = vector.broadcast %74 : vector<1x32xf32> to vector<8x32xf32>
    %76 = arith.addf %73, %75 : vector<8x32xf32>
    %77 = arith.truncf %71 : vector<8x32xf32> to vector<8x32xbf16>
    %cst_39 = arith.constant dense<0.000000e+00> : vector<8x64xf32>
    %78 = tpu.matmul %77, %11, %cst_39 {dimension_numbers = #tpu.dot_dimension_numbers<[1], [0], [0], [1], [0, 0, 1, 1], [], []>} : vector<8x32xbf16>, vector<32x64xbf16>, vector<8x64xf32> -> vector<8x64xf32>
    %79 = vector.shape_cast %13 : vector<64xf32> to vector<1x64xf32>
    %80 = vector.broadcast %79 : vector<1x64xf32> to vector<8x64xf32>
    %81 = arith.addf %78, %80 : vector<8x64xf32>
    %82 = vector.extract_strided_slice %81 {offsets = [0, 0], sizes = [8, 32], strides = [1, 1]} : vector<8x64xf32> to vector<8x32xf32>
    %83 = vector.extract_strided_slice %81 {offsets = [0, 32], sizes = [8, 32], strides = [1, 1]} : vector<8x64xf32> to vector<8x32xf32>
    %84 = vector.shape_cast %76 : vector<8x32xf32> to vector<8x4x8xf32>
    %85 = tpu.transpose %84, [1, 0, 2] : vector<8x4x8xf32> -> vector<4x8x8xf32>
    %86 = arith.truncf %85 : vector<4x8x8xf32> to vector<4x8x8xbf16>
    %87 = vector.shape_cast %82 : vector<8x32xf32> to vector<8x4x8xf32>
    %88 = tpu.transpose %87, [1, 0, 2] : vector<8x4x8xf32> -> vector<4x8x8xf32>
    %89 = arith.truncf %88 : vector<4x8x8xf32> to vector<4x8x8xbf16>
    %90 = vector.shape_cast %83 : vector<8x32xf32> to vector<8x4x8xf32>
    %91 = tpu.transpose %90, [1, 0, 2] : vector<8x4x8xf32> -> vector<4x8x8xf32>
    %92 = arith.truncf %91 : vector<4x8x8xf32> to vector<4x8x8xbf16>
    "tpu.trace_start"() <{level = 10 : i32, message = "hqd,hkd->hqk"}> : () -> ()
    %cst_40 = arith.constant dense<0.000000e+00> : vector<4x8x8xf32>
    %93 = tpu.matmul %86, %89, %cst_40 {dimension_numbers = #tpu.dot_dimension_numbers<[2], [2], [1], [1], [0, 0, 0, 1, 1, 1], [0], [0]>} : vector<4x8x8xbf16>, vector<4x8x8xbf16>, vector<4x8x8xf32> -> vector<4x8x8xf32>
    "tpu.trace_stop"() : () -> ()
    %cst_41 = arith.constant dense<0xFF800000> : vector<4x8xf32>
    %94 = vector.multi_reduction <maximumf>, %93, %cst_41 [2] : vector<4x8x8xf32> to vector<4x8xf32>
    %95 = vector.shape_cast %94 : vector<4x8xf32> to vector<4x8x1xf32>
    %96 = vector.broadcast %95 : vector<4x8x1xf32> to vector<4x8x8xf32>
    %97 = arith.subf %93, %96 : vector<4x8x8xf32>
    %98 = math.exp %97 : vector<4x8x8xf32>
    %cst_42 = arith.constant dense<0.000000e+00> : vector<4x8xf32>
    %99 = vector.multi_reduction <add>, %98, %cst_42 [2] : vector<4x8x8xf32> to vector<4x8xf32>
    %100 = vector.shape_cast %99 : vector<4x8xf32> to vector<4x8x1xf32>
    %101 = tpu.reciprocal %100 {approx = true} : vector<4x8x1xf32> -> vector<4x8x1xf32>
    %102 = vector.broadcast %101 : vector<4x8x1xf32> to vector<4x8x8xf32>
    %103 = arith.mulf %98, %102 : vector<4x8x8xf32>
    %104 = arith.truncf %103 : vector<4x8x8xf32> to vector<4x8x8xbf16>
    "tpu.trace_start"() <{level = 10 : i32, message = "hqk,hkd->hqd"}> : () -> ()
    %cst_43 = arith.constant dense<0.000000e+00> : vector<4x8x8xf32>
    %105 = tpu.matmul %104, %92, %cst_43 {dimension_numbers = #tpu.dot_dimension_numbers<[2], [1], [1], [2], [0, 0, 0, 1, 1, 2], [0], [0]>} : vector<4x8x8xbf16>, vector<4x8x8xbf16>, vector<4x8x8xf32> -> vector<4x8x8xf32>
    "tpu.trace_stop"() : () -> ()
    %106 = tpu.transpose %105, [1, 0, 2] : vector<4x8x8xf32> -> vector<8x4x8xf32>
    %107 = vector.shape_cast %106 : vector<8x4x8xf32> to vector<8x32xf32>
    %108 = arith.addf %107, %1 : vector<8x32xf32>
    %cst_44 = arith.constant dense<0.000000e+00> : vector<8xf32>
    %109 = vector.multi_reduction <add>, %108, %cst_44 [1] : vector<8x32xf32> to vector<8xf32>
    %110 = vector.shape_cast %109 : vector<8xf32> to vector<8x1xf32>
    %cst_45 = arith.constant 3.200000e+01 : f32
    %111 = vector.broadcast %cst_45 : f32 to vector<8x1xf32>
    %112 = arith.divf %110, %111 : vector<8x1xf32>
    %113 = vector.broadcast %112 : vector<8x1xf32> to vector<8x32xf32>
    %114 = arith.subf %108, %113 : vector<8x32xf32>
    %115 = arith.mulf %114, %114 : vector<8x32xf32>
    %cst_46 = arith.constant dense<0.000000e+00> : vector<8xf32>
    %116 = vector.multi_reduction <add>, %115, %cst_46 [1] : vector<8x32xf32> to vector<8xf32>
    %117 = vector.shape_cast %116 : vector<8xf32> to vector<8x1xf32>
    %cst_47 = arith.constant 3.200000e+01 : f32
    %118 = vector.broadcast %cst_47 : f32 to vector<8x1xf32>
    %119 = arith.divf %117, %118 : vector<8x1xf32>
    %120 = vector.broadcast %112 : vector<8x1xf32> to vector<8x32xf32>
    %121 = arith.subf %108, %120 : vector<8x32xf32>
    %cst_48 = arith.constant 9.99999974E-6 : f32
    %122 = vector.broadcast %cst_48 : f32 to vector<8x1xf32>
    %123 = arith.addf %119, %122 : vector<8x1xf32>
    %124 = math.rsqrt %123 : vector<8x1xf32>
    %125 = vector.broadcast %124 : vector<8x1xf32> to vector<8x32xf32>
    %126 = arith.mulf %121, %125 : vector<8x32xf32>
    %127 = vector.shape_cast %15 : vector<32xf32> to vector<1x32xf32>
    %128 = vector.broadcast %127 : vector<1x32xf32> to vector<8x32xf32>
    %129 = arith.mulf %126, %128 : vector<8x32xf32>
    %130 = vector.shape_cast %17 : vector<32xf32> to vector<1x32xf32>
    %131 = vector.broadcast %130 : vector<1x32xf32> to vector<8x32xf32>
    %132 = arith.addf %129, %131 : vector<8x32xf32>
    %133 = arith.truncf %132 : vector<8x32xf32> to vector<8x32xbf16>
    %cst_49 = arith.constant dense<0.000000e+00> : vector<8x64xf32>
    %134 = tpu.matmul %133, %18, %cst_49 {dimension_numbers = #tpu.dot_dimension_numbers<[1], [0], [0], [1], [0, 0, 1, 1], [], []>} : vector<8x32xbf16>, vector<32x64xbf16>, vector<8x64xf32> -> vector<8x64xf32>
    %135 = vector.shape_cast %20 : vector<64xf32> to vector<1x64xf32>
    %136 = vector.broadcast %135 : vector<1x64xf32> to vector<8x64xf32>
    %137 = arith.addf %134, %136 : vector<8x64xf32>
    %cst_50 = arith.constant 5.000000e-01 : f32
    %138 = vector.broadcast %cst_50 : f32 to vector<8x64xf32>
    %139 = arith.mulf %138, %137 : vector<8x64xf32>
    %cst_51 = arith.constant 0.707106769 : f32
    %140 = vector.broadcast %cst_51 : f32 to vector<8x64xf32>
    %141 = arith.mulf %137, %140 : vector<8x64xf32>
    %142 = math.erf %141 : vector<8x64xf32>
    %cst_52 = arith.constant 1.000000e+00 : f32
    %143 = vector.broadcast %cst_52 : f32 to vector<8x64xf32>
    %144 = arith.addf %143, %142 : vector<8x64xf32>
    %145 = arith.mulf %139, %144 : vector<8x64xf32>
    %146 = arith.truncf %145 : vector<8x64xf32> to vector<8x64xbf16>
    %cst_53 = arith.constant dense<0.000000e+00> : vector<8x32xf32>
    %147 = tpu.matmul %146, %21, %cst_53 {dimension_numbers = #tpu.dot_dimension_numbers<[1], [0], [0], [1], [0, 0, 1, 1], [], []>} : vector<8x64xbf16>, vector<64x32xbf16>, vector<8x32xf32> -> vector<8x32xf32>
    %148 = vector.shape_cast %23 : vector<32xf32> to vector<1x32xf32>
    %149 = vector.broadcast %148 : vector<1x32xf32> to vector<8x32xf32>
    %150 = arith.addf %147, %149 : vector<8x32xf32>
    %151 = arith.addf %150, %108 : vector<8x32xf32>
    %c0_54 = arith.constant 0 : index
    %c0_55 = arith.constant 0 : index
    %c0_56 = arith.constant 0 : index
    %152 = vector.load %arg16[%c0_54, %c0_55, %c0_56] : memref<1x8x32xf32, #tpu.memory_space<vmem>>, vector<1x8x32xf32>
    %153 = vector.shape_cast %152 : vector<1x8x32xf32> to vector<8x32xf32>
    %154 = vector.shape_cast %151 : vector<8x32xf32> to vector<1x8x32xf32>
    tpu.vector_store %arg16[%c0_54, %c0_55, %c0_56], %154 {strides = array<i32>} : memref<1x8x32xf32, #tpu.memory_space<vmem>>, vector<1x8x32xf32>,
    return
  }
  func.func @transform_0(%arg0: i32, %arg1: i32) -> (i32, i32, i32) {
    %c0_i32 = arith.constant 0 : i32
    %c0_i32_0 = arith.constant 0 : i32
    return %arg0, %arg1, %c0_i32 : i32, i32, i32
  }
  func.func @transform_1(%arg0: i32, %arg1: i32) -> (i32, i32, i32) {
    %c0_i32 = arith.constant 0 : i32
    %c0_i32_0 = arith.constant 0 : i32
    %c0_i32_1 = arith.constant 0 : i32
    return %arg0, %c0_i32, %c0_i32_0 : i32, i32, i32
  }
  func.func @transform_2(%arg0: i32, %arg1: i32) -> (i32, i32) {
    %c0_i32 = arith.constant 0 : i32
    %c0_i32_0 = arith.constant 0 : i32
    %c0_i32_1 = arith.constant 0 : i32
    return %c0_i32, %c0_i32_0 : i32, i32
  }
  func.func @transform_3(%arg0: i32, %arg1: i32) -> (i32, i32) {
    %c0_i32 = arith.constant 0 : i32
    %c0_i32_0 = arith.constant 0 : i32
    %c0_i32_1 = arith.constant 0 : i32
    return %c0_i32, %c0_i32_0 : i32, i32
  }
  func.func @transform_4(%arg0: i32, %arg1: i32) -> (i32, i32) {
    %c0_i32 = arith.constant 0 : i32
    %c0_i32_0 = arith.constant 0 : i32
    %c0_i32_1 = arith.constant 0 : i32
    return %c0_i32, %c0_i32_0 : i32, i32
  }
  func.func @transform_5(%arg0: i32, %arg1: i32) -> (i32, i32) {
    %c0_i32 = arith.constant 0 : i32
    %c0_i32_0 = arith.constant 0 : i32
    %c0_i32_1 = arith.constant 0 : i32
    return %c0_i32, %c0_i32_0 : i32, i32
  }
  func.func @transform_6(%arg0: i32, %arg1: i32) -> (i32, i32) {
    %c0_i32 = arith.constant 0 : i32
    %c0_i32_0 = arith.constant 0 : i32
    %c0_i32_1 = arith.constant 0 : i32
    return %c0_i32, %c0_i32_0 : i32, i32
  }
  func.func @transform_7(%arg0: i32, %arg1: i32) -> (i32, i32) {
    %c0_i32 = arith.constant 0 : i32
    %c0_i32_0 = arith.constant 0 : i32
    %c0_i32_1 = arith.constant 0 : i32
    return %c0_i32, %c0_i32_0 : i32, i32
  }
  func.func @transform_8(%arg0: i32, %arg1: i32) -> (i32, i32) {
    %c0_i32 = arith.constant 0 : i32
    %c0_i32_0 = arith.constant 0 : i32
    %c0_i32_1 = arith.constant 0 : i32
    return %c0_i32, %c0_i32_0 : i32, i32
  }
  func.func @transform_9(%arg0: i32, %arg1: i32) -> (i32, i32) {
    %c0_i32 = arith.constant 0 : i32
    %c0_i32_0 = arith.constant 0 : i32
    %c0_i32_1 = arith.constant 0 : i32
    return %c0_i32, %c0_i32_0 : i32, i32
  }
  func.func @transform_10(%arg0: i32, %arg1: i32) -> (i32, i32) {
    %c0_i32 = arith.constant 0 : i32
    %c0_i32_0 = arith.constant 0 : i32
    %c0_i32_1 = arith.constant 0 : i32
    return %c0_i32, %c0_i32_0 : i32, i32
  }
  func.func @transform_11(%arg0: i32, %arg1: i32) -> (i32, i32) {
    %c0_i32 = arith.constant 0 : i32
    %c0_i32_0 = arith.constant 0 : i32
    %c0_i32_1 = arith.constant 0 : i32
    return %c0_i32, %c0_i32_0 : i32, i32
  }
  func.func @transform_12(%arg0: i32, %arg1: i32) -> (i32, i32) {
    %c0_i32 = arith.constant 0 : i32
    %c0_i32_0 = arith.constant 0 : i32
    %c0_i32_1 = arith.constant 0 : i32
    return %c0_i32, %c0_i32_0 : i32, i32
  }
  func.func @transform_13(%arg0: i32, %arg1: i32) -> (i32, i32) {
    %c0_i32 = arith.constant 0 : i32
    %c0_i32_0 = arith.constant 0 : i32
    %c0_i32_1 = arith.constant 0 : i32
    return %c0_i32, %c0_i32_0 : i32, i32
  }
  func.func @transform_14(%arg0: i32, %arg1: i32) -> (i32, i32, i32) {
    %c0_i32 = arith.constant 0 : i32
    %c0_i32_0 = arith.constant 0 : i32
    return %arg0, %arg1, %c0_i32 : i32, i32, i32
  }
}

module attributes {stable_mosaic.version = 11 : i64} {
  func.func @layer_kernel(%arg0: i32, %arg1: i32, %arg2: memref<1x8x32xf32, #tpu.memory_space<vmem>>, %arg3: memref<1x8x32xf32, #tpu.memory_space<vmem>>, %arg4: memref<1x32xf32, #tpu.memory_space<vmem>>, %arg5: memref<1x32xf32, #tpu.memory_space<vmem>>, %arg6: memref<32x32xbf16, #tpu.memory_space<vmem>>, %arg7: memref<1x32xf32, #tpu.memory_space<vmem>>, %arg8: memref<32x64xbf16, #tpu.memory_space<vmem>>, %arg9: memref<1x64xf32, #tpu.memory_space<vmem>>, %arg10: memref<1x32xf32, #tpu.memory_space<vmem>>, %arg11: memref<1x32xf32, #tpu.memory_space<vmem>>, %arg12: memref<32x64xbf16, #tpu.memory_space<vmem>>, %arg13: memref<1x64xf32, #tpu.memory_space<vmem>>, %arg14: memref<64x32xbf16, #tpu.memory_space<vmem>>, %arg15: memref<1x32xf32, #tpu.memory_space<vmem>>, %arg16: memref<1x8x32xf32, #tpu.memory_space<vmem>>) attributes {dimension_semantics = [#tpu.dimension_semantics<parallel>, #tpu.dimension_semantics<parallel>], iteration_bounds = array<i64: 2, 1>, scalar_prefetch = 0 : i64, scratch_operands = 0 : i64, tpu.core_type = #tpu.core_type<tc>, window_params = [{transform_indices = @transform_0, window_bounds = array<i64: 1, 8, 32>}, {transform_indices = @transform_1, window_bounds = array<i64: 1, 8, 32>}, {pipeline_mode = #tpu.pipeline_mode<synchronous>, transform_indices = @transform_2, window_bounds = array<i64: 1, 32>}, {pipeline_mode = #tpu.pipeline_mode<synchronous>, transform_indices = @transform_3, window_bounds = array<i64: 1, 32>}, {pipeline_mode = #tpu.pipeline_mode<synchronous>, transform_indices = @transform_4, window_bounds = array<i64: 32, 32>}, {pipeline_mode = #tpu.pipeline_mode<synchronous>, transform_indices = @transform_5, window_bounds = array<i64: 1, 32>}, {pipeline_mode = #tpu.pipeline_mode<synchronous>, transform_indices = @transform_6, window_bounds = array<i64: 32, 64>}, {pipeline_mode = #tpu.pipeline_mode<synchronous>, transform_indices = @transform_7, window_bounds = array<i64: 1, 64>}, {pipeline_mode = #tpu.pipeline_mode<synchronous>, transform_indices = @transform_8, window_bounds = array<i64: 1, 32>}, {pipeline_mode = #tpu.pipeline_mode<synchronous>, transform_indices = @transform_9, window_bounds = array<i64: 1, 32>}, {pipeline_mode = #tpu.pipeline_mode<synchronous>, transform_indices = @transform_10, window_bounds = array<i64: 32, 64>}, {pipeline_mode = #tpu.pipeline_mode<synchronous>, transform_indices = @transform_11, window_bounds = array<i64: 1, 64>}, {pipeline_mode = #tpu.pipeline_mode<synchronous>, transform_indices = @transform_12, window_bounds = array<i64: 64, 32>}, {pipeline_mode = #tpu.pipeline_mode<synchronous>, transform_indices = @transform_13, window_bounds = array<i64: 1, 32>}, {transform_indices = @transform_14, window_bounds = array<i64: 1, 8, 32>}]} {
    %c0 = arith.constant 0 : index
    %c0_0 = arith.constant 0 : index
    %c0_1 = arith.constant 0 : index
    %0 = vector.load %arg2[%c0, %c0_0, %c0_1] : memref<1x8x32xf32, #tpu.memory_space<vmem>>, vector<1x8x32xf32>
    %1 = vector.shape_cast %0 : vector<1x8x32xf32> to vector<8x32xf32>
    %c0_2 = arith.constant 0 : index
    %c0_3 = arith.constant 0 : index
    %c0_4 = arith.constant 0 : index
    %2 = vector.load %arg3[%c0_2, %c0_3, %c0_4] : memref<1x8x32xf32, #tpu.memory_space<vmem>>, vector<1x8x32xf32>
    %3 = vector.shape_cast %2 : vector<1x8x32xf32> to vector<8x32xf32>
    %c0_5 = arith.constant 0 : index
    %c0_6 = arith.constant 0 : index
    %4 = vector.load %arg4[%c0_5, %c0_6] : memref<1x32xf32, #tpu.memory_space<vmem>>, vector<1x32xf32>
    %5 = vector.shape_cast %4 : vector<1x32xf32> to vector<32xf32>
    %c0_7 = arith.constant 0 : index
    %c0_8 = arith.constant 0 : index
    %6 = vector.load %arg5[%c0_7, %c0_8] : memref<1x32xf32, #tpu.memory_space<vmem>>, vector<1x32xf32>
    %7 = vector.shape_cast %6 : vector<1x32xf32> to vector<32xf32>
    %c0_9 = arith.constant 0 : index
    %c0_10 = arith.constant 0 : index
    %8 = vector.load %arg6[%c0_9, %c0_10] : memref<32x32xbf16, #tpu.memory_space<vmem>>, vector<32x32xbf16>
    %c0_11 = arith.constant 0 : index
    %c0_12 = arith.constant 0 : index
    %9 = vector.load %arg7[%c0_11, %c0_12] : memref<1x32xf32, #tpu.memory_space<vmem>>, vector<1x32xf32>
    %10 = vector.shape_cast %9 : vector<1x32xf32> to vector<32xf32>
    %c0_13 = arith.constant 0 : index
    %c0_14 = arith.constant 0 : index
    %11 = vector.load %arg8[%c0_13, %c0_14] : memref<32x64xbf16, #tpu.memory_space<vmem>>, vector<32x64xbf16>
    %c0_15 = arith.constant 0 : index
    %c0_16 = arith.constant 0 : index
    %12 = vector.load %arg9[%c0_15, %c0_16] : memref<1x64xf32, #tpu.memory_space<vmem>>, vector<1x64xf32>
    %13 = vector.shape_cast %12 : vector<1x64xf32> to vector<64xf32>
    %c0_17 = arith.constant 0 : index
    %c0_18 = arith.constant 0 : index
    %14 = vector.load %arg10[%c0_17, %c0_18] : memref<1x32xf32, #tpu.memory_space<vmem>>, vector<1x32xf32>
    %15 = vector.shape_cast %14 : vector<1x32xf32> to vector<32xf32>
    %c0_19 = arith.constant 0 : index
    %c0_20 = arith.constant 0 : index
    %16 = vector.load %arg11[%c0_19, %c0_20] : memref<1x32xf32, #tpu.memory_space<vmem>>, vector<1x32xf32>
    %17 = vector.shape_cast %16 : vector<1x32xf32> to vector<32xf32>
    %c0_21 = arith.constant 0 : index
    %c0_22 = arith.constant 0 : index
    %18 = vector.load %arg12[%c0_21, %c0_22] : memref<32x64xbf16, #tpu.memory_space<vmem>>, vector<32x64xbf16>
    %c0_23 = arith.constant 0 : index
    %c0_24 = arith.constant 0 : index
    %19 = vector.load %arg13[%c0_23, %c0_24] : memref<1x64xf32, #tpu.memory_space<vmem>>, vector<1x64xf32>
    %20 = vector.shape_cast %19 : vector<1x64xf32> to vector<64xf32>
    %c0_25 = arith.constant 0 : index
    %c0_26 = arith.constant 0 : index
    %21 = vector.load %arg14[%c0_25, %c0_26] : memref<64x32xbf16, #tpu.memory_space<vmem>>, vector<64x32xbf16>
    %c0_27 = arith.constant 0 : index
    %c0_28 = arith.constant 0 : index
    %22 = vector.load %arg15[%c0_27, %c0_28] : memref<1x32xf32, #tpu.memory_space<vmem>>, vector<1x32xf32>
    %23 = vector.shape_cast %22 : vector<1x32xf32> to vector<32xf32>
    %cst = arith.constant dense<0.000000e+00> : vector<8xf32>
    %24 = vector.multi_reduction <add>, %1, %cst [1] : vector<8x32xf32> to vector<8xf32>
    %25 = vector.shape_cast %24 : vector<8xf32> to vector<8x1xf32>
    %cst_29 = arith.constant 3.200000e+01 : f32
    %26 = vector.broadcast %cst_29 : f32 to vector<8x1xf32>
    %27 = arith.divf %25, %26 : vector<8x1xf32>
    %28 = vector.broadcast %27 : vector<8x1xf32> to vector<8x32xf32>
    %29 = arith.subf %1, %28 : vector<8x32xf32>
    %30 = arith.mulf %29, %29 : vector<8x32xf32>
    %cst_30 = arith.constant dense<0.000000e+00> : vector<8xf32>
    %31 = vector.multi_reduction <add>, %30, %cst_30 [1] : vector<8x32xf32> to vector<8xf32>
    %32 = vector.shape_cast %31 : vector<8xf32> to vector<8x1xf32>
    %cst_31 = arith.constant 3.200000e+01 : f32
    %33 = vector.broadcast %cst_31 : f32 to vector<8x1xf32>
    %34 = arith.divf %32, %33 : vector<8x1xf32>
    %35 = vector.broadcast %27 : vector<8x1xf32> to vector<8x32xf32>
    %36 = arith.subf %1, %35 : vector<8x32xf32>
    %cst_32 = arith.constant 9.99999974E-6 : f32
    %37 = vector.broadcast %cst_32 : f32 to vector<8x1xf32>
    %38 = arith.addf %34, %37 : vector<8x1xf32>
    %39 = math.rsqrt %38 : vector<8x1xf32>
    %40 = vector.broadcast %39 : vector<8x1xf32> to vector<8x32xf32>
    %41 = arith.mulf %36, %40 : vector<8x32xf32>
    %42 = vector.shape_cast %5 : vector<32xf32> to vector<1x32xf32>
    %43 = vector.broadcast %42 : vector<1x32xf32> to vector<8x32xf32>
    %44 = arith.mulf %41, %43 : vector<8x32xf32>
    %45 = vector.shape_cast %7 : vector<32xf32> to vector<1x32xf32>
    %46 = vector.broadcast %45 : vector<1x32xf32> to vector<8x32xf32>
    %47 = arith.addf %44, %46 : vector<8x32xf32>
    %cst_33 = arith.constant dense<0.000000e+00> : vector<8xf32>
    %48 = vector.multi_reduction <add>, %3, %cst_33 [1] : vector<8x32xf32> to vector<8xf32>
    %49 = vector.shape_cast %48 : vector<8xf32> to vector<8x1xf32>
    %cst_34 = arith.constant 3.200000e+01 : f32
    %50 = vector.broadcast %cst_34 : f32 to vector<8x1xf32>
    %51 = arith.divf %49, %50 : vector<8x1xf32>
    %52 = vector.broadcast %51 : vector<8x1xf32> to vector<8x32xf32>
    %53 = arith.subf %3, %52 : vector<8x32xf32>
    %54 = arith.mulf %53, %53 : vector<8x32xf32>
    %cst_35 = arith.constant dense<0.000000e+00> : vector<8xf32>
    %55 = vector.multi_reduction <add>, %54, %cst_35 [1] : vector<8x32xf32> to vector<8xf32>
    %56 = vector.shape_cast %55 : vector<8xf32> to vector<8x1xf32>
    %cst_36 = arith.constant 3.200000e+01 : f32
    %57 = vector.broadcast %cst_36 : f32 to vector<8x1xf32>
    %58 = arith.divf %56, %57 : vector<8x1xf32>
    %59 = vector.broadcast %51 : vector<8x1xf32> to vector<8x32xf32>
    %60 = arith.subf %3, %59 : vector<8x32xf32>
    %cst_37 = arith.constant 9.99999974E-6 : f32
    %61 = vector.broadcast %cst_37 : f32 to vector<8x1xf32>
    %62 = arith.addf %58, %61 : vector<8x1xf32>
    %63 = math.rsqrt %62 : vector<8x1xf32>
    %64 = vector.broadcast %63 : vector<8x1xf32> to vector<8x32xf32>
    %65 = arith.mulf %60, %64 : vector<8x32xf32>
    %66 = vector.shape_cast %5 : vector<32xf32> to vector<1x32xf32>
    %67 = vector.broadcast %66 : vector<1x32xf32> to vector<8x32xf32>
    %68 = arith.mulf %65, %67 : vector<8x32xf32>
    %69 = vector.shape_cast %7 : vector<32xf32> to vector<1x32xf32>
    %70 = vector.broadcast %69 : vector<1x32xf32> to vector<8x32xf32>
    %71 = arith.addf %68, %70 : vector<8x32xf32>
    %72 = arith.truncf %47 : vector<8x32xf32> to vector<8x32xbf16>
    %cst_38 = arith.constant dense<0.000000e+00> : vector<8x32xf32>
    %73 = tpu.matmul %72, %8, %cst_38 {dimension_numbers = #tpu.dot_dimension_numbers<[1], [0], [0], [1], [0, 0, 1, 1], [], []>} : vector<8x32xbf16>, vector<32x32xbf16>, vector<8x32xf32> -> vector<8x32xf32>
    %74 = vector.shape_cast %10 : vector<32xf32> to vector<1x32xf32>
    %75 = vector.broadcast %74 : vector<1x32xf32> to vector<8x32xf32>
    %76 = arith.addf %73, %75 : vector<8x32xf32>
    %77 = arith.truncf %71 : vector<8x32xf32> to vector<8x32xbf16>
    %cst_39 = arith.constant dense<0.000000e+00> : vector<8x64xf32>
    %78 = tpu.matmul %77, %11, %cst_39 {dimension_numbers = #tpu.dot_dimension_numbers<[1], [0], [0], [1], [0, 0, 1, 1], [], []>} : vector<8x32xbf16>, vector<32x64xbf16>, vector<8x64xf32> -> vector<8x64xf32>
    %79 = vector.shape_cast %13 : vector<64xf32> to vector<1x64xf32>
    %80 = vector.broadcast %79 : vector<1x64xf32> to vector<8x64xf32>
    %81 = arith.addf %78, %80 : vector<8x64xf32>
    %82 = vector.extract_strided_slice %81 {offsets = [0, 0], sizes = [8, 32], strides = [1, 1]} : vector<8x64xf32> to vector<8x32xf32>
    %83 = vector.extract_strided_slice %81 {offsets = [0, 32], sizes = [8, 32], strides = [1, 1]} : vector<8x64xf32> to vector<8x32xf32>
    %84 = vector.shape_cast %76 : vector<8x32xf32> to vector<8x4x8xf32>
    %85 = tpu.transpose %84, [1, 0, 2] : vector<8x4x8xf32> -> vector<4x8x8xf32>
    %86 = arith.truncf %85 : vector<4x8x8xf32> to vector<4x8x8xbf16>
    %87 = vector.shape_cast %82 : vector<8x32xf32> to vector<8x4x8xf32>
    %88 = tpu.transpose %87, [1, 0, 2] : vector<8x4x8xf32> -> vector<4x8x8xf32>
    %89 = arith.truncf %88 : vector<4x8x8xf32> to vector<4x8x8xbf16>
    %90 = vector.shape_cast %83 : vector<8x32xf32> to vector<8x4x8xf32>
    %91 = tpu.transpose %90, [1, 0, 2] : vector<8x4x8xf32> -> vector<4x8x8xf32>
    %92 = arith.truncf %91 : vector<4x8x8xf32> to vector<4x8x8xbf16>
    "tpu.trace_start"() <{level = 10 : i32, message = "hqd,hkd->hqk"}> : () -> ()
    %cst_40 = arith.constant dense<0.000000e+00> : vector<4x8x8xf32>
    %93 = tpu.matmul %86, %89, %cst_40 {dimension_numbers = #tpu.dot_dimension_numbers<[2], [2], [1], [1], [0, 0, 0, 1, 1, 1], [0], [0]>} : vector<4x8x8xbf16>, vector<4x8x8xbf16>, vector<4x8x8xf32> -> vector<4x8x8xf32>
    "tpu.trace_stop"() : () -> ()
    %cst_41 = arith.constant dense<0xFF800000> : vector<4x8xf32>
    %94 = vector.multi_reduction <maximumf>, %93, %cst_41 [2] : vector<4x8x8xf32> to vector<4x8xf32>
    %95 = vector.shape_cast %94 : vector<4x8xf32> to vector<4x8x1xf32>
    %96 = vector.broadcast %95 : vector<4x8x1xf32> to vector<4x8x8xf32>
    %97 = arith.subf %93, %96 : vector<4x8x8xf32>
    %98 = math.exp %97 : vector<4x8x8xf32>
    %cst_42 = arith.constant dense<0.000000e+00> : vector<4x8xf32>
    %99 = vector.multi_reduction <add>, %98, %cst_42 [2] : vector<4x8x8xf32> to vector<4x8xf32>
    %100 = vector.shape_cast %99 : vector<4x8xf32> to vector<4x8x1xf32>
    %101 = tpu.reciprocal %100 {approx = true} : vector<4x8x1xf32> -> vector<4x8x1xf32>
    %102 = vector.broadcast %101 : vector<4x8x1xf32> to vector<4x8x8xf32>
    %103 = arith.mulf %98, %102 : vector<4x8x8xf32>
    %104 = arith.truncf %103 : vector<4x8x8xf32> to vector<4x8x8xbf16>
    "tpu.trace_start"() <{level = 10 : i32, message = "hqk,hkd->hqd"}> : () -> ()
    %cst_43 = arith.constant dense<0.000000e+00> : vector<4x8x8xf32>
    %105 = tpu.matmul %104, %92, %cst_43 {dimension_numbers = #tpu.dot_dimension_numbers<[2], [1], [1], [2], [0, 0, 0, 1, 1, 2], [0], [0]>} : vector<4x8x8xbf16>, vector<4x8x8xbf16>, vector<4x8x8xf32> -> vector<4x8x8xf32>
    "tpu.trace_stop"() : () -> ()
    %106 = tpu.transpose %105, [1, 0, 2] : vector<4x8x8xf32> -> vector<8x4x8xf32>
    %107 = vector.shape_cast %106 : vector<8x4x8xf32> to vector<8x32xf32>
    %108 = arith.addf %107, %1 : vector<8x32xf32>
    %cst_44 = arith.constant dense<0.000000e+00> : vector<8xf32>
    %109 = vector.multi_reduction <add>, %108, %cst_44 [1] : vector<8x32xf32> to vector<8xf32>
    %110 = vector.shape_cast %109 : vector<8xf32> to vector<8x1xf32>
    %cst_45 = arith.constant 3.200000e+01 : f32
    %111 = vector.broadcast %cst_45 : f32 to vector<8x1xf32>
    %112 = arith.divf %110, %111 : vector<8x1xf32>
    %113 = vector.broadcast %112 : vector<8x1xf32> to vector<8x32xf32>
    %114 = arith.subf %108, %113 : vector<8x32xf32>
    %115 = arith.mulf %114, %114 : vector<8x32xf32>
    %cst_46 = arith.constant dense<0.000000e+00> : vector<8xf32>
    %116 = vector.multi_reduction <add>, %115, %cst_46 [1] : vector<8x32xf32> to vector<8xf32>
    %117 = vector.shape_cast %116 : vector<8xf32> to vector<8x1xf32>
    %cst_47 = arith.constant 3.200000e+01 : f32
    %118 = vector.broadcast %cst_47 : f32 to vector<8x1xf32>
    %119 = arith.divf %117, %118 : vector<8x1xf32>
    %120 = vector.broadcast %112 : vector<8x1xf32> to vector<8x32xf32>
    %121 = arith.subf %108, %120 : vector<8x32xf32>
    %cst_48 = arith.constant 9.99999974E-6 : f32
    %122 = vector.broadcast %cst_48 : f32 to vector<8x1xf32>
    %123 = arith.addf %119, %122 : vector<8x1xf32>
    %124 = math.rsqrt %123 : vector<8x1xf32>
    %125 = vector.broadcast %124 : vector<8x1xf32> to vector<8x32xf32>
    %126 = arith.mulf %121, %125 : vector<8x32xf32>
    %127 = vector.shape_cast %15 : vector<32xf32> to vector<1x32xf32>
    %128 = vector.broadcast %127 : vector<1x32xf32> to vector<8x32xf32>
    %129 = arith.mulf %126, %128 : vector<8x32xf32>
    %130 = vector.shape_cast %17 : vector<32xf32> to vector<1x32xf32>
    %131 = vector.broadcast %130 : vector<1x32xf32> to vector<8x32xf32>
    %132 = arith.addf %129, %131 : vector<8x32xf32>
    %133 = arith.truncf %132 : vector<8x32xf32> to vector<8x32xbf16>
    %cst_49 = arith.constant dense<0.000000e+00> : vector<8x64xf32>
    %134 = tpu.matmul %133, %18, %cst_49 {dimension_numbers = #tpu.dot_dimension_numbers<[1], [0], [0], [1], [0, 0, 1, 1], [], []>} : vector<8x32xbf16>, vector<32x64xbf16>, vector<8x64xf32> -> vector<8x64xf32>
    %135 = vector.shape_cast %20 : vector<64xf32> to vector<1x64xf32>
    %136 = vector.broadcast %135 : vector<1x64xf32> to vector<8x64xf32>
    %137 = arith.addf %134, %136 : vector<8x64xf32>
    %cst_50 = arith.constant 5.000000e-01 : f32
    %138 = vector.broadcast %cst_50 : f32 to vector<8x64xf32>
    %139 = arith.mulf %138, %137 : vector<8x64xf32>
    %cst_51 = arith.constant 0.707106769 : f32
    %140 = vector.broadcast %cst_51 : f32 to vector<8x64xf32>
    %141 = arith.mulf %137, %140 : vector<8x64xf32>
    %142 = math.erf %141 : vector<8x64xf32>
    %cst_52 = arith.constant 1.000000e+00 : f32
    %143 = vector.broadcast %cst_52 : f32 to vector<8x64xf32>
    %144 = arith.addf %143, %142 : vector<8x64xf32>
    %145 = arith.mulf %139, %144 : vector<8x64xf32>
    %146 = arith.truncf %145 : vector<8x64xf32> to vector<8x64xbf16>
    %cst_53 = arith.constant dense<0.000000e+00> : vector<8x32xf32>
    %147 = tpu.matmul %146, %21, %cst_53 {dimension_numbers = #tpu.dot_dimension_numbers<[1], [0], [0], [1], [0, 0, 1, 1], [], []>} : vector<8x64xbf16>, vector<64x32xbf16>, vector<8x32xf32> -> vector<8x32xf32>
    %148 = vector.shape_cast %23 : vector<32xf32> to vector<1x32xf32>
    %149 = vector.broadcast %148 : vector<1x32xf32> to vector<8x32xf32>
    %150 = arith.addf %147, %149 : vector<8x32xf32>
    %151 = arith.addf %150, %108 : vector<8x32xf32>
    %c0_54 = arith.constant 0 : index
    %c0_55 = arith.constant 0 : index
    %c0_56 = arith.constant 0 : index
    %152 = vector.load %arg16[%c0_54, %c0_55, %c0_56] : memref<1x8x32xf32, #tpu.memory_space<vmem>>, vector<1x8x32xf32>
    %153 = vector.shape_cast %152 : vector<1x8x32xf32> to vector<8x32xf32>
    %154 = vector.shape_cast %151 : vector<8x32xf32> to vector<1x8x32xf32>
    tpu.vector_store %arg16[%c0_54, %c0_55, %c0_56], %154 {strides = array<i32>} : memref<1x8x32xf32, #tpu.memory_space<vmem>>, vector<1x8x32xf32>,
    return
  }
  func.func @transform_0(%arg0: i32, %arg1: i32) -> (i32, i32, i32) {
    %c0_i32 = arith.constant 0 : i32
    %c0_i32_0 = arith.constant 0 : i32
    return %arg0, %arg1, %c0_i32 : i32, i32, i32
  }
  func.func @transform_1(%arg0: i32, %arg1: i32) -> (i32, i32, i32) {
    %c0_i32 = arith.constant 0 : i32
    %c0_i32_0 = arith.constant 0 : i32
    %c0_i32_1 = arith.constant 0 : i32
    return %arg0, %c0_i32, %c0_i32_0 : i32, i32, i32
  }
  func.func @transform_2(%arg0: i32, %arg1: i32) -> (i32, i32) {
    %c0_i32 = arith.constant 0 : i32
    %c0_i32_0 = arith.constant 0 : i32
    %c0_i32_1 = arith.constant 0 : i32
    return %c0_i32, %c0_i32_0 : i32, i32
  }
  func.func @transform_3(%arg0: i32, %arg1: i32) -> (i32, i32) {
    %c0_i32 = arith.constant 0 : i32
    %c0_i32_0 = arith.constant 0 : i32
    %c0_i32_1 = arith.constant 0 : i32
    return %c0_i32, %c0_i32_0 : i32, i32
  }
  func.func @transform_4(%arg0: i32, %arg1: i32) -> (i32, i32) {
    %c0_i32 = arith.constant 0 : i32
    %c0_i32_0 = arith.constant 0 : i32
    %c0_i32_1 = arith.constant 0 : i32
    return %c0_i32, %c0_i32_0 : i32, i32
  }
  func.func @transform_5(%arg0: i32, %arg1: i32) -> (i32, i32) {
    %c0_i32 = arith.constant 0 : i32
    %c0_i32_0 = arith.constant 0 : i32
    %c0_i32_1 = arith.constant 0 : i32
    return %c0_i32, %c0_i32_0 : i32, i32
  }
  func.func @transform_6(%arg0: i32, %arg1: i32) -> (i32, i32) {
    %c0_i32 = arith.constant 0 : i32
    %c0_i32_0 = arith.constant 0 : i32
    %c0_i32_1 = arith.constant 0 : i32
    return %c0_i32, %c0_i32_0 : i32, i32
  }
  func.func @transform_7(%arg0: i32, %arg1: i32) -> (i32, i32) {
    %c0_i32 = arith.constant 0 : i32
    %c0_i32_0 = arith.constant 0 : i32
    %c0_i32_1 = arith.constant 0 : i32
    return %c0_i32, %c0_i32_0 : i32, i32
  }
  func.func @transform_8(%arg0: i32, %arg1: i32) -> (i32, i32) {
    %c0_i32 = arith.constant 0 : i32
    %c0_i32_0 = arith.constant 0 : i32
    %c0_i32_1 = arith.constant 0 : i32
    return %c0_i32, %c0_i32_0 : i32, i32
  }
  func.func @transform_9(%arg0: i32, %arg1: i32) -> (i32, i32) {
    %c0_i32 = arith.constant 0 : i32
    %c0_i32_0 = arith.constant 0 : i32
    %c0_i32_1 = arith.constant 0 : i32
    return %c0_i32, %c0_i32_0 : i32, i32
  }
  func.func @transform_10(%arg0: i32, %arg1: i32) -> (i32, i32) {
    %c0_i32 = arith.constant 0 : i32
    %c0_i32_0 = arith.constant 0 : i32
    %c0_i32_1 = arith.constant 0 : i32
    return %c0_i32, %c0_i32_0 : i32, i32
  }
  func.func @transform_11(%arg0: i32, %arg1: i32) -> (i32, i32) {
    %c0_i32 = arith.constant 0 : i32
    %c0_i32_0 = arith.constant 0 : i32
    %c0_i32_1 = arith.constant 0 : i32
    return %c0_i32, %c0_i32_0 : i32, i32
  }
  func.func @transform_12(%arg0: i32, %arg1: i32) -> (i32, i32) {
    %c0_i32 = arith.constant 0 : i32
    %c0_i32_0 = arith.constant 0 : i32
    %c0_i32_1 = arith.constant 0 : i32
    return %c0_i32, %c0_i32_0 : i32, i32
  }
  func.func @transform_13(%arg0: i32, %arg1: i32) -> (i32, i32) {
    %c0_i32 = arith.constant 0 : i32
    %c0_i32_0 = arith.constant 0 : i32
    %c0_i32_1 = arith.constant 0 : i32
    return %c0_i32, %c0_i32_0 : i32, i32
  }
  func.func @transform_14(%arg0: i32, %arg1: i32) -> (i32, i32, i32) {
    %c0_i32 = arith.constant 0 : i32
    %c0_i32_0 = arith.constant 0 : i32
    return %arg0, %arg1, %c0_i32 : i32, i32, i32
  }
}

</mosaic_0001>

<llo_original>
// kernel: transformer_forward.2
$region0: #{transformer_forward.2}
  #allocation0 [shape = 'u32[]', space=smem, size = 0x4, offset = 0x4, fixed_abs, tag = 'smem constant byte address 0x4 - core index']
  #allocation1 [shape = 'u32[144,128]{1,0:T(1,128)}', space=vmem, size = 0x12000, scoped, tag = 'internal scratch']
  %s0 = inlined_call_operand.vmem [shape: f32[2,8,32], index: 0, kind: input, shape index: {}, may-alias: {0,1}]
  %s1 = inlined_call_operand.vmem [shape: f32[2,8,32], index: 1, kind: input, shape index: {}, may-alias: {0,1}]
  %s2 = inlined_call_operand.vmem [shape: f32[1,32], index: 2, kind: input, shape index: {}]
  %s3 = inlined_call_operand.vmem [shape: f32[1,32], index: 3, kind: input, shape index: {}]
  %s4 = inlined_call_operand.vmem [shape: bf16[32,32], index: 4, kind: input, shape index: {}]
  %s5 = inlined_call_operand.hbm [shape: f32[1,32], index: 5, kind: input, shape index: {}]
  %s6 = inlined_call_operand.vmem [shape: bf16[32,64], index: 6, kind: input, shape index: {}]
  %s7 = inlined_call_operand.hbm [shape: f32[1,64], index: 7, kind: input, shape index: {}]
  %s8 = inlined_call_operand.hbm [shape: f32[1,32], index: 8, kind: input, shape index: {}]
  %s9 = inlined_call_operand.hbm [shape: f32[1,32], index: 9, kind: input, shape index: {}]
  %s10 = inlined_call_operand.vmem [shape: bf16[32,64], index: 10, kind: input, shape index: {}]
  %s11 = inlined_call_operand.hbm [shape: f32[1,64], index: 11, kind: input, shape index: {}]
  %s12 = inlined_call_operand.vmem [shape: bf16[64,32], index: 12, kind: input, shape index: {}]
  %s13 = inlined_call_operand.hbm [shape: f32[1,32], index: 13, kind: input, shape index: {}]
  %s14 = inlined_call_operand.vmem [shape: f32[2,8,32], index: 14, kind: output, shape index: {}]
  %s15 = sld [smem:[#allocation0]]
  $region113: #{transformer_forward.2} parent=0
    _
  %s17 = ssub.s32 1, %s15
  %s18 = scalar_select 0, %s17, %s15
  $region1: #{transformer_forward.2} parent=0
    #allocation2 [shape = 'u8[512]{0}', space=vmem, size = 0x400, scoped, tag = 'input window, operand 5, single buffered']
    #allocation3 [shape = 's32[2]{0}', space=sflag, size = 0x8, scoped, tag = 'scoped memory for transformer_forward.2']
    #allocation4 [shape = 'u8[512]{0}', space=vmem, size = 0x400, scoped, tag = 'input window, operand 7, single buffered']
    #allocation5 [shape = 's32[1]{0}', space=sflag, size = 0x4, scoped, tag = 'scoped memory for transformer_forward.2']
    #allocation6 [shape = 'u8[512]{0}', space=vmem, size = 0x400, scoped, tag = 'input window, operand 8, single buffered']
    #allocation7 [shape = 'u8[512]{0}', space=vmem, size = 0x400, scoped, tag = 'input window, operand 9, single buffered']
    #allocation8 [shape = 's32[1]{0}', space=sflag, size = 0x4, scoped, tag = 'scoped memory for transformer_forward.2']
    #allocation9 [shape = 'u8[512]{0}', space=vmem, size = 0x400, scoped, tag = 'input window, operand 11, single buffered']
    #allocation10 [shape = 'u8[512]{0}', space=vmem, size = 0x400, scoped, tag = 'input window, operand 13, single buffered']
    #allocation11 [shape = 's32[1]{0}', space=sflag, size = 0x4, scoped, tag = 'scoped memory for transformer_forward.2']
    %19 = vsyncpa [#allocation3], 0
    %20 = vsyncpa [#allocation5], 0
    %21 = vsyncpa [#allocation8], 0
    %22 = vsyncpa [#allocation11], 0
    loop: start=0, step=1, limit=4
    $region2: #{transformer_forward.2} parent=1 // loop_pre_header
      _
    $region3: #{transformer_forward.2} parent=1 // loop_header
      %s24 = sphi 0, %s28
      %p25 = scmp.ge.s32.totalorder %s24, 4
      %s31 = sphi 0, %s43
      %s32 = sphi 0, %s39
      %s33 = sphi 0, %s31
      %s34 = sphi 0, %s32
      %s35 = sphi 0, %s33
      %s36 = sphi 0, %s34
      %s48 = sphi 0, %s50
      %s51 = sphi 0, %s48
      %s52 = sphi 0, %s51
      %s68 = sphi 0, %s52
      %s74 = sphi 0, %s76
      %s77 = sphi 0, %s74
      %s78 = sphi 0, %s77
      %s94 = sphi 0, %s78
      %s98 = sphi 0, %s98
      %s100 = sphi 0, %s98
      %s101 = sphi 0, %s100
      %s115 = sphi 0, %s101
      %s119 = sphi 0, %s119
      %s121 = sphi 0, %s119
      %s122 = sphi 0, %s121
      %s136 = sphi 0, %s122
      %s140 = sphi 0, %s140
      %s142 = sphi 0, %s140
      %s143 = sphi 0, %s142
      %s157 = sphi 0, %s143
      %s161 = sphi 0, %s161
      %s163 = sphi 0, %s161
      %s164 = sphi 0, %s163
      %s178 = sphi 0, %s164
      %s182 = sphi 0, %s182
      %s184 = sphi 0, %s182
      %s185 = sphi 0, %s184
      %s199 = sphi 0, %s185
      %s203 = sphi 0, %s203
      %s205 = sphi 0, %s203
      %s206 = sphi 0, %s205
      %s220 = sphi 0, %s206
      %s224 = sphi 0, %s224
      %s226 = sphi 0, %s224
      %s227 = sphi 0, %s226
      %s241 = sphi 0, %s227
      %s245 = sphi 0, %s245
      %s247 = sphi 0, %s245
      %s248 = sphi 0, %s247
      %s262 = sphi 0, %s248
      %s266 = sphi 0, %s266
      %s268 = sphi 0, %s266
      %s269 = sphi 0, %s268
      %s283 = sphi 0, %s269
      %s287 = sphi 0, %s287
      %s289 = sphi 0, %s287
      %s290 = sphi 0, %s289
      %s304 = sphi 0, %s290
      %s308 = sphi 0, %s308
      %s310 = sphi 0, %s308
      %s311 = sphi 0, %s310
      %s325 = sphi 0, %s311
      %s329 = sphi 0, %s329
      %s331 = sphi 0, %s329
      %s332 = sphi 0, %s331
      %s346 = sphi 0, %s332
      %s354 = sphi 0, %s356
      %s357 = sphi 0, %s354
      %s358 = sphi 0, %s357
      %s374 = sphi 0, %s358
    $region4: #{transformer_forward.2} parent=1 // loop_header_branch
      %27 = sbr.rel (%p25) target = $region8
    $region5: #{transformer_forward.2} parent=1 // loop_body
      %s29 = ssub.s32 %s24, 1
      %s30 = ssub.s32 %s24, 2
      %s37 = sadd.s32 1, %s32
      %p38 = scmp.ge.s32.totalorder %s37, 1
      %s39 = scalar_select %p38, 0, %s37
      %s40 = sadd.s32 1, %s31
      %s41 = scalar_select %p38, %s40, %s31
      %p42 = scmp.ge.s32.totalorder %s41, 2
      %s43 = scalar_select %p42, 0, %s41
      %s44 = ssub.s32 %s31, %s43
      %s45 = ssub.s32 %s32, %s39
      %s46 = sor.u32 %s44, %s45
      %p47 = scmp.eq.s32.totalorder %s46, 0
      %s49 = sadd.s32 %s48, 1
      %s50 = scalar_select %p47, %s48, %s49
      %p53 = pneg %p47
      %p54 = scmp.eq.s32.totalorder %s24, 1
      %p55 = por %p53, %p54
      %p56 = scmp.ne.s32.totalorder %s48, %s51
      %p57 = scmp.eq.s32.totalorder %s24, 0
      %p58 = por %p56, %p57
      %p59 = scmp.ne.s32.totalorder %s48, %s51
      %p60 = scmp.eq.s32.totalorder %s29, 1
      %p61 = por %p59, %p60
      %p62 = scmp.ne.s32.totalorder %s51, %s52
      %p63 = scmp.eq.s32.totalorder %s29, 0
      %p64 = por %p62, %p63
      %p65 = scmp.ne.s32.totalorder %s51, %s52
      %p66 = scmp.eq.s32.totalorder %s30, 1
      %p67 = por %p65, %p66
      %p69 = scmp.ne.s32.totalorder %s52, %s68
      %p70 = scmp.eq.s32.totalorder %s30, 0
      %p71 = por %p69, %p70
      %s72 = ssub.s32 %s31, %s43
      %p73 = scmp.eq.s32.totalorder %s72, 0
      %s75 = sadd.s32 %s74, 1
      %s76 = scalar_select %p73, %s74, %s75
      %p79 = pneg %p73
      %p80 = scmp.eq.s32.totalorder %s24, 1
      %p81 = por %p79, %p80
      %p82 = scmp.ne.s32.totalorder %s74, %s77
      %p83 = scmp.eq.s32.totalorder %s24, 0
      %p84 = por %p82, %p83
      %p85 = scmp.ne.s32.totalorder %s74, %s77
      %p86 = scmp.eq.s32.totalorder %s29, 1
      %p87 = por %p85, %p86
      %p88 = scmp.ne.s32.totalorder %s77, %s78
      %p89 = scmp.eq.s32.totalorder %s29, 0
      %p90 = por %p88, %p89
      %p91 = scmp.ne.s32.totalorder %s77, %s78
      %p92 = scmp.eq.s32.totalorder %s30, 1
      %p93 = por %p91, %p92
      %p95 = scmp.ne.s32.totalorder %s78, %s94
      %p96 = scmp.eq.s32.totalorder %s30, 0
      %p97 = por %p95, %p96
      %s99 = sadd.s32 %s98, 1
      %p102 = scmp.eq.s32.totalorder %s24, 1
      %p103 = scmp.ne.s32.totalorder %s98, %s100
      %p104 = scmp.eq.s32.totalorder %s24, 0
      %p105 = por %p103, %p104
      %p106 = scmp.ne.s32.totalorder %s98, %s100
      %p107 = scmp.eq.s32.totalorder %s29, 1
      %p108 = por %p106, %p107
      %p109 = scmp.ne.s32.totalorder %s100, %s101
      %p110 = scmp.eq.s32.totalorder %s29, 0
      %p111 = por %p109, %p110
      %p112 = scmp.ne.s32.totalorder %s100, %s101
      %p113 = scmp.eq.s32.totalorder %s30, 1
      %p114 = por %p112, %p113
      %p116 = scmp.ne.s32.totalorder %s101, %s115
      %p117 = scmp.eq.s32.totalorder %s30, 0
      %p118 = por %p116, %p117
      %s120 = sadd.s32 %s119, 1
      %p123 = scmp.eq.s32.totalorder %s24, 1
      %p124 = scmp.ne.s32.totalorder %s119, %s121
      %p125 = scmp.eq.s32.totalorder %s24, 0
      %p126 = por %p124, %p125
      %p127 = scmp.ne.s32.totalorder %s119, %s121
      %p128 = scmp.eq.s32.totalorder %s29, 1
      %p129 = por %p127, %p128
      %p130 = scmp.ne.s32.totalorder %s121, %s122
      %p131 = scmp.eq.s32.totalorder %s29, 0
      %p132 = por %p130, %p131
      %p133 = scmp.ne.s32.totalorder %s121, %s122
      %p134 = scmp.eq.s32.totalorder %s30, 1
      %p135 = por %p133, %p134
      %p137 = scmp.ne.s32.totalorder %s122, %s136
      %p138 = scmp.eq.s32.totalorder %s30, 0
      %p139 = por %p137, %p138
      %s141 = sadd.s32 %s140, 1
      %p144 = scmp.eq.s32.totalorder %s24, 1
      %p145 = scmp.ne.s32.totalorder %s140, %s142
      %p146 = scmp.eq.s32.totalorder %s24, 0
      %p147 = por %p145, %p146
      %p148 = scmp.ne.s32.totalorder %s140, %s142
      %p149 = scmp.eq.s32.totalorder %s29, 1
      %p150 = por %p148, %p149
      %p151 = scmp.ne.s32.totalorder %s142, %s143
      %p152 = scmp.eq.s32.totalorder %s29, 0
      %p153 = por %p151, %p152
      %p154 = scmp.ne.s32.totalorder %s142, %s143
      %p155 = scmp.eq.s32.totalorder %s30, 1
      %p156 = por %p154, %p155
      %p158 = scmp.ne.s32.totalorder %s143, %s157
      %p159 = scmp.eq.s32.totalorder %s30, 0
      %p160 = por %p158, %p159
      %s162 = sadd.s32 %s161, 1
      %p165 = scmp.eq.s32.totalorder %s24, 1
      %p166 = scmp.ne.s32.totalorder %s161, %s163
      %p167 = scmp.eq.s32.totalorder %s24, 0
      %p168 = por %p166, %p167
      %p169 = scmp.ne.s32.totalorder %s161, %s163
      %p170 = scmp.eq.s32.totalorder %s29, 1
      %p171 = por %p169, %p170
      %p172 = scmp.ne.s32.totalorder %s163, %s164
      %p173 = scmp.eq.s32.totalorder %s29, 0
      %p174 = por %p172, %p173
      %p175 = scmp.ne.s32.totalorder %s163, %s164
      %p176 = scmp.eq.s32.totalorder %s30, 1
      %p177 = por %p175, %p176
      %p179 = scmp.ne.s32.totalorder %s164, %s178
      %p180 = scmp.eq.s32.totalorder %s30, 0
      %p181 = por %p179, %p180
      %s183 = sadd.s32 %s182, 1
      %p186 = scmp.eq.s32.totalorder %s24, 1
      %p187 = scmp.ne.s32.totalorder %s182, %s184
      %p188 = scmp.eq.s32.totalorder %s24, 0
      %p189 = por %p187, %p188
      %p190 = scmp.ne.s32.totalorder %s182, %s184
      %p191 = scmp.eq.s32.totalorder %s29, 1
      %p192 = por %p190, %p191
      %p193 = scmp.ne.s32.totalorder %s184, %s185
      %p194 = scmp.eq.s32.totalorder %s29, 0
      %p195 = por %p193, %p194
      %p196 = scmp.ne.s32.totalorder %s184, %s185
      %p197 = scmp.eq.s32.totalorder %s30, 1
      %p198 = por %p196, %p197
      %p200 = scmp.ne.s32.totalorder %s185, %s199
      %p201 = scmp.eq.s32.totalorder %s30, 0
      %p202 = por %p200, %p201
      %s204 = sadd.s32 %s203, 1
      %p207 = scmp.eq.s32.totalorder %s24, 1
      %p208 = scmp.ne.s32.totalorder %s203, %s205
      %p209 = scmp.eq.s32.totalorder %s24, 0
      %p210 = por %p208, %p209
      %p211 = scmp.ne.s32.totalorder %s203, %s205
      %p212 = scmp.eq.s32.totalorder %s29, 1
      %p213 = por %p211, %p212
      %p214 = scmp.ne.s32.totalorder %s205, %s206
      %p215 = scmp.eq.s32.totalorder %s29, 0
      %p216 = por %p214, %p215
      %p217 = scmp.ne.s32.totalorder %s205, %s206
      %p218 = scmp.eq.s32.totalorder %s30, 1
      %p219 = por %p217, %p218
      %p221 = scmp.ne.s32.totalorder %s206, %s220
      %p222 = scmp.eq.s32.totalorder %s30, 0
      %p223 = por %p221, %p222
      %s225 = sadd.s32 %s224, 1
      %p228 = scmp.eq.s32.totalorder %s24, 1
      %p229 = scmp.ne.s32.totalorder %s224, %s226
      %p230 = scmp.eq.s32.totalorder %s24, 0
      %p231 = por %p229, %p230
      %p232 = scmp.ne.s32.totalorder %s224, %s226
      %p233 = scmp.eq.s32.totalorder %s29, 1
      %p234 = por %p232, %p233
      %p235 = scmp.ne.s32.totalorder %s226, %s227
      %p236 = scmp.eq.s32.totalorder %s29, 0
      %p237 = por %p235, %p236
      %p238 = scmp.ne.s32.totalorder %s226, %s227
      %p239 = scmp.eq.s32.totalorder %s30, 1
      %p240 = por %p238, %p239
      %p242 = scmp.ne.s32.totalorder %s227, %s241
      %p243 = scmp.eq.s32.totalorder %s30, 0
      %p244 = por %p242, %p243
      %s246 = sadd.s32 %s245, 1
      %p249 = scmp.eq.s32.totalorder %s24, 1
      %p250 = scmp.ne.s32.totalorder %s245, %s247
      %p251 = scmp.eq.s32.totalorder %s24, 0
      %p252 = por %p250, %p251
      %p253 = scmp.ne.s32.totalorder %s245, %s247
      %p254 = scmp.eq.s32.totalorder %s29, 1
      %p255 = por %p253, %p254
      %p256 = scmp.ne.s32.totalorder %s247, %s248
      %p257 = scmp.eq.s32.totalorder %s29, 0
      %p258 = por %p256, %p257
      %p259 = scmp.ne.s32.totalorder %s247, %s248
      %p260 = scmp.eq.s32.totalorder %s30, 1
      %p261 = por %p259, %p260
      %p263 = scmp.ne.s32.totalorder %s248, %s262
      %p264 = scmp.eq.s32.totalorder %s30, 0
      %p265 = por %p263, %p264
      %s267 = sadd.s32 %s266, 1
      %p270 = scmp.eq.s32.totalorder %s24, 1
      %p271 = scmp.ne.s32.totalorder %s266, %s268
      %p272 = scmp.eq.s32.totalorder %s24, 0
      %p273 = por %p271, %p272
      %p274 = scmp.ne.s32.totalorder %s266, %s268
      %p275 = scmp.eq.s32.totalorder %s29, 1
      %p276 = por %p274, %p275
      %p277 = scmp.ne.s32.totalorder %s268, %s269
      %p278 = scmp.eq.s32.totalorder %s29, 0
      %p279 = por %p277, %p278
      %p280 = scmp.ne.s32.totalorder %s268, %s269
      %p281 = scmp.eq.s32.totalorder %s30, 1
      %p282 = por %p280, %p281
      %p284 = scmp.ne.s32.totalorder %s269, %s283
      %p285 = scmp.eq.s32.totalorder %s30, 0
      %p286 = por %p284, %p285
      %s288 = sadd.s32 %s287, 1
      %p291 = scmp.eq.s32.totalorder %s24, 1
      %p292 = scmp.ne.s32.totalorder %s287, %s289
      %p293 = scmp.eq.s32.totalorder %s24, 0
      %p294 = por %p292, %p293
      %p295 = scmp.ne.s32.totalorder %s287, %s289
      %p296 = scmp.eq.s32.totalorder %s29, 1
      %p297 = por %p295, %p296
      %p298 = scmp.ne.s32.totalorder %s289, %s290
      %p299 = scmp.eq.s32.totalorder %s29, 0
      %p300 = por %p298, %p299
      %p301 = scmp.ne.s32.totalorder %s289, %s290
      %p302 = scmp.eq.s32.totalorder %s30, 1
      %p303 = por %p301, %p302
      %p305 = scmp.ne.s32.totalorder %s290, %s304
      %p306 = scmp.eq.s32.totalorder %s30, 0
      %p307 = por %p305, %p306
      %s309 = sadd.s32 %s308, 1
      %p312 = scmp.eq.s32.totalorder %s24, 1
      %p313 = scmp.ne.s32.totalorder %s308, %s310
      %p314 = scmp.eq.s32.totalorder %s24, 0
      %p315 = por %p313, %p314
      %p316 = scmp.ne.s32.totalorder %s308, %s310
      %p317 = scmp.eq.s32.totalorder %s29, 1
      %p318 = por %p316, %p317
      %p319 = scmp.ne.s32.totalorder %s310, %s311
      %p320 = scmp.eq.s32.totalorder %s29, 0
      %p321 = por %p319, %p320
      %p322 = scmp.ne.s32.totalorder %s310, %s311
      %p323 = scmp.eq.s32.totalorder %s30, 1
      %p324 = por %p322, %p323
      %p326 = scmp.ne.s32.totalorder %s311, %s325
      %p327 = scmp.eq.s32.totalorder %s30, 0
      %p328 = por %p326, %p327
      %s330 = sadd.s32 %s329, 1
      %p333 = scmp.eq.s32.totalorder %s24, 1
      %p334 = scmp.ne.s32.totalorder %s329, %s331
      %p335 = scmp.eq.s32.totalorder %s24, 0
      %p336 = por %p334, %p335
      %p337 = scmp.ne.s32.totalorder %s329, %s331
      %p338 = scmp.eq.s32.totalorder %s29, 1
      %p339 = por %p337, %p338
      %p340 = scmp.ne.s32.totalorder %s331, %s332
      %p341 = scmp.eq.s32.totalorder %s29, 0
      %p342 = por %p340, %p341
      %p343 = scmp.ne.s32.totalorder %s331, %s332
      %p344 = scmp.eq.s32.totalorder %s30, 1
      %p345 = por %p343, %p344
      %p347 = scmp.ne.s32.totalorder %s332, %s346
      %p348 = scmp.eq.s32.totalorder %s30, 0
      %p349 = por %p347, %p348
      %s350 = ssub.s32 %s31, %s43
      %s351 = ssub.s32 %s32, %s39
      %s352 = sor.u32 %s350, %s351
      %p353 = scmp.eq.s32.totalorder %s352, 0
      %s355 = sadd.s32 %s354, 1
      %s356 = scalar_select %p353, %s354, %s355
      %p359 = pneg %p353
      %p360 = scmp.eq.s32.totalorder %s24, 1
      %p361 = por %p359, %p360
      %p362 = scmp.ne.s32.totalorder %s354, %s357
      %p363 = scmp.eq.s32.totalorder %s24, 0
      %p364 = por %p362, %p363
      %p365 = scmp.ne.s32.totalorder %s354, %s357
      %p366 = scmp.eq.s32.totalorder %s29, 1
      %p367 = por %p365, %p366
      %p368 = scmp.ne.s32.totalorder %s357, %s358
      %p369 = scmp.eq.s32.totalorder %s29, 0
      %p370 = por %p368, %p369
      %p371 = scmp.ne.s32.totalorder %s357, %s358
      %p372 = scmp.eq.s32.totalorder %s30, 1
      %p373 = por %p371, %p372
      %p375 = scmp.ne.s32.totalorder %s358, %s374
      %p376 = scmp.eq.s32.totalorder %s30, 0
      %p377 = por %p375, %p376
      %p378 = scmp.le.s32.totalorder 1, %s24
      %p379 = scmp.lt.s32.totalorder %s24, 3
      %p380 = pnand %p378, %p379
      %p381 = pneg %p380
      // Predicated region
      $region9: #{transformer_forward.2} parent=5 // pred_check
        _
      $region10: #{transformer_forward.2} parent=5 // pred_check_branch
        %383 = sbr.rel (%p380) target = $region12
      $region11: #{transformer_forward.2} parent=5 // pred_region
        %s384 = ssub.s32 %s24, 1
        // Predicated region
        $region13: #{transformer_forward.2} parent=11 // pred_check
          %p385 = pneg %p111
        $region14: #{transformer_forward.2} parent=11 // pred_check_branch
          %387 = sbr.rel (%p385) target = $region16
        $region15: #{transformer_forward.2} parent=11 // pred_region
          _
        $region16: #{transformer_forward.2} parent=11 // pred_fallthru
          _
        // Predicated region
        $region17: #{transformer_forward.2} parent=11 // pred_check
          %p388 = pneg %p132
        $region18: #{transformer_forward.2} parent=11 // pred_check_branch
          %390 = sbr.rel (%p388) target = $region20
        $region19: #{transformer_forward.2} parent=11 // pred_region
          _
        $region20: #{transformer_forward.2} parent=11 // pred_fallthru
          _
        // Predicated region
        $region21: #{transformer_forward.2} parent=11 // pred_check
          %p391 = pneg %p153
        $region22: #{transformer_forward.2} parent=11 // pred_check_branch
          %393 = sbr.rel (%p391) target = $region24
        $region23: #{transformer_forward.2} parent=11 // pred_region
          _
        $region24: #{transformer_forward.2} parent=11 // pred_fallthru
          _
        // Predicated region
        $region25: #{transformer_forward.2} parent=11 // pred_check
          %p394 = pneg %p174
        $region26: #{transformer_forward.2} parent=11 // pred_check_branch
          %396 = sbr.rel (%p394) target = $region28
        $region27: #{transformer_forward.2} parent=11 // pred_region
          %s398 = ssub.s32 16, 16
          %399 = vsyncadd [#allocation3], %s398
          %s401 = sshll.u32 [#allocation2], 4
          %s402 = int_to_ptr.vmem [resolvable:$true] %s401
          %404 = dma.hbm_to_vmem [thread:$0]  %s5, 16, %s402, [#allocation3]
        $region28: #{transformer_forward.2} parent=11 // pred_fallthru
          _
        // Predicated region
        $region29: #{transformer_forward.2} parent=11 // pred_check
          %p405 = pneg %p195
        $region30: #{transformer_forward.2} parent=11 // pred_check_branch
          %407 = sbr.rel (%p405) target = $region32
        $region31: #{transformer_forward.2} parent=11 // pred_region
          _
        $region32: #{transformer_forward.2} parent=11 // pred_fallthru
          _
        // Predicated region
        $region33: #{transformer_forward.2} parent=11 // pred_check
          %p408 = pneg %p216
        $region34: #{transformer_forward.2} parent=11 // pred_check_branch
          %410 = sbr.rel (%p408) target = $region36
        $region35: #{transformer_forward.2} parent=11 // pred_region
          %s412 = ssub.s32 16, 16
          %413 = vsyncadd [#allocation5], %s412
          %s415 = sshll.u32 [#allocation4], 4
          %s416 = int_to_ptr.vmem [resolvable:$true] %s415
          %418 = dma.hbm_to_vmem [thread:$0]  %s7, 16, %s416, [#allocation5]
        $region36: #{transformer_forward.2} parent=11 // pred_fallthru
          _
        // Predicated region
        $region37: #{transformer_forward.2} parent=11 // pred_check
          %p419 = pneg %p237
        $region38: #{transformer_forward.2} parent=11 // pred_check_branch
          %421 = sbr.rel (%p419) target = $region40
        $region39: #{transformer_forward.2} parent=11 // pred_region
          %s423 = ssub.s32 16, 16
          %424 = vsyncadd [#allocation5], %s423
          %s426 = sshll.u32 [#allocation6], 4
          %s427 = int_to_ptr.vmem [resolvable:$true] %s426
          %429 = dma.hbm_to_vmem [thread:$0]  %s8, 16, %s427, [#allocation5]
        $region40: #{transformer_forward.2} parent=11 // pred_fallthru
          _
        // Predicated region
        $region41: #{transformer_forward.2} parent=11 // pred_check
          %p430 = pneg %p258
        $region42: #{transformer_forward.2} parent=11 // pred_check_branch
          %432 = sbr.rel (%p430) target = $region44
        $region43: #{transformer_forward.2} parent=11 // pred_region
          %s434 = ssub.s32 16, 16
          %435 = vsyncadd [#allocation8], %s434
          %s437 = sshll.u32 [#allocation7], 4
          %s438 = int_to_ptr.vmem [resolvable:$true] %s437
          %440 = dma.hbm_to_vmem [thread:$0]  %s9, 16, %s438, [#allocation8]
        $region44: #{transformer_forward.2} parent=11 // pred_fallthru
          _
        // Predicated region
        $region45: #{transformer_forward.2} parent=11 // pred_check
          %p441 = pneg %p279
        $region46: #{transformer_forward.2} parent=11 // pred_check_branch
          %443 = sbr.rel (%p441) target = $region48
        $region47: #{transformer_forward.2} parent=11 // pred_region
          _
        $region48: #{transformer_forward.2} parent=11 // pred_fallthru
          _
        // Predicated region
        $region49: #{transformer_forward.2} parent=11 // pred_check
          %p444 = pneg %p300
        $region50: #{transformer_forward.2} parent=11 // pred_check_branch
          %446 = sbr.rel (%p444) target = $region52
        $region51: #{transformer_forward.2} parent=11 // pred_region
          %s448 = ssub.s32 16, 16
          %449 = vsyncadd [#allocation8], %s448
          %s451 = sshll.u32 [#allocation9], 4
          %s452 = int_to_ptr.vmem [resolvable:$true] %s451
          %454 = dma.hbm_to_vmem [thread:$0]  %s11, 16, %s452, [#allocation8]
        $region52: #{transformer_forward.2} parent=11 // pred_fallthru
          _
        // Predicated region
        $region53: #{transformer_forward.2} parent=11 // pred_check
          %p455 = pneg %p321
        $region54: #{transformer_forward.2} parent=11 // pred_check_branch
          %457 = sbr.rel (%p455) target = $region56
        $region55: #{transformer_forward.2} parent=11 // pred_region
          _
        $region56: #{transformer_forward.2} parent=11 // pred_fallthru
          _
        // Predicated region
        $region57: #{transformer_forward.2} parent=11 // pred_check
          %p458 = pneg %p342
        $region58: #{transformer_forward.2} parent=11 // pred_check_branch
          %460 = sbr.rel (%p458) target = $region60
        $region59: #{transformer_forward.2} parent=11 // pred_region
          %s462 = ssub.s32 16, 16
          %463 = vsyncadd [#allocation11], %s462
          %s465 = sshll.u32 [#allocation10], 4
          %s466 = int_to_ptr.vmem [resolvable:$true] %s465
          %468 = dma.hbm_to_vmem [thread:$0]  %s13, 16, %s466, [#allocation11]
        $region60: #{transformer_forward.2} parent=11 // pred_fallthru
          _
      $region12: #{transformer_forward.2} parent=5 // pred_fallthru
        _
      %p469 = scmp.lt.s32.totalorder %s24, 2
      // Predicated region
      $region61: #{transformer_forward.2} parent=5 // pred_check
        %p470 = pneg %p469
      $region62: #{transformer_forward.2} parent=5 // pred_check_branch
        %472 = sbr.rel (%p470) target = $region64
      $region63: #{transformer_forward.2} parent=5 // pred_region
        // Predicated region
        $region65: #{transformer_forward.2} parent=63 // pred_check
          %p473 = pneg %p58
        $region66: #{transformer_forward.2} parent=63 // pred_check_branch
          %475 = sbr.rel (%p473) target = $region68
        $region67: #{transformer_forward.2} parent=63 // pred_region
          %p476 = scmp.lt.s32.totalorder %s31, 1
          %s477 = scalar_select %p476, %s31, 1
          %p478 = scmp.lt.s32.totalorder %s32, 0
          %s479 = scalar_select %p478, %s32, 0
          %s480 = sadd.s32 %s479, %s477
          %s481 = smul.addr %s480, 8
          %s482 = scalar_lea.vmem %s0, %s481
        $region68: #{transformer_forward.2} parent=63 // pred_fallthru
          _
        // Predicated region
        $region69: #{transformer_forward.2} parent=63 // pred_check
          %p483 = pneg %p84
        $region70: #{transformer_forward.2} parent=63 // pred_check_branch
          %485 = sbr.rel (%p483) target = $region72
        $region71: #{transformer_forward.2} parent=63 // pred_region
          %p486 = scmp.lt.s32.totalorder %s31, 1
          %s487 = scalar_select %p486, %s31, 1
          %s488 = smul.addr %s487, 8
          %s489 = scalar_lea.vmem %s1, %s488
        $region72: #{transformer_forward.2} parent=63 // pred_fallthru
          _
      $region64: #{transformer_forward.2} parent=5 // pred_fallthru
        _
      %p490 = scmp.le.s32.totalorder 1, %s24
      %p491 = scmp.lt.s32.totalorder %s24, 3
      %p492 = pnand %p490, %p491
      %p493 = pneg %p492
      // Predicated region
      $region73: #{transformer_forward.2} parent=5 // pred_check
        _
      $region74: #{transformer_forward.2} parent=5 // pred_check_branch
        %495 = sbr.rel (%p492) target = $region76
      $region75: #{transformer_forward.2} parent=5 // pred_region
        %s496 = ssub.s32 %s24, 1
        // Predicated region
        $region77: #{transformer_forward.2} parent=75 // pred_check
          %p497 = pneg %p174
        $region78: #{transformer_forward.2} parent=75 // pred_check_branch
          %499 = sbr.rel (%p497) target = $region80
        $region79: #{transformer_forward.2} parent=75 // pred_region
          %500 = dma.done [#allocation3], 16
        $region80: #{transformer_forward.2} parent=75 // pred_fallthru
          _
        // Predicated region
        $region81: #{transformer_forward.2} parent=75 // pred_check
          %p501 = pneg %p216
        $region82: #{transformer_forward.2} parent=75 // pred_check_branch
          %503 = sbr.rel (%p501) target = $region84
        $region83: #{transformer_forward.2} parent=75 // pred_region
          %504 = dma.done [#allocation5], 16
        $region84: #{transformer_forward.2} parent=75 // pred_fallthru
          _
        // Predicated region
        $region85: #{transformer_forward.2} parent=75 // pred_check
          %p505 = pneg %p237
        $region86: #{transformer_forward.2} parent=75 // pred_check_branch
          %507 = sbr.rel (%p505) target = $region88
        $region87: #{transformer_forward.2} parent=75 // pred_region
          %508 = dma.done [#allocation5], 16
        $region88: #{transformer_forward.2} parent=75 // pred_fallthru
          _
        // Predicated region
        $region89: #{transformer_forward.2} parent=75 // pred_check
          %p509 = pneg %p258
        $region90: #{transformer_forward.2} parent=75 // pred_check_branch
          %511 = sbr.rel (%p509) target = $region92
        $region91: #{transformer_forward.2} parent=75 // pred_region
          %512 = dma.done [#allocation8], 16
        $region92: #{transformer_forward.2} parent=75 // pred_fallthru
          _
        // Predicated region
        $region93: #{transformer_forward.2} parent=75 // pred_check
          %p513 = pneg %p300
        $region94: #{transformer_forward.2} parent=75 // pred_check_branch
          %515 = sbr.rel (%p513) target = $region96
        $region95: #{transformer_forward.2} parent=75 // pred_region
          %516 = dma.done [#allocation8], 16
        $region96: #{transformer_forward.2} parent=75 // pred_fallthru
          _
        // Predicated region
        $region97: #{transformer_forward.2} parent=75 // pred_check
          %p517 = pneg %p342
        $region98: #{transformer_forward.2} parent=75 // pred_check_branch
          %519 = sbr.rel (%p517) target = $region100
        $region99: #{transformer_forward.2} parent=75 // pred_region
          %520 = dma.done [#allocation11], 16
        $region100: #{transformer_forward.2} parent=75 // pred_fallthru
          _
        %p521 = scmp.lt.s32.totalorder %s33, 1
        %s522 = scalar_select %p521, %s33, 1
        %p523 = scmp.lt.s32.totalorder %s34, 0
        %s524 = scalar_select %p523, %s34, 0
        %s525 = sadd.s32 %s524, %s522
        %s526 = smul.addr %s525, 8
        %s527 = scalar_lea.vmem %s0, %s526
        %p528 = pneg %p64
        %p529 = pneg %p61
        %p530 = scmp.lt.s32.totalorder %s33, 1
        %s531 = scalar_select %p530, %s33, 1
        %s532 = smul.addr %s531, 8
        %s533 = scalar_lea.vmem %s1, %s532
        %p534 = pneg %p90
        %p535 = pneg %p87
        %p536 = pneg %p111
        %p537 = pneg %p108
        %p538 = pneg %p132
        %p539 = pneg %p129
        %p540 = pneg %p153
        %p541 = pneg %p150
        %p542 = pneg %p174
        %p543 = pneg %p171
        %p544 = pneg %p195
        %p545 = pneg %p192
        %p546 = pneg %p216
        %p547 = pneg %p213
        %p548 = pneg %p237
        %p549 = pneg %p234
        %p550 = pneg %p258
        %p551 = pneg %p255
        %p552 = pneg %p279
        %p553 = pneg %p276
        %p554 = pneg %p300
        %p555 = pneg %p297
        %p556 = pneg %p321
        %p557 = pneg %p318
        %p558 = pneg %p342
        %p559 = pneg %p339
        %p560 = pneg %p370
        %p561 = pneg %p367
        %p562 = scmp.lt.s32.totalorder %s33, 1
        %s563 = scalar_select %p562, %s33, 1
        %p564 = scmp.lt.s32.totalorder %s34, 0
        %s565 = scalar_select %p564, %s34, 0
        %s566 = sadd.s32 %s565, %s563
        %s567 = smul.addr %s566, 8
        %s568 = scalar_lea.vmem %s14, %s567
        %p569 = scmp.lt.s32.totalorder %s33, 1
        %s570 = scalar_select %p569, %s33, 1
        %p571 = scmp.lt.s32.totalorder %s34, 0
        %s572 = scalar_select %p571, %s34, 0
        %s573 = sadd.s32 %s572, %s570
        %s574 = smul.addr %s573, 8
        %s575 = scalar_lea.vmem %s0, %s574
        %p576 = scmp.lt.s32.totalorder %s33, 1
        %s577 = scalar_select %p576, %s33, 1
        %s578 = smul.addr %s577, 8
        %s579 = scalar_lea.vmem %s1, %s578
        %p580 = scmp.lt.s32.totalorder %s33, 1
        %s581 = scalar_select %p580, %s33, 1
        %p582 = scmp.lt.s32.totalorder %s34, 0
        %s583 = scalar_select %p582, %s34, 0
        %s584 = sadd.s32 %s583, %s581
        %s585 = smul.addr %s584, 8
        %s586 = scalar_lea.vmem %s14, %s585
        %v588 = vld [vmem:[%s575] sm:$0xff]
        %v589 = vld [vmem:[%s579] sm:$0xff]
        %v590 = vld [vmem:[%s2] sm:$0x1]
        %v591 = vld [vmem:[%s3] sm:$0x1]
        %v592 = vld [vmem:[%s4] sm:$0xf]
        %v593 = vld [vmem:[%s4 + $0x4] sm:$0xf]
        %v594 = vld [vmem:[%s4 + $0x8] sm:$0xf]
        %v595 = vld [vmem:[%s4 + $0xc] sm:$0xf]
        %v596 = vld [vmem:[#allocation2] sm:$0x1]
        %v597 = vld [vmem:[%s6] sm:$0xf]
        %v598 = vld [vmem:[%s6 + $0x4] sm:$0xf]
        %v599 = vld [vmem:[%s6 + $0x8] sm:$0xf]
        %v600 = vld [vmem:[%s6 + $0xc] sm:$0xf]
        %v601 = vld [vmem:[#allocation4] sm:$0x1]
        %v602 = vld [vmem:[#allocation6] sm:$0x1]
        %v603 = vld [vmem:[#allocation7] sm:$0x1]
        %v604 = vld [vmem:[%s10] sm:$0xf]
        %v605 = vld [vmem:[%s10 + $0x4] sm:$0xf]
        %v606 = vld [vmem:[%s10 + $0x8] sm:$0xf]
        %v607 = vld [vmem:[%s10 + $0xc] sm:$0xf]
        %v608 = vld [vmem:[#allocation9] sm:$0x1]
        %v609 = vld [vmem:[%s12] sm:$0xf]
        %v610 = vld [vmem:[%s12 + $0x4] sm:$0xf]
        %v611 = vld [vmem:[%s12 + $0x8] sm:$0xf]
        %v612 = vld [vmem:[%s12 + $0xc] sm:$0xf]
        %v613 = vld [vmem:[%s12 + $0x10] sm:$0xf]
        %v614 = vld [vmem:[%s12 + $0x14] sm:$0xf]
        %v615 = vld [vmem:[%s12 + $0x18] sm:$0xf]
        %v616 = vld [vmem:[%s12 + $0x1c] sm:$0xf]
        %v617 = vld [vmem:[#allocation10] sm:$0x1]
        %vm618 = vcmask 261120
        %v619 = vsel %vm618, %v588, 0.0
        %620 = vadd.xlane.f32.xlu0 %v619
        %v621 = vpop.xlane.xlu0 %620
        %v622 = vrcp.pop 32.0
        %v623 = vmul.f32 %v621, %v622
        %v624 = vsub.f32 %v588, %v623
        %v625 = vmul.f32 %v624, %v624
        %v626 = vsel %vm618, %v625, 0.0
        %627 = vadd.xlane.f32.xlu0 %v626
        %v628 = vpop.xlane.xlu0 %627
        %v629 = vmul.f32 %v628, %v622
        %v630 = vadd.f32 %v629, 1e-05
        %v631 = vrsqrt.pop %v630
        %v632 = vmul.f32 %v624, %v631
        %v634 = vlaneseq
        %v635 = vshrl.u32 %v634, 7
        %v636 = vsub.s32 0, %v635
        %v637 = vrot.slane %v590, %v636
        %v639 = vmul.f32 %v632, %v637
        %v641 = vlaneseq
        %v642 = vshrl.u32 %v641, 7
        %v643 = vsub.s32 0, %v642
        %v644 = vrot.slane %v591, %v643
        %v646 = vadd.f32 %v639, %v644
        %v647 = vsel %vm618, %v589, 0.0
        %648 = vadd.xlane.f32.xlu0 %v647
        %v649 = vpop.xlane.xlu0 %648
        %v650 = vmul.f32 %v649, %v622
        %v651 = vsub.f32 %v589, %v650
        %v652 = vmul.f32 %v651, %v651
        %v653 = vsel %vm618, %v652, 0.0
        %654 = vadd.xlane.f32.xlu0 %v653
        %v655 = vpop.xlane.xlu0 %654
        %v656 = vmul.f32 %v655, %v622
        %v657 = vadd.f32 %v656, 1e-05
        %v658 = vrsqrt.pop %v657
        %v659 = vmul.f32 %v651, %v658
        %v660 = vmul.f32 %v659, %v637
        %v661 = vadd.f32 %v660, %v644
        %v662 = vpack.c.bf16 %v646, %v646
        %v664 = vlaneseq
        %v665 = vshrl.u32 %v664, 7
        %v666 = vsub.s32 0, %v665
        %v667 = vrot.slane %v596, %v666
        %v673 = vunpack.c.l.b16 %v592
        %v674 = vunpack.c.l.b16 %v593
        %v675 = vunpack.c.l.b16 %v594
        %v676 = vunpack.c.l.b16 %v595
        %v677 = vpack.c.b16 %v674, %v673
        %v678 = vpack.c.b16 %v676, %v675
        %v682 = vsel %vm618, %v662, 0
        %684 = vmatprep.subr.bf16.mxu0 0
        %685 = vmatpush1.bf16.msra.mxu0 %v677
        %686 = vmatprep.subr.bf16.mxu0 0
        %687 = vmatpush1.bf16.msra.mxu0 %v678
        %688 = vmatprep.subr.bf16.mxu0 0
        %689 = vmatpush1.bf16.msra.mxu0 0
        %690 = vmatprep.subr.bf16.mxu0 0
        %691 = vmatpush1.bf16.msra.mxu0 0
        %692 = vmatprep.subr.bf16.mxu0 0
        %693 = vmatpush1.bf16.msra.mxu0 0
        %694 = vmatprep.subr.bf16.mxu0 0
        %695 = vmatpush1.bf16.msra.mxu0 0
        %696 = vmatprep.subr.bf16.mxu0 0
        %697 = vmatpush1.bf16.msra.mxu0 0
        %698 = vmatprep.subr.bf16.mxu0 0
        %699 = vmatpush1.bf16.msra.mxu0 0
        %700 = vmatprep.subr.bf16.mxu0 0
        %701 = vmatpush1.bf16.msra.mxu0 0
        %702 = vmatprep.subr.bf16.mxu0 0
        %703 = vmatpush1.bf16.msra.mxu0 0
        %704 = vmatprep.subr.bf16.mxu0 0
        %705 = vmatpush1.bf16.msra.mxu0 0
        %706 = vmatprep.subr.bf16.mxu0 0
        %707 = vmatpush1.bf16.msra.mxu0 0
        %708 = vmatprep.subr.bf16.mxu0 0
        %709 = vmatpush1.bf16.msra.mxu0 0
        %710 = vmatprep.subr.bf16.mxu0 0
        %711 = vmatpush1.bf16.msra.mxu0 0
        %712 = vmatprep.subr.bf16.mxu0 0
        %713 = vmatpush1.bf16.msra.mxu0 0
        %714 = vmatprep.subr.bf16.mxu0 0
        %715 = vmatpush1.bf16.msra.mxu0 0
        %716 = vmatprep.mubr.bf16.mxu0 0
        %717 = vmatmul.mubr.bf16.gmra.mrb[0].mxu0 %v682
        %v718 = vpop.f32.mrb[0].mxu0
        %v719 = vadd.f32 %v667, %v718
        %v720 = vpop.f32.mrb[0].mxu0
        %v721 = vpop.f32.mrb[0].mxu0
        %v722 = vpop.f32.mrb[0].mxu0
        %723 = vdwg.mxu0
        %v724 = vpack.c.bf16 %v661, %v661
        %v726 = vlaneseq
        %v727 = vshrl.u32 %v726, 7
        %v728 = vsub.s32 0, %v727
        %v729 = vrot.slane %v601, %v728
        %v735 = vunpack.c.l.b16 %v597
        %v736 = vunpack.c.l.b16 %v598
        %v737 = vunpack.c.l.b16 %v599
        %v738 = vunpack.c.l.b16 %v600
        %v739 = vpack.c.b16 %v736, %v735
        %v740 = vpack.c.b16 %v738, %v737
        %v744 = vsel %vm618, %v724, 0
        %746 = vmatprep.subr.bf16.mxu0 0
        %747 = vmatpush1.bf16.msra.mxu0 %v739
        %748 = vmatprep.subr.bf16.mxu0 0
        %749 = vmatpush1.bf16.msra.mxu0 %v740
        %750 = vmatprep.subr.bf16.mxu0 0
        %751 = vmatpush1.bf16.msra.mxu0 0
        %752 = vmatprep.subr.bf16.mxu0 0
        %753 = vmatpush1.bf16.msra.mxu0 0
        %754 = vmatprep.subr.bf16.mxu0 0
        %755 = vmatpush1.bf16.msra.mxu0 0
        %756 = vmatprep.subr.bf16.mxu0 0
        %757 = vmatpush1.bf16.msra.mxu0 0
        %758 = vmatprep.subr.bf16.mxu0 0
        %759 = vmatpush1.bf16.msra.mxu0 0
        %760 = vmatprep.subr.bf16.mxu0 0
        %761 = vmatpush1.bf16.msra.mxu0 0
        %762 = vmatprep.subr.bf16.mxu0 0
        %763 = vmatpush1.bf16.msra.mxu0 0
        %764 = vmatprep.subr.bf16.mxu0 0
        %765 = vmatpush1.bf16.msra.mxu0 0
        %766 = vmatprep.subr.bf16.mxu0 0
        %767 = vmatpush1.bf16.msra.mxu0 0
        %768 = vmatprep.subr.bf16.mxu0 0
        %769 = vmatpush1.bf16.msra.mxu0 0
        %770 = vmatprep.subr.bf16.mxu0 0
        %771 = vmatpush1.bf16.msra.mxu0 0
        %772 = vmatprep.subr.bf16.mxu0 0
        %773 = vmatpush1.bf16.msra.mxu0 0
        %774 = vmatprep.subr.bf16.mxu0 0
        %775 = vmatpush1.bf16.msra.mxu0 0
        %776 = vmatprep.subr.bf16.mxu0 0
        %777 = vmatpush1.bf16.msra.mxu0 0
        %778 = vmatprep.mubr.bf16.mxu0 0
        %779 = vmatmul.mubr.bf16.gmra.mrb[0].mxu0 %v744
        %v780 = vpop.f32.mrb[0].mxu0
        %v781 = vadd.f32 %v729, %v780
        %v782 = vpop.f32.mrb[0].mxu0
        %v783 = vpop.f32.mrb[0].mxu0
        %v784 = vpop.f32.mrb[0].mxu0
        %785 = vdwg.mxu0
        %787 = vrot.lane.b32.xlu0 %v719, 120
        %v788 = vpop.permute.xlu0 %787
        %790 = vrot.lane.b32.xlu0 %v719, 112
        %v791 = vpop.permute.xlu0 %790
        %793 = vrot.lane.b32.xlu0 %v719, 104
        %v794 = vpop.permute.xlu0 %793
        %v796 = vcombine.low %v719, %v791
        %v797 = vcombine.high %v719, %v791
        %v799 = vunpack.c.l.s4 1983009808
        %v800 = vunpack.c.0.s8 %v799
        %v801 = vlaneseq
        %v802 = vshrl.u32 %v801, 7
        %v803 = vsub.s32 %v800, %v802
        %v804 = vrot.slane %v796, %v803
        %v806 = vunpack.c.l.s4 1983009808
        %v807 = vunpack.c.0.s8 %v806
        %v808 = vlaneseq
        %v809 = vshrl.u32 %v808, 7
        %v810 = vsub.s32 %v807, %v809
        %v811 = vrot.slane %v797, %v810
        %v812 = vcombine.low %v788, %v794
        %v813 = vcombine.high %v788, %v794
        %v815 = vunpack.c.l.s4 1983009808
        %v816 = vunpack.c.0.s8 %v815
        %v817 = vlaneseq
        %v818 = vshrl.u32 %v817, 7
        %v819 = vsub.s32 %v816, %v818
        %v820 = vrot.slane %v812, %v819
        %v822 = vunpack.c.l.s4 1983009808
        %v823 = vunpack.c.0.s8 %v822
        %v824 = vlaneseq
        %v825 = vshrl.u32 %v824, 7
        %v826 = vsub.s32 %v823, %v825
        %v827 = vrot.slane %v813, %v826
        %v828 = vcombine.low %v804, %v820
        %v829 = vcombine.high %v804, %v820
        %v831 = vunpack.c.l.s4 1934713408
        %v832 = vunpack.c.0.s8 %v831
        %v833 = vlaneseq
        %v834 = vshrl.u32 %v833, 7
        %v835 = vsub.s32 %v832, %v834
        %v836 = vrot.slane %v828, %v835
        %v838 = vunpack.c.l.s4 1934713408
        %v839 = vunpack.c.0.s8 %v838
        %v840 = vlaneseq
        %v841 = vshrl.u32 %v840, 7
        %v842 = vsub.s32 %v839, %v841
        %v843 = vrot.slane %v829, %v842
        %v844 = vcombine.low %v811, %v827
        %v845 = vcombine.high %v811, %v827
        %v847 = vunpack.c.l.s4 1934713408
        %v848 = vunpack.c.0.s8 %v847
        %v849 = vlaneseq
        %v850 = vshrl.u32 %v849, 7
        %v851 = vsub.s32 %v848, %v850
        %v852 = vrot.slane %v844, %v851
        %v854 = vunpack.c.l.s4 1934713408
        %v855 = vunpack.c.0.s8 %v854
        %v856 = vlaneseq
        %v857 = vshrl.u32 %v856, 7
        %v858 = vsub.s32 %v855, %v857
        %v859 = vrot.slane %v845, %v858
        %v860 = vcombine.high %v836, 0.0
        %v861 = vcombine.high %v843, 0.0
        %v862 = vcombine.high %v852, 0.0
        %v863 = vcombine.high %v859, 0.0
        %v864 = vcombine.low %v836, %v843
        %v866 = vunpack.c.l.s4 1983009808
        %v867 = vunpack.c.0.s8 %v866
        %v868 = vlaneseq
        %v869 = vshrl.u32 %v868, 7
        %v870 = vsub.s32 %v867, %v869
        %v871 = vrot.slane %v864, %v870
        %v872 = vcombine.low %v860, %v861
        %v874 = vunpack.c.l.s4 1983009808
        %v875 = vunpack.c.0.s8 %v874
        %v876 = vlaneseq
        %v877 = vshrl.u32 %v876, 7
        %v878 = vsub.s32 %v875, %v877
        %v879 = vrot.slane %v872, %v878
        %v880 = vcombine.low %v852, %v859
        %v882 = vunpack.c.l.s4 1983009808
        %v883 = vunpack.c.0.s8 %v882
        %v884 = vlaneseq
        %v885 = vshrl.u32 %v884, 7
        %v886 = vsub.s32 %v883, %v885
        %v887 = vrot.slane %v880, %v886
        %v888 = vcombine.low %v862, %v863
        %v890 = vunpack.c.l.s4 1983009808
        %v891 = vunpack.c.0.s8 %v890
        %v892 = vlaneseq
        %v893 = vshrl.u32 %v892, 7
        %v894 = vsub.s32 %v891, %v893
        %v895 = vrot.slane %v888, %v894
        %v896 = vcombine.low %v871, %v879
        %v897 = vcombine.high %v871, %v879
        %v899 = vunpack.c.l.s4 1934713408
        %v900 = vunpack.c.0.s8 %v899
        %v901 = vlaneseq
        %v902 = vshrl.u32 %v901, 7
        %v903 = vsub.s32 %v900, %v902
        %v904 = vrot.slane %v896, %v903
        %v906 = vunpack.c.l.s4 1934713408
        %v907 = vunpack.c.0.s8 %v906
        %v908 = vlaneseq
        %v909 = vshrl.u32 %v908, 7
        %v910 = vsub.s32 %v907, %v909
        %v911 = vrot.slane %v897, %v910
        %v912 = vcombine.low %v887, %v895
        %v913 = vcombine.high %v887, %v895
        %v915 = vunpack.c.l.s4 1934713408
        %v916 = vunpack.c.0.s8 %v915
        %v917 = vlaneseq
        %v918 = vshrl.u32 %v917, 7
        %v919 = vsub.s32 %v916, %v918
        %v920 = vrot.slane %v912, %v919
        %v922 = vunpack.c.l.s4 1934713408
        %v923 = vunpack.c.0.s8 %v922
        %v924 = vlaneseq
        %v925 = vshrl.u32 %v924, 7
        %v926 = vsub.s32 %v923, %v925
        %v927 = vrot.slane %v913, %v926
        %v928 = vcombine.low %v904, %v920
        %v929 = vcombine.high %v904, %v920
        %v930 = vcombine.low %v911, %v927
        %v931 = vcombine.high %v911, %v927
        %v932 = vpack.c.bf16 %v928, %v928
        %v933 = vpack.c.bf16 %v929, %v929
        %v934 = vpack.c.bf16 %v930, %v930
        %v935 = vpack.c.bf16 %v931, %v931
        %937 = vrot.lane.b32.xlu0 %v781, 120
        %v938 = vpop.permute.xlu0 %937
        %940 = vrot.lane.b32.xlu0 %v781, 112
        %v941 = vpop.permute.xlu0 %940
        %943 = vrot.lane.b32.xlu0 %v781, 104
        %v944 = vpop.permute.xlu0 %943
        %v946 = vcombine.low %v781, %v941
        %v947 = vcombine.high %v781, %v941
        %v949 = vunpack.c.l.s4 1983009808
        %v950 = vunpack.c.0.s8 %v949
        %v951 = vlaneseq
        %v952 = vshrl.u32 %v951, 7
        %v953 = vsub.s32 %v950, %v952
        %v954 = vrot.slane %v946, %v953
        %v956 = vunpack.c.l.s4 1983009808
        %v957 = vunpack.c.0.s8 %v956
        %v958 = vlaneseq
        %v959 = vshrl.u32 %v958, 7
        %v960 = vsub.s32 %v957, %v959
        %v961 = vrot.slane %v947, %v960
        %v962 = vcombine.low %v938, %v944
        %v963 = vcombine.high %v938, %v944
        %v965 = vunpack.c.l.s4 1983009808
        %v966 = vunpack.c.0.s8 %v965
        %v967 = vlaneseq
        %v968 = vshrl.u32 %v967, 7
        %v969 = vsub.s32 %v966, %v968
        %v970 = vrot.slane %v962, %v969
        %v972 = vunpack.c.l.s4 1983009808
        %v973 = vunpack.c.0.s8 %v972
        %v974 = vlaneseq
        %v975 = vshrl.u32 %v974, 7
        %v976 = vsub.s32 %v973, %v975
        %v977 = vrot.slane %v963, %v976
        %v978 = vcombine.low %v954, %v970
        %v979 = vcombine.high %v954, %v970
        %v981 = vunpack.c.l.s4 1934713408
        %v982 = vunpack.c.0.s8 %v981
        %v983 = vlaneseq
        %v984 = vshrl.u32 %v983, 7
        %v985 = vsub.s32 %v982, %v984
        %v986 = vrot.slane %v978, %v985
        %v988 = vunpack.c.l.s4 1934713408
        %v989 = vunpack.c.0.s8 %v988
        %v990 = vlaneseq
        %v991 = vshrl.u32 %v990, 7
        %v992 = vsub.s32 %v989, %v991
        %v993 = vrot.slane %v979, %v992
        %v994 = vcombine.low %v961, %v977
        %v995 = vcombine.high %v961, %v977
        %v997 = vunpack.c.l.s4 1934713408
        %v998 = vunpack.c.0.s8 %v997
        %v999 = vlaneseq
        %v1000 = vshrl.u32 %v999, 7
        %v1001 = vsub.s32 %v998, %v1000
        %v1002 = vrot.slane %v994, %v1001
        %v1004 = vunpack.c.l.s4 1934713408
        %v1005 = vunpack.c.0.s8 %v1004
        %v1006 = vlaneseq
        %v1007 = vshrl.u32 %v1006, 7
        %v1008 = vsub.s32 %v1005, %v1007
        %v1009 = vrot.slane %v995, %v1008
        %v1010 = vcombine.high %v986, 0.0
        %v1011 = vcombine.high %v993, 0.0
        %v1012 = vcombine.high %v1002, 0.0
        %v1013 = vcombine.high %v1009, 0.0
        %v1014 = vcombine.low %v986, %v993
        %v1016 = vunpack.c.l.s4 1983009808
        %v1017 = vunpack.c.0.s8 %v1016
        %v1018 = vlaneseq
        %v1019 = vshrl.u32 %v1018, 7
        %v1020 = vsub.s32 %v1017, %v1019
        %v1021 = vrot.slane %v1014, %v1020
        %v1022 = vcombine.low %v1010, %v1011
        %v1024 = vunpack.c.l.s4 1983009808
        %v1025 = vunpack.c.0.s8 %v1024
        %v1026 = vlaneseq
        %v1027 = vshrl.u32 %v1026, 7
        %v1028 = vsub.s32 %v1025, %v1027
        %v1029 = vrot.slane %v1022, %v1028
        %v1030 = vcombine.low %v1002, %v1009
        %v1032 = vunpack.c.l.s4 1983009808
        %v1033 = vunpack.c.0.s8 %v1032
        %v1034 = vlaneseq
        %v1035 = vshrl.u32 %v1034, 7
        %v1036 = vsub.s32 %v1033, %v1035
        %v1037 = vrot.slane %v1030, %v1036
        %v1038 = vcombine.low %v1012, %v1013
        %v1040 = vunpack.c.l.s4 1983009808
        %v1041 = vunpack.c.0.s8 %v1040
        %v1042 = vlaneseq
        %v1043 = vshrl.u32 %v1042, 7
        %v1044 = vsub.s32 %v1041, %v1043
        %v1045 = vrot.slane %v1038, %v1044
        %v1046 = vcombine.low %v1021, %v1029
        %v1047 = vcombine.high %v1021, %v1029
        %v1049 = vunpack.c.l.s4 1934713408
        %v1050 = vunpack.c.0.s8 %v1049
        %v1051 = vlaneseq
        %v1052 = vshrl.u32 %v1051, 7
        %v1053 = vsub.s32 %v1050, %v1052
        %v1054 = vrot.slane %v1046, %v1053
        %v1056 = vunpack.c.l.s4 1934713408
        %v1057 = vunpack.c.0.s8 %v1056
        %v1058 = vlaneseq
        %v1059 = vshrl.u32 %v1058, 7
        %v1060 = vsub.s32 %v1057, %v1059
        %v1061 = vrot.slane %v1047, %v1060
        %v1062 = vcombine.low %v1037, %v1045
        %v1063 = vcombine.high %v1037, %v1045
        %v1065 = vunpack.c.l.s4 1934713408
        %v1066 = vunpack.c.0.s8 %v1065
        %v1067 = vlaneseq
        %v1068 = vshrl.u32 %v1067, 7
        %v1069 = vsub.s32 %v1066, %v1068
        %v1070 = vrot.slane %v1062, %v1069
        %v1072 = vunpack.c.l.s4 1934713408
        %v1073 = vunpack.c.0.s8 %v1072
        %v1074 = vlaneseq
        %v1075 = vshrl.u32 %v1074, 7
        %v1076 = vsub.s32 %v1073, %v1075
        %v1077 = vrot.slane %v1063, %v1076
        %v1078 = vcombine.low %v1054, %v1070
        %v1079 = vcombine.high %v1054, %v1070
        %v1080 = vcombine.low %v1061, %v1077
        %v1081 = vcombine.high %v1061, %v1077
        %v1082 = vpack.c.bf16 %v1078, %v1078
        %v1083 = vpack.c.bf16 %v1079, %v1079
        %v1084 = vpack.c.bf16 %v1080, %v1080
        %v1085 = vpack.c.bf16 %v1081, %v1081
        %1086 = vrot.lane.b32.xlu0 %v781, 96
        %v1087 = vpop.permute.xlu0 %1086
        %1088 = vrot.lane.b32.xlu0 %v938, 96
        %v1089 = vpop.permute.xlu0 %1088
        %1090 = vrot.lane.b32.xlu0 %v941, 96
        %v1091 = vpop.permute.xlu0 %1090
        %1092 = vrot.lane.b32.xlu0 %v944, 96
        %v1093 = vpop.permute.xlu0 %1092
        %v1098 = vcombine.low %v1087, %v1091
        %v1099 = vcombine.high %v1087, %v1091
        %v1101 = vunpack.c.l.s4 1983009808
        %v1102 = vunpack.c.0.s8 %v1101
        %v1103 = vlaneseq
        %v1104 = vshrl.u32 %v1103, 7
        %v1105 = vsub.s32 %v1102, %v1104
        %v1106 = vrot.slane %v1098, %v1105
        %v1108 = vunpack.c.l.s4 1983009808
        %v1109 = vunpack.c.0.s8 %v1108
        %v1110 = vlaneseq
        %v1111 = vshrl.u32 %v1110, 7
        %v1112 = vsub.s32 %v1109, %v1111
        %v1113 = vrot.slane %v1099, %v1112
        %v1114 = vcombine.low %v1089, %v1093
        %v1115 = vcombine.high %v1089, %v1093
        %v1117 = vunpack.c.l.s4 1983009808
        %v1118 = vunpack.c.0.s8 %v1117
        %v1119 = vlaneseq
        %v1120 = vshrl.u32 %v1119, 7
        %v1121 = vsub.s32 %v1118, %v1120
        %v1122 = vrot.slane %v1114, %v1121
        %v1124 = vunpack.c.l.s4 1983009808
        %v1125 = vunpack.c.0.s8 %v1124
        %v1126 = vlaneseq
        %v1127 = vshrl.u32 %v1126, 7
        %v1128 = vsub.s32 %v1125, %v1127
        %v1129 = vrot.slane %v1115, %v1128
        %v1130 = vcombine.low %v1106, %v1122
        %v1131 = vcombine.high %v1106, %v1122
        %v1133 = vunpack.c.l.s4 1934713408
        %v1134 = vunpack.c.0.s8 %v1133
        %v1135 = vlaneseq
        %v1136 = vshrl.u32 %v1135, 7
        %v1137 = vsub.s32 %v1134, %v1136
        %v1138 = vrot.slane %v1130, %v1137
        %v1140 = vunpack.c.l.s4 1934713408
        %v1141 = vunpack.c.0.s8 %v1140
        %v1142 = vlaneseq
        %v1143 = vshrl.u32 %v1142, 7
        %v1144 = vsub.s32 %v1141, %v1143
        %v1145 = vrot.slane %v1131, %v1144
        %v1146 = vcombine.low %v1113, %v1129
        %v1147 = vcombine.high %v1113, %v1129
        %v1149 = vunpack.c.l.s4 1934713408
        %v1150 = vunpack.c.0.s8 %v1149
        %v1151 = vlaneseq
        %v1152 = vshrl.u32 %v1151, 7
        %v1153 = vsub.s32 %v1150, %v1152
        %v1154 = vrot.slane %v1146, %v1153
        %v1156 = vunpack.c.l.s4 1934713408
        %v1157 = vunpack.c.0.s8 %v1156
        %v1158 = vlaneseq
        %v1159 = vshrl.u32 %v1158, 7
        %v1160 = vsub.s32 %v1157, %v1159
        %v1161 = vrot.slane %v1147, %v1160
        %v1162 = vcombine.high %v1138, 0.0
        %v1163 = vcombine.high %v1145, 0.0
        %v1164 = vcombine.high %v1154, 0.0
        %v1165 = vcombine.high %v1161, 0.0
        %v1166 = vcombine.low %v1138, %v1145
        %v1168 = vunpack.c.l.s4 1983009808
        %v1169 = vunpack.c.0.s8 %v1168
        %v1170 = vlaneseq
        %v1171 = vshrl.u32 %v1170, 7
        %v1172 = vsub.s32 %v1169, %v1171
        %v1173 = vrot.slane %v1166, %v1172
        %v1174 = vcombine.low %v1162, %v1163
        %v1176 = vunpack.c.l.s4 1983009808
        %v1177 = vunpack.c.0.s8 %v1176
        %v1178 = vlaneseq
        %v1179 = vshrl.u32 %v1178, 7
        %v1180 = vsub.s32 %v1177, %v1179
        %v1181 = vrot.slane %v1174, %v1180
        %v1182 = vcombine.low %v1154, %v1161
        %v1184 = vunpack.c.l.s4 1983009808
        %v1185 = vunpack.c.0.s8 %v1184
        %v1186 = vlaneseq
        %v1187 = vshrl.u32 %v1186, 7
        %v1188 = vsub.s32 %v1185, %v1187
        %v1189 = vrot.slane %v1182, %v1188
        %v1190 = vcombine.low %v1164, %v1165
        %v1192 = vunpack.c.l.s4 1983009808
        %v1193 = vunpack.c.0.s8 %v1192
        %v1194 = vlaneseq
        %v1195 = vshrl.u32 %v1194, 7
        %v1196 = vsub.s32 %v1193, %v1195
        %v1197 = vrot.slane %v1190, %v1196
        %v1198 = vcombine.low %v1173, %v1181
        %v1199 = vcombine.high %v1173, %v1181
        %v1201 = vunpack.c.l.s4 1934713408
        %v1202 = vunpack.c.0.s8 %v1201
        %v1203 = vlaneseq
        %v1204 = vshrl.u32 %v1203, 7
        %v1205 = vsub.s32 %v1202, %v1204
        %v1206 = vrot.slane %v1198, %v1205
        %v1208 = vunpack.c.l.s4 1934713408
        %v1209 = vunpack.c.0.s8 %v1208
        %v1210 = vlaneseq
        %v1211 = vshrl.u32 %v1210, 7
        %v1212 = vsub.s32 %v1209, %v1211
        %v1213 = vrot.slane %v1199, %v1212
        %v1214 = vcombine.low %v1189, %v1197
        %v1215 = vcombine.high %v1189, %v1197
        %v1217 = vunpack.c.l.s4 1934713408
        %v1218 = vunpack.c.0.s8 %v1217
        %v1219 = vlaneseq
        %v1220 = vshrl.u32 %v1219, 7
        %v1221 = vsub.s32 %v1218, %v1220
        %v1222 = vrot.slane %v1214, %v1221
        %v1224 = vunpack.c.l.s4 1934713408
        %v1225 = vunpack.c.0.s8 %v1224
        %v1226 = vlaneseq
        %v1227 = vshrl.u32 %v1226, 7
        %v1228 = vsub.s32 %v1225, %v1227
        %v1229 = vrot.slane %v1215, %v1228
        %v1230 = vcombine.low %v1206, %v1222
        %v1231 = vcombine.high %v1206, %v1222
        %v1232 = vcombine.low %v1213, %v1229
        %v1233 = vcombine.high %v1213, %v1229
        %v1234 = vpack.c.bf16 %v1230, %v1230
        %v1235 = vpack.c.bf16 %v1231, %v1231
        %v1236 = vpack.c.bf16 %v1232, %v1232
        %v1237 = vpack.c.bf16 %v1233, %v1233
        %vm1238 = vcmask 64512
        %v1240 = vsel %vm1238, %v932, 0
        %v1243 = vsel %vm1238, %v1082, 0
        %1245 = vmatprep.subr.bf16.mxu0 0
        %1246 = vmatpush1.bf16.xpose.msra.mxu0 %v1243
        %1247 = vmatprep.subr.bf16.mxu0 0
        %1248 = vmatpush1.bf16.xpose.msra.mxu0 0
        %1249 = vmatprep.subr.bf16.mxu0 0
        %1250 = vmatpush1.bf16.xpose.msra.mxu0 0
        %1251 = vmatprep.subr.bf16.mxu0 0
        %1252 = vmatpush1.bf16.xpose.msra.mxu0 0
        %1253 = vmatprep.subr.bf16.mxu0 0
        %1254 = vmatpush1.bf16.xpose.msra.mxu0 0
        %1255 = vmatprep.subr.bf16.mxu0 0
        %1256 = vmatpush1.bf16.xpose.msra.mxu0 0
        %1257 = vmatprep.subr.bf16.mxu0 0
        %1258 = vmatpush1.bf16.xpose.msra.mxu0 0
        %1259 = vmatprep.subr.bf16.mxu0 0
        %1260 = vmatpush1.bf16.xpose.msra.mxu0 0
        %1261 = vmatprep.subr.bf16.mxu0 0
        %1262 = vmatpush1.bf16.xpose.msra.mxu0 0
        %1263 = vmatprep.subr.bf16.mxu0 0
        %1264 = vmatpush1.bf16.xpose.msra.mxu0 0
        %1265 = vmatprep.subr.bf16.mxu0 0
        %1266 = vmatpush1.bf16.xpose.msra.mxu0 0
        %1267 = vmatprep.subr.bf16.mxu0 0
        %1268 = vmatpush1.bf16.xpose.msra.mxu0 0
        %1269 = vmatprep.subr.bf16.mxu0 0
        %1270 = vmatpush1.bf16.xpose.msra.mxu0 0
        %1271 = vmatprep.subr.bf16.mxu0 0
        %1272 = vmatpush1.bf16.xpose.msra.mxu0 0
        %1273 = vmatprep.subr.bf16.mxu0 0
        %1274 = vmatpush1.bf16.xpose.msra.mxu0 0
        %1275 = vmatprep.subr.bf16.mxu0 0
        %1276 = vmatpush1.bf16.xpose.msra.mxu0 0
        %1277 = vmatprep.mubr.bf16.mxu0 0
        %1278 = vmatmul.mubr.bf16.gmra.mrb[0].mxu0 %v1240
        %v1279 = vpop.f32.mrb[0].mxu0
        %v1280 = vadd.f32 0.0, %v1279
        %v1281 = vpop.f32.mrb[0].mxu0
        %v1282 = vpop.f32.mrb[0].mxu0
        %v1283 = vpop.f32.mrb[0].mxu0
        %1284 = vdwg.mxu0
        %v1286 = vsel %vm1238, %v933, 0
        %v1289 = vsel %vm1238, %v1083, 0
        %1291 = vmatprep.subr.bf16.mxu0 0
        %1292 = vmatpush1.bf16.xpose.msra.mxu0 %v1289
        %1293 = vmatprep.subr.bf16.mxu0 0
        %1294 = vmatpush1.bf16.xpose.msra.mxu0 0
        %1295 = vmatprep.subr.bf16.mxu0 0
        %1296 = vmatpush1.bf16.xpose.msra.mxu0 0
        %1297 = vmatprep.subr.bf16.mxu0 0
        %1298 = vmatpush1.bf16.xpose.msra.mxu0 0
        %1299 = vmatprep.subr.bf16.mxu0 0
        %1300 = vmatpush1.bf16.xpose.msra.mxu0 0
        %1301 = vmatprep.subr.bf16.mxu0 0
        %1302 = vmatpush1.bf16.xpose.msra.mxu0 0
        %1303 = vmatprep.subr.bf16.mxu0 0
        %1304 = vmatpush1.bf16.xpose.msra.mxu0 0
        %1305 = vmatprep.subr.bf16.mxu0 0
        %1306 = vmatpush1.bf16.xpose.msra.mxu0 0
        %1307 = vmatprep.subr.bf16.mxu0 0
        %1308 = vmatpush1.bf16.xpose.msra.mxu0 0
        %1309 = vmatprep.subr.bf16.mxu0 0
        %1310 = vmatpush1.bf16.xpose.msra.mxu0 0
        %1311 = vmatprep.subr.bf16.mxu0 0
        %1312 = vmatpush1.bf16.xpose.msra.mxu0 0
        %1313 = vmatprep.subr.bf16.mxu0 0
        %1314 = vmatpush1.bf16.xpose.msra.mxu0 0
        %1315 = vmatprep.subr.bf16.mxu0 0
        %1316 = vmatpush1.bf16.xpose.msra.mxu0 0
        %1317 = vmatprep.subr.bf16.mxu0 0
        %1318 = vmatpush1.bf16.xpose.msra.mxu0 0
        %1319 = vmatprep.subr.bf16.mxu0 0
        %1320 = vmatpush1.bf16.xpose.msra.mxu0 0
        %1321 = vmatprep.subr.bf16.mxu0 0
        %1322 = vmatpush1.bf16.xpose.msra.mxu0 0
        %1323 = vmatprep.mubr.bf16.mxu0 0
        %1324 = vmatmul.mubr.bf16.gmra.mrb[0].mxu0 %v1286
        %v1325 = vpop.f32.mrb[0].mxu0
        %v1326 = vadd.f32 0.0, %v1325
        %v1327 = vpop.f32.mrb[0].mxu0
        %v1328 = vpop.f32.mrb[0].mxu0
        %v1329 = vpop.f32.mrb[0].mxu0
        %1330 = vdwg.mxu0
        %v1332 = vsel %vm1238, %v934, 0
        %v1335 = vsel %vm1238, %v1084, 0
        %1337 = vmatprep.subr.bf16.mxu0 0
        %1338 = vmatpush1.bf16.xpose.msra.mxu0 %v1335
        %1339 = vmatprep.subr.bf16.mxu0 0
        %1340 = vmatpush1.bf16.xpose.msra.mxu0 0
        %1341 = vmatprep.subr.bf16.mxu0 0
        %1342 = vmatpush1.bf16.xpose.msra.mxu0 0
        %1343 = vmatprep.subr.bf16.mxu0 0
        %1344 = vmatpush1.bf16.xpose.msra.mxu0 0
        %1345 = vmatprep.subr.bf16.mxu0 0
        %1346 = vmatpush1.bf16.xpose.msra.mxu0 0
        %1347 = vmatprep.subr.bf16.mxu0 0
        %1348 = vmatpush1.bf16.xpose.msra.mxu0 0
        %1349 = vmatprep.subr.bf16.mxu0 0
        %1350 = vmatpush1.bf16.xpose.msra.mxu0 0
        %1351 = vmatprep.subr.bf16.mxu0 0
        %1352 = vmatpush1.bf16.xpose.msra.mxu0 0
        %1353 = vmatprep.subr.bf16.mxu0 0
        %1354 = vmatpush1.bf16.xpose.msra.mxu0 0
        %1355 = vmatprep.subr.bf16.mxu0 0
        %1356 = vmatpush1.bf16.xpose.msra.mxu0 0
        %1357 = vmatprep.subr.bf16.mxu0 0
        %1358 = vmatpush1.bf16.xpose.msra.mxu0 0
        %1359 = vmatprep.subr.bf16.mxu0 0
        %1360 = vmatpush1.bf16.xpose.msra.mxu0 0
        %1361 = vmatprep.subr.bf16.mxu0 0
        %1362 = vmatpush1.bf16.xpose.msra.mxu0 0
        %1363 = vmatprep.subr.bf16.mxu0 0
        %1364 = vmatpush1.bf16.xpose.msra.mxu0 0
        %1365 = vmatprep.subr.bf16.mxu0 0
        %1366 = vmatpush1.bf16.xpose.msra.mxu0 0
        %1367 = vmatprep.subr.bf16.mxu0 0
        %1368 = vmatpush1.bf16.xpose.msra.mxu0 0
        %1369 = vmatprep.mubr.bf16.mxu0 0
        %1370 = vmatmul.mubr.bf16.gmra.mrb[0].mxu0 %v1332
        %v1371 = vpop.f32.mrb[0].mxu0
        %v1372 = vadd.f32 0.0, %v1371
        %v1373 = vpop.f32.mrb[0].mxu0
        %v1374 = vpop.f32.mrb[0].mxu0
        %v1375 = vpop.f32.mrb[0].mxu0
        %1376 = vdwg.mxu0
        %v1378 = vsel %vm1238, %v935, 0
        %v1381 = vsel %vm1238, %v1085, 0
        %1383 = vmatprep.subr.bf16.mxu0 0
        %1384 = vmatpush1.bf16.xpose.msra.mxu0 %v1381
        %1385 = vmatprep.subr.bf16.mxu0 0
        %1386 = vmatpush1.bf16.xpose.msra.mxu0 0
        %1387 = vmatprep.subr.bf16.mxu0 0
        %1388 = vmatpush1.bf16.xpose.msra.mxu0 0
        %1389 = vmatprep.subr.bf16.mxu0 0
        %1390 = vmatpush1.bf16.xpose.msra.mxu0 0
        %1391 = vmatprep.subr.bf16.mxu0 0
        %1392 = vmatpush1.bf16.xpose.msra.mxu0 0
        %1393 = vmatprep.subr.bf16.mxu0 0
        %1394 = vmatpush1.bf16.xpose.msra.mxu0 0
        %1395 = vmatprep.subr.bf16.mxu0 0
        %1396 = vmatpush1.bf16.xpose.msra.mxu0 0
        %1397 = vmatprep.subr.bf16.mxu0 0
        %1398 = vmatpush1.bf16.xpose.msra.mxu0 0
        %1399 = vmatprep.subr.bf16.mxu0 0
        %1400 = vmatpush1.bf16.xpose.msra.mxu0 0
        %1401 = vmatprep.subr.bf16.mxu0 0
        %1402 = vmatpush1.bf16.xpose.msra.mxu0 0
        %1403 = vmatprep.subr.bf16.mxu0 0
        %1404 = vmatpush1.bf16.xpose.msra.mxu0 0
        %1405 = vmatprep.subr.bf16.mxu0 0
        %1406 = vmatpush1.bf16.xpose.msra.mxu0 0
        %1407 = vmatprep.subr.bf16.mxu0 0
        %1408 = vmatpush1.bf16.xpose.msra.mxu0 0
        %1409 = vmatprep.subr.bf16.mxu0 0
        %1410 = vmatpush1.bf16.xpose.msra.mxu0 0
        %1411 = vmatprep.subr.bf16.mxu0 0
        %1412 = vmatpush1.bf16.xpose.msra.mxu0 0
        %1413 = vmatprep.subr.bf16.mxu0 0
        %1414 = vmatpush1.bf16.xpose.msra.mxu0 0
        %1415 = vmatprep.mubr.bf16.mxu0 0
        %1416 = vmatmul.mubr.bf16.gmra.mrb[0].mxu0 %v1378
        %v1417 = vpop.f32.mrb[0].mxu0
        %v1418 = vadd.f32 0.0, %v1417
        %v1419 = vpop.f32.mrb[0].mxu0
        %v1420 = vpop.f32.mrb[0].mxu0
        %v1421 = vpop.f32.mrb[0].mxu0
        %1422 = vdwg.mxu0
        %v1423 = vsel %vm1238, %v1280, -inf
        %1424 = vmax.xlane.f32.xlu0 %v1423
        %v1425 = vpop.xlane.xlu0 %1424
        %v1426 = vsel %vm1238, %v1326, -inf
        %1427 = vmax.xlane.f32.xlu0 %v1426
        %v1428 = vpop.xlane.xlu0 %1427
        %v1429 = vsel %vm1238, %v1372, -inf
        %1430 = vmax.xlane.f32.xlu0 %v1429
        %v1431 = vpop.xlane.xlu0 %1430
        %v1432 = vsel %vm1238, %v1418, -inf
        %1433 = vmax.xlane.f32.xlu0 %v1432
        %v1434 = vpop.xlane.xlu0 %1433
        %v1435 = vsub.f32 %v1280, %v1425
        %v1436 = vsub.f32 %v1326, %v1428
        %v1437 = vsub.f32 %v1372, %v1431
        %v1438 = vsub.f32 %v1418, %v1434
        %v1439 = vmul.f32 %v1435, 1.442695
        %v1440 = vpow.pop %v1439
        %v1441 = vmul.f32 %v1436, 1.442695
        %v1442 = vpow.pop %v1441
        %v1443 = vmul.f32 %v1437, 1.442695
        %v1444 = vpow.pop %v1443
        %v1445 = vmul.f32 %v1438, 1.442695
        %v1446 = vpow.pop %v1445
        %v1447 = vsel %vm1238, %v1440, 0.0
        %1448 = vadd.xlane.f32.xlu0 %v1447
        %v1449 = vpop.xlane.xlu0 %1448
        %v1450 = vsel %vm1238, %v1442, 0.0
        %1451 = vadd.xlane.f32.xlu0 %v1450
        %v1452 = vpop.xlane.xlu0 %1451
        %v1453 = vsel %vm1238, %v1444, 0.0
        %1454 = vadd.xlane.f32.xlu0 %v1453
        %v1455 = vpop.xlane.xlu0 %1454
        %v1456 = vsel %vm1238, %v1446, 0.0
        %1457 = vadd.xlane.f32.xlu0 %v1456
        %v1458 = vpop.xlane.xlu0 %1457
        %v1459 = vrcp.pop %v1449
        %v1460 = vrcp.pop %v1452
        %v1461 = vrcp.pop %v1455
        %v1462 = vrcp.pop %v1458
        %v1463 = vmul.f32 %v1440, %v1459
        %v1464 = vmul.f32 %v1442, %v1460
        %v1465 = vmul.f32 %v1444, %v1461
        %v1466 = vmul.f32 %v1446, %v1462
        %v1467 = vpack.c.bf16 %v1463, %v1463
        %v1468 = vpack.c.bf16 %v1464, %v1464
        %v1469 = vpack.c.bf16 %v1465, %v1465
        %v1470 = vpack.c.bf16 %v1466, %v1466
        %v1472 = vsel %vm1238, %v1467, 0
        %vm1474 = vcmask 1043456
        %v1476 = vsel %vm1474, %v1234, 0
        %1478 = vmatprep.subr.bf16.mxu0 0
        %1479 = vmatpush1.bf16.msra.mxu0 %v1476
        %1480 = vmatprep.subr.bf16.mxu0 0
        %1481 = vmatpush1.bf16.msra.mxu0 0
        %1482 = vmatprep.subr.bf16.mxu0 0
        %1483 = vmatpush1.bf16.msra.mxu0 0
        %1484 = vmatprep.subr.bf16.mxu0 0
        %1485 = vmatpush1.bf16.msra.mxu0 0
        %1486 = vmatprep.subr.bf16.mxu0 0
        %1487 = vmatpush1.bf16.msra.mxu0 0
        %1488 = vmatprep.subr.bf16.mxu0 0
        %1489 = vmatpush1.bf16.msra.mxu0 0
        %1490 = vmatprep.subr.bf16.mxu0 0
        %1491 = vmatpush1.bf16.msra.mxu0 0
        %1492 = vmatprep.subr.bf16.mxu0 0
        %1493 = vmatpush1.bf16.msra.mxu0 0
        %1494 = vmatprep.subr.bf16.mxu0 0
        %1495 = vmatpush1.bf16.msra.mxu0 0
        %1496 = vmatprep.subr.bf16.mxu0 0
        %1497 = vmatpush1.bf16.msra.mxu0 0
        %1498 = vmatprep.subr.bf16.mxu0 0
        %1499 = vmatpush1.bf16.msra.mxu0 0
        %1500 = vmatprep.subr.bf16.mxu0 0
        %1501 = vmatpush1.bf16.msra.mxu0 0
        %1502 = vmatprep.subr.bf16.mxu0 0
        %1503 = vmatpush1.bf16.msra.mxu0 0
        %1504 = vmatprep.subr.bf16.mxu0 0
        %1505 = vmatpush1.bf16.msra.mxu0 0
        %1506 = vmatprep.subr.bf16.mxu0 0
        %1507 = vmatpush1.bf16.msra.mxu0 0
        %1508 = vmatprep.subr.bf16.mxu0 0
        %1509 = vmatpush1.bf16.msra.mxu0 0
        %1510 = vmatprep.mubr.bf16.mxu0 0
        %1511 = vmatmul.mubr.bf16.gmra.mrb[0].mxu0 %v1472
        %v1512 = vpop.f32.mrb[0].mxu0
        %v1513 = vadd.f32 0.0, %v1512
        %v1514 = vpop.f32.mrb[0].mxu0
        %v1515 = vpop.f32.mrb[0].mxu0
        %v1516 = vpop.f32.mrb[0].mxu0
        %1517 = vdwg.mxu0
        %v1519 = vsel %vm1238, %v1468, 0
        %v1522 = vsel %vm1474, %v1235, 0
        %1524 = vmatprep.subr.bf16.mxu0 0
        %1525 = vmatpush1.bf16.msra.mxu0 %v1522
        %1526 = vmatprep.subr.bf16.mxu0 0
        %1527 = vmatpush1.bf16.msra.mxu0 0
        %1528 = vmatprep.subr.bf16.mxu0 0
        %1529 = vmatpush1.bf16.msra.mxu0 0
        %1530 = vmatprep.subr.bf16.mxu0 0
        %1531 = vmatpush1.bf16.msra.mxu0 0
        %1532 = vmatprep.subr.bf16.mxu0 0
        %1533 = vmatpush1.bf16.msra.mxu0 0
        %1534 = vmatprep.subr.bf16.mxu0 0
        %1535 = vmatpush1.bf16.msra.mxu0 0
        %1536 = vmatprep.subr.bf16.mxu0 0
        %1537 = vmatpush1.bf16.msra.mxu0 0
        %1538 = vmatprep.subr.bf16.mxu0 0
        %1539 = vmatpush1.bf16.msra.mxu0 0
        %1540 = vmatprep.subr.bf16.mxu0 0
        %1541 = vmatpush1.bf16.msra.mxu0 0
        %1542 = vmatprep.subr.bf16.mxu0 0
        %1543 = vmatpush1.bf16.msra.mxu0 0
        %1544 = vmatprep.subr.bf16.mxu0 0
        %1545 = vmatpush1.bf16.msra.mxu0 0
        %1546 = vmatprep.subr.bf16.mxu0 0
        %1547 = vmatpush1.bf16.msra.mxu0 0
        %1548 = vmatprep.subr.bf16.mxu0 0
        %1549 = vmatpush1.bf16.msra.mxu0 0
        %1550 = vmatprep.subr.bf16.mxu0 0
        %1551 = vmatpush1.bf16.msra.mxu0 0
        %1552 = vmatprep.subr.bf16.mxu0 0
        %1553 = vmatpush1.bf16.msra.mxu0 0
        %1554 = vmatprep.subr.bf16.mxu0 0
        %1555 = vmatpush1.bf16.msra.mxu0 0
        %1556 = vmatprep.mubr.bf16.mxu0 0
        %1557 = vmatmul.mubr.bf16.gmra.mrb[0].mxu0 %v1519
        %v1558 = vpop.f32.mrb[0].mxu0
        %v1559 = vadd.f32 0.0, %v1558
        %v1560 = vpop.f32.mrb[0].mxu0
        %v1561 = vpop.f32.mrb[0].mxu0
        %v1562 = vpop.f32.mrb[0].mxu0
        %1563 = vdwg.mxu0
        %v1565 = vsel %vm1238, %v1469, 0
        %v1568 = vsel %vm1474, %v1236, 0
        %1570 = vmatprep.subr.bf16.mxu0 0
        %1571 = vmatpush1.bf16.msra.mxu0 %v1568
        %1572 = vmatprep.subr.bf16.mxu0 0
        %1573 = vmatpush1.bf16.msra.mxu0 0
        %1574 = vmatprep.subr.bf16.mxu0 0
        %1575 = vmatpush1.bf16.msra.mxu0 0
        %1576 = vmatprep.subr.bf16.mxu0 0
        %1577 = vmatpush1.bf16.msra.mxu0 0
        %1578 = vmatprep.subr.bf16.mxu0 0
        %1579 = vmatpush1.bf16.msra.mxu0 0
        %1580 = vmatprep.subr.bf16.mxu0 0
        %1581 = vmatpush1.bf16.msra.mxu0 0
        %1582 = vmatprep.subr.bf16.mxu0 0
        %1583 = vmatpush1.bf16.msra.mxu0 0
        %1584 = vmatprep.subr.bf16.mxu0 0
        %1585 = vmatpush1.bf16.msra.mxu0 0
        %1586 = vmatprep.subr.bf16.mxu0 0
        %1587 = vmatpush1.bf16.msra.mxu0 0
        %1588 = vmatprep.subr.bf16.mxu0 0
        %1589 = vmatpush1.bf16.msra.mxu0 0
        %1590 = vmatprep.subr.bf16.mxu0 0
        %1591 = vmatpush1.bf16.msra.mxu0 0
        %1592 = vmatprep.subr.bf16.mxu0 0
        %1593 = vmatpush1.bf16.msra.mxu0 0
        %1594 = vmatprep.subr.bf16.mxu0 0
        %1595 = vmatpush1.bf16.msra.mxu0 0
        %1596 = vmatprep.subr.bf16.mxu0 0
        %1597 = vmatpush1.bf16.msra.mxu0 0
        %1598 = vmatprep.subr.bf16.mxu0 0
        %1599 = vmatpush1.bf16.msra.mxu0 0
        %1600 = vmatprep.subr.bf16.mxu0 0
        %1601 = vmatpush1.bf16.msra.mxu0 0
        %1602 = vmatprep.mubr.bf16.mxu0 0
        %1603 = vmatmul.mubr.bf16.gmra.mrb[0].mxu0 %v1565
        %v1604 = vpop.f32.mrb[0].mxu0
        %v1605 = vadd.f32 0.0, %v1604
        %v1606 = vpop.f32.mrb[0].mxu0
        %v1607 = vpop.f32.mrb[0].mxu0
        %v1608 = vpop.f32.mrb[0].mxu0
        %1609 = vdwg.mxu0
        %v1611 = vsel %vm1238, %v1470, 0
        %v1614 = vsel %vm1474, %v1237, 0
        %1616 = vmatprep.subr.bf16.mxu0 0
        %1617 = vmatpush1.bf16.msra.mxu0 %v1614
        %1618 = vmatprep.subr.bf16.mxu0 0
        %1619 = vmatpush1.bf16.msra.mxu0 0
        %1620 = vmatprep.subr.bf16.mxu0 0
        %1621 = vmatpush1.bf16.msra.mxu0 0
        %1622 = vmatprep.subr.bf16.mxu0 0
        %1623 = vmatpush1.bf16.msra.mxu0 0
        %1624 = vmatprep.subr.bf16.mxu0 0
        %1625 = vmatpush1.bf16.msra.mxu0 0
        %1626 = vmatprep.subr.bf16.mxu0 0
        %1627 = vmatpush1.bf16.msra.mxu0 0
        %1628 = vmatprep.subr.bf16.mxu0 0
        %1629 = vmatpush1.bf16.msra.mxu0 0
        %1630 = vmatprep.subr.bf16.mxu0 0
        %1631 = vmatpush1.bf16.msra.mxu0 0
        %1632 = vmatprep.subr.bf16.mxu0 0
        %1633 = vmatpush1.bf16.msra.mxu0 0
        %1634 = vmatprep.subr.bf16.mxu0 0
        %1635 = vmatpush1.bf16.msra.mxu0 0
        %1636 = vmatprep.subr.bf16.mxu0 0
        %1637 = vmatpush1.bf16.msra.mxu0 0
        %1638 = vmatprep.subr.bf16.mxu0 0
        %1639 = vmatpush1.bf16.msra.mxu0 0
        %1640 = vmatprep.subr.bf16.mxu0 0
        %1641 = vmatpush1.bf16.msra.mxu0 0
        %1642 = vmatprep.subr.bf16.mxu0 0
        %1643 = vmatpush1.bf16.msra.mxu0 0
        %1644 = vmatprep.subr.bf16.mxu0 0
        %1645 = vmatpush1.bf16.msra.mxu0 0
        %1646 = vmatprep.subr.bf16.mxu0 0
        %1647 = vmatpush1.bf16.msra.mxu0 0
        %1648 = vmatprep.mubr.bf16.mxu0 0
        %1649 = vmatmul.mubr.bf16.gmra.mrb[0].mxu0 %v1611
        %v1650 = vpop.f32.mrb[0].mxu0
        %v1651 = vadd.f32 0.0, %v1650
        %v1652 = vpop.f32.mrb[0].mxu0
        %v1653 = vpop.f32.mrb[0].mxu0
        %v1654 = vpop.f32.mrb[0].mxu0
        %1655 = vdwg.mxu0
        %v1656 = vcombine.low %v1513, %v1605
        %v1657 = vcombine.high %v1513, %v1605
        %v1659 = vunpack.c.l.s4 1983009808
        %v1660 = vunpack.c.0.s8 %v1659
        %v1661 = vlaneseq
        %v1662 = vshrl.u32 %v1661, 7
        %v1663 = vsub.s32 %v1660, %v1662
        %v1664 = vrot.slane %v1656, %v1663
        %v1666 = vunpack.c.l.s4 1983009808
        %v1667 = vunpack.c.0.s8 %v1666
        %v1668 = vlaneseq
        %v1669 = vshrl.u32 %v1668, 7
        %v1670 = vsub.s32 %v1667, %v1669
        %v1671 = vrot.slane %v1657, %v1670
        %v1672 = vcombine.low %v1559, %v1651
        %v1673 = vcombine.high %v1559, %v1651
        %v1675 = vunpack.c.l.s4 1983009808
        %v1676 = vunpack.c.0.s8 %v1675
        %v1677 = vlaneseq
        %v1678 = vshrl.u32 %v1677, 7
        %v1679 = vsub.s32 %v1676, %v1678
        %v1680 = vrot.slane %v1672, %v1679
        %v1682 = vunpack.c.l.s4 1983009808
        %v1683 = vunpack.c.0.s8 %v1682
        %v1684 = vlaneseq
        %v1685 = vshrl.u32 %v1684, 7
        %v1686 = vsub.s32 %v1683, %v1685
        %v1687 = vrot.slane %v1673, %v1686
        %v1688 = vcombine.low %v1664, %v1680
        %v1689 = vcombine.high %v1664, %v1680
        %v1691 = vunpack.c.l.s4 1934713408
        %v1692 = vunpack.c.0.s8 %v1691
        %v1693 = vlaneseq
        %v1694 = vshrl.u32 %v1693, 7
        %v1695 = vsub.s32 %v1692, %v1694
        %v1696 = vrot.slane %v1688, %v1695
        %v1698 = vunpack.c.l.s4 1934713408
        %v1699 = vunpack.c.0.s8 %v1698
        %v1700 = vlaneseq
        %v1701 = vshrl.u32 %v1700, 7
        %v1702 = vsub.s32 %v1699, %v1701
        %v1703 = vrot.slane %v1689, %v1702
        %v1704 = vcombine.low %v1671, %v1687
        %v1705 = vcombine.high %v1671, %v1687
        %v1707 = vunpack.c.l.s4 1934713408
        %v1708 = vunpack.c.0.s8 %v1707
        %v1709 = vlaneseq
        %v1710 = vshrl.u32 %v1709, 7
        %v1711 = vsub.s32 %v1708, %v1710
        %v1712 = vrot.slane %v1704, %v1711
        %v1714 = vunpack.c.l.s4 1934713408
        %v1715 = vunpack.c.0.s8 %v1714
        %v1716 = vlaneseq
        %v1717 = vshrl.u32 %v1716, 7
        %v1718 = vsub.s32 %v1715, %v1717
        %v1719 = vrot.slane %v1705, %v1718
        %v1720 = vcombine.high %v1696, 0.0
        %v1721 = vcombine.high %v1703, 0.0
        %v1722 = vcombine.high %v1712, 0.0
        %v1723 = vcombine.high %v1719, 0.0
        %v1724 = vcombine.low %v1696, %v1703
        %v1726 = vunpack.c.l.s4 1983009808
        %v1727 = vunpack.c.0.s8 %v1726
        %v1728 = vlaneseq
        %v1729 = vshrl.u32 %v1728, 7
        %v1730 = vsub.s32 %v1727, %v1729
        %v1731 = vrot.slane %v1724, %v1730
        %v1732 = vcombine.low %v1720, %v1721
        %v1734 = vunpack.c.l.s4 1983009808
        %v1735 = vunpack.c.0.s8 %v1734
        %v1736 = vlaneseq
        %v1737 = vshrl.u32 %v1736, 7
        %v1738 = vsub.s32 %v1735, %v1737
        %v1739 = vrot.slane %v1732, %v1738
        %v1740 = vcombine.low %v1712, %v1719
        %v1742 = vunpack.c.l.s4 1983009808
        %v1743 = vunpack.c.0.s8 %v1742
        %v1744 = vlaneseq
        %v1745 = vshrl.u32 %v1744, 7
        %v1746 = vsub.s32 %v1743, %v1745
        %v1747 = vrot.slane %v1740, %v1746
        %v1748 = vcombine.low %v1722, %v1723
        %v1750 = vunpack.c.l.s4 1983009808
        %v1751 = vunpack.c.0.s8 %v1750
        %v1752 = vlaneseq
        %v1753 = vshrl.u32 %v1752, 7
        %v1754 = vsub.s32 %v1751, %v1753
        %v1755 = vrot.slane %v1748, %v1754
        %v1756 = vcombine.low %v1731, %v1739
        %v1757 = vcombine.high %v1731, %v1739
        %v1759 = vunpack.c.l.s4 1934713408
        %v1760 = vunpack.c.0.s8 %v1759
        %v1761 = vlaneseq
        %v1762 = vshrl.u32 %v1761, 7
        %v1763 = vsub.s32 %v1760, %v1762
        %v1764 = vrot.slane %v1756, %v1763
        %v1766 = vunpack.c.l.s4 1934713408
        %v1767 = vunpack.c.0.s8 %v1766
        %v1768 = vlaneseq
        %v1769 = vshrl.u32 %v1768, 7
        %v1770 = vsub.s32 %v1767, %v1769
        %v1771 = vrot.slane %v1757, %v1770
        %v1772 = vcombine.low %v1747, %v1755
        %v1773 = vcombine.high %v1747, %v1755
        %v1775 = vunpack.c.l.s4 1934713408
        %v1776 = vunpack.c.0.s8 %v1775
        %v1777 = vlaneseq
        %v1778 = vshrl.u32 %v1777, 7
        %v1779 = vsub.s32 %v1776, %v1778
        %v1780 = vrot.slane %v1772, %v1779
        %v1782 = vunpack.c.l.s4 1934713408
        %v1783 = vunpack.c.0.s8 %v1782
        %v1784 = vlaneseq
        %v1785 = vshrl.u32 %v1784, 7
        %v1786 = vsub.s32 %v1783, %v1785
        %v1787 = vrot.slane %v1773, %v1786
        %v1788 = vcombine.low %v1764, %v1780
        %v1789 = vcombine.high %v1764, %v1780
        %v1790 = vcombine.low %v1771, %v1787
        %v1791 = vcombine.high %v1771, %v1787
        %1793 = vrot.lane.b32.xlu0 %v1789, 8
        %v1794 = vpop.permute.xlu0 %1793
        %1797 = vrot.lane.b32.xlu0 %v1790, 16
        %v1798 = vpop.permute.xlu0 %1797
        %1801 = vrot.lane.b32.xlu0 %v1791, 24
        %v1802 = vpop.permute.xlu0 %1801
        %v1804 = vsel %vm1238, %v1788, %v1794
        %vm1805 = vcmask 130048
        %v1806 = vsel %vm1805, %v1804, %v1798
        %vm1807 = vcmask 195584
        %v1808 = vsel %vm1807, %v1806, %v1802
        %v1809 = vadd.f32 %v1808, %v588
        %v1810 = vsel %vm618, %v1809, 0.0
        %1811 = vadd.xlane.f32.xlu0 %v1810
        %v1812 = vpop.xlane.xlu0 %1811
        %v1813 = vmul.f32 %v1812, %v622
        %v1814 = vsub.f32 %v1809, %v1813
        %v1815 = vmul.f32 %v1814, %v1814
        %v1816 = vsel %vm618, %v1815, 0.0
        %1817 = vadd.xlane.f32.xlu0 %v1816
        %v1818 = vpop.xlane.xlu0 %1817
        %v1819 = vmul.f32 %v1818, %v622
        %v1820 = vadd.f32 %v1819, 1e-05
        %v1821 = vrsqrt.pop %v1820
        %v1822 = vmul.f32 %v1814, %v1821
        %v1824 = vlaneseq
        %v1825 = vshrl.u32 %v1824, 7
        %v1826 = vsub.s32 0, %v1825
        %v1827 = vrot.slane %v602, %v1826
        %v1829 = vmul.f32 %v1822, %v1827
        %v1831 = vlaneseq
        %v1832 = vshrl.u32 %v1831, 7
        %v1833 = vsub.s32 0, %v1832
        %v1834 = vrot.slane %v603, %v1833
        %v1836 = vadd.f32 %v1829, %v1834
        %v1837 = vpack.c.bf16 %v1836, %v1836
        %v1839 = vlaneseq
        %v1840 = vshrl.u32 %v1839, 7
        %v1841 = vsub.s32 0, %v1840
        %v1842 = vrot.slane %v608, %v1841
        %v1848 = vunpack.c.l.b16 %v604
        %v1849 = vunpack.c.l.b16 %v605
        %v1850 = vunpack.c.l.b16 %v606
        %v1851 = vunpack.c.l.b16 %v607
        %v1852 = vpack.c.b16 %v1849, %v1848
        %v1853 = vpack.c.b16 %v1851, %v1850
        %v1857 = vsel %vm618, %v1837, 0
        %1859 = vmatprep.subr.bf16.mxu0 0
        %1860 = vmatpush1.bf16.msra.mxu0 %v1852
        %1861 = vmatprep.subr.bf16.mxu0 0
        %1862 = vmatpush1.bf16.msra.mxu0 %v1853
        %1863 = vmatprep.subr.bf16.mxu0 0
        %1864 = vmatpush1.bf16.msra.mxu0 0
        %1865 = vmatprep.subr.bf16.mxu0 0
        %1866 = vmatpush1.bf16.msra.mxu0 0
        %1867 = vmatprep.subr.bf16.mxu0 0
        %1868 = vmatpush1.bf16.msra.mxu0 0
        %1869 = vmatprep.subr.bf16.mxu0 0
        %1870 = vmatpush1.bf16.msra.mxu0 0
        %1871 = vmatprep.subr.bf16.mxu0 0
        %1872 = vmatpush1.bf16.msra.mxu0 0
        %1873 = vmatprep.subr.bf16.mxu0 0
        %1874 = vmatpush1.bf16.msra.mxu0 0
        %1875 = vmatprep.subr.bf16.mxu0 0
        %1876 = vmatpush1.bf16.msra.mxu0 0
        %1877 = vmatprep.subr.bf16.mxu0 0
        %1878 = vmatpush1.bf16.msra.mxu0 0
        %1879 = vmatprep.subr.bf16.mxu0 0
        %1880 = vmatpush1.bf16.msra.mxu0 0
        %1881 = vmatprep.subr.bf16.mxu0 0
        %1882 = vmatpush1.bf16.msra.mxu0 0
        %1883 = vmatprep.subr.bf16.mxu0 0
        %1884 = vmatpush1.bf16.msra.mxu0 0
        %1885 = vmatprep.subr.bf16.mxu0 0
        %1886 = vmatpush1.bf16.msra.mxu0 0
        %1887 = vmatprep.subr.bf16.mxu0 0
        %1888 = vmatpush1.bf16.msra.mxu0 0
        %1889 = vmatprep.subr.bf16.mxu0 0
        %1890 = vmatpush1.bf16.msra.mxu0 0
        %1891 = vmatprep.mubr.bf16.mxu0 0
        %1892 = vmatmul.mubr.bf16.gmra.mrb[0].mxu0 %v1857
        %v1893 = vpop.f32.mrb[0].mxu0
        %v1894 = vadd.f32 %v1842, %v1893
        %v1895 = vpop.f32.mrb[0].mxu0
        %v1896 = vpop.f32.mrb[0].mxu0
        %v1897 = vpop.f32.mrb[0].mxu0
        %1898 = vdwg.mxu0
        %v1899 = vmul.f32 %v1894, 0.5
        %v1900 = vmul.f32 %v1894, 0.70710677
        %v1901 = verf.f32.pop %v1900
        %v1902 = vadd.f32 %v1901, 1.0
        %v1903 = vmul.f32 %v1899, %v1902
        %v1904 = vpack.c.bf16 %v1903, %v1903
        %v1906 = vlaneseq
        %v1907 = vshrl.u32 %v1906, 7
        %v1908 = vsub.s32 0, %v1907
        %v1909 = vrot.slane %v617, %v1908
        %v1919 = vunpack.c.l.b16 %v609
        %v1920 = vunpack.c.l.b16 %v610
        %v1921 = vunpack.c.l.b16 %v611
        %v1922 = vunpack.c.l.b16 %v612
        %v1923 = vunpack.c.l.b16 %v613
        %v1924 = vunpack.c.l.b16 %v614
        %v1925 = vunpack.c.l.b16 %v615
        %v1926 = vunpack.c.l.b16 %v616
        %v1927 = vpack.c.b16 %v1920, %v1919
        %v1928 = vpack.c.b16 %v1922, %v1921
        %v1929 = vpack.c.b16 %v1924, %v1923
        %v1930 = vpack.c.b16 %v1926, %v1925
        %vm1935 = vcmask 523264
        %v1937 = vsel %vm1935, %v1904, 0
        %1939 = vmatprep.subr.bf16.mxu0 0
        %1940 = vmatpush1.bf16.msra.mxu0 %v1927
        %1941 = vmatprep.subr.bf16.mxu0 0
        %1942 = vmatpush1.bf16.msra.mxu0 %v1928
        %1943 = vmatprep.subr.bf16.mxu0 0
        %1944 = vmatpush1.bf16.msra.mxu0 %v1929
        %1945 = vmatprep.subr.bf16.mxu0 0
        %1946 = vmatpush1.bf16.msra.mxu0 %v1930
        %1947 = vmatprep.subr.bf16.mxu0 0
        %1948 = vmatpush1.bf16.msra.mxu0 0
        %1949 = vmatprep.subr.bf16.mxu0 0
        %1950 = vmatpush1.bf16.msra.mxu0 0
        %1951 = vmatprep.subr.bf16.mxu0 0
        %1952 = vmatpush1.bf16.msra.mxu0 0
        %1953 = vmatprep.subr.bf16.mxu0 0
        %1954 = vmatpush1.bf16.msra.mxu0 0
        %1955 = vmatprep.subr.bf16.mxu0 0
        %1956 = vmatpush1.bf16.msra.mxu0 0
        %1957 = vmatprep.subr.bf16.mxu0 0
        %1958 = vmatpush1.bf16.msra.mxu0 0
        %1959 = vmatprep.subr.bf16.mxu0 0
        %1960 = vmatpush1.bf16.msra.mxu0 0
        %1961 = vmatprep.subr.bf16.mxu0 0
        %1962 = vmatpush1.bf16.msra.mxu0 0
        %1963 = vmatprep.subr.bf16.mxu0 0
        %1964 = vmatpush1.bf16.msra.mxu0 0
        %1965 = vmatprep.subr.bf16.mxu0 0
        %1966 = vmatpush1.bf16.msra.mxu0 0
        %1967 = vmatprep.subr.bf16.mxu0 0
        %1968 = vmatpush1.bf16.msra.mxu0 0
        %1969 = vmatprep.subr.bf16.mxu0 0
        %1970 = vmatpush1.bf16.msra.mxu0 0
        %1971 = vmatprep.mubr.bf16.mxu0 0
        %1972 = vmatmul.mubr.bf16.gmra.mrb[0].mxu0 %v1937
        %v1973 = vpop.f32.mrb[0].mxu0
        %v1974 = vadd.f32 %v1909, %v1973
        %v1975 = vpop.f32.mrb[0].mxu0
        %v1976 = vpop.f32.mrb[0].mxu0
        %v1977 = vpop.f32.mrb[0].mxu0
        %1978 = vdwg.mxu0
        %v1979 = vadd.f32 %v1974, %v1809
        %1980 = vst.msk [vmem:[%s586] sm:$0xff] %vm618, %v1979
        %p1981 = scmp.lt.s32.totalorder %s33, 1
        %s1982 = scalar_select %p1981, %s33, 1
        %p1983 = scmp.lt.s32.totalorder %s34, 0
        %s1984 = scalar_select %p1983, %s34, 0
        %s1985 = sadd.s32 %s1984, %s1982
        %s1986 = smul.addr %s1985, 8
        %s1987 = scalar_lea.vmem %s14, %s1986
        // Predicated region
        $region101: #{transformer_forward.2} parent=75 // pred_check
          %p1988 = pneg %p367
        $region102: #{transformer_forward.2} parent=75 // pred_check_branch
          %1990 = sbr.rel (%p1988) target = $region104
        $region103: #{transformer_forward.2} parent=75 // pred_region
          _
        $region104: #{transformer_forward.2} parent=75 // pred_fallthru
          _
      $region76: #{transformer_forward.2} parent=5 // pred_fallthru
        _
      %p1991 = scmp.le.s32.totalorder 2, %s24
      // Predicated region
      $region105: #{transformer_forward.2} parent=5 // pred_check
        %p1992 = pneg %p1991
      $region106: #{transformer_forward.2} parent=5 // pred_check_branch
        %1994 = sbr.rel (%p1992) target = $region108
      $region107: #{transformer_forward.2} parent=5 // pred_region
        %s1995 = ssub.s32 %s24, 2
        // Predicated region
        $region109: #{transformer_forward.2} parent=107 // pred_check
          %p1996 = pneg %p373
        $region110: #{transformer_forward.2} parent=107 // pred_check_branch
          %1998 = sbr.rel (%p1996) target = $region112
        $region111: #{transformer_forward.2} parent=107 // pred_region
          %p1999 = scmp.lt.s32.totalorder %s35, 1
          %s2000 = scalar_select %p1999, %s35, 1
          %p2001 = scmp.lt.s32.totalorder %s36, 0
          %s2002 = scalar_select %p2001, %s36, 0
          %s2003 = sadd.s32 %s2002, %s2000
          %s2004 = smul.addr %s2003, 8
          %s2005 = scalar_lea.vmem %s14, %s2004
        $region112: #{transformer_forward.2} parent=107 // pred_fallthru
          _
      $region108: #{transformer_forward.2} parent=5 // pred_fallthru
        _
    $region6: #{transformer_forward.2} parent=1 // loop_footer
      %s28 = sadd.s32 1, %s24
    $region7: #{transformer_forward.2} parent=1 // loop_footer_branch
      %23 = sbr.rel target = $region3
    $region8: #{transformer_forward.2} parent=1 // loop_exit
      _
    %2006 = vsyncpa [#allocation3], 1
    %s2007 = scalar_lea.sflag [#allocation3], 1
    %2008 = vsyncpa %s2007, 1
    %2009 = vsyncpa [#allocation5], 1
    %2010 = vsyncpa [#allocation8], 1
    %2011 = vsyncpa [#allocation11], 1

// kernel: transformer_forward.3
$region0: #{transformer_forward.3}
  #allocation0 [shape = 'u32[]', space=smem, size = 0x4, offset = 0x4, fixed_abs, tag = 'smem constant byte address 0x4 - core index']
  #allocation1 [shape = 'u32[144,128]{1,0:T(1,128)}', space=vmem, size = 0x12000, scoped, tag = 'internal scratch']
  %s0 = inlined_call_operand.vmem [shape: f32[2,8,32], index: 0, kind: input, shape index: {}, may-alias: {0,1}]
  %s1 = inlined_call_operand.vmem [shape: f32[2,8,32], index: 1, kind: input, shape index: {}, may-alias: {0,1}]
  %s2 = inlined_call_operand.vmem [shape: f32[1,32], index: 2, kind: input, shape index: {}]
  %s3 = inlined_call_operand.vmem [shape: f32[1,32], index: 3, kind: input, shape index: {}]
  %s4 = inlined_call_operand.vmem [shape: bf16[32,32], index: 4, kind: input, shape index: {}]
  %s5 = inlined_call_operand.vmem [shape: f32[1,32], index: 5, kind: input, shape index: {}]
  %s6 = inlined_call_operand.vmem [shape: bf16[32,64], index: 6, kind: input, shape index: {}]
  %s7 = inlined_call_operand.vmem [shape: f32[1,64], index: 7, kind: input, shape index: {}]
  %s8 = inlined_call_operand.vmem [shape: f32[1,32], index: 8, kind: input, shape index: {}]
  %s9 = inlined_call_operand.vmem [shape: f32[1,32], index: 9, kind: input, shape index: {}]
  %s10 = inlined_call_operand.vmem [shape: bf16[32,64], index: 10, kind: input, shape index: {}]
  %s11 = inlined_call_operand.vmem [shape: f32[1,64], index: 11, kind: input, shape index: {}]
  %s12 = inlined_call_operand.vmem [shape: bf16[64,32], index: 12, kind: input, shape index: {}]
  %s13 = inlined_call_operand.vmem [shape: f32[1,32], index: 13, kind: input, shape index: {}]
  %s14 = inlined_call_operand.hbm [shape: f32[2,8,32], index: 14, kind: output, shape index: {}]
  %s15 = sld [smem:[#allocation0]]
  $region89: #{transformer_forward.3} parent=0
    _
  %s17 = ssub.s32 1, %s15
  %s18 = scalar_select 0, %s17, %s15
  $region1: #{transformer_forward.3} parent=0
    #allocation2 [shape = 'u8[8192]{0}', space=vmem, size = 0x2000, scoped, tag = 'output window, operand 0']
    #allocation3 [shape = 's32[2]{0}', space=sflag, size = 0x8, scoped, tag = 'scoped memory for transformer_forward.3']
    %19 = vsyncpa [#allocation3], 0
    %s20 = scalar_lea.sflag [#allocation3], 1
    %21 = vsyncpa %s20, 0
    loop: start=0, step=1, limit=4
    $region2: #{transformer_forward.3} parent=1 // loop_pre_header
      _
    $region3: #{transformer_forward.3} parent=1 // loop_header
      %s23 = sphi 0, %s27
      %p24 = scmp.ge.s32.totalorder %s23, 4
      %s30 = sphi 0, %s42
      %s31 = sphi 0, %s38
      %s32 = sphi 0, %s30
      %s33 = sphi 0, %s31
      %s34 = sphi 0, %s32
      %s35 = sphi 0, %s33
      %s47 = sphi 0, %s49
      %s50 = sphi 0, %s47
      %s51 = sphi 0, %s50
      %s67 = sphi 0, %s51
      %s73 = sphi 0, %s75
      %s76 = sphi 0, %s73
      %s77 = sphi 0, %s76
      %s93 = sphi 0, %s77
      %s97 = sphi 0, %s97
      %s99 = sphi 0, %s97
      %s100 = sphi 0, %s99
      %s114 = sphi 0, %s100
      %s118 = sphi 0, %s118
      %s120 = sphi 0, %s118
      %s121 = sphi 0, %s120
      %s135 = sphi 0, %s121
      %s139 = sphi 0, %s139
      %s141 = sphi 0, %s139
      %s142 = sphi 0, %s141
      %s156 = sphi 0, %s142
      %s160 = sphi 0, %s160
      %s162 = sphi 0, %s160
      %s163 = sphi 0, %s162
      %s177 = sphi 0, %s163
      %s181 = sphi 0, %s181
      %s183 = sphi 0, %s181
      %s184 = sphi 0, %s183
      %s198 = sphi 0, %s184
      %s202 = sphi 0, %s202
      %s204 = sphi 0, %s202
      %s205 = sphi 0, %s204
      %s219 = sphi 0, %s205
      %s223 = sphi 0, %s223
      %s225 = sphi 0, %s223
      %s226 = sphi 0, %s225
      %s240 = sphi 0, %s226
      %s244 = sphi 0, %s244
      %s246 = sphi 0, %s244
      %s247 = sphi 0, %s246
      %s261 = sphi 0, %s247
      %s265 = sphi 0, %s265
      %s267 = sphi 0, %s265
      %s268 = sphi 0, %s267
      %s282 = sphi 0, %s268
      %s286 = sphi 0, %s286
      %s288 = sphi 0, %s286
      %s289 = sphi 0, %s288
      %s303 = sphi 0, %s289
      %s307 = sphi 0, %s307
      %s309 = sphi 0, %s307
      %s310 = sphi 0, %s309
      %s324 = sphi 0, %s310
      %s328 = sphi 0, %s328
      %s330 = sphi 0, %s328
      %s331 = sphi 0, %s330
      %s345 = sphi 0, %s331
      %s353 = sphi 0, %s355
      %s356 = sphi 0, %s353
      %s357 = sphi 0, %s356
      %s373 = sphi 0, %s357
    $region4: #{transformer_forward.3} parent=1 // loop_header_branch
      %26 = sbr.rel (%p24) target = $region8
    $region5: #{transformer_forward.3} parent=1 // loop_body
      %s28 = ssub.s32 %s23, 1
      %s29 = ssub.s32 %s23, 2
      %s36 = sadd.s32 1, %s31
      %p37 = scmp.ge.s32.totalorder %s36, 1
      %s38 = scalar_select %p37, 0, %s36
      %s39 = sadd.s32 1, %s30
      %s40 = scalar_select %p37, %s39, %s30
      %p41 = scmp.ge.s32.totalorder %s40, 2
      %s42 = scalar_select %p41, 0, %s40
      %s43 = ssub.s32 %s30, %s42
      %s44 = ssub.s32 %s31, %s38
      %s45 = sor.u32 %s43, %s44
      %p46 = scmp.eq.s32.totalorder %s45, 0
      %s48 = sadd.s32 %s47, 1
      %s49 = scalar_select %p46, %s47, %s48
      %p52 = pneg %p46
      %p53 = scmp.eq.s32.totalorder %s23, 1
      %p54 = por %p52, %p53
      %p55 = scmp.ne.s32.totalorder %s47, %s50
      %p56 = scmp.eq.s32.totalorder %s23, 0
      %p57 = por %p55, %p56
      %p58 = scmp.ne.s32.totalorder %s47, %s50
      %p59 = scmp.eq.s32.totalorder %s28, 1
      %p60 = por %p58, %p59
      %p61 = scmp.ne.s32.totalorder %s50, %s51
      %p62 = scmp.eq.s32.totalorder %s28, 0
      %p63 = por %p61, %p62
      %p64 = scmp.ne.s32.totalorder %s50, %s51
      %p65 = scmp.eq.s32.totalorder %s29, 1
      %p66 = por %p64, %p65
      %p68 = scmp.ne.s32.totalorder %s51, %s67
      %p69 = scmp.eq.s32.totalorder %s29, 0
      %p70 = por %p68, %p69
      %s71 = ssub.s32 %s30, %s42
      %p72 = scmp.eq.s32.totalorder %s71, 0
      %s74 = sadd.s32 %s73, 1
      %s75 = scalar_select %p72, %s73, %s74
      %p78 = pneg %p72
      %p79 = scmp.eq.s32.totalorder %s23, 1
      %p80 = por %p78, %p79
      %p81 = scmp.ne.s32.totalorder %s73, %s76
      %p82 = scmp.eq.s32.totalorder %s23, 0
      %p83 = por %p81, %p82
      %p84 = scmp.ne.s32.totalorder %s73, %s76
      %p85 = scmp.eq.s32.totalorder %s28, 1
      %p86 = por %p84, %p85
      %p87 = scmp.ne.s32.totalorder %s76, %s77
      %p88 = scmp.eq.s32.totalorder %s28, 0
      %p89 = por %p87, %p88
      %p90 = scmp.ne.s32.totalorder %s76, %s77
      %p91 = scmp.eq.s32.totalorder %s29, 1
      %p92 = por %p90, %p91
      %p94 = scmp.ne.s32.totalorder %s77, %s93
      %p95 = scmp.eq.s32.totalorder %s29, 0
      %p96 = por %p94, %p95
      %s98 = sadd.s32 %s97, 1
      %p101 = scmp.eq.s32.totalorder %s23, 1
      %p102 = scmp.ne.s32.totalorder %s97, %s99
      %p103 = scmp.eq.s32.totalorder %s23, 0
      %p104 = por %p102, %p103
      %p105 = scmp.ne.s32.totalorder %s97, %s99
      %p106 = scmp.eq.s32.totalorder %s28, 1
      %p107 = por %p105, %p106
      %p108 = scmp.ne.s32.totalorder %s99, %s100
      %p109 = scmp.eq.s32.totalorder %s28, 0
      %p110 = por %p108, %p109
      %p111 = scmp.ne.s32.totalorder %s99, %s100
      %p112 = scmp.eq.s32.totalorder %s29, 1
      %p113 = por %p111, %p112
      %p115 = scmp.ne.s32.totalorder %s100, %s114
      %p116 = scmp.eq.s32.totalorder %s29, 0
      %p117 = por %p115, %p116
      %s119 = sadd.s32 %s118, 1
      %p122 = scmp.eq.s32.totalorder %s23, 1
      %p123 = scmp.ne.s32.totalorder %s118, %s120
      %p124 = scmp.eq.s32.totalorder %s23, 0
      %p125 = por %p123, %p124
      %p126 = scmp.ne.s32.totalorder %s118, %s120
      %p127 = scmp.eq.s32.totalorder %s28, 1
      %p128 = por %p126, %p127
      %p129 = scmp.ne.s32.totalorder %s120, %s121
      %p130 = scmp.eq.s32.totalorder %s28, 0
      %p131 = por %p129, %p130
      %p132 = scmp.ne.s32.totalorder %s120, %s121
      %p133 = scmp.eq.s32.totalorder %s29, 1
      %p134 = por %p132, %p133
      %p136 = scmp.ne.s32.totalorder %s121, %s135
      %p137 = scmp.eq.s32.totalorder %s29, 0
      %p138 = por %p136, %p137
      %s140 = sadd.s32 %s139, 1
      %p143 = scmp.eq.s32.totalorder %s23, 1
      %p144 = scmp.ne.s32.totalorder %s139, %s141
      %p145 = scmp.eq.s32.totalorder %s23, 0
      %p146 = por %p144, %p145
      %p147 = scmp.ne.s32.totalorder %s139, %s141
      %p148 = scmp.eq.s32.totalorder %s28, 1
      %p149 = por %p147, %p148
      %p150 = scmp.ne.s32.totalorder %s141, %s142
      %p151 = scmp.eq.s32.totalorder %s28, 0
      %p152 = por %p150, %p151
      %p153 = scmp.ne.s32.totalorder %s141, %s142
      %p154 = scmp.eq.s32.totalorder %s29, 1
      %p155 = por %p153, %p154
      %p157 = scmp.ne.s32.totalorder %s142, %s156
      %p158 = scmp.eq.s32.totalorder %s29, 0
      %p159 = por %p157, %p158
      %s161 = sadd.s32 %s160, 1
      %p164 = scmp.eq.s32.totalorder %s23, 1
      %p165 = scmp.ne.s32.totalorder %s160, %s162
      %p166 = scmp.eq.s32.totalorder %s23, 0
      %p167 = por %p165, %p166
      %p168 = scmp.ne.s32.totalorder %s160, %s162
      %p169 = scmp.eq.s32.totalorder %s28, 1
      %p170 = por %p168, %p169
      %p171 = scmp.ne.s32.totalorder %s162, %s163
      %p172 = scmp.eq.s32.totalorder %s28, 0
      %p173 = por %p171, %p172
      %p174 = scmp.ne.s32.totalorder %s162, %s163
      %p175 = scmp.eq.s32.totalorder %s29, 1
      %p176 = por %p174, %p175
      %p178 = scmp.ne.s32.totalorder %s163, %s177
      %p179 = scmp.eq.s32.totalorder %s29, 0
      %p180 = por %p178, %p179
      %s182 = sadd.s32 %s181, 1
      %p185 = scmp.eq.s32.totalorder %s23, 1
      %p186 = scmp.ne.s32.totalorder %s181, %s183
      %p187 = scmp.eq.s32.totalorder %s23, 0
      %p188 = por %p186, %p187
      %p189 = scmp.ne.s32.totalorder %s181, %s183
      %p190 = scmp.eq.s32.totalorder %s28, 1
      %p191 = por %p189, %p190
      %p192 = scmp.ne.s32.totalorder %s183, %s184
      %p193 = scmp.eq.s32.totalorder %s28, 0
      %p194 = por %p192, %p193
      %p195 = scmp.ne.s32.totalorder %s183, %s184
      %p196 = scmp.eq.s32.totalorder %s29, 1
      %p197 = por %p195, %p196
      %p199 = scmp.ne.s32.totalorder %s184, %s198
      %p200 = scmp.eq.s32.totalorder %s29, 0
      %p201 = por %p199, %p200
      %s203 = sadd.s32 %s202, 1
      %p206 = scmp.eq.s32.totalorder %s23, 1
      %p207 = scmp.ne.s32.totalorder %s202, %s204
      %p208 = scmp.eq.s32.totalorder %s23, 0
      %p209 = por %p207, %p208
      %p210 = scmp.ne.s32.totalorder %s202, %s204
      %p211 = scmp.eq.s32.totalorder %s28, 1
      %p212 = por %p210, %p211
      %p213 = scmp.ne.s32.totalorder %s204, %s205
      %p214 = scmp.eq.s32.totalorder %s28, 0
      %p215 = por %p213, %p214
      %p216 = scmp.ne.s32.totalorder %s204, %s205
      %p217 = scmp.eq.s32.totalorder %s29, 1
      %p218 = por %p216, %p217
      %p220 = scmp.ne.s32.totalorder %s205, %s219
      %p221 = scmp.eq.s32.totalorder %s29, 0
      %p222 = por %p220, %p221
      %s224 = sadd.s32 %s223, 1
      %p227 = scmp.eq.s32.totalorder %s23, 1
      %p228 = scmp.ne.s32.totalorder %s223, %s225
      %p229 = scmp.eq.s32.totalorder %s23, 0
      %p230 = por %p228, %p229
      %p231 = scmp.ne.s32.totalorder %s223, %s225
      %p232 = scmp.eq.s32.totalorder %s28, 1
      %p233 = por %p231, %p232
      %p234 = scmp.ne.s32.totalorder %s225, %s226
      %p235 = scmp.eq.s32.totalorder %s28, 0
      %p236 = por %p234, %p235
      %p237 = scmp.ne.s32.totalorder %s225, %s226
      %p238 = scmp.eq.s32.totalorder %s29, 1
      %p239 = por %p237, %p238
      %p241 = scmp.ne.s32.totalorder %s226, %s240
      %p242 = scmp.eq.s32.totalorder %s29, 0
      %p243 = por %p241, %p242
      %s245 = sadd.s32 %s244, 1
      %p248 = scmp.eq.s32.totalorder %s23, 1
      %p249 = scmp.ne.s32.totalorder %s244, %s246
      %p250 = scmp.eq.s32.totalorder %s23, 0
      %p251 = por %p249, %p250
      %p252 = scmp.ne.s32.totalorder %s244, %s246
      %p253 = scmp.eq.s32.totalorder %s28, 1
      %p254 = por %p252, %p253
      %p255 = scmp.ne.s32.totalorder %s246, %s247
      %p256 = scmp.eq.s32.totalorder %s28, 0
      %p257 = por %p255, %p256
      %p258 = scmp.ne.s32.totalorder %s246, %s247
      %p259 = scmp.eq.s32.totalorder %s29, 1
      %p260 = por %p258, %p259
      %p262 = scmp.ne.s32.totalorder %s247, %s261
      %p263 = scmp.eq.s32.totalorder %s29, 0
      %p264 = por %p262, %p263
      %s266 = sadd.s32 %s265, 1
      %p269 = scmp.eq.s32.totalorder %s23, 1
      %p270 = scmp.ne.s32.totalorder %s265, %s267
      %p271 = scmp.eq.s32.totalorder %s23, 0
      %p272 = por %p270, %p271
      %p273 = scmp.ne.s32.totalorder %s265, %s267
      %p274 = scmp.eq.s32.totalorder %s28, 1
      %p275 = por %p273, %p274
      %p276 = scmp.ne.s32.totalorder %s267, %s268
      %p277 = scmp.eq.s32.totalorder %s28, 0
      %p278 = por %p276, %p277
      %p279 = scmp.ne.s32.totalorder %s267, %s268
      %p280 = scmp.eq.s32.totalorder %s29, 1
      %p281 = por %p279, %p280
      %p283 = scmp.ne.s32.totalorder %s268, %s282
      %p284 = scmp.eq.s32.totalorder %s29, 0
      %p285 = por %p283, %p284
      %s287 = sadd.s32 %s286, 1
      %p290 = scmp.eq.s32.totalorder %s23, 1
      %p291 = scmp.ne.s32.totalorder %s286, %s288
      %p292 = scmp.eq.s32.totalorder %s23, 0
      %p293 = por %p291, %p292
      %p294 = scmp.ne.s32.totalorder %s286, %s288
      %p295 = scmp.eq.s32.totalorder %s28, 1
      %p296 = por %p294, %p295
      %p297 = scmp.ne.s32.totalorder %s288, %s289
      %p298 = scmp.eq.s32.totalorder %s28, 0
      %p299 = por %p297, %p298
      %p300 = scmp.ne.s32.totalorder %s288, %s289
      %p301 = scmp.eq.s32.totalorder %s29, 1
      %p302 = por %p300, %p301
      %p304 = scmp.ne.s32.totalorder %s289, %s303
      %p305 = scmp.eq.s32.totalorder %s29, 0
      %p306 = por %p304, %p305
      %s308 = sadd.s32 %s307, 1
      %p311 = scmp.eq.s32.totalorder %s23, 1
      %p312 = scmp.ne.s32.totalorder %s307, %s309
      %p313 = scmp.eq.s32.totalorder %s23, 0
      %p314 = por %p312, %p313
      %p315 = scmp.ne.s32.totalorder %s307, %s309
      %p316 = scmp.eq.s32.totalorder %s28, 1
      %p317 = por %p315, %p316
      %p318 = scmp.ne.s32.totalorder %s309, %s310
      %p319 = scmp.eq.s32.totalorder %s28, 0
      %p320 = por %p318, %p319
      %p321 = scmp.ne.s32.totalorder %s309, %s310
      %p322 = scmp.eq.s32.totalorder %s29, 1
      %p323 = por %p321, %p322
      %p325 = scmp.ne.s32.totalorder %s310, %s324
      %p326 = scmp.eq.s32.totalorder %s29, 0
      %p327 = por %p325, %p326
      %s329 = sadd.s32 %s328, 1
      %p332 = scmp.eq.s32.totalorder %s23, 1
      %p333 = scmp.ne.s32.totalorder %s328, %s330
      %p334 = scmp.eq.s32.totalorder %s23, 0
      %p335 = por %p333, %p334
      %p336 = scmp.ne.s32.totalorder %s328, %s330
      %p337 = scmp.eq.s32.totalorder %s28, 1
      %p338 = por %p336, %p337
      %p339 = scmp.ne.s32.totalorder %s330, %s331
      %p340 = scmp.eq.s32.totalorder %s28, 0
      %p341 = por %p339, %p340
      %p342 = scmp.ne.s32.totalorder %s330, %s331
      %p343 = scmp.eq.s32.totalorder %s29, 1
      %p344 = por %p342, %p343
      %p346 = scmp.ne.s32.totalorder %s331, %s345
      %p347 = scmp.eq.s32.totalorder %s29, 0
      %p348 = por %p346, %p347
      %s349 = ssub.s32 %s30, %s42
      %s350 = ssub.s32 %s31, %s38
      %s351 = sor.u32 %s349, %s350
      %p352 = scmp.eq.s32.totalorder %s351, 0
      %s354 = sadd.s32 %s353, 1
      %s355 = scalar_select %p352, %s353, %s354
      %p358 = pneg %p352
      %p359 = scmp.eq.s32.totalorder %s23, 1
      %p360 = por %p358, %p359
      %p361 = scmp.ne.s32.totalorder %s353, %s356
      %p362 = scmp.eq.s32.totalorder %s23, 0
      %p363 = por %p361, %p362
      %p364 = scmp.ne.s32.totalorder %s353, %s356
      %p365 = scmp.eq.s32.totalorder %s28, 1
      %p366 = por %p364, %p365
      %p367 = scmp.ne.s32.totalorder %s356, %s357
      %p368 = scmp.eq.s32.totalorder %s28, 0
      %p369 = por %p367, %p368
      %p370 = scmp.ne.s32.totalorder %s356, %s357
      %p371 = scmp.eq.s32.totalorder %s29, 1
      %p372 = por %p370, %p371
      %p374 = scmp.ne.s32.totalorder %s357, %s373
      %p375 = scmp.eq.s32.totalorder %s29, 0
      %p376 = por %p374, %p375
      %p377 = scmp.le.s32.totalorder 1, %s23
      %p378 = scmp.lt.s32.totalorder %s23, 3
      %p379 = pnand %p377, %p378
      %p380 = pneg %p379
      // Predicated region
      $region9: #{transformer_forward.3} parent=5 // pred_check
        _
      $region10: #{transformer_forward.3} parent=5 // pred_check_branch
        %382 = sbr.rel (%p379) target = $region12
      $region11: #{transformer_forward.3} parent=5 // pred_region
        %s383 = ssub.s32 %s23, 1
        // Predicated region
        $region13: #{transformer_forward.3} parent=11 // pred_check
          %p384 = pneg %p110
        $region14: #{transformer_forward.3} parent=11 // pred_check_branch
          %386 = sbr.rel (%p384) target = $region16
        $region15: #{transformer_forward.3} parent=11 // pred_region
          _
        $region16: #{transformer_forward.3} parent=11 // pred_fallthru
          _
        // Predicated region
        $region17: #{transformer_forward.3} parent=11 // pred_check
          %p387 = pneg %p131
        $region18: #{transformer_forward.3} parent=11 // pred_check_branch
          %389 = sbr.rel (%p387) target = $region20
        $region19: #{transformer_forward.3} parent=11 // pred_region
          _
        $region20: #{transformer_forward.3} parent=11 // pred_fallthru
          _
        // Predicated region
        $region21: #{transformer_forward.3} parent=11 // pred_check
          %p390 = pneg %p152
        $region22: #{transformer_forward.3} parent=11 // pred_check_branch
          %392 = sbr.rel (%p390) target = $region24
        $region23: #{transformer_forward.3} parent=11 // pred_region
          _
        $region24: #{transformer_forward.3} parent=11 // pred_fallthru
          _
        // Predicated region
        $region25: #{transformer_forward.3} parent=11 // pred_check
          %p393 = pneg %p173
        $region26: #{transformer_forward.3} parent=11 // pred_check_branch
          %395 = sbr.rel (%p393) target = $region28
        $region27: #{transformer_forward.3} parent=11 // pred_region
          _
        $region28: #{transformer_forward.3} parent=11 // pred_fallthru
          _
        // Predicated region
        $region29: #{transformer_forward.3} parent=11 // pred_check
          %p396 = pneg %p194
        $region30: #{transformer_forward.3} parent=11 // pred_check_branch
          %398 = sbr.rel (%p396) target = $region32
        $region31: #{transformer_forward.3} parent=11 // pred_region
          _
        $region32: #{transformer_forward.3} parent=11 // pred_fallthru
          _
        // Predicated region
        $region33: #{transformer_forward.3} parent=11 // pred_check
          %p399 = pneg %p215
        $region34: #{transformer_forward.3} parent=11 // pred_check_branch
          %401 = sbr.rel (%p399) target = $region36
        $region35: #{transformer_forward.3} parent=11 // pred_region
          _
        $region36: #{transformer_forward.3} parent=11 // pred_fallthru
          _
        // Predicated region
        $region37: #{transformer_forward.3} parent=11 // pred_check
          %p402 = pneg %p236
        $region38: #{transformer_forward.3} parent=11 // pred_check_branch
          %404 = sbr.rel (%p402) target = $region40
        $region39: #{transformer_forward.3} parent=11 // pred_region
          _
        $region40: #{transformer_forward.3} parent=11 // pred_fallthru
          _
        // Predicated region
        $region41: #{transformer_forward.3} parent=11 // pred_check
          %p405 = pneg %p257
        $region42: #{transformer_forward.3} parent=11 // pred_check_branch
          %407 = sbr.rel (%p405) target = $region44
        $region43: #{transformer_forward.3} parent=11 // pred_region
          _
        $region44: #{transformer_forward.3} parent=11 // pred_fallthru
          _
        // Predicated region
        $region45: #{transformer_forward.3} parent=11 // pred_check
          %p408 = pneg %p278
        $region46: #{transformer_forward.3} parent=11 // pred_check_branch
          %410 = sbr.rel (%p408) target = $region48
        $region47: #{transformer_forward.3} parent=11 // pred_region
          _
        $region48: #{transformer_forward.3} parent=11 // pred_fallthru
          _
        // Predicated region
        $region49: #{transformer_forward.3} parent=11 // pred_check
          %p411 = pneg %p299
        $region50: #{transformer_forward.3} parent=11 // pred_check_branch
          %413 = sbr.rel (%p411) target = $region52
        $region51: #{transformer_forward.3} parent=11 // pred_region
          _
        $region52: #{transformer_forward.3} parent=11 // pred_fallthru
          _
        // Predicated region
        $region53: #{transformer_forward.3} parent=11 // pred_check
          %p414 = pneg %p320
        $region54: #{transformer_forward.3} parent=11 // pred_check_branch
          %416 = sbr.rel (%p414) target = $region56
        $region55: #{transformer_forward.3} parent=11 // pred_region
          _
        $region56: #{transformer_forward.3} parent=11 // pred_fallthru
          _
        // Predicated region
        $region57: #{transformer_forward.3} parent=11 // pred_check
          %p417 = pneg %p341
        $region58: #{transformer_forward.3} parent=11 // pred_check_branch
          %419 = sbr.rel (%p417) target = $region60
        $region59: #{transformer_forward.3} parent=11 // pred_region
          _
        $region60: #{transformer_forward.3} parent=11 // pred_fallthru
          _
      $region12: #{transformer_forward.3} parent=5 // pred_fallthru
        _
      %p420 = scmp.lt.s32.totalorder %s23, 2
      // Predicated region
      $region61: #{transformer_forward.3} parent=5 // pred_check
        %p421 = pneg %p420
      $region62: #{transformer_forward.3} parent=5 // pred_check_branch
        %423 = sbr.rel (%p421) target = $region64
      $region63: #{transformer_forward.3} parent=5 // pred_region
        // Predicated region
        $region65: #{transformer_forward.3} parent=63 // pred_check
          %p424 = pneg %p57
        $region66: #{transformer_forward.3} parent=63 // pred_check_branch
          %426 = sbr.rel (%p424) target = $region68
        $region67: #{transformer_forward.3} parent=63 // pred_region
          %p427 = scmp.lt.s32.totalorder %s30, 1
          %s428 = scalar_select %p427, %s30, 1
          %p429 = scmp.lt.s32.totalorder %s31, 0
          %s430 = scalar_select %p429, %s31, 0
          %s431 = sadd.s32 %s430, %s428
          %s432 = smul.addr %s431, 8
          %s433 = scalar_lea.vmem %s0, %s432
        $region68: #{transformer_forward.3} parent=63 // pred_fallthru
          _
        // Predicated region
        $region69: #{transformer_forward.3} parent=63 // pred_check
          %p434 = pneg %p83
        $region70: #{transformer_forward.3} parent=63 // pred_check_branch
          %436 = sbr.rel (%p434) target = $region72
        $region71: #{transformer_forward.3} parent=63 // pred_region
          %p437 = scmp.lt.s32.totalorder %s30, 1
          %s438 = scalar_select %p437, %s30, 1
          %s439 = smul.addr %s438, 8
          %s440 = scalar_lea.vmem %s1, %s439
        $region72: #{transformer_forward.3} parent=63 // pred_fallthru
          _
      $region64: #{transformer_forward.3} parent=5 // pred_fallthru
        _
      %p441 = scmp.le.s32.totalorder 1, %s23
      %p442 = scmp.lt.s32.totalorder %s23, 3
      %p443 = pnand %p441, %p442
      %p444 = pneg %p443
      // Predicated region
      $region73: #{transformer_forward.3} parent=5 // pred_check
        _
      $region74: #{transformer_forward.3} parent=5 // pred_check_branch
        %446 = sbr.rel (%p443) target = $region76
      $region75: #{transformer_forward.3} parent=5 // pred_region
        %s447 = ssub.s32 %s23, 1
        %p448 = scmp.lt.s32.totalorder %s32, 1
        %s449 = scalar_select %p448, %s32, 1
        %p450 = scmp.lt.s32.totalorder %s33, 0
        %s451 = scalar_select %p450, %s33, 0
        %s452 = sadd.s32 %s451, %s449
        %s453 = smul.addr %s452, 8
        %s454 = scalar_lea.vmem %s0, %s453
        %p455 = pneg %p63
        %p456 = pneg %p60
        %p457 = scmp.lt.s32.totalorder %s32, 1
        %s458 = scalar_select %p457, %s32, 1
        %s459 = smul.addr %s458, 8
        %s460 = scalar_lea.vmem %s1, %s459
        %p461 = pneg %p89
        %p462 = pneg %p86
        %p463 = pneg %p110
        %p464 = pneg %p107
        %p465 = pneg %p131
        %p466 = pneg %p128
        %p467 = pneg %p152
        %p468 = pneg %p149
        %p469 = pneg %p173
        %p470 = pneg %p170
        %p471 = pneg %p194
        %p472 = pneg %p191
        %p473 = pneg %p215
        %p474 = pneg %p212
        %p475 = pneg %p236
        %p476 = pneg %p233
        %p477 = pneg %p257
        %p478 = pneg %p254
        %p479 = pneg %p278
        %p480 = pneg %p275
        %p481 = pneg %p299
        %p482 = pneg %p296
        %p483 = pneg %p320
        %p484 = pneg %p317
        %p485 = pneg %p341
        %p486 = pneg %p338
        %p487 = pneg %p369
        %p488 = pneg %p366
        %s489 = sand.u32 %s356, 1
        %s490 = scalar_lea.sflag [#allocation3], %s489
        %s491 = sand.u32 %s356, 1
        %s492 = smul.addr %s491, 8
        %s493 = scalar_lea.vmem [#allocation2], %s492
        %p494 = scmp.lt.s32.totalorder %s32, 1
        %s495 = scalar_select %p494, %s32, 1
        %p496 = scmp.lt.s32.totalorder %s33, 0
        %s497 = scalar_select %p496, %s33, 0
        %s498 = sadd.s32 %s497, %s495
        %s499 = smul.addr %s498, 8
        %s500 = scalar_lea.vmem %s0, %s499
        %p501 = scmp.lt.s32.totalorder %s32, 1
        %s502 = scalar_select %p501, %s32, 1
        %s503 = smul.addr %s502, 8
        %s504 = scalar_lea.vmem %s1, %s503
        %v506 = vld [vmem:[%s500] sm:$0xff]
        %v507 = vld [vmem:[%s504] sm:$0xff]
        %v508 = vld [vmem:[%s2] sm:$0x1]
        %v509 = vld [vmem:[%s3] sm:$0x1]
        %v510 = vld [vmem:[%s4] sm:$0xf]
        %v511 = vld [vmem:[%s4 + $0x4] sm:$0xf]
        %v512 = vld [vmem:[%s4 + $0x8] sm:$0xf]
        %v513 = vld [vmem:[%s4 + $0xc] sm:$0xf]
        %v514 = vld [vmem:[%s5] sm:$0x1]
        %v515 = vld [vmem:[%s6] sm:$0xf]
        %v516 = vld [vmem:[%s6 + $0x4] sm:$0xf]
        %v517 = vld [vmem:[%s6 + $0x8] sm:$0xf]
        %v518 = vld [vmem:[%s6 + $0xc] sm:$0xf]
        %v519 = vld [vmem:[%s7] sm:$0x1]
        %v520 = vld [vmem:[%s8] sm:$0x1]
        %v521 = vld [vmem:[%s9] sm:$0x1]
        %v522 = vld [vmem:[%s10] sm:$0xf]
        %v523 = vld [vmem:[%s10 + $0x4] sm:$0xf]
        %v524 = vld [vmem:[%s10 + $0x8] sm:$0xf]
        %v525 = vld [vmem:[%s10 + $0xc] sm:$0xf]
        %v526 = vld [vmem:[%s11] sm:$0x1]
        %v527 = vld [vmem:[%s12] sm:$0xf]
        %v528 = vld [vmem:[%s12 + $0x4] sm:$0xf]
        %v529 = vld [vmem:[%s12 + $0x8] sm:$0xf]
        %v530 = vld [vmem:[%s12 + $0xc] sm:$0xf]
        %v531 = vld [vmem:[%s12 + $0x10] sm:$0xf]
        %v532 = vld [vmem:[%s12 + $0x14] sm:$0xf]
        %v533 = vld [vmem:[%s12 + $0x18] sm:$0xf]
        %v534 = vld [vmem:[%s12 + $0x1c] sm:$0xf]
        %v535 = vld [vmem:[%s13] sm:$0x1]
        %vm536 = vcmask 261120
        %v537 = vsel %vm536, %v506, 0.0
        %538 = vadd.xlane.f32.xlu0 %v537
        %v539 = vpop.xlane.xlu0 %538
        %v540 = vrcp.pop 32.0
        %v541 = vmul.f32 %v539, %v540
        %v542 = vsub.f32 %v506, %v541
        %v543 = vmul.f32 %v542, %v542
        %v544 = vsel %vm536, %v543, 0.0
        %545 = vadd.xlane.f32.xlu0 %v544
        %v546 = vpop.xlane.xlu0 %545
        %v547 = vmul.f32 %v546, %v540
        %v548 = vadd.f32 %v547, 1e-05
        %v549 = vrsqrt.pop %v548
        %v550 = vmul.f32 %v542, %v549
        %v552 = vlaneseq
        %v553 = vshrl.u32 %v552, 7
        %v554 = vsub.s32 0, %v553
        %v555 = vrot.slane %v508, %v554
        %v557 = vmul.f32 %v550, %v555
        %v559 = vlaneseq
        %v560 = vshrl.u32 %v559, 7
        %v561 = vsub.s32 0, %v560
        %v562 = vrot.slane %v509, %v561
        %v564 = vadd.f32 %v557, %v562
        %v565 = vsel %vm536, %v507, 0.0
        %566 = vadd.xlane.f32.xlu0 %v565
        %v567 = vpop.xlane.xlu0 %566
        %v568 = vmul.f32 %v567, %v540
        %v569 = vsub.f32 %v507, %v568
        %v570 = vmul.f32 %v569, %v569
        %v571 = vsel %vm536, %v570, 0.0
        %572 = vadd.xlane.f32.xlu0 %v571
        %v573 = vpop.xlane.xlu0 %572
        %v574 = vmul.f32 %v573, %v540
        %v575 = vadd.f32 %v574, 1e-05
        %v576 = vrsqrt.pop %v575
        %v577 = vmul.f32 %v569, %v576
        %v578 = vmul.f32 %v577, %v555
        %v579 = vadd.f32 %v578, %v562
        %v580 = vpack.c.bf16 %v564, %v564
        %v582 = vlaneseq
        %v583 = vshrl.u32 %v582, 7
        %v584 = vsub.s32 0, %v583
        %v585 = vrot.slane %v514, %v584
        %v591 = vunpack.c.l.b16 %v510
        %v592 = vunpack.c.l.b16 %v511
        %v593 = vunpack.c.l.b16 %v512
        %v594 = vunpack.c.l.b16 %v513
        %v595 = vpack.c.b16 %v592, %v591
        %v596 = vpack.c.b16 %v594, %v593
        %v600 = vsel %vm536, %v580, 0
        %602 = vmatprep.subr.bf16.mxu0 0
        %603 = vmatpush1.bf16.msra.mxu0 %v595
        %604 = vmatprep.subr.bf16.mxu0 0
        %605 = vmatpush1.bf16.msra.mxu0 %v596
        %606 = vmatprep.subr.bf16.mxu0 0
        %607 = vmatpush1.bf16.msra.mxu0 0
        %608 = vmatprep.subr.bf16.mxu0 0
        %609 = vmatpush1.bf16.msra.mxu0 0
        %610 = vmatprep.subr.bf16.mxu0 0
        %611 = vmatpush1.bf16.msra.mxu0 0
        %612 = vmatprep.subr.bf16.mxu0 0
        %613 = vmatpush1.bf16.msra.mxu0 0
        %614 = vmatprep.subr.bf16.mxu0 0
        %615 = vmatpush1.bf16.msra.mxu0 0
        %616 = vmatprep.subr.bf16.mxu0 0
        %617 = vmatpush1.bf16.msra.mxu0 0
        %618 = vmatprep.subr.bf16.mxu0 0
        %619 = vmatpush1.bf16.msra.mxu0 0
        %620 = vmatprep.subr.bf16.mxu0 0
        %621 = vmatpush1.bf16.msra.mxu0 0
        %622 = vmatprep.subr.bf16.mxu0 0
        %623 = vmatpush1.bf16.msra.mxu0 0
        %624 = vmatprep.subr.bf16.mxu0 0
        %625 = vmatpush1.bf16.msra.mxu0 0
        %626 = vmatprep.subr.bf16.mxu0 0
        %627 = vmatpush1.bf16.msra.mxu0 0
        %628 = vmatprep.subr.bf16.mxu0 0
        %629 = vmatpush1.bf16.msra.mxu0 0
        %630 = vmatprep.subr.bf16.mxu0 0
        %631 = vmatpush1.bf16.msra.mxu0 0
        %632 = vmatprep.subr.bf16.mxu0 0
        %633 = vmatpush1.bf16.msra.mxu0 0
        %634 = vmatprep.mubr.bf16.mxu0 0
        %635 = vmatmul.mubr.bf16.gmra.mrb[0].mxu0 %v600
        %v636 = vpop.f32.mrb[0].mxu0
        %v637 = vadd.f32 %v585, %v636
        %v638 = vpop.f32.mrb[0].mxu0
        %v639 = vpop.f32.mrb[0].mxu0
        %v640 = vpop.f32.mrb[0].mxu0
        %641 = vdwg.mxu0
        %v642 = vpack.c.bf16 %v579, %v579
        %v644 = vlaneseq
        %v645 = vshrl.u32 %v644, 7
        %v646 = vsub.s32 0, %v645
        %v647 = vrot.slane %v519, %v646
        %v653 = vunpack.c.l.b16 %v515
        %v654 = vunpack.c.l.b16 %v516
        %v655 = vunpack.c.l.b16 %v517
        %v656 = vunpack.c.l.b16 %v518
        %v657 = vpack.c.b16 %v654, %v653
        %v658 = vpack.c.b16 %v656, %v655
        %v662 = vsel %vm536, %v642, 0
        %664 = vmatprep.subr.bf16.mxu0 0
        %665 = vmatpush1.bf16.msra.mxu0 %v657
        %666 = vmatprep.subr.bf16.mxu0 0
        %667 = vmatpush1.bf16.msra.mxu0 %v658
        %668 = vmatprep.subr.bf16.mxu0 0
        %669 = vmatpush1.bf16.msra.mxu0 0
        %670 = vmatprep.subr.bf16.mxu0 0
        %671 = vmatpush1.bf16.msra.mxu0 0
        %672 = vmatprep.subr.bf16.mxu0 0
        %673 = vmatpush1.bf16.msra.mxu0 0
        %674 = vmatprep.subr.bf16.mxu0 0
        %675 = vmatpush1.bf16.msra.mxu0 0
        %676 = vmatprep.subr.bf16.mxu0 0
        %677 = vmatpush1.bf16.msra.mxu0 0
        %678 = vmatprep.subr.bf16.mxu0 0
        %679 = vmatpush1.bf16.msra.mxu0 0
        %680 = vmatprep.subr.bf16.mxu0 0
        %681 = vmatpush1.bf16.msra.mxu0 0
        %682 = vmatprep.subr.bf16.mxu0 0
        %683 = vmatpush1.bf16.msra.mxu0 0
        %684 = vmatprep.subr.bf16.mxu0 0
        %685 = vmatpush1.bf16.msra.mxu0 0
        %686 = vmatprep.subr.bf16.mxu0 0
        %687 = vmatpush1.bf16.msra.mxu0 0
        %688 = vmatprep.subr.bf16.mxu0 0
        %689 = vmatpush1.bf16.msra.mxu0 0
        %690 = vmatprep.subr.bf16.mxu0 0
        %691 = vmatpush1.bf16.msra.mxu0 0
        %692 = vmatprep.subr.bf16.mxu0 0
        %693 = vmatpush1.bf16.msra.mxu0 0
        %694 = vmatprep.subr.bf16.mxu0 0
        %695 = vmatpush1.bf16.msra.mxu0 0
        %696 = vmatprep.mubr.bf16.mxu0 0
        %697 = vmatmul.mubr.bf16.gmra.mrb[0].mxu0 %v662
        %v698 = vpop.f32.mrb[0].mxu0
        %v699 = vadd.f32 %v647, %v698
        %v700 = vpop.f32.mrb[0].mxu0
        %v701 = vpop.f32.mrb[0].mxu0
        %v702 = vpop.f32.mrb[0].mxu0
        %703 = vdwg.mxu0
        %705 = vrot.lane.b32.xlu0 %v637, 120
        %v706 = vpop.permute.xlu0 %705
        %708 = vrot.lane.b32.xlu0 %v637, 112
        %v709 = vpop.permute.xlu0 %708
        %711 = vrot.lane.b32.xlu0 %v637, 104
        %v712 = vpop.permute.xlu0 %711
        %v714 = vcombine.low %v637, %v709
        %v715 = vcombine.high %v637, %v709
        %v717 = vunpack.c.l.s4 1983009808
        %v718 = vunpack.c.0.s8 %v717
        %v719 = vlaneseq
        %v720 = vshrl.u32 %v719, 7
        %v721 = vsub.s32 %v718, %v720
        %v722 = vrot.slane %v714, %v721
        %v724 = vunpack.c.l.s4 1983009808
        %v725 = vunpack.c.0.s8 %v724
        %v726 = vlaneseq
        %v727 = vshrl.u32 %v726, 7
        %v728 = vsub.s32 %v725, %v727
        %v729 = vrot.slane %v715, %v728
        %v730 = vcombine.low %v706, %v712
        %v731 = vcombine.high %v706, %v712
        %v733 = vunpack.c.l.s4 1983009808
        %v734 = vunpack.c.0.s8 %v733
        %v735 = vlaneseq
        %v736 = vshrl.u32 %v735, 7
        %v737 = vsub.s32 %v734, %v736
        %v738 = vrot.slane %v730, %v737
        %v740 = vunpack.c.l.s4 1983009808
        %v741 = vunpack.c.0.s8 %v740
        %v742 = vlaneseq
        %v743 = vshrl.u32 %v742, 7
        %v744 = vsub.s32 %v741, %v743
        %v745 = vrot.slane %v731, %v744
        %v746 = vcombine.low %v722, %v738
        %v747 = vcombine.high %v722, %v738
        %v749 = vunpack.c.l.s4 1934713408
        %v750 = vunpack.c.0.s8 %v749
        %v751 = vlaneseq
        %v752 = vshrl.u32 %v751, 7
        %v753 = vsub.s32 %v750, %v752
        %v754 = vrot.slane %v746, %v753
        %v756 = vunpack.c.l.s4 1934713408
        %v757 = vunpack.c.0.s8 %v756
        %v758 = vlaneseq
        %v759 = vshrl.u32 %v758, 7
        %v760 = vsub.s32 %v757, %v759
        %v761 = vrot.slane %v747, %v760
        %v762 = vcombine.low %v729, %v745
        %v763 = vcombine.high %v729, %v745
        %v765 = vunpack.c.l.s4 1934713408
        %v766 = vunpack.c.0.s8 %v765
        %v767 = vlaneseq
        %v768 = vshrl.u32 %v767, 7
        %v769 = vsub.s32 %v766, %v768
        %v770 = vrot.slane %v762, %v769
        %v772 = vunpack.c.l.s4 1934713408
        %v773 = vunpack.c.0.s8 %v772
        %v774 = vlaneseq
        %v775 = vshrl.u32 %v774, 7
        %v776 = vsub.s32 %v773, %v775
        %v777 = vrot.slane %v763, %v776
        %v778 = vcombine.high %v754, 0.0
        %v779 = vcombine.high %v761, 0.0
        %v780 = vcombine.high %v770, 0.0
        %v781 = vcombine.high %v777, 0.0
        %v782 = vcombine.low %v754, %v761
        %v784 = vunpack.c.l.s4 1983009808
        %v785 = vunpack.c.0.s8 %v784
        %v786 = vlaneseq
        %v787 = vshrl.u32 %v786, 7
        %v788 = vsub.s32 %v785, %v787
        %v789 = vrot.slane %v782, %v788
        %v790 = vcombine.low %v778, %v779
        %v792 = vunpack.c.l.s4 1983009808
        %v793 = vunpack.c.0.s8 %v792
        %v794 = vlaneseq
        %v795 = vshrl.u32 %v794, 7
        %v796 = vsub.s32 %v793, %v795
        %v797 = vrot.slane %v790, %v796
        %v798 = vcombine.low %v770, %v777
        %v800 = vunpack.c.l.s4 1983009808
        %v801 = vunpack.c.0.s8 %v800
        %v802 = vlaneseq
        %v803 = vshrl.u32 %v802, 7
        %v804 = vsub.s32 %v801, %v803
        %v805 = vrot.slane %v798, %v804
        %v806 = vcombine.low %v780, %v781
        %v808 = vunpack.c.l.s4 1983009808
        %v809 = vunpack.c.0.s8 %v808
        %v810 = vlaneseq
        %v811 = vshrl.u32 %v810, 7
        %v812 = vsub.s32 %v809, %v811
        %v813 = vrot.slane %v806, %v812
        %v814 = vcombine.low %v789, %v797
        %v815 = vcombine.high %v789, %v797
        %v817 = vunpack.c.l.s4 1934713408
        %v818 = vunpack.c.0.s8 %v817
        %v819 = vlaneseq
        %v820 = vshrl.u32 %v819, 7
        %v821 = vsub.s32 %v818, %v820
        %v822 = vrot.slane %v814, %v821
        %v824 = vunpack.c.l.s4 1934713408
        %v825 = vunpack.c.0.s8 %v824
        %v826 = vlaneseq
        %v827 = vshrl.u32 %v826, 7
        %v828 = vsub.s32 %v825, %v827
        %v829 = vrot.slane %v815, %v828
        %v830 = vcombine.low %v805, %v813
        %v831 = vcombine.high %v805, %v813
        %v833 = vunpack.c.l.s4 1934713408
        %v834 = vunpack.c.0.s8 %v833
        %v835 = vlaneseq
        %v836 = vshrl.u32 %v835, 7
        %v837 = vsub.s32 %v834, %v836
        %v838 = vrot.slane %v830, %v837
        %v840 = vunpack.c.l.s4 1934713408
        %v841 = vunpack.c.0.s8 %v840
        %v842 = vlaneseq
        %v843 = vshrl.u32 %v842, 7
        %v844 = vsub.s32 %v841, %v843
        %v845 = vrot.slane %v831, %v844
        %v846 = vcombine.low %v822, %v838
        %v847 = vcombine.high %v822, %v838
        %v848 = vcombine.low %v829, %v845
        %v849 = vcombine.high %v829, %v845
        %v850 = vpack.c.bf16 %v846, %v846
        %v851 = vpack.c.bf16 %v847, %v847
        %v852 = vpack.c.bf16 %v848, %v848
        %v853 = vpack.c.bf16 %v849, %v849
        %855 = vrot.lane.b32.xlu0 %v699, 120
        %v856 = vpop.permute.xlu0 %855
        %858 = vrot.lane.b32.xlu0 %v699, 112
        %v859 = vpop.permute.xlu0 %858
        %861 = vrot.lane.b32.xlu0 %v699, 104
        %v862 = vpop.permute.xlu0 %861
        %v864 = vcombine.low %v699, %v859
        %v865 = vcombine.high %v699, %v859
        %v867 = vunpack.c.l.s4 1983009808
        %v868 = vunpack.c.0.s8 %v867
        %v869 = vlaneseq
        %v870 = vshrl.u32 %v869, 7
        %v871 = vsub.s32 %v868, %v870
        %v872 = vrot.slane %v864, %v871
        %v874 = vunpack.c.l.s4 1983009808
        %v875 = vunpack.c.0.s8 %v874
        %v876 = vlaneseq
        %v877 = vshrl.u32 %v876, 7
        %v878 = vsub.s32 %v875, %v877
        %v879 = vrot.slane %v865, %v878
        %v880 = vcombine.low %v856, %v862
        %v881 = vcombine.high %v856, %v862
        %v883 = vunpack.c.l.s4 1983009808
        %v884 = vunpack.c.0.s8 %v883
        %v885 = vlaneseq
        %v886 = vshrl.u32 %v885, 7
        %v887 = vsub.s32 %v884, %v886
        %v888 = vrot.slane %v880, %v887
        %v890 = vunpack.c.l.s4 1983009808
        %v891 = vunpack.c.0.s8 %v890
        %v892 = vlaneseq
        %v893 = vshrl.u32 %v892, 7
        %v894 = vsub.s32 %v891, %v893
        %v895 = vrot.slane %v881, %v894
        %v896 = vcombine.low %v872, %v888
        %v897 = vcombine.high %v872, %v888
        %v899 = vunpack.c.l.s4 1934713408
        %v900 = vunpack.c.0.s8 %v899
        %v901 = vlaneseq
        %v902 = vshrl.u32 %v901, 7
        %v903 = vsub.s32 %v900, %v902
        %v904 = vrot.slane %v896, %v903
        %v906 = vunpack.c.l.s4 1934713408
        %v907 = vunpack.c.0.s8 %v906
        %v908 = vlaneseq
        %v909 = vshrl.u32 %v908, 7
        %v910 = vsub.s32 %v907, %v909
        %v911 = vrot.slane %v897, %v910
        %v912 = vcombine.low %v879, %v895
        %v913 = vcombine.high %v879, %v895
        %v915 = vunpack.c.l.s4 1934713408
        %v916 = vunpack.c.0.s8 %v915
        %v917 = vlaneseq
        %v918 = vshrl.u32 %v917, 7
        %v919 = vsub.s32 %v916, %v918
        %v920 = vrot.slane %v912, %v919
        %v922 = vunpack.c.l.s4 1934713408
        %v923 = vunpack.c.0.s8 %v922
        %v924 = vlaneseq
        %v925 = vshrl.u32 %v924, 7
        %v926 = vsub.s32 %v923, %v925
        %v927 = vrot.slane %v913, %v926
        %v928 = vcombine.high %v904, 0.0
        %v929 = vcombine.high %v911, 0.0
        %v930 = vcombine.high %v920, 0.0
        %v931 = vcombine.high %v927, 0.0
        %v932 = vcombine.low %v904, %v911
        %v934 = vunpack.c.l.s4 1983009808
        %v935 = vunpack.c.0.s8 %v934
        %v936 = vlaneseq
        %v937 = vshrl.u32 %v936, 7
        %v938 = vsub.s32 %v935, %v937
        %v939 = vrot.slane %v932, %v938
        %v940 = vcombine.low %v928, %v929
        %v942 = vunpack.c.l.s4 1983009808
        %v943 = vunpack.c.0.s8 %v942
        %v944 = vlaneseq
        %v945 = vshrl.u32 %v944, 7
        %v946 = vsub.s32 %v943, %v945
        %v947 = vrot.slane %v940, %v946
        %v948 = vcombine.low %v920, %v927
        %v950 = vunpack.c.l.s4 1983009808
        %v951 = vunpack.c.0.s8 %v950
        %v952 = vlaneseq
        %v953 = vshrl.u32 %v952, 7
        %v954 = vsub.s32 %v951, %v953
        %v955 = vrot.slane %v948, %v954
        %v956 = vcombine.low %v930, %v931
        %v958 = vunpack.c.l.s4 1983009808
        %v959 = vunpack.c.0.s8 %v958
        %v960 = vlaneseq
        %v961 = vshrl.u32 %v960, 7
        %v962 = vsub.s32 %v959, %v961
        %v963 = vrot.slane %v956, %v962
        %v964 = vcombine.low %v939, %v947
        %v965 = vcombine.high %v939, %v947
        %v967 = vunpack.c.l.s4 1934713408
        %v968 = vunpack.c.0.s8 %v967
        %v969 = vlaneseq
        %v970 = vshrl.u32 %v969, 7
        %v971 = vsub.s32 %v968, %v970
        %v972 = vrot.slane %v964, %v971
        %v974 = vunpack.c.l.s4 1934713408
        %v975 = vunpack.c.0.s8 %v974
        %v976 = vlaneseq
        %v977 = vshrl.u32 %v976, 7
        %v978 = vsub.s32 %v975, %v977
        %v979 = vrot.slane %v965, %v978
        %v980 = vcombine.low %v955, %v963
        %v981 = vcombine.high %v955, %v963
        %v983 = vunpack.c.l.s4 1934713408
        %v984 = vunpack.c.0.s8 %v983
        %v985 = vlaneseq
        %v986 = vshrl.u32 %v985, 7
        %v987 = vsub.s32 %v984, %v986
        %v988 = vrot.slane %v980, %v987
        %v990 = vunpack.c.l.s4 1934713408
        %v991 = vunpack.c.0.s8 %v990
        %v992 = vlaneseq
        %v993 = vshrl.u32 %v992, 7
        %v994 = vsub.s32 %v991, %v993
        %v995 = vrot.slane %v981, %v994
        %v996 = vcombine.low %v972, %v988
        %v997 = vcombine.high %v972, %v988
        %v998 = vcombine.low %v979, %v995
        %v999 = vcombine.high %v979, %v995
        %v1000 = vpack.c.bf16 %v996, %v996
        %v1001 = vpack.c.bf16 %v997, %v997
        %v1002 = vpack.c.bf16 %v998, %v998
        %v1003 = vpack.c.bf16 %v999, %v999
        %1004 = vrot.lane.b32.xlu0 %v699, 96
        %v1005 = vpop.permute.xlu0 %1004
        %1006 = vrot.lane.b32.xlu0 %v856, 96
        %v1007 = vpop.permute.xlu0 %1006
        %1008 = vrot.lane.b32.xlu0 %v859, 96
        %v1009 = vpop.permute.xlu0 %1008
        %1010 = vrot.lane.b32.xlu0 %v862, 96
        %v1011 = vpop.permute.xlu0 %1010
        %v1016 = vcombine.low %v1005, %v1009
        %v1017 = vcombine.high %v1005, %v1009
        %v1019 = vunpack.c.l.s4 1983009808
        %v1020 = vunpack.c.0.s8 %v1019
        %v1021 = vlaneseq
        %v1022 = vshrl.u32 %v1021, 7
        %v1023 = vsub.s32 %v1020, %v1022
        %v1024 = vrot.slane %v1016, %v1023
        %v1026 = vunpack.c.l.s4 1983009808
        %v1027 = vunpack.c.0.s8 %v1026
        %v1028 = vlaneseq
        %v1029 = vshrl.u32 %v1028, 7
        %v1030 = vsub.s32 %v1027, %v1029
        %v1031 = vrot.slane %v1017, %v1030
        %v1032 = vcombine.low %v1007, %v1011
        %v1033 = vcombine.high %v1007, %v1011
        %v1035 = vunpack.c.l.s4 1983009808
        %v1036 = vunpack.c.0.s8 %v1035
        %v1037 = vlaneseq
        %v1038 = vshrl.u32 %v1037, 7
        %v1039 = vsub.s32 %v1036, %v1038
        %v1040 = vrot.slane %v1032, %v1039
        %v1042 = vunpack.c.l.s4 1983009808
        %v1043 = vunpack.c.0.s8 %v1042
        %v1044 = vlaneseq
        %v1045 = vshrl.u32 %v1044, 7
        %v1046 = vsub.s32 %v1043, %v1045
        %v1047 = vrot.slane %v1033, %v1046
        %v1048 = vcombine.low %v1024, %v1040
        %v1049 = vcombine.high %v1024, %v1040
        %v1051 = vunpack.c.l.s4 1934713408
        %v1052 = vunpack.c.0.s8 %v1051
        %v1053 = vlaneseq
        %v1054 = vshrl.u32 %v1053, 7
        %v1055 = vsub.s32 %v1052, %v1054
        %v1056 = vrot.slane %v1048, %v1055
        %v1058 = vunpack.c.l.s4 1934713408
        %v1059 = vunpack.c.0.s8 %v1058
        %v1060 = vlaneseq
        %v1061 = vshrl.u32 %v1060, 7
        %v1062 = vsub.s32 %v1059, %v1061
        %v1063 = vrot.slane %v1049, %v1062
        %v1064 = vcombine.low %v1031, %v1047
        %v1065 = vcombine.high %v1031, %v1047
        %v1067 = vunpack.c.l.s4 1934713408
        %v1068 = vunpack.c.0.s8 %v1067
        %v1069 = vlaneseq
        %v1070 = vshrl.u32 %v1069, 7
        %v1071 = vsub.s32 %v1068, %v1070
        %v1072 = vrot.slane %v1064, %v1071
        %v1074 = vunpack.c.l.s4 1934713408
        %v1075 = vunpack.c.0.s8 %v1074
        %v1076 = vlaneseq
        %v1077 = vshrl.u32 %v1076, 7
        %v1078 = vsub.s32 %v1075, %v1077
        %v1079 = vrot.slane %v1065, %v1078
        %v1080 = vcombine.high %v1056, 0.0
        %v1081 = vcombine.high %v1063, 0.0
        %v1082 = vcombine.high %v1072, 0.0
        %v1083 = vcombine.high %v1079, 0.0
        %v1084 = vcombine.low %v1056, %v1063
        %v1086 = vunpack.c.l.s4 1983009808
        %v1087 = vunpack.c.0.s8 %v1086
        %v1088 = vlaneseq
        %v1089 = vshrl.u32 %v1088, 7
        %v1090 = vsub.s32 %v1087, %v1089
        %v1091 = vrot.slane %v1084, %v1090
        %v1092 = vcombine.low %v1080, %v1081
        %v1094 = vunpack.c.l.s4 1983009808
        %v1095 = vunpack.c.0.s8 %v1094
        %v1096 = vlaneseq
        %v1097 = vshrl.u32 %v1096, 7
        %v1098 = vsub.s32 %v1095, %v1097
        %v1099 = vrot.slane %v1092, %v1098
        %v1100 = vcombine.low %v1072, %v1079
        %v1102 = vunpack.c.l.s4 1983009808
        %v1103 = vunpack.c.0.s8 %v1102
        %v1104 = vlaneseq
        %v1105 = vshrl.u32 %v1104, 7
        %v1106 = vsub.s32 %v1103, %v1105
        %v1107 = vrot.slane %v1100, %v1106
        %v1108 = vcombine.low %v1082, %v1083
        %v1110 = vunpack.c.l.s4 1983009808
        %v1111 = vunpack.c.0.s8 %v1110
        %v1112 = vlaneseq
        %v1113 = vshrl.u32 %v1112, 7
        %v1114 = vsub.s32 %v1111, %v1113
        %v1115 = vrot.slane %v1108, %v1114
        %v1116 = vcombine.low %v1091, %v1099
        %v1117 = vcombine.high %v1091, %v1099
        %v1119 = vunpack.c.l.s4 1934713408
        %v1120 = vunpack.c.0.s8 %v1119
        %v1121 = vlaneseq
        %v1122 = vshrl.u32 %v1121, 7
        %v1123 = vsub.s32 %v1120, %v1122
        %v1124 = vrot.slane %v1116, %v1123
        %v1126 = vunpack.c.l.s4 1934713408
        %v1127 = vunpack.c.0.s8 %v1126
        %v1128 = vlaneseq
        %v1129 = vshrl.u32 %v1128, 7
        %v1130 = vsub.s32 %v1127, %v1129
        %v1131 = vrot.slane %v1117, %v1130
        %v1132 = vcombine.low %v1107, %v1115
        %v1133 = vcombine.high %v1107, %v1115
        %v1135 = vunpack.c.l.s4 1934713408
        %v1136 = vunpack.c.0.s8 %v1135
        %v1137 = vlaneseq
        %v1138 = vshrl.u32 %v1137, 7
        %v1139 = vsub.s32 %v1136, %v1138
        %v1140 = vrot.slane %v1132, %v1139
        %v1142 = vunpack.c.l.s4 1934713408
        %v1143 = vunpack.c.0.s8 %v1142
        %v1144 = vlaneseq
        %v1145 = vshrl.u32 %v1144, 7
        %v1146 = vsub.s32 %v1143, %v1145
        %v1147 = vrot.slane %v1133, %v1146
        %v1148 = vcombine.low %v1124, %v1140
        %v1149 = vcombine.high %v1124, %v1140
        %v1150 = vcombine.low %v1131, %v1147
        %v1151 = vcombine.high %v1131, %v1147
        %v1152 = vpack.c.bf16 %v1148, %v1148
        %v1153 = vpack.c.bf16 %v1149, %v1149
        %v1154 = vpack.c.bf16 %v1150, %v1150
        %v1155 = vpack.c.bf16 %v1151, %v1151
        %vm1156 = vcmask 64512
        %v1158 = vsel %vm1156, %v850, 0
        %v1161 = vsel %vm1156, %v1000, 0
        %1163 = vmatprep.subr.bf16.mxu0 0
        %1164 = vmatpush1.bf16.xpose.msra.mxu0 %v1161
        %1165 = vmatprep.subr.bf16.mxu0 0
        %1166 = vmatpush1.bf16.xpose.msra.mxu0 0
        %1167 = vmatprep.subr.bf16.mxu0 0
        %1168 = vmatpush1.bf16.xpose.msra.mxu0 0
        %1169 = vmatprep.subr.bf16.mxu0 0
        %1170 = vmatpush1.bf16.xpose.msra.mxu0 0
        %1171 = vmatprep.subr.bf16.mxu0 0
        %1172 = vmatpush1.bf16.xpose.msra.mxu0 0
        %1173 = vmatprep.subr.bf16.mxu0 0
        %1174 = vmatpush1.bf16.xpose.msra.mxu0 0
        %1175 = vmatprep.subr.bf16.mxu0 0
        %1176 = vmatpush1.bf16.xpose.msra.mxu0 0
        %1177 = vmatprep.subr.bf16.mxu0 0
        %1178 = vmatpush1.bf16.xpose.msra.mxu0 0
        %1179 = vmatprep.subr.bf16.mxu0 0
        %1180 = vmatpush1.bf16.xpose.msra.mxu0 0
        %1181 = vmatprep.subr.bf16.mxu0 0
        %1182 = vmatpush1.bf16.xpose.msra.mxu0 0
        %1183 = vmatprep.subr.bf16.mxu0 0
        %1184 = vmatpush1.bf16.xpose.msra.mxu0 0
        %1185 = vmatprep.subr.bf16.mxu0 0
        %1186 = vmatpush1.bf16.xpose.msra.mxu0 0
        %1187 = vmatprep.subr.bf16.mxu0 0
        %1188 = vmatpush1.bf16.xpose.msra.mxu0 0
        %1189 = vmatprep.subr.bf16.mxu0 0
        %1190 = vmatpush1.bf16.xpose.msra.mxu0 0
        %1191 = vmatprep.subr.bf16.mxu0 0
        %1192 = vmatpush1.bf16.xpose.msra.mxu0 0
        %1193 = vmatprep.subr.bf16.mxu0 0
        %1194 = vmatpush1.bf16.xpose.msra.mxu0 0
        %1195 = vmatprep.mubr.bf16.mxu0 0
        %1196 = vmatmul.mubr.bf16.gmra.mrb[0].mxu0 %v1158
        %v1197 = vpop.f32.mrb[0].mxu0
        %v1198 = vadd.f32 0.0, %v1197
        %v1199 = vpop.f32.mrb[0].mxu0
        %v1200 = vpop.f32.mrb[0].mxu0
        %v1201 = vpop.f32.mrb[0].mxu0
        %1202 = vdwg.mxu0
        %v1204 = vsel %vm1156, %v851, 0
        %v1207 = vsel %vm1156, %v1001, 0
        %1209 = vmatprep.subr.bf16.mxu0 0
        %1210 = vmatpush1.bf16.xpose.msra.mxu0 %v1207
        %1211 = vmatprep.subr.bf16.mxu0 0
        %1212 = vmatpush1.bf16.xpose.msra.mxu0 0
        %1213 = vmatprep.subr.bf16.mxu0 0
        %1214 = vmatpush1.bf16.xpose.msra.mxu0 0
        %1215 = vmatprep.subr.bf16.mxu0 0
        %1216 = vmatpush1.bf16.xpose.msra.mxu0 0
        %1217 = vmatprep.subr.bf16.mxu0 0
        %1218 = vmatpush1.bf16.xpose.msra.mxu0 0
        %1219 = vmatprep.subr.bf16.mxu0 0
        %1220 = vmatpush1.bf16.xpose.msra.mxu0 0
        %1221 = vmatprep.subr.bf16.mxu0 0
        %1222 = vmatpush1.bf16.xpose.msra.mxu0 0
        %1223 = vmatprep.subr.bf16.mxu0 0
        %1224 = vmatpush1.bf16.xpose.msra.mxu0 0
        %1225 = vmatprep.subr.bf16.mxu0 0
        %1226 = vmatpush1.bf16.xpose.msra.mxu0 0
        %1227 = vmatprep.subr.bf16.mxu0 0
        %1228 = vmatpush1.bf16.xpose.msra.mxu0 0
        %1229 = vmatprep.subr.bf16.mxu0 0
        %1230 = vmatpush1.bf16.xpose.msra.mxu0 0
        %1231 = vmatprep.subr.bf16.mxu0 0
        %1232 = vmatpush1.bf16.xpose.msra.mxu0 0
        %1233 = vmatprep.subr.bf16.mxu0 0
        %1234 = vmatpush1.bf16.xpose.msra.mxu0 0
        %1235 = vmatprep.subr.bf16.mxu0 0
        %1236 = vmatpush1.bf16.xpose.msra.mxu0 0
        %1237 = vmatprep.subr.bf16.mxu0 0
        %1238 = vmatpush1.bf16.xpose.msra.mxu0 0
        %1239 = vmatprep.subr.bf16.mxu0 0
        %1240 = vmatpush1.bf16.xpose.msra.mxu0 0
        %1241 = vmatprep.mubr.bf16.mxu0 0
        %1242 = vmatmul.mubr.bf16.gmra.mrb[0].mxu0 %v1204
        %v1243 = vpop.f32.mrb[0].mxu0
        %v1244 = vadd.f32 0.0, %v1243
        %v1245 = vpop.f32.mrb[0].mxu0
        %v1246 = vpop.f32.mrb[0].mxu0
        %v1247 = vpop.f32.mrb[0].mxu0
        %1248 = vdwg.mxu0
        %v1250 = vsel %vm1156, %v852, 0
        %v1253 = vsel %vm1156, %v1002, 0
        %1255 = vmatprep.subr.bf16.mxu0 0
        %1256 = vmatpush1.bf16.xpose.msra.mxu0 %v1253
        %1257 = vmatprep.subr.bf16.mxu0 0
        %1258 = vmatpush1.bf16.xpose.msra.mxu0 0
        %1259 = vmatprep.subr.bf16.mxu0 0
        %1260 = vmatpush1.bf16.xpose.msra.mxu0 0
        %1261 = vmatprep.subr.bf16.mxu0 0
        %1262 = vmatpush1.bf16.xpose.msra.mxu0 0
        %1263 = vmatprep.subr.bf16.mxu0 0
        %1264 = vmatpush1.bf16.xpose.msra.mxu0 0
        %1265 = vmatprep.subr.bf16.mxu0 0
        %1266 = vmatpush1.bf16.xpose.msra.mxu0 0
        %1267 = vmatprep.subr.bf16.mxu0 0
        %1268 = vmatpush1.bf16.xpose.msra.mxu0 0
        %1269 = vmatprep.subr.bf16.mxu0 0
        %1270 = vmatpush1.bf16.xpose.msra.mxu0 0
        %1271 = vmatprep.subr.bf16.mxu0 0
        %1272 = vmatpush1.bf16.xpose.msra.mxu0 0
        %1273 = vmatprep.subr.bf16.mxu0 0
        %1274 = vmatpush1.bf16.xpose.msra.mxu0 0
        %1275 = vmatprep.subr.bf16.mxu0 0
        %1276 = vmatpush1.bf16.xpose.msra.mxu0 0
        %1277 = vmatprep.subr.bf16.mxu0 0
        %1278 = vmatpush1.bf16.xpose.msra.mxu0 0
        %1279 = vmatprep.subr.bf16.mxu0 0
        %1280 = vmatpush1.bf16.xpose.msra.mxu0 0
        %1281 = vmatprep.subr.bf16.mxu0 0
        %1282 = vmatpush1.bf16.xpose.msra.mxu0 0
        %1283 = vmatprep.subr.bf16.mxu0 0
        %1284 = vmatpush1.bf16.xpose.msra.mxu0 0
        %1285 = vmatprep.subr.bf16.mxu0 0
        %1286 = vmatpush1.bf16.xpose.msra.mxu0 0
        %1287 = vmatprep.mubr.bf16.mxu0 0
        %1288 = vmatmul.mubr.bf16.gmra.mrb[0].mxu0 %v1250
        %v1289 = vpop.f32.mrb[0].mxu0
        %v1290 = vadd.f32 0.0, %v1289
        %v1291 = vpop.f32.mrb[0].mxu0
        %v1292 = vpop.f32.mrb[0].mxu0
        %v1293 = vpop.f32.mrb[0].mxu0
        %1294 = vdwg.mxu0
        %v1296 = vsel %vm1156, %v853, 0
        %v1299 = vsel %vm1156, %v1003, 0
        %1301 = vmatprep.subr.bf16.mxu0 0
        %1302 = vmatpush1.bf16.xpose.msra.mxu0 %v1299
        %1303 = vmatprep.subr.bf16.mxu0 0
        %1304 = vmatpush1.bf16.xpose.msra.mxu0 0
        %1305 = vmatprep.subr.bf16.mxu0 0
        %1306 = vmatpush1.bf16.xpose.msra.mxu0 0
        %1307 = vmatprep.subr.bf16.mxu0 0
        %1308 = vmatpush1.bf16.xpose.msra.mxu0 0
        %1309 = vmatprep.subr.bf16.mxu0 0
        %1310 = vmatpush1.bf16.xpose.msra.mxu0 0
        %1311 = vmatprep.subr.bf16.mxu0 0
        %1312 = vmatpush1.bf16.xpose.msra.mxu0 0
        %1313 = vmatprep.subr.bf16.mxu0 0
        %1314 = vmatpush1.bf16.xpose.msra.mxu0 0
        %1315 = vmatprep.subr.bf16.mxu0 0
        %1316 = vmatpush1.bf16.xpose.msra.mxu0 0
        %1317 = vmatprep.subr.bf16.mxu0 0
        %1318 = vmatpush1.bf16.xpose.msra.mxu0 0
        %1319 = vmatprep.subr.bf16.mxu0 0
        %1320 = vmatpush1.bf16.xpose.msra.mxu0 0
        %1321 = vmatprep.subr.bf16.mxu0 0
        %1322 = vmatpush1.bf16.xpose.msra.mxu0 0
        %1323 = vmatprep.subr.bf16.mxu0 0
        %1324 = vmatpush1.bf16.xpose.msra.mxu0 0
        %1325 = vmatprep.subr.bf16.mxu0 0
        %1326 = vmatpush1.bf16.xpose.msra.mxu0 0
        %1327 = vmatprep.subr.bf16.mxu0 0
        %1328 = vmatpush1.bf16.xpose.msra.mxu0 0
        %1329 = vmatprep.subr.bf16.mxu0 0
        %1330 = vmatpush1.bf16.xpose.msra.mxu0 0
        %1331 = vmatprep.subr.bf16.mxu0 0
        %1332 = vmatpush1.bf16.xpose.msra.mxu0 0
        %1333 = vmatprep.mubr.bf16.mxu0 0
        %1334 = vmatmul.mubr.bf16.gmra.mrb[0].mxu0 %v1296
        %v1335 = vpop.f32.mrb[0].mxu0
        %v1336 = vadd.f32 0.0, %v1335
        %v1337 = vpop.f32.mrb[0].mxu0
        %v1338 = vpop.f32.mrb[0].mxu0
        %v1339 = vpop.f32.mrb[0].mxu0
        %1340 = vdwg.mxu0
        %v1341 = vsel %vm1156, %v1198, -inf
        %1342 = vmax.xlane.f32.xlu0 %v1341
        %v1343 = vpop.xlane.xlu0 %1342
        %v1344 = vsel %vm1156, %v1244, -inf
        %1345 = vmax.xlane.f32.xlu0 %v1344
        %v1346 = vpop.xlane.xlu0 %1345
        %v1347 = vsel %vm1156, %v1290, -inf
        %1348 = vmax.xlane.f32.xlu0 %v1347
        %v1349 = vpop.xlane.xlu0 %1348
        %v1350 = vsel %vm1156, %v1336, -inf
        %1351 = vmax.xlane.f32.xlu0 %v1350
        %v1352 = vpop.xlane.xlu0 %1351
        %v1353 = vsub.f32 %v1198, %v1343
        %v1354 = vsub.f32 %v1244, %v1346
        %v1355 = vsub.f32 %v1290, %v1349
        %v1356 = vsub.f32 %v1336, %v1352
        %v1357 = vmul.f32 %v1353, 1.442695
        %v1358 = vpow.pop %v1357
        %v1359 = vmul.f32 %v1354, 1.442695
        %v1360 = vpow.pop %v1359
        %v1361 = vmul.f32 %v1355, 1.442695
        %v1362 = vpow.pop %v1361
        %v1363 = vmul.f32 %v1356, 1.442695
        %v1364 = vpow.pop %v1363
        %v1365 = vsel %vm1156, %v1358, 0.0
        %1366 = vadd.xlane.f32.xlu0 %v1365
        %v1367 = vpop.xlane.xlu0 %1366
        %v1368 = vsel %vm1156, %v1360, 0.0
        %1369 = vadd.xlane.f32.xlu0 %v1368
        %v1370 = vpop.xlane.xlu0 %1369
        %v1371 = vsel %vm1156, %v1362, 0.0
        %1372 = vadd.xlane.f32.xlu0 %v1371
        %v1373 = vpop.xlane.xlu0 %1372
        %v1374 = vsel %vm1156, %v1364, 0.0
        %1375 = vadd.xlane.f32.xlu0 %v1374
        %v1376 = vpop.xlane.xlu0 %1375
        %v1377 = vrcp.pop %v1367
        %v1378 = vrcp.pop %v1370
        %v1379 = vrcp.pop %v1373
        %v1380 = vrcp.pop %v1376
        %v1381 = vmul.f32 %v1358, %v1377
        %v1382 = vmul.f32 %v1360, %v1378
        %v1383 = vmul.f32 %v1362, %v1379
        %v1384 = vmul.f32 %v1364, %v1380
        %v1385 = vpack.c.bf16 %v1381, %v1381
        %v1386 = vpack.c.bf16 %v1382, %v1382
        %v1387 = vpack.c.bf16 %v1383, %v1383
        %v1388 = vpack.c.bf16 %v1384, %v1384
        %v1390 = vsel %vm1156, %v1385, 0
        %vm1392 = vcmask 1043456
        %v1394 = vsel %vm1392, %v1152, 0
        %1396 = vmatprep.subr.bf16.mxu0 0
        %1397 = vmatpush1.bf16.msra.mxu0 %v1394
        %1398 = vmatprep.subr.bf16.mxu0 0
        %1399 = vmatpush1.bf16.msra.mxu0 0
        %1400 = vmatprep.subr.bf16.mxu0 0
        %1401 = vmatpush1.bf16.msra.mxu0 0
        %1402 = vmatprep.subr.bf16.mxu0 0
        %1403 = vmatpush1.bf16.msra.mxu0 0
        %1404 = vmatprep.subr.bf16.mxu0 0
        %1405 = vmatpush1.bf16.msra.mxu0 0
        %1406 = vmatprep.subr.bf16.mxu0 0
        %1407 = vmatpush1.bf16.msra.mxu0 0
        %1408 = vmatprep.subr.bf16.mxu0 0
        %1409 = vmatpush1.bf16.msra.mxu0 0
        %1410 = vmatprep.subr.bf16.mxu0 0
        %1411 = vmatpush1.bf16.msra.mxu0 0
        %1412 = vmatprep.subr.bf16.mxu0 0
        %1413 = vmatpush1.bf16.msra.mxu0 0
        %1414 = vmatprep.subr.bf16.mxu0 0
        %1415 = vmatpush1.bf16.msra.mxu0 0
        %1416 = vmatprep.subr.bf16.mxu0 0
        %1417 = vmatpush1.bf16.msra.mxu0 0
        %1418 = vmatprep.subr.bf16.mxu0 0
        %1419 = vmatpush1.bf16.msra.mxu0 0
        %1420 = vmatprep.subr.bf16.mxu0 0
        %1421 = vmatpush1.bf16.msra.mxu0 0
        %1422 = vmatprep.subr.bf16.mxu0 0
        %1423 = vmatpush1.bf16.msra.mxu0 0
        %1424 = vmatprep.subr.bf16.mxu0 0
        %1425 = vmatpush1.bf16.msra.mxu0 0
        %1426 = vmatprep.subr.bf16.mxu0 0
        %1427 = vmatpush1.bf16.msra.mxu0 0
        %1428 = vmatprep.mubr.bf16.mxu0 0
        %1429 = vmatmul.mubr.bf16.gmra.mrb[0].mxu0 %v1390
        %v1430 = vpop.f32.mrb[0].mxu0
        %v1431 = vadd.f32 0.0, %v1430
        %v1432 = vpop.f32.mrb[0].mxu0
        %v1433 = vpop.f32.mrb[0].mxu0
        %v1434 = vpop.f32.mrb[0].mxu0
        %1435 = vdwg.mxu0
        %v1437 = vsel %vm1156, %v1386, 0
        %v1440 = vsel %vm1392, %v1153, 0
        %1442 = vmatprep.subr.bf16.mxu0 0
        %1443 = vmatpush1.bf16.msra.mxu0 %v1440
        %1444 = vmatprep.subr.bf16.mxu0 0
        %1445 = vmatpush1.bf16.msra.mxu0 0
        %1446 = vmatprep.subr.bf16.mxu0 0
        %1447 = vmatpush1.bf16.msra.mxu0 0
        %1448 = vmatprep.subr.bf16.mxu0 0
        %1449 = vmatpush1.bf16.msra.mxu0 0
        %1450 = vmatprep.subr.bf16.mxu0 0
        %1451 = vmatpush1.bf16.msra.mxu0 0
        %1452 = vmatprep.subr.bf16.mxu0 0
        %1453 = vmatpush1.bf16.msra.mxu0 0
        %1454 = vmatprep.subr.bf16.mxu0 0
        %1455 = vmatpush1.bf16.msra.mxu0 0
        %1456 = vmatprep.subr.bf16.mxu0 0
        %1457 = vmatpush1.bf16.msra.mxu0 0
        %1458 = vmatprep.subr.bf16.mxu0 0
        %1459 = vmatpush1.bf16.msra.mxu0 0
        %1460 = vmatprep.subr.bf16.mxu0 0
        %1461 = vmatpush1.bf16.msra.mxu0 0
        %1462 = vmatprep.subr.bf16.mxu0 0
        %1463 = vmatpush1.bf16.msra.mxu0 0
        %1464 = vmatprep.subr.bf16.mxu0 0
        %1465 = vmatpush1.bf16.msra.mxu0 0
        %1466 = vmatprep.subr.bf16.mxu0 0
        %1467 = vmatpush1.bf16.msra.mxu0 0
        %1468 = vmatprep.subr.bf16.mxu0 0
        %1469 = vmatpush1.bf16.msra.mxu0 0
        %1470 = vmatprep.subr.bf16.mxu0 0
        %1471 = vmatpush1.bf16.msra.mxu0 0
        %1472 = vmatprep.subr.bf16.mxu0 0
        %1473 = vmatpush1.bf16.msra.mxu0 0
        %1474 = vmatprep.mubr.bf16.mxu0 0
        %1475 = vmatmul.mubr.bf16.gmra.mrb[0].mxu0 %v1437
        %v1476 = vpop.f32.mrb[0].mxu0
        %v1477 = vadd.f32 0.0, %v1476
        %v1478 = vpop.f32.mrb[0].mxu0
        %v1479 = vpop.f32.mrb[0].mxu0
        %v1480 = vpop.f32.mrb[0].mxu0
        %1481 = vdwg.mxu0
        %v1483 = vsel %vm1156, %v1387, 0
        %v1486 = vsel %vm1392, %v1154, 0
        %1488 = vmatprep.subr.bf16.mxu0 0
        %1489 = vmatpush1.bf16.msra.mxu0 %v1486
        %1490 = vmatprep.subr.bf16.mxu0 0
        %1491 = vmatpush1.bf16.msra.mxu0 0
        %1492 = vmatprep.subr.bf16.mxu0 0
        %1493 = vmatpush1.bf16.msra.mxu0 0
        %1494 = vmatprep.subr.bf16.mxu0 0
        %1495 = vmatpush1.bf16.msra.mxu0 0
        %1496 = vmatprep.subr.bf16.mxu0 0
        %1497 = vmatpush1.bf16.msra.mxu0 0
        %1498 = vmatprep.subr.bf16.mxu0 0
        %1499 = vmatpush1.bf16.msra.mxu0 0
        %1500 = vmatprep.subr.bf16.mxu0 0
        %1501 = vmatpush1.bf16.msra.mxu0 0
        %1502 = vmatprep.subr.bf16.mxu0 0
        %1503 = vmatpush1.bf16.msra.mxu0 0
        %1504 = vmatprep.subr.bf16.mxu0 0
        %1505 = vmatpush1.bf16.msra.mxu0 0
        %1506 = vmatprep.subr.bf16.mxu0 0
        %1507 = vmatpush1.bf16.msra.mxu0 0
        %1508 = vmatprep.subr.bf16.mxu0 0
        %1509 = vmatpush1.bf16.msra.mxu0 0
        %1510 = vmatprep.subr.bf16.mxu0 0
        %1511 = vmatpush1.bf16.msra.mxu0 0
        %1512 = vmatprep.subr.bf16.mxu0 0
        %1513 = vmatpush1.bf16.msra.mxu0 0
        %1514 = vmatprep.subr.bf16.mxu0 0
        %1515 = vmatpush1.bf16.msra.mxu0 0
        %1516 = vmatprep.subr.bf16.mxu0 0
        %1517 = vmatpush1.bf16.msra.mxu0 0
        %1518 = vmatprep.subr.bf16.mxu0 0
        %1519 = vmatpush1.bf16.msra.mxu0 0
        %1520 = vmatprep.mubr.bf16.mxu0 0
        %1521 = vmatmul.mubr.bf16.gmra.mrb[0].mxu0 %v1483
        %v1522 = vpop.f32.mrb[0].mxu0
        %v1523 = vadd.f32 0.0, %v1522
        %v1524 = vpop.f32.mrb[0].mxu0
        %v1525 = vpop.f32.mrb[0].mxu0
        %v1526 = vpop.f32.mrb[0].mxu0
        %1527 = vdwg.mxu0
        %v1529 = vsel %vm1156, %v1388, 0
        %v1532 = vsel %vm1392, %v1155, 0
        %1534 = vmatprep.subr.bf16.mxu0 0
        %1535 = vmatpush1.bf16.msra.mxu0 %v1532
        %1536 = vmatprep.subr.bf16.mxu0 0
        %1537 = vmatpush1.bf16.msra.mxu0 0
        %1538 = vmatprep.subr.bf16.mxu0 0
        %1539 = vmatpush1.bf16.msra.mxu0 0
        %1540 = vmatprep.subr.bf16.mxu0 0
        %1541 = vmatpush1.bf16.msra.mxu0 0
        %1542 = vmatprep.subr.bf16.mxu0 0
        %1543 = vmatpush1.bf16.msra.mxu0 0
        %1544 = vmatprep.subr.bf16.mxu0 0
        %1545 = vmatpush1.bf16.msra.mxu0 0
        %1546 = vmatprep.subr.bf16.mxu0 0
        %1547 = vmatpush1.bf16.msra.mxu0 0
        %1548 = vmatprep.subr.bf16.mxu0 0
        %1549 = vmatpush1.bf16.msra.mxu0 0
        %1550 = vmatprep.subr.bf16.mxu0 0
        %1551 = vmatpush1.bf16.msra.mxu0 0
        %1552 = vmatprep.subr.bf16.mxu0 0
        %1553 = vmatpush1.bf16.msra.mxu0 0
        %1554 = vmatprep.subr.bf16.mxu0 0
        %1555 = vmatpush1.bf16.msra.mxu0 0
        %1556 = vmatprep.subr.bf16.mxu0 0
        %1557 = vmatpush1.bf16.msra.mxu0 0
        %1558 = vmatprep.subr.bf16.mxu0 0
        %1559 = vmatpush1.bf16.msra.mxu0 0
        %1560 = vmatprep.subr.bf16.mxu0 0
        %1561 = vmatpush1.bf16.msra.mxu0 0
        %1562 = vmatprep.subr.bf16.mxu0 0
        %1563 = vmatpush1.bf16.msra.mxu0 0
        %1564 = vmatprep.subr.bf16.mxu0 0
        %1565 = vmatpush1.bf16.msra.mxu0 0
        %1566 = vmatprep.mubr.bf16.mxu0 0
        %1567 = vmatmul.mubr.bf16.gmra.mrb[0].mxu0 %v1529
        %v1568 = vpop.f32.mrb[0].mxu0
        %v1569 = vadd.f32 0.0, %v1568
        %v1570 = vpop.f32.mrb[0].mxu0
        %v1571 = vpop.f32.mrb[0].mxu0
        %v1572 = vpop.f32.mrb[0].mxu0
        %1573 = vdwg.mxu0
        %v1574 = vcombine.low %v1431, %v1523
        %v1575 = vcombine.high %v1431, %v1523
        %v1577 = vunpack.c.l.s4 1983009808
        %v1578 = vunpack.c.0.s8 %v1577
        %v1579 = vlaneseq
        %v1580 = vshrl.u32 %v1579, 7
        %v1581 = vsub.s32 %v1578, %v1580
        %v1582 = vrot.slane %v1574, %v1581
        %v1584 = vunpack.c.l.s4 1983009808
        %v1585 = vunpack.c.0.s8 %v1584
        %v1586 = vlaneseq
        %v1587 = vshrl.u32 %v1586, 7
        %v1588 = vsub.s32 %v1585, %v1587
        %v1589 = vrot.slane %v1575, %v1588
        %v1590 = vcombine.low %v1477, %v1569
        %v1591 = vcombine.high %v1477, %v1569
        %v1593 = vunpack.c.l.s4 1983009808
        %v1594 = vunpack.c.0.s8 %v1593
        %v1595 = vlaneseq
        %v1596 = vshrl.u32 %v1595, 7
        %v1597 = vsub.s32 %v1594, %v1596
        %v1598 = vrot.slane %v1590, %v1597
        %v1600 = vunpack.c.l.s4 1983009808
        %v1601 = vunpack.c.0.s8 %v1600
        %v1602 = vlaneseq
        %v1603 = vshrl.u32 %v1602, 7
        %v1604 = vsub.s32 %v1601, %v1603
        %v1605 = vrot.slane %v1591, %v1604
        %v1606 = vcombine.low %v1582, %v1598
        %v1607 = vcombine.high %v1582, %v1598
        %v1609 = vunpack.c.l.s4 1934713408
        %v1610 = vunpack.c.0.s8 %v1609
        %v1611 = vlaneseq
        %v1612 = vshrl.u32 %v1611, 7
        %v1613 = vsub.s32 %v1610, %v1612
        %v1614 = vrot.slane %v1606, %v1613
        %v1616 = vunpack.c.l.s4 1934713408
        %v1617 = vunpack.c.0.s8 %v1616
        %v1618 = vlaneseq
        %v1619 = vshrl.u32 %v1618, 7
        %v1620 = vsub.s32 %v1617, %v1619
        %v1621 = vrot.slane %v1607, %v1620
        %v1622 = vcombine.low %v1589, %v1605
        %v1623 = vcombine.high %v1589, %v1605
        %v1625 = vunpack.c.l.s4 1934713408
        %v1626 = vunpack.c.0.s8 %v1625
        %v1627 = vlaneseq
        %v1628 = vshrl.u32 %v1627, 7
        %v1629 = vsub.s32 %v1626, %v1628
        %v1630 = vrot.slane %v1622, %v1629
        %v1632 = vunpack.c.l.s4 1934713408
        %v1633 = vunpack.c.0.s8 %v1632
        %v1634 = vlaneseq
        %v1635 = vshrl.u32 %v1634, 7
        %v1636 = vsub.s32 %v1633, %v1635
        %v1637 = vrot.slane %v1623, %v1636
        %v1638 = vcombine.high %v1614, 0.0
        %v1639 = vcombine.high %v1621, 0.0
        %v1640 = vcombine.high %v1630, 0.0
        %v1641 = vcombine.high %v1637, 0.0
        %v1642 = vcombine.low %v1614, %v1621
        %v1644 = vunpack.c.l.s4 1983009808
        %v1645 = vunpack.c.0.s8 %v1644
        %v1646 = vlaneseq
        %v1647 = vshrl.u32 %v1646, 7
        %v1648 = vsub.s32 %v1645, %v1647
        %v1649 = vrot.slane %v1642, %v1648
        %v1650 = vcombine.low %v1638, %v1639
        %v1652 = vunpack.c.l.s4 1983009808
        %v1653 = vunpack.c.0.s8 %v1652
        %v1654 = vlaneseq
        %v1655 = vshrl.u32 %v1654, 7
        %v1656 = vsub.s32 %v1653, %v1655
        %v1657 = vrot.slane %v1650, %v1656
        %v1658 = vcombine.low %v1630, %v1637
        %v1660 = vunpack.c.l.s4 1983009808
        %v1661 = vunpack.c.0.s8 %v1660
        %v1662 = vlaneseq
        %v1663 = vshrl.u32 %v1662, 7
        %v1664 = vsub.s32 %v1661, %v1663
        %v1665 = vrot.slane %v1658, %v1664
        %v1666 = vcombine.low %v1640, %v1641
        %v1668 = vunpack.c.l.s4 1983009808
        %v1669 = vunpack.c.0.s8 %v1668
        %v1670 = vlaneseq
        %v1671 = vshrl.u32 %v1670, 7
        %v1672 = vsub.s32 %v1669, %v1671
        %v1673 = vrot.slane %v1666, %v1672
        %v1674 = vcombine.low %v1649, %v1657
        %v1675 = vcombine.high %v1649, %v1657
        %v1677 = vunpack.c.l.s4 1934713408
        %v1678 = vunpack.c.0.s8 %v1677
        %v1679 = vlaneseq
        %v1680 = vshrl.u32 %v1679, 7
        %v1681 = vsub.s32 %v1678, %v1680
        %v1682 = vrot.slane %v1674, %v1681
        %v1684 = vunpack.c.l.s4 1934713408
        %v1685 = vunpack.c.0.s8 %v1684
        %v1686 = vlaneseq
        %v1687 = vshrl.u32 %v1686, 7
        %v1688 = vsub.s32 %v1685, %v1687
        %v1689 = vrot.slane %v1675, %v1688
        %v1690 = vcombine.low %v1665, %v1673
        %v1691 = vcombine.high %v1665, %v1673
        %v1693 = vunpack.c.l.s4 1934713408
        %v1694 = vunpack.c.0.s8 %v1693
        %v1695 = vlaneseq
        %v1696 = vshrl.u32 %v1695, 7
        %v1697 = vsub.s32 %v1694, %v1696
        %v1698 = vrot.slane %v1690, %v1697
        %v1700 = vunpack.c.l.s4 1934713408
        %v1701 = vunpack.c.0.s8 %v1700
        %v1702 = vlaneseq
        %v1703 = vshrl.u32 %v1702, 7
        %v1704 = vsub.s32 %v1701, %v1703
        %v1705 = vrot.slane %v1691, %v1704
        %v1706 = vcombine.low %v1682, %v1698
        %v1707 = vcombine.high %v1682, %v1698
        %v1708 = vcombine.low %v1689, %v1705
        %v1709 = vcombine.high %v1689, %v1705
        %1711 = vrot.lane.b32.xlu0 %v1707, 8
        %v1712 = vpop.permute.xlu0 %1711
        %1715 = vrot.lane.b32.xlu0 %v1708, 16
        %v1716 = vpop.permute.xlu0 %1715
        %1719 = vrot.lane.b32.xlu0 %v1709, 24
        %v1720 = vpop.permute.xlu0 %1719
        %v1722 = vsel %vm1156, %v1706, %v1712
        %vm1723 = vcmask 130048
        %v1724 = vsel %vm1723, %v1722, %v1716
        %vm1725 = vcmask 195584
        %v1726 = vsel %vm1725, %v1724, %v1720
        %v1727 = vadd.f32 %v1726, %v506
        %v1728 = vsel %vm536, %v1727, 0.0
        %1729 = vadd.xlane.f32.xlu0 %v1728
        %v1730 = vpop.xlane.xlu0 %1729
        %v1731 = vmul.f32 %v1730, %v540
        %v1732 = vsub.f32 %v1727, %v1731
        %v1733 = vmul.f32 %v1732, %v1732
        %v1734 = vsel %vm536, %v1733, 0.0
        %1735 = vadd.xlane.f32.xlu0 %v1734
        %v1736 = vpop.xlane.xlu0 %1735
        %v1737 = vmul.f32 %v1736, %v540
        %v1738 = vadd.f32 %v1737, 1e-05
        %v1739 = vrsqrt.pop %v1738
        %v1740 = vmul.f32 %v1732, %v1739
        %v1742 = vlaneseq
        %v1743 = vshrl.u32 %v1742, 7
        %v1744 = vsub.s32 0, %v1743
        %v1745 = vrot.slane %v520, %v1744
        %v1747 = vmul.f32 %v1740, %v1745
        %v1749 = vlaneseq
        %v1750 = vshrl.u32 %v1749, 7
        %v1751 = vsub.s32 0, %v1750
        %v1752 = vrot.slane %v521, %v1751
        %v1754 = vadd.f32 %v1747, %v1752
        %v1755 = vpack.c.bf16 %v1754, %v1754
        %v1757 = vlaneseq
        %v1758 = vshrl.u32 %v1757, 7
        %v1759 = vsub.s32 0, %v1758
        %v1760 = vrot.slane %v526, %v1759
        %v1766 = vunpack.c.l.b16 %v522
        %v1767 = vunpack.c.l.b16 %v523
        %v1768 = vunpack.c.l.b16 %v524
        %v1769 = vunpack.c.l.b16 %v525
        %v1770 = vpack.c.b16 %v1767, %v1766
        %v1771 = vpack.c.b16 %v1769, %v1768
        %v1775 = vsel %vm536, %v1755, 0
        %1777 = vmatprep.subr.bf16.mxu0 0
        %1778 = vmatpush1.bf16.msra.mxu0 %v1770
        %1779 = vmatprep.subr.bf16.mxu0 0
        %1780 = vmatpush1.bf16.msra.mxu0 %v1771
        %1781 = vmatprep.subr.bf16.mxu0 0
        %1782 = vmatpush1.bf16.msra.mxu0 0
        %1783 = vmatprep.subr.bf16.mxu0 0
        %1784 = vmatpush1.bf16.msra.mxu0 0
        %1785 = vmatprep.subr.bf16.mxu0 0
        %1786 = vmatpush1.bf16.msra.mxu0 0
        %1787 = vmatprep.subr.bf16.mxu0 0
        %1788 = vmatpush1.bf16.msra.mxu0 0
        %1789 = vmatprep.subr.bf16.mxu0 0
        %1790 = vmatpush1.bf16.msra.mxu0 0
        %1791 = vmatprep.subr.bf16.mxu0 0
        %1792 = vmatpush1.bf16.msra.mxu0 0
        %1793 = vmatprep.subr.bf16.mxu0 0
        %1794 = vmatpush1.bf16.msra.mxu0 0
        %1795 = vmatprep.subr.bf16.mxu0 0
        %1796 = vmatpush1.bf16.msra.mxu0 0
        %1797 = vmatprep.subr.bf16.mxu0 0
        %1798 = vmatpush1.bf16.msra.mxu0 0
        %1799 = vmatprep.subr.bf16.mxu0 0
        %1800 = vmatpush1.bf16.msra.mxu0 0
        %1801 = vmatprep.subr.bf16.mxu0 0
        %1802 = vmatpush1.bf16.msra.mxu0 0
        %1803 = vmatprep.subr.bf16.mxu0 0
        %1804 = vmatpush1.bf16.msra.mxu0 0
        %1805 = vmatprep.subr.bf16.mxu0 0
        %1806 = vmatpush1.bf16.msra.mxu0 0
        %1807 = vmatprep.subr.bf16.mxu0 0
        %1808 = vmatpush1.bf16.msra.mxu0 0
        %1809 = vmatprep.mubr.bf16.mxu0 0
        %1810 = vmatmul.mubr.bf16.gmra.mrb[0].mxu0 %v1775
        %v1811 = vpop.f32.mrb[0].mxu0
        %v1812 = vadd.f32 %v1760, %v1811
        %v1813 = vpop.f32.mrb[0].mxu0
        %v1814 = vpop.f32.mrb[0].mxu0
        %v1815 = vpop.f32.mrb[0].mxu0
        %1816 = vdwg.mxu0
        %v1817 = vmul.f32 %v1812, 0.5
        %v1818 = vmul.f32 %v1812, 0.70710677
        %v1819 = verf.f32.pop %v1818
        %v1820 = vadd.f32 %v1819, 1.0
        %v1821 = vmul.f32 %v1817, %v1820
        %v1822 = vpack.c.bf16 %v1821, %v1821
        %v1824 = vlaneseq
        %v1825 = vshrl.u32 %v1824, 7
        %v1826 = vsub.s32 0, %v1825
        %v1827 = vrot.slane %v535, %v1826
        %v1837 = vunpack.c.l.b16 %v527
        %v1838 = vunpack.c.l.b16 %v528
        %v1839 = vunpack.c.l.b16 %v529
        %v1840 = vunpack.c.l.b16 %v530
        %v1841 = vunpack.c.l.b16 %v531
        %v1842 = vunpack.c.l.b16 %v532
        %v1843 = vunpack.c.l.b16 %v533
        %v1844 = vunpack.c.l.b16 %v534
        %v1845 = vpack.c.b16 %v1838, %v1837
        %v1846 = vpack.c.b16 %v1840, %v1839
        %v1847 = vpack.c.b16 %v1842, %v1841
        %v1848 = vpack.c.b16 %v1844, %v1843
        %vm1853 = vcmask 523264
        %v1855 = vsel %vm1853, %v1822, 0
        %1857 = vmatprep.subr.bf16.mxu0 0
        %1858 = vmatpush1.bf16.msra.mxu0 %v1845
        %1859 = vmatprep.subr.bf16.mxu0 0
        %1860 = vmatpush1.bf16.msra.mxu0 %v1846
        %1861 = vmatprep.subr.bf16.mxu0 0
        %1862 = vmatpush1.bf16.msra.mxu0 %v1847
        %1863 = vmatprep.subr.bf16.mxu0 0
        %1864 = vmatpush1.bf16.msra.mxu0 %v1848
        %1865 = vmatprep.subr.bf16.mxu0 0
        %1866 = vmatpush1.bf16.msra.mxu0 0
        %1867 = vmatprep.subr.bf16.mxu0 0
        %1868 = vmatpush1.bf16.msra.mxu0 0
        %1869 = vmatprep.subr.bf16.mxu0 0
        %1870 = vmatpush1.bf16.msra.mxu0 0
        %1871 = vmatprep.subr.bf16.mxu0 0
        %1872 = vmatpush1.bf16.msra.mxu0 0
        %1873 = vmatprep.subr.bf16.mxu0 0
        %1874 = vmatpush1.bf16.msra.mxu0 0
        %1875 = vmatprep.subr.bf16.mxu0 0
        %1876 = vmatpush1.bf16.msra.mxu0 0
        %1877 = vmatprep.subr.bf16.mxu0 0
        %1878 = vmatpush1.bf16.msra.mxu0 0
        %1879 = vmatprep.subr.bf16.mxu0 0
        %1880 = vmatpush1.bf16.msra.mxu0 0
        %1881 = vmatprep.subr.bf16.mxu0 0
        %1882 = vmatpush1.bf16.msra.mxu0 0
        %1883 = vmatprep.subr.bf16.mxu0 0
        %1884 = vmatpush1.bf16.msra.mxu0 0
        %1885 = vmatprep.subr.bf16.mxu0 0
        %1886 = vmatpush1.bf16.msra.mxu0 0
        %1887 = vmatprep.subr.bf16.mxu0 0
        %1888 = vmatpush1.bf16.msra.mxu0 0
        %1889 = vmatprep.mubr.bf16.mxu0 0
        %1890 = vmatmul.mubr.bf16.gmra.mrb[0].mxu0 %v1855
        %v1891 = vpop.f32.mrb[0].mxu0
        %v1892 = vadd.f32 %v1827, %v1891
        %v1893 = vpop.f32.mrb[0].mxu0
        %v1894 = vpop.f32.mrb[0].mxu0
        %v1895 = vpop.f32.mrb[0].mxu0
        %1896 = vdwg.mxu0
        %v1897 = vadd.f32 %v1892, %v1727
        %1898 = vst.msk [vmem:[%s493] sm:$0xff] %vm536, %v1897
        %s1899 = sand.u32 %s356, 1
        %s1900 = scalar_lea.sflag [#allocation3], %s1899
        %s1901 = sand.u32 %s356, 1
        %s1902 = smul.addr %s1901, 8
        %s1903 = scalar_lea.vmem [#allocation2], %s1902
        // Predicated region
        $region77: #{transformer_forward.3} parent=75 // pred_check
          %p1904 = pneg %p366
        $region78: #{transformer_forward.3} parent=75 // pred_check_branch
          %1906 = sbr.rel (%p1904) target = $region80
        $region79: #{transformer_forward.3} parent=75 // pred_region
          %s1908 = ssub.s32 128, 128
          %1909 = vsyncadd %s1900, %s1908
          %s1910 = sadd.s32 %s33, %s32
          %s1911 = smul.addr %s1910, 128
          %s1912 = scalar_lea.hbm %s14, %s1911
          %s1914 = sshll.u32 %s1903, 4
          %s1915 = int_to_ptr.vmem [resolvable:$true] %s1914
          %1917 = dma.vmem_to_hbm [thread:$0]  %s1915, 128, %s1912, %s1900
        $region80: #{transformer_forward.3} parent=75 // pred_fallthru
          _
      $region76: #{transformer_forward.3} parent=5 // pred_fallthru
        _
      %p1918 = scmp.le.s32.totalorder 2, %s23
      // Predicated region
      $region81: #{transformer_forward.3} parent=5 // pred_check
        %p1919 = pneg %p1918
      $region82: #{transformer_forward.3} parent=5 // pred_check_branch
        %1921 = sbr.rel (%p1919) target = $region84
      $region83: #{transformer_forward.3} parent=5 // pred_region
        %s1922 = ssub.s32 %s23, 2
        // Predicated region
        $region85: #{transformer_forward.3} parent=83 // pred_check
          %p1923 = pneg %p372
        $region86: #{transformer_forward.3} parent=83 // pred_check_branch
          %1925 = sbr.rel (%p1923) target = $region88
        $region87: #{transformer_forward.3} parent=83 // pred_region
          %s1926 = sand.u32 %s357, 1
          %s1927 = scalar_lea.sflag [#allocation3], %s1926
          %s1928 = sand.u32 %s357, 1
          %s1929 = smul.addr %s1928, 8
          %s1930 = scalar_lea.vmem [#allocation2], %s1929
          %1931 = dma.done %s1927, 128
        $region88: #{transformer_forward.3} parent=83 // pred_fallthru
          _
      $region84: #{transformer_forward.3} parent=5 // pred_fallthru
        _
    $region6: #{transformer_forward.3} parent=1 // loop_footer
      %s27 = sadd.s32 1, %s23
    $region7: #{transformer_forward.3} parent=1 // loop_footer_branch
      %22 = sbr.rel target = $region3
    $region8: #{transformer_forward.3} parent=1 // loop_exit
      _
    %1932 = vsyncpa [#allocation3], 1
    %s1933 = scalar_lea.sflag [#allocation3], 1
    %1934 = vsyncpa %s1933, 1

// kernel: transformer_forward.2
$region0: #{transformer_forward.2}
  #allocation0 [shape = 'u32[]', space=smem, size = 0x4, offset = 0x4, fixed_abs, tag = 'smem constant byte address 0x4 - core index']
  #allocation1 [shape = 'u32[144,128]{1,0:T(1,128)}', space=vmem, size = 0x12000, scoped, tag = 'internal scratch']
  %s0 = inlined_call_operand.vmem [shape: f32[2,8,32], index: 0, kind: input, shape index: {}, may-alias: {0,1}]
  %s1 = inlined_call_operand.vmem [shape: f32[2,8,32], index: 1, kind: input, shape index: {}, may-alias: {0,1}]
  %s2 = inlined_call_operand.vmem [shape: f32[1,32], index: 2, kind: input, shape index: {}]
  %s3 = inlined_call_operand.vmem [shape: f32[1,32], index: 3, kind: input, shape index: {}]
  %s4 = inlined_call_operand.vmem [shape: bf16[32,32], index: 4, kind: input, shape index: {}]
  %s5 = inlined_call_operand.hbm [shape: f32[1,32], index: 5, kind: input, shape index: {}]
  %s6 = inlined_call_operand.vmem [shape: bf16[32,64], index: 6, kind: input, shape index: {}]
  %s7 = inlined_call_operand.hbm [shape: f32[1,64], index: 7, kind: input, shape index: {}]
  %s8 = inlined_call_operand.hbm [shape: f32[1,32], index: 8, kind: input, shape index: {}]
  %s9 = inlined_call_operand.hbm [shape: f32[1,32], index: 9, kind: input, shape index: {}]
  %s10 = inlined_call_operand.vmem [shape: bf16[32,64], index: 10, kind: input, shape index: {}]
  %s11 = inlined_call_operand.hbm [shape: f32[1,64], index: 11, kind: input, shape index: {}]
  %s12 = inlined_call_operand.vmem [shape: bf16[64,32], index: 12, kind: input, shape index: {}]
  %s13 = inlined_call_operand.hbm [shape: f32[1,32], index: 13, kind: input, shape index: {}]
  %s14 = inlined_call_operand.vmem [shape: f32[2,8,32], index: 14, kind: output, shape index: {}]
  %s15 = sld [smem:[#allocation0]]
  $region113: #{transformer_forward.2} parent=0
    _
  %s17 = ssub.s32 1, %s15
  %s18 = scalar_select 0, %s17, %s15
  $region1: #{transformer_forward.2} parent=0
    #allocation2 [shape = 'u8[512]{0}', space=vmem, size = 0x400, scoped, tag = 'input window, operand 5, single buffered']
    #allocation3 [shape = 's32[2]{0}', space=sflag, size = 0x8, scoped, tag = 'scoped memory for transformer_forward.2']
    #allocation4 [shape = 'u8[512]{0}', space=vmem, size = 0x400, scoped, tag = 'input window, operand 7, single buffered']
    #allocation5 [shape = 's32[1]{0}', space=sflag, size = 0x4, scoped, tag = 'scoped memory for transformer_forward.2']
    #allocation6 [shape = 'u8[512]{0}', space=vmem, size = 0x400, scoped, tag = 'input window, operand 8, single buffered']
    #allocation7 [shape = 'u8[512]{0}', space=vmem, size = 0x400, scoped, tag = 'input window, operand 9, single buffered']
    #allocation8 [shape = 's32[1]{0}', space=sflag, size = 0x4, scoped, tag = 'scoped memory for transformer_forward.2']
    #allocation9 [shape = 'u8[512]{0}', space=vmem, size = 0x400, scoped, tag = 'input window, operand 11, single buffered']
    #allocation10 [shape = 'u8[512]{0}', space=vmem, size = 0x400, scoped, tag = 'input window, operand 13, single buffered']
    #allocation11 [shape = 's32[1]{0}', space=sflag, size = 0x4, scoped, tag = 'scoped memory for transformer_forward.2']
    %19 = vsyncpa [#allocation3], 0
    %20 = vsyncpa [#allocation5], 0
    %21 = vsyncpa [#allocation8], 0
    %22 = vsyncpa [#allocation11], 0
    loop: start=0, step=1, limit=4
    $region2: #{transformer_forward.2} parent=1 // loop_pre_header
      _
    $region3: #{transformer_forward.2} parent=1 // loop_header
      %s24 = sphi 0, %s28
      %p25 = scmp.ge.s32.totalorder %s24, 4
      %s31 = sphi 0, %s43
      %s32 = sphi 0, %s39
      %s33 = sphi 0, %s31
      %s34 = sphi 0, %s32
      %s35 = sphi 0, %s33
      %s36 = sphi 0, %s34
      %s48 = sphi 0, %s50
      %s51 = sphi 0, %s48
      %s52 = sphi 0, %s51
      %s68 = sphi 0, %s52
      %s74 = sphi 0, %s76
      %s77 = sphi 0, %s74
      %s78 = sphi 0, %s77
      %s94 = sphi 0, %s78
      %s98 = sphi 0, %s98
      %s100 = sphi 0, %s98
      %s101 = sphi 0, %s100
      %s115 = sphi 0, %s101
      %s119 = sphi 0, %s119
      %s121 = sphi 0, %s119
      %s122 = sphi 0, %s121
      %s136 = sphi 0, %s122
      %s140 = sphi 0, %s140
      %s142 = sphi 0, %s140
      %s143 = sphi 0, %s142
      %s157 = sphi 0, %s143
      %s161 = sphi 0, %s161
      %s163 = sphi 0, %s161
      %s164 = sphi 0, %s163
      %s178 = sphi 0, %s164
      %s182 = sphi 0, %s182
      %s184 = sphi 0, %s182
      %s185 = sphi 0, %s184
      %s199 = sphi 0, %s185
      %s203 = sphi 0, %s203
      %s205 = sphi 0, %s203
      %s206 = sphi 0, %s205
      %s220 = sphi 0, %s206
      %s224 = sphi 0, %s224
      %s226 = sphi 0, %s224
      %s227 = sphi 0, %s226
      %s241 = sphi 0, %s227
      %s245 = sphi 0, %s245
      %s247 = sphi 0, %s245
      %s248 = sphi 0, %s247
      %s262 = sphi 0, %s248
      %s266 = sphi 0, %s266
      %s268 = sphi 0, %s266
      %s269 = sphi 0, %s268
      %s283 = sphi 0, %s269
      %s287 = sphi 0, %s287
      %s289 = sphi 0, %s287
      %s290 = sphi 0, %s289
      %s304 = sphi 0, %s290
      %s308 = sphi 0, %s308
      %s310 = sphi 0, %s308
      %s311 = sphi 0, %s310
      %s325 = sphi 0, %s311
      %s329 = sphi 0, %s329
      %s331 = sphi 0, %s329
      %s332 = sphi 0, %s331
      %s346 = sphi 0, %s332
      %s354 = sphi 0, %s356
      %s357 = sphi 0, %s354
      %s358 = sphi 0, %s357
      %s374 = sphi 0, %s358
    $region4: #{transformer_forward.2} parent=1 // loop_header_branch
      %27 = sbr.rel (%p25) target = $region8
    $region5: #{transformer_forward.2} parent=1 // loop_body
      %s29 = ssub.s32 %s24, 1
      %s30 = ssub.s32 %s24, 2
      %s37 = sadd.s32 1, %s32
      %p38 = scmp.ge.s32.totalorder %s37, 1
      %s39 = scalar_select %p38, 0, %s37
      %s40 = sadd.s32 1, %s31
      %s41 = scalar_select %p38, %s40, %s31
      %p42 = scmp.ge.s32.totalorder %s41, 2
      %s43 = scalar_select %p42, 0, %s41
      %s44 = ssub.s32 %s31, %s43
      %s45 = ssub.s32 %s32, %s39
      %s46 = sor.u32 %s44, %s45
      %p47 = scmp.eq.s32.totalorder %s46, 0
      %s49 = sadd.s32 %s48, 1
      %s50 = scalar_select %p47, %s48, %s49
      %p53 = pneg %p47
      %p54 = scmp.eq.s32.totalorder %s24, 1
      %p55 = por %p53, %p54
      %p56 = scmp.ne.s32.totalorder %s48, %s51
      %p57 = scmp.eq.s32.totalorder %s24, 0
      %p58 = por %p56, %p57
      %p59 = scmp.ne.s32.totalorder %s48, %s51
      %p60 = scmp.eq.s32.totalorder %s29, 1
      %p61 = por %p59, %p60
      %p62 = scmp.ne.s32.totalorder %s51, %s52
      %p63 = scmp.eq.s32.totalorder %s29, 0
      %p64 = por %p62, %p63
      %p65 = scmp.ne.s32.totalorder %s51, %s52
      %p66 = scmp.eq.s32.totalorder %s30, 1
      %p67 = por %p65, %p66
      %p69 = scmp.ne.s32.totalorder %s52, %s68
      %p70 = scmp.eq.s32.totalorder %s30, 0
      %p71 = por %p69, %p70
      %s72 = ssub.s32 %s31, %s43
      %p73 = scmp.eq.s32.totalorder %s72, 0
      %s75 = sadd.s32 %s74, 1
      %s76 = scalar_select %p73, %s74, %s75
      %p79 = pneg %p73
      %p80 = scmp.eq.s32.totalorder %s24, 1
      %p81 = por %p79, %p80
      %p82 = scmp.ne.s32.totalorder %s74, %s77
      %p83 = scmp.eq.s32.totalorder %s24, 0
      %p84 = por %p82, %p83
      %p85 = scmp.ne.s32.totalorder %s74, %s77
      %p86 = scmp.eq.s32.totalorder %s29, 1
      %p87 = por %p85, %p86
      %p88 = scmp.ne.s32.totalorder %s77, %s78
      %p89 = scmp.eq.s32.totalorder %s29, 0
      %p90 = por %p88, %p89
      %p91 = scmp.ne.s32.totalorder %s77, %s78
      %p92 = scmp.eq.s32.totalorder %s30, 1
      %p93 = por %p91, %p92
      %p95 = scmp.ne.s32.totalorder %s78, %s94
      %p96 = scmp.eq.s32.totalorder %s30, 0
      %p97 = por %p95, %p96
      %s99 = sadd.s32 %s98, 1
      %p102 = scmp.eq.s32.totalorder %s24, 1
      %p103 = scmp.ne.s32.totalorder %s98, %s100
      %p104 = scmp.eq.s32.totalorder %s24, 0
      %p105 = por %p103, %p104
      %p106 = scmp.ne.s32.totalorder %s98, %s100
      %p107 = scmp.eq.s32.totalorder %s29, 1
      %p108 = por %p106, %p107
      %p109 = scmp.ne.s32.totalorder %s100, %s101
      %p110 = scmp.eq.s32.totalorder %s29, 0
      %p111 = por %p109, %p110
      %p112 = scmp.ne.s32.totalorder %s100, %s101
      %p113 = scmp.eq.s32.totalorder %s30, 1
      %p114 = por %p112, %p113
      %p116 = scmp.ne.s32.totalorder %s101, %s115
      %p117 = scmp.eq.s32.totalorder %s30, 0
      %p118 = por %p116, %p117
      %s120 = sadd.s32 %s119, 1
      %p123 = scmp.eq.s32.totalorder %s24, 1
      %p124 = scmp.ne.s32.totalorder %s119, %s121
      %p125 = scmp.eq.s32.totalorder %s24, 0
      %p126 = por %p124, %p125
      %p127 = scmp.ne.s32.totalorder %s119, %s121
      %p128 = scmp.eq.s32.totalorder %s29, 1
      %p129 = por %p127, %p128
      %p130 = scmp.ne.s32.totalorder %s121, %s122
      %p131 = scmp.eq.s32.totalorder %s29, 0
      %p132 = por %p130, %p131
      %p133 = scmp.ne.s32.totalorder %s121, %s122
      %p134 = scmp.eq.s32.totalorder %s30, 1
      %p135 = por %p133, %p134
      %p137 = scmp.ne.s32.totalorder %s122, %s136
      %p138 = scmp.eq.s32.totalorder %s30, 0
      %p139 = por %p137, %p138
      %s141 = sadd.s32 %s140, 1
      %p144 = scmp.eq.s32.totalorder %s24, 1
      %p145 = scmp.ne.s32.totalorder %s140, %s142
      %p146 = scmp.eq.s32.totalorder %s24, 0
      %p147 = por %p145, %p146
      %p148 = scmp.ne.s32.totalorder %s140, %s142
      %p149 = scmp.eq.s32.totalorder %s29, 1
      %p150 = por %p148, %p149
      %p151 = scmp.ne.s32.totalorder %s142, %s143
      %p152 = scmp.eq.s32.totalorder %s29, 0
      %p153 = por %p151, %p152
      %p154 = scmp.ne.s32.totalorder %s142, %s143
      %p155 = scmp.eq.s32.totalorder %s30, 1
      %p156 = por %p154, %p155
      %p158 = scmp.ne.s32.totalorder %s143, %s157
      %p159 = scmp.eq.s32.totalorder %s30, 0
      %p160 = por %p158, %p159
      %s162 = sadd.s32 %s161, 1
      %p165 = scmp.eq.s32.totalorder %s24, 1
      %p166 = scmp.ne.s32.totalorder %s161, %s163
      %p167 = scmp.eq.s32.totalorder %s24, 0
      %p168 = por %p166, %p167
      %p169 = scmp.ne.s32.totalorder %s161, %s163
      %p170 = scmp.eq.s32.totalorder %s29, 1
      %p171 = por %p169, %p170
      %p172 = scmp.ne.s32.totalorder %s163, %s164
      %p173 = scmp.eq.s32.totalorder %s29, 0
      %p174 = por %p172, %p173
      %p175 = scmp.ne.s32.totalorder %s163, %s164
      %p176 = scmp.eq.s32.totalorder %s30, 1
      %p177 = por %p175, %p176
      %p179 = scmp.ne.s32.totalorder %s164, %s178
      %p180 = scmp.eq.s32.totalorder %s30, 0
      %p181 = por %p179, %p180
      %s183 = sadd.s32 %s182, 1
      %p186 = scmp.eq.s32.totalorder %s24, 1
      %p187 = scmp.ne.s32.totalorder %s182, %s184
      %p188 = scmp.eq.s32.totalorder %s24, 0
      %p189 = por %p187, %p188
      %p190 = scmp.ne.s32.totalorder %s182, %s184
      %p191 = scmp.eq.s32.totalorder %s29, 1
      %p192 = por %p190, %p191
      %p193 = scmp.ne.s32.totalorder %s184, %s185
      %p194 = scmp.eq.s32.totalorder %s29, 0
      %p195 = por %p193, %p194
      %p196 = scmp.ne.s32.totalorder %s184, %s185
      %p197 = scmp.eq.s32.totalorder %s30, 1
      %p198 = por %p196, %p197
      %p200 = scmp.ne.s32.totalorder %s185, %s199
      %p201 = scmp.eq.s32.totalorder %s30, 0
      %p202 = por %p200, %p201
      %s204 = sadd.s32 %s203, 1
      %p207 = scmp.eq.s32.totalorder %s24, 1
      %p208 = scmp.ne.s32.totalorder %s203, %s205
      %p209 = scmp.eq.s32.totalorder %s24, 0
      %p210 = por %p208, %p209
      %p211 = scmp.ne.s32.totalorder %s203, %s205
      %p212 = scmp.eq.s32.totalorder %s29, 1
      %p213 = por %p211, %p212
      %p214 = scmp.ne.s32.totalorder %s205, %s206
      %p215 = scmp.eq.s32.totalorder %s29, 0
      %p216 = por %p214, %p215
      %p217 = scmp.ne.s32.totalorder %s205, %s206
      %p218 = scmp.eq.s32.totalorder %s30, 1
      %p219 = por %p217, %p218
      %p221 = scmp.ne.s32.totalorder %s206, %s220
      %p222 = scmp.eq.s32.totalorder %s30, 0
      %p223 = por %p221, %p222
      %s225 = sadd.s32 %s224, 1
      %p228 = scmp.eq.s32.totalorder %s24, 1
      %p229 = scmp.ne.s32.totalorder %s224, %s226
      %p230 = scmp.eq.s32.totalorder %s24, 0
      %p231 = por %p229, %p230
      %p232 = scmp.ne.s32.totalorder %s224, %s226
      %p233 = scmp.eq.s32.totalorder %s29, 1
      %p234 = por %p232, %p233
      %p235 = scmp.ne.s32.totalorder %s226, %s227
      %p236 = scmp.eq.s32.totalorder %s29, 0
      %p237 = por %p235, %p236
      %p238 = scmp.ne.s32.totalorder %s226, %s227
      %p239 = scmp.eq.s32.totalorder %s30, 1
      %p240 = por %p238, %p239
      %p242 = scmp.ne.s32.totalorder %s227, %s241
      %p243 = scmp.eq.s32.totalorder %s30, 0
      %p244 = por %p242, %p243
      %s246 = sadd.s32 %s245, 1
      %p249 = scmp.eq.s32.totalorder %s24, 1
      %p250 = scmp.ne.s32.totalorder %s245, %s247
      %p251 = scmp.eq.s32.totalorder %s24, 0
      %p252 = por %p250, %p251
      %p253 = scmp.ne.s32.totalorder %s245, %s247
      %p254 = scmp.eq.s32.totalorder %s29, 1
      %p255 = por %p253, %p254
      %p256 = scmp.ne.s32.totalorder %s247, %s248
      %p257 = scmp.eq.s32.totalorder %s29, 0
      %p258 = por %p256, %p257
      %p259 = scmp.ne.s32.totalorder %s247, %s248
      %p260 = scmp.eq.s32.totalorder %s30, 1
      %p261 = por %p259, %p260
      %p263 = scmp.ne.s32.totalorder %s248, %s262
      %p264 = scmp.eq.s32.totalorder %s30, 0
      %p265 = por %p263, %p264
      %s267 = sadd.s32 %s266, 1
      %p270 = scmp.eq.s32.totalorder %s24, 1
      %p271 = scmp.ne.s32.totalorder %s266, %s268
      %p272 = scmp.eq.s32.totalorder %s24, 0
      %p273 = por %p271, %p272
      %p274 = scmp.ne.s32.totalorder %s266, %s268
      %p275 = scmp.eq.s32.totalorder %s29, 1
      %p276 = por %p274, %p275
      %p277 = scmp.ne.s32.totalorder %s268, %s269
      %p278 = scmp.eq.s32.totalorder %s29, 0
      %p279 = por %p277, %p278
      %p280 = scmp.ne.s32.totalorder %s268, %s269
      %p281 = scmp.eq.s32.totalorder %s30, 1
      %p282 = por %p280, %p281
      %p284 = scmp.ne.s32.totalorder %s269, %s283
      %p285 = scmp.eq.s32.totalorder %s30, 0
      %p286 = por %p284, %p285
      %s288 = sadd.s32 %s287, 1
      %p291 = scmp.eq.s32.totalorder %s24, 1
      %p292 = scmp.ne.s32.totalorder %s287, %s289
      %p293 = scmp.eq.s32.totalorder %s24, 0
      %p294 = por %p292, %p293
      %p295 = scmp.ne.s32.totalorder %s287, %s289
      %p296 = scmp.eq.s32.totalorder %s29, 1
      %p297 = por %p295, %p296
      %p298 = scmp.ne.s32.totalorder %s289, %s290
      %p299 = scmp.eq.s32.totalorder %s29, 0
      %p300 = por %p298, %p299
      %p301 = scmp.ne.s32.totalorder %s289, %s290
      %p302 = scmp.eq.s32.totalorder %s30, 1
      %p303 = por %p301, %p302
      %p305 = scmp.ne.s32.totalorder %s290, %s304
      %p306 = scmp.eq.s32.totalorder %s30, 0
      %p307 = por %p305, %p306
      %s309 = sadd.s32 %s308, 1
      %p312 = scmp.eq.s32.totalorder %s24, 1
      %p313 = scmp.ne.s32.totalorder %s308, %s310
      %p314 = scmp.eq.s32.totalorder %s24, 0
      %p315 = por %p313, %p314
      %p316 = scmp.ne.s32.totalorder %s308, %s310
      %p317 = scmp.eq.s32.totalorder %s29, 1
      %p318 = por %p316, %p317
      %p319 = scmp.ne.s32.totalorder %s310, %s311
      %p320 = scmp.eq.s32.totalorder %s29, 0
      %p321 = por %p319, %p320
      %p322 = scmp.ne.s32.totalorder %s310, %s311
      %p323 = scmp.eq.s32.totalorder %s30, 1
      %p324 = por %p322, %p323
      %p326 = scmp.ne.s32.totalorder %s311, %s325
      %p327 = scmp.eq.s32.totalorder %s30, 0
      %p328 = por %p326, %p327
      %s330 = sadd.s32 %s329, 1
      %p333 = scmp.eq.s32.totalorder %s24, 1
      %p334 = scmp.ne.s32.totalorder %s329, %s331
      %p335 = scmp.eq.s32.totalorder %s24, 0
      %p336 = por %p334, %p335
      %p337 = scmp.ne.s32.totalorder %s329, %s331
      %p338 = scmp.eq.s32.totalorder %s29, 1
      %p339 = por %p337, %p338
      %p340 = scmp.ne.s32.totalorder %s331, %s332
      %p341 = scmp.eq.s32.totalorder %s29, 0
      %p342 = por %p340, %p341
      %p343 = scmp.ne.s32.totalorder %s331, %s332
      %p344 = scmp.eq.s32.totalorder %s30, 1
      %p345 = por %p343, %p344
      %p347 = scmp.ne.s32.totalorder %s332, %s346
      %p348 = scmp.eq.s32.totalorder %s30, 0
      %p349 = por %p347, %p348
      %s350 = ssub.s32 %s31, %s43
      %s351 = ssub.s32 %s32, %s39
      %s352 = sor.u32 %s350, %s351
      %p353 = scmp.eq.s32.totalorder %s352, 0
      %s355 = sadd.s32 %s354, 1
      %s356 = scalar_select %p353, %s354, %s355
      %p359 = pneg %p353
      %p360 = scmp.eq.s32.totalorder %s24, 1
      %p361 = por %p359, %p360
      %p362 = scmp.ne.s32.totalorder %s354, %s357
      %p363 = scmp.eq.s32.totalorder %s24, 0
      %p364 = por %p362, %p363
      %p365 = scmp.ne.s32.totalorder %s354, %s357
      %p366 = scmp.eq.s32.totalorder %s29, 1
      %p367 = por %p365, %p366
      %p368 = scmp.ne.s32.totalorder %s357, %s358
      %p369 = scmp.eq.s32.totalorder %s29, 0
      %p370 = por %p368, %p369
      %p371 = scmp.ne.s32.totalorder %s357, %s358
      %p372 = scmp.eq.s32.totalorder %s30, 1
      %p373 = por %p371, %p372
      %p375 = scmp.ne.s32.totalorder %s358, %s374
      %p376 = scmp.eq.s32.totalorder %s30, 0
      %p377 = por %p375, %p376
      %p378 = scmp.le.s32.totalorder 1, %s24
      %p379 = scmp.lt.s32.totalorder %s24, 3
      %p380 = pnand %p378, %p379
      %p381 = pneg %p380
      // Predicated region
      $region9: #{transformer_forward.2} parent=5 // pred_check
        _
      $region10: #{transformer_forward.2} parent=5 // pred_check_branch
        %383 = sbr.rel (%p380) target = $region12
      $region11: #{transformer_forward.2} parent=5 // pred_region
        %s384 = ssub.s32 %s24, 1
        // Predicated region
        $region13: #{transformer_forward.2} parent=11 // pred_check
          %p385 = pneg %p111
        $region14: #{transformer_forward.2} parent=11 // pred_check_branch
          %387 = sbr.rel (%p385) target = $region16
        $region15: #{transformer_forward.2} parent=11 // pred_region
          _
        $region16: #{transformer_forward.2} parent=11 // pred_fallthru
          _
        // Predicated region
        $region17: #{transformer_forward.2} parent=11 // pred_check
          %p388 = pneg %p132
        $region18: #{transformer_forward.2} parent=11 // pred_check_branch
          %390 = sbr.rel (%p388) target = $region20
        $region19: #{transformer_forward.2} parent=11 // pred_region
          _
        $region20: #{transformer_forward.2} parent=11 // pred_fallthru
          _
        // Predicated region
        $region21: #{transformer_forward.2} parent=11 // pred_check
          %p391 = pneg %p153
        $region22: #{transformer_forward.2} parent=11 // pred_check_branch
          %393 = sbr.rel (%p391) target = $region24
        $region23: #{transformer_forward.2} parent=11 // pred_region
          _
        $region24: #{transformer_forward.2} parent=11 // pred_fallthru
          _
        // Predicated region
        $region25: #{transformer_forward.2} parent=11 // pred_check
          %p394 = pneg %p174
        $region26: #{transformer_forward.2} parent=11 // pred_check_branch
          %396 = sbr.rel (%p394) target = $region28
        $region27: #{transformer_forward.2} parent=11 // pred_region
          %s398 = ssub.s32 16, 16
          %399 = vsyncadd [#allocation3], %s398
          %s401 = sshll.u32 [#allocation2], 4
          %s402 = int_to_ptr.vmem [resolvable:$true] %s401
          %404 = dma.hbm_to_vmem [thread:$0]  %s5, 16, %s402, [#allocation3]
        $region28: #{transformer_forward.2} parent=11 // pred_fallthru
          _
        // Predicated region
        $region29: #{transformer_forward.2} parent=11 // pred_check
          %p405 = pneg %p195
        $region30: #{transformer_forward.2} parent=11 // pred_check_branch
          %407 = sbr.rel (%p405) target = $region32
        $region31: #{transformer_forward.2} parent=11 // pred_region
          _
        $region32: #{transformer_forward.2} parent=11 // pred_fallthru
          _
        // Predicated region
        $region33: #{transformer_forward.2} parent=11 // pred_check
          %p408 = pneg %p216
        $region34: #{transformer_forward.2} parent=11 // pred_check_branch
          %410 = sbr.rel (%p408) target = $region36
        $region35: #{transformer_forward.2} parent=11 // pred_region
          %s412 = ssub.s32 16, 16
          %413 = vsyncadd [#allocation5], %s412
          %s415 = sshll.u32 [#allocation4], 4
          %s416 = int_to_ptr.vmem [resolvable:$true] %s415
          %418 = dma.hbm_to_vmem [thread:$0]  %s7, 16, %s416, [#allocation5]
        $region36: #{transformer_forward.2} parent=11 // pred_fallthru
          _
        // Predicated region
        $region37: #{transformer_forward.2} parent=11 // pred_check
          %p419 = pneg %p237
        $region38: #{transformer_forward.2} parent=11 // pred_check_branch
          %421 = sbr.rel (%p419) target = $region40
        $region39: #{transformer_forward.2} parent=11 // pred_region
          %s423 = ssub.s32 16, 16
          %424 = vsyncadd [#allocation5], %s423
          %s426 = sshll.u32 [#allocation6], 4
          %s427 = int_to_ptr.vmem [resolvable:$true] %s426
          %429 = dma.hbm_to_vmem [thread:$0]  %s8, 16, %s427, [#allocation5]
        $region40: #{transformer_forward.2} parent=11 // pred_fallthru
          _
        // Predicated region
        $region41: #{transformer_forward.2} parent=11 // pred_check
          %p430 = pneg %p258
        $region42: #{transformer_forward.2} parent=11 // pred_check_branch
          %432 = sbr.rel (%p430) target = $region44
        $region43: #{transformer_forward.2} parent=11 // pred_region
          %s434 = ssub.s32 16, 16
          %435 = vsyncadd [#allocation8], %s434
          %s437 = sshll.u32 [#allocation7], 4
          %s438 = int_to_ptr.vmem [resolvable:$true] %s437
          %440 = dma.hbm_to_vmem [thread:$0]  %s9, 16, %s438, [#allocation8]
        $region44: #{transformer_forward.2} parent=11 // pred_fallthru
          _
        // Predicated region
        $region45: #{transformer_forward.2} parent=11 // pred_check
          %p441 = pneg %p279
        $region46: #{transformer_forward.2} parent=11 // pred_check_branch
          %443 = sbr.rel (%p441) target = $region48
        $region47: #{transformer_forward.2} parent=11 // pred_region
          _
        $region48: #{transformer_forward.2} parent=11 // pred_fallthru
          _
        // Predicated region
        $region49: #{transformer_forward.2} parent=11 // pred_check
          %p444 = pneg %p300
        $region50: #{transformer_forward.2} parent=11 // pred_check_branch
          %446 = sbr.rel (%p444) target = $region52
        $region51: #{transformer_forward.2} parent=11 // pred_region
          %s448 = ssub.s32 16, 16
          %449 = vsyncadd [#allocation8], %s448
          %s451 = sshll.u32 [#allocation9], 4
          %s452 = int_to_ptr.vmem [resolvable:$true] %s451
          %454 = dma.hbm_to_vmem [thread:$0]  %s11, 16, %s452, [#allocation8]
        $region52: #{transformer_forward.2} parent=11 // pred_fallthru
          _
        // Predicated region
        $region53: #{transformer_forward.2} parent=11 // pred_check
          %p455 = pneg %p321
        $region54: #{transformer_forward.2} parent=11 // pred_check_branch
          %457 = sbr.rel (%p455) target = $region56
        $region55: #{transformer_forward.2} parent=11 // pred_region
          _
        $region56: #{transformer_forward.2} parent=11 // pred_fallthru
          _
        // Predicated region
        $region57: #{transformer_forward.2} parent=11 // pred_check
          %p458 = pneg %p342
        $region58: #{transformer_forward.2} parent=11 // pred_check_branch
          %460 = sbr.rel (%p458) target = $region60
        $region59: #{transformer_forward.2} parent=11 // pred_region
          %s462 = ssub.s32 16, 16
          %463 = vsyncadd [#allocation11], %s462
          %s465 = sshll.u32 [#allocation10], 4
          %s466 = int_to_ptr.vmem [resolvable:$true] %s465
          %468 = dma.hbm_to_vmem [thread:$0]  %s13, 16, %s466, [#allocation11]
        $region60: #{transformer_forward.2} parent=11 // pred_fallthru
          _
      $region12: #{transformer_forward.2} parent=5 // pred_fallthru
        _
      %p469 = scmp.lt.s32.totalorder %s24, 2
      // Predicated region
      $region61: #{transformer_forward.2} parent=5 // pred_check
        %p470 = pneg %p469
      $region62: #{transformer_forward.2} parent=5 // pred_check_branch
        %472 = sbr.rel (%p470) target = $region64
      $region63: #{transformer_forward.2} parent=5 // pred_region
        // Predicated region
        $region65: #{transformer_forward.2} parent=63 // pred_check
          %p473 = pneg %p58
        $region66: #{transformer_forward.2} parent=63 // pred_check_branch
          %475 = sbr.rel (%p473) target = $region68
        $region67: #{transformer_forward.2} parent=63 // pred_region
          %p476 = scmp.lt.s32.totalorder %s31, 1
          %s477 = scalar_select %p476, %s31, 1
          %p478 = scmp.lt.s32.totalorder %s32, 0
          %s479 = scalar_select %p478, %s32, 0
          %s480 = sadd.s32 %s479, %s477
          %s481 = smul.addr %s480, 8
          %s482 = scalar_lea.vmem %s0, %s481
        $region68: #{transformer_forward.2} parent=63 // pred_fallthru
          _
        // Predicated region
        $region69: #{transformer_forward.2} parent=63 // pred_check
          %p483 = pneg %p84
        $region70: #{transformer_forward.2} parent=63 // pred_check_branch
          %485 = sbr.rel (%p483) target = $region72
        $region71: #{transformer_forward.2} parent=63 // pred_region
          %p486 = scmp.lt.s32.totalorder %s31, 1
          %s487 = scalar_select %p486, %s31, 1
          %s488 = smul.addr %s487, 8
          %s489 = scalar_lea.vmem %s1, %s488
        $region72: #{transformer_forward.2} parent=63 // pred_fallthru
          _
      $region64: #{transformer_forward.2} parent=5 // pred_fallthru
        _
      %p490 = scmp.le.s32.totalorder 1, %s24
      %p491 = scmp.lt.s32.totalorder %s24, 3
      %p492 = pnand %p490, %p491
      %p493 = pneg %p492
      // Predicated region
      $region73: #{transformer_forward.2} parent=5 // pred_check
        _
      $region74: #{transformer_forward.2} parent=5 // pred_check_branch
        %495 = sbr.rel (%p492) target = $region76
      $region75: #{transformer_forward.2} parent=5 // pred_region
        %s496 = ssub.s32 %s24, 1
        // Predicated region
        $region77: #{transformer_forward.2} parent=75 // pred_check
          %p497 = pneg %p174
        $region78: #{transformer_forward.2} parent=75 // pred_check_branch
          %499 = sbr.rel (%p497) target = $region80
        $region79: #{transformer_forward.2} parent=75 // pred_region
          %500 = dma.done [#allocation3], 16
        $region80: #{transformer_forward.2} parent=75 // pred_fallthru
          _
        // Predicated region
        $region81: #{transformer_forward.2} parent=75 // pred_check
          %p501 = pneg %p216
        $region82: #{transformer_forward.2} parent=75 // pred_check_branch
          %503 = sbr.rel (%p501) target = $region84
        $region83: #{transformer_forward.2} parent=75 // pred_region
          %504 = dma.done [#allocation5], 16
        $region84: #{transformer_forward.2} parent=75 // pred_fallthru
          _
        // Predicated region
        $region85: #{transformer_forward.2} parent=75 // pred_check
          %p505 = pneg %p237
        $region86: #{transformer_forward.2} parent=75 // pred_check_branch
          %507 = sbr.rel (%p505) target = $region88
        $region87: #{transformer_forward.2} parent=75 // pred_region
          %508 = dma.done [#allocation5], 16
        $region88: #{transformer_forward.2} parent=75 // pred_fallthru
          _
        // Predicated region
        $region89: #{transformer_forward.2} parent=75 // pred_check
          %p509 = pneg %p258
        $region90: #{transformer_forward.2} parent=75 // pred_check_branch
          %511 = sbr.rel (%p509) target = $region92
        $region91: #{transformer_forward.2} parent=75 // pred_region
          %512 = dma.done [#allocation8], 16
        $region92: #{transformer_forward.2} parent=75 // pred_fallthru
          _
        // Predicated region
        $region93: #{transformer_forward.2} parent=75 // pred_check
          %p513 = pneg %p300
        $region94: #{transformer_forward.2} parent=75 // pred_check_branch
          %515 = sbr.rel (%p513) target = $region96
        $region95: #{transformer_forward.2} parent=75 // pred_region
          %516 = dma.done [#allocation8], 16
        $region96: #{transformer_forward.2} parent=75 // pred_fallthru
          _
        // Predicated region
        $region97: #{transformer_forward.2} parent=75 // pred_check
          %p517 = pneg %p342
        $region98: #{transformer_forward.2} parent=75 // pred_check_branch
          %519 = sbr.rel (%p517) target = $region100
        $region99: #{transformer_forward.2} parent=75 // pred_region
          %520 = dma.done [#allocation11], 16
        $region100: #{transformer_forward.2} parent=75 // pred_fallthru
          _
        %p521 = scmp.lt.s32.totalorder %s33, 1
        %s522 = scalar_select %p521, %s33, 1
        %p523 = scmp.lt.s32.totalorder %s34, 0
        %s524 = scalar_select %p523, %s34, 0
        %s525 = sadd.s32 %s524, %s522
        %s526 = smul.addr %s525, 8
        %s527 = scalar_lea.vmem %s0, %s526
        %p528 = pneg %p64
        %p529 = pneg %p61
        %p530 = scmp.lt.s32.totalorder %s33, 1
        %s531 = scalar_select %p530, %s33, 1
        %s532 = smul.addr %s531, 8
        %s533 = scalar_lea.vmem %s1, %s532
        %p534 = pneg %p90
        %p535 = pneg %p87
        %p536 = pneg %p111
        %p537 = pneg %p108
        %p538 = pneg %p132
        %p539 = pneg %p129
        %p540 = pneg %p153
        %p541 = pneg %p150
        %p542 = pneg %p174
        %p543 = pneg %p171
        %p544 = pneg %p195
        %p545 = pneg %p192
        %p546 = pneg %p216
        %p547 = pneg %p213
        %p548 = pneg %p237
        %p549 = pneg %p234
        %p550 = pneg %p258
        %p551 = pneg %p255
        %p552 = pneg %p279
        %p553 = pneg %p276
        %p554 = pneg %p300
        %p555 = pneg %p297
        %p556 = pneg %p321
        %p557 = pneg %p318
        %p558 = pneg %p342
        %p559 = pneg %p339
        %p560 = pneg %p370
        %p561 = pneg %p367
        %p562 = scmp.lt.s32.totalorder %s33, 1
        %s563 = scalar_select %p562, %s33, 1
        %p564 = scmp.lt.s32.totalorder %s34, 0
        %s565 = scalar_select %p564, %s34, 0
        %s566 = sadd.s32 %s565, %s563
        %s567 = smul.addr %s566, 8
        %s568 = scalar_lea.vmem %s14, %s567
        %p569 = scmp.lt.s32.totalorder %s33, 1
        %s570 = scalar_select %p569, %s33, 1
        %p571 = scmp.lt.s32.totalorder %s34, 0
        %s572 = scalar_select %p571, %s34, 0
        %s573 = sadd.s32 %s572, %s570
        %s574 = smul.addr %s573, 8
        %s575 = scalar_lea.vmem %s0, %s574
        %p576 = scmp.lt.s32.totalorder %s33, 1
        %s577 = scalar_select %p576, %s33, 1
        %s578 = smul.addr %s577, 8
        %s579 = scalar_lea.vmem %s1, %s578
        %p580 = scmp.lt.s32.totalorder %s33, 1
        %s581 = scalar_select %p580, %s33, 1
        %p582 = scmp.lt.s32.totalorder %s34, 0
        %s583 = scalar_select %p582, %s34, 0
        %s584 = sadd.s32 %s583, %s581
        %s585 = smul.addr %s584, 8
        %s586 = scalar_lea.vmem %s14, %s585
        %v588 = vld [vmem:[%s575] sm:$0xff]
        %v589 = vld [vmem:[%s579] sm:$0xff]
        %v590 = vld [vmem:[%s2] sm:$0x1]
        %v591 = vld [vmem:[%s3] sm:$0x1]
        %v592 = vld [vmem:[%s4] sm:$0xf]
        %v593 = vld [vmem:[%s4 + $0x4] sm:$0xf]
        %v594 = vld [vmem:[%s4 + $0x8] sm:$0xf]
        %v595 = vld [vmem:[%s4 + $0xc] sm:$0xf]
        %v596 = vld [vmem:[#allocation2] sm:$0x1]
        %v597 = vld [vmem:[%s6] sm:$0xf]
        %v598 = vld [vmem:[%s6 + $0x4] sm:$0xf]
        %v599 = vld [vmem:[%s6 + $0x8] sm:$0xf]
        %v600 = vld [vmem:[%s6 + $0xc] sm:$0xf]
        %v601 = vld [vmem:[#allocation4] sm:$0x1]
        %v602 = vld [vmem:[#allocation6] sm:$0x1]
        %v603 = vld [vmem:[#allocation7] sm:$0x1]
        %v604 = vld [vmem:[%s10] sm:$0xf]
        %v605 = vld [vmem:[%s10 + $0x4] sm:$0xf]
        %v606 = vld [vmem:[%s10 + $0x8] sm:$0xf]
        %v607 = vld [vmem:[%s10 + $0xc] sm:$0xf]
        %v608 = vld [vmem:[#allocation9] sm:$0x1]
        %v609 = vld [vmem:[%s12] sm:$0xf]
        %v610 = vld [vmem:[%s12 + $0x4] sm:$0xf]
        %v611 = vld [vmem:[%s12 + $0x8] sm:$0xf]
        %v612 = vld [vmem:[%s12 + $0xc] sm:$0xf]
        %v613 = vld [vmem:[%s12 + $0x10] sm:$0xf]
        %v614 = vld [vmem:[%s12 + $0x14] sm:$0xf]
        %v615 = vld [vmem:[%s12 + $0x18] sm:$0xf]
        %v616 = vld [vmem:[%s12 + $0x1c] sm:$0xf]
        %v617 = vld [vmem:[#allocation10] sm:$0x1]
        %vm618 = vcmask 261120
        %v619 = vsel %vm618, %v588, 0.0
        %620 = vadd.xlane.f32.xlu0 %v619
        %v621 = vpop.xlane.xlu0 %620
        %v622 = vrcp.pop 32.0
        %v623 = vmul.f32 %v621, %v622
        %v624 = vsub.f32 %v588, %v623
        %v625 = vmul.f32 %v624, %v624
        %v626 = vsel %vm618, %v625, 0.0
        %627 = vadd.xlane.f32.xlu0 %v626
        %v628 = vpop.xlane.xlu0 %627
        %v629 = vmul.f32 %v628, %v622
        %v630 = vadd.f32 %v629, 1e-05
        %v631 = vrsqrt.pop %v630
        %v632 = vmul.f32 %v624, %v631
        %v634 = vlaneseq
        %v635 = vshrl.u32 %v634, 7
        %v636 = vsub.s32 0, %v635
        %v637 = vrot.slane %v590, %v636
        %v639 = vmul.f32 %v632, %v637
        %v641 = vlaneseq
        %v642 = vshrl.u32 %v641, 7
        %v643 = vsub.s32 0, %v642
        %v644 = vrot.slane %v591, %v643
        %v646 = vadd.f32 %v639, %v644
        %v647 = vsel %vm618, %v589, 0.0
        %648 = vadd.xlane.f32.xlu0 %v647
        %v649 = vpop.xlane.xlu0 %648
        %v650 = vmul.f32 %v649, %v622
        %v651 = vsub.f32 %v589, %v650
        %v652 = vmul.f32 %v651, %v651
        %v653 = vsel %vm618, %v652, 0.0
        %654 = vadd.xlane.f32.xlu0 %v653
        %v655 = vpop.xlane.xlu0 %654
        %v656 = vmul.f32 %v655, %v622
        %v657 = vadd.f32 %v656, 1e-05
        %v658 = vrsqrt.pop %v657
        %v659 = vmul.f32 %v651, %v658
        %v660 = vmul.f32 %v659, %v637
        %v661 = vadd.f32 %v660, %v644
        %v662 = vpack.c.bf16 %v646, %v646
        %v664 = vlaneseq
        %v665 = vshrl.u32 %v664, 7
        %v666 = vsub.s32 0, %v665
        %v667 = vrot.slane %v596, %v666
        %v673 = vunpack.c.l.b16 %v592
        %v674 = vunpack.c.l.b16 %v593
        %v675 = vunpack.c.l.b16 %v594
        %v676 = vunpack.c.l.b16 %v595
        %v677 = vpack.c.b16 %v674, %v673
        %v678 = vpack.c.b16 %v676, %v675
        %v682 = vsel %vm618, %v662, 0
        %684 = vmatprep.subr.bf16.mxu0 0
        %685 = vmatpush1.bf16.msra.mxu0 %v677
        %686 = vmatprep.subr.bf16.mxu0 0
        %687 = vmatpush1.bf16.msra.mxu0 %v678
        %688 = vmatprep.subr.bf16.mxu0 0
        %689 = vmatpush1.bf16.msra.mxu0 0
        %690 = vmatprep.subr.bf16.mxu0 0
        %691 = vmatpush1.bf16.msra.mxu0 0
        %692 = vmatprep.subr.bf16.mxu0 0
        %693 = vmatpush1.bf16.msra.mxu0 0
        %694 = vmatprep.subr.bf16.mxu0 0
        %695 = vmatpush1.bf16.msra.mxu0 0
        %696 = vmatprep.subr.bf16.mxu0 0
        %697 = vmatpush1.bf16.msra.mxu0 0
        %698 = vmatprep.subr.bf16.mxu0 0
        %699 = vmatpush1.bf16.msra.mxu0 0
        %700 = vmatprep.subr.bf16.mxu0 0
        %701 = vmatpush1.bf16.msra.mxu0 0
        %702 = vmatprep.subr.bf16.mxu0 0
        %703 = vmatpush1.bf16.msra.mxu0 0
        %704 = vmatprep.subr.bf16.mxu0 0
        %705 = vmatpush1.bf16.msra.mxu0 0
        %706 = vmatprep.subr.bf16.mxu0 0
        %707 = vmatpush1.bf16.msra.mxu0 0
        %708 = vmatprep.subr.bf16.mxu0 0
        %709 = vmatpush1.bf16.msra.mxu0 0
        %710 = vmatprep.subr.bf16.mxu0 0
        %711 = vmatpush1.bf16.msra.mxu0 0
        %712 = vmatprep.subr.bf16.mxu0 0
        %713 = vmatpush1.bf16.msra.mxu0 0
        %714 = vmatprep.subr.bf16.mxu0 0
        %715 = vmatpush1.bf16.msra.mxu0 0
        %716 = vmatprep.mubr.bf16.mxu0 0
        %717 = vmatmul.mubr.bf16.gmra.mrb[0].mxu0 %v682
        %v718 = vpop.f32.mrb[0].mxu0
        %v719 = vadd.f32 %v667, %v718
        %v720 = vpop.f32.mrb[0].mxu0
        %v721 = vpop.f32.mrb[0].mxu0
        %v722 = vpop.f32.mrb[0].mxu0
        %723 = vdwg.mxu0
        %v724 = vpack.c.bf16 %v661, %v661
        %v726 = vlaneseq
        %v727 = vshrl.u32 %v726, 7
        %v728 = vsub.s32 0, %v727
        %v729 = vrot.slane %v601, %v728
        %v735 = vunpack.c.l.b16 %v597
        %v736 = vunpack.c.l.b16 %v598
        %v737 = vunpack.c.l.b16 %v599
        %v738 = vunpack.c.l.b16 %v600
        %v739 = vpack.c.b16 %v736, %v735
        %v740 = vpack.c.b16 %v738, %v737
        %v744 = vsel %vm618, %v724, 0
        %746 = vmatprep.subr.bf16.mxu0 0
        %747 = vmatpush1.bf16.msra.mxu0 %v739
        %748 = vmatprep.subr.bf16.mxu0 0
        %749 = vmatpush1.bf16.msra.mxu0 %v740
        %750 = vmatprep.subr.bf16.mxu0 0
        %751 = vmatpush1.bf16.msra.mxu0 0
        %752 = vmatprep.subr.bf16.mxu0 0
        %753 = vmatpush1.bf16.msra.mxu0 0
        %754 = vmatprep.subr.bf16.mxu0 0
        %755 = vmatpush1.bf16.msra.mxu0 0
        %756 = vmatprep.subr.bf16.mxu0 0
        %757 = vmatpush1.bf16.msra.mxu0 0
        %758 = vmatprep.subr.bf16.mxu0 0
        %759 = vmatpush1.bf16.msra.mxu0 0
        %760 = vmatprep.subr.bf16.mxu0 0
        %761 = vmatpush1.bf16.msra.mxu0 0
        %762 = vmatprep.subr.bf16.mxu0 0
        %763 = vmatpush1.bf16.msra.mxu0 0
        %764 = vmatprep.subr.bf16.mxu0 0
        %765 = vmatpush1.bf16.msra.mxu0 0
        %766 = vmatprep.subr.bf16.mxu0 0
        %767 = vmatpush1.bf16.msra.mxu0 0
        %768 = vmatprep.subr.bf16.mxu0 0
        %769 = vmatpush1.bf16.msra.mxu0 0
        %770 = vmatprep.subr.bf16.mxu0 0
        %771 = vmatpush1.bf16.msra.mxu0 0
        %772 = vmatprep.subr.bf16.mxu0 0
        %773 = vmatpush1.bf16.msra.mxu0 0
        %774 = vmatprep.subr.bf16.mxu0 0
        %775 = vmatpush1.bf16.msra.mxu0 0
        %776 = vmatprep.subr.bf16.mxu0 0
        %777 = vmatpush1.bf16.msra.mxu0 0
        %778 = vmatprep.mubr.bf16.mxu0 0
        %779 = vmatmul.mubr.bf16.gmra.mrb[0].mxu0 %v744
        %v780 = vpop.f32.mrb[0].mxu0
        %v781 = vadd.f32 %v729, %v780
        %v782 = vpop.f32.mrb[0].mxu0
        %v783 = vpop.f32.mrb[0].mxu0
        %v784 = vpop.f32.mrb[0].mxu0
        %785 = vdwg.mxu0
        %787 = vrot.lane.b32.xlu0 %v719, 120
        %v788 = vpop.permute.xlu0 %787
        %790 = vrot.lane.b32.xlu0 %v719, 112
        %v791 = vpop.permute.xlu0 %790
        %793 = vrot.lane.b32.xlu0 %v719, 104
        %v794 = vpop.permute.xlu0 %793
        %v796 = vcombine.low %v719, %v791
        %v797 = vcombine.high %v719, %v791
        %v799 = vunpack.c.l.s4 1983009808
        %v800 = vunpack.c.0.s8 %v799
        %v801 = vlaneseq
        %v802 = vshrl.u32 %v801, 7
        %v803 = vsub.s32 %v800, %v802
        %v804 = vrot.slane %v796, %v803
        %v806 = vunpack.c.l.s4 1983009808
        %v807 = vunpack.c.0.s8 %v806
        %v808 = vlaneseq
        %v809 = vshrl.u32 %v808, 7
        %v810 = vsub.s32 %v807, %v809
        %v811 = vrot.slane %v797, %v810
        %v812 = vcombine.low %v788, %v794
        %v813 = vcombine.high %v788, %v794
        %v815 = vunpack.c.l.s4 1983009808
        %v816 = vunpack.c.0.s8 %v815
        %v817 = vlaneseq
        %v818 = vshrl.u32 %v817, 7
        %v819 = vsub.s32 %v816, %v818
        %v820 = vrot.slane %v812, %v819
        %v822 = vunpack.c.l.s4 1983009808
        %v823 = vunpack.c.0.s8 %v822
        %v824 = vlaneseq
        %v825 = vshrl.u32 %v824, 7
        %v826 = vsub.s32 %v823, %v825
        %v827 = vrot.slane %v813, %v826
        %v828 = vcombine.low %v804, %v820
        %v829 = vcombine.high %v804, %v820
        %v831 = vunpack.c.l.s4 1934713408
        %v832 = vunpack.c.0.s8 %v831
        %v833 = vlaneseq
        %v834 = vshrl.u32 %v833, 7
        %v835 = vsub.s32 %v832, %v834
        %v836 = vrot.slane %v828, %v835
        %v838 = vunpack.c.l.s4 1934713408
        %v839 = vunpack.c.0.s8 %v838
        %v840 = vlaneseq
        %v841 = vshrl.u32 %v840, 7
        %v842 = vsub.s32 %v839, %v841
        %v843 = vrot.slane %v829, %v842
        %v844 = vcombine.low %v811, %v827
        %v845 = vcombine.high %v811, %v827
        %v847 = vunpack.c.l.s4 1934713408
        %v848 = vunpack.c.0.s8 %v847
        %v849 = vlaneseq
        %v850 = vshrl.u32 %v849, 7
        %v851 = vsub.s32 %v848, %v850
        %v852 = vrot.slane %v844, %v851
        %v854 = vunpack.c.l.s4 1934713408
        %v855 = vunpack.c.0.s8 %v854
        %v856 = vlaneseq
        %v857 = vshrl.u32 %v856, 7
        %v858 = vsub.s32 %v855, %v857
        %v859 = vrot.slane %v845, %v858
        %v860 = vcombine.high %v836, 0.0
        %v861 = vcombine.high %v843, 0.0
        %v862 = vcombine.high %v852, 0.0
        %v863 = vcombine.high %v859, 0.0
        %v864 = vcombine.low %v836, %v843
        %v866 = vunpack.c.l.s4 1983009808
        %v867 = vunpack.c.0.s8 %v866
        %v868 = vlaneseq
        %v869 = vshrl.u32 %v868, 7
        %v870 = vsub.s32 %v867, %v869
        %v871 = vrot.slane %v864, %v870
        %v872 = vcombine.low %v860, %v861
        %v874 = vunpack.c.l.s4 1983009808
        %v875 = vunpack.c.0.s8 %v874
        %v876 = vlaneseq
        %v877 = vshrl.u32 %v876, 7
        %v878 = vsub.s32 %v875, %v877
        %v879 = vrot.slane %v872, %v878
        %v880 = vcombine.low %v852, %v859
        %v882 = vunpack.c.l.s4 1983009808
        %v883 = vunpack.c.0.s8 %v882
        %v884 = vlaneseq
        %v885 = vshrl.u32 %v884, 7
        %v886 = vsub.s32 %v883, %v885
        %v887 = vrot.slane %v880, %v886
        %v888 = vcombine.low %v862, %v863
        %v890 = vunpack.c.l.s4 1983009808
        %v891 = vunpack.c.0.s8 %v890
        %v892 = vlaneseq
        %v893 = vshrl.u32 %v892, 7
        %v894 = vsub.s32 %v891, %v893
        %v895 = vrot.slane %v888, %v894
        %v896 = vcombine.low %v871, %v879
        %v897 = vcombine.high %v871, %v879
        %v899 = vunpack.c.l.s4 1934713408
        %v900 = vunpack.c.0.s8 %v899
        %v901 = vlaneseq
        %v902 = vshrl.u32 %v901, 7
        %v903 = vsub.s32 %v900, %v902
        %v904 = vrot.slane %v896, %v903
        %v906 = vunpack.c.l.s4 1934713408
        %v907 = vunpack.c.0.s8 %v906
        %v908 = vlaneseq
        %v909 = vshrl.u32 %v908, 7
        %v910 = vsub.s32 %v907, %v909
        %v911 = vrot.slane %v897, %v910
        %v912 = vcombine.low %v887, %v895
        %v913 = vcombine.high %v887, %v895
        %v915 = vunpack.c.l.s4 1934713408
        %v916 = vunpack.c.0.s8 %v915
        %v917 = vlaneseq
        %v918 = vshrl.u32 %v917, 7
        %v919 = vsub.s32 %v916, %v918
        %v920 = vrot.slane %v912, %v919
        %v922 = vunpack.c.l.s4 1934713408
        %v923 = vunpack.c.0.s8 %v922
        %v924 = vlaneseq
        %v925 = vshrl.u32 %v924, 7
        %v926 = vsub.s32 %v923, %v925
        %v927 = vrot.slane %v913, %v926
        %v928 = vcombine.low %v904, %v920
        %v929 = vcombine.high %v904, %v920
        %v930 = vcombine.low %v911, %v927
        %v931 = vcombine.high %v911, %v927
        %v932 = vpack.c.bf16 %v928, %v928
        %v933 = vpack.c.bf16 %v929, %v929
        %v934 = vpack.c.bf16 %v930, %v930
        %v935 = vpack.c.bf16 %v931, %v931
        %937 = vrot.lane.b32.xlu0 %v781, 120
        %v938 = vpop.permute.xlu0 %937
        %940 = vrot.lane.b32.xlu0 %v781, 112
        %v941 = vpop.permute.xlu0 %940
        %943 = vrot.lane.b32.xlu0 %v781, 104
        %v944 = vpop.permute.xlu0 %943
        %v946 = vcombine.low %v781, %v941
        %v947 = vcombine.high %v781, %v941
        %v949 = vunpack.c.l.s4 1983009808
        %v950 = vunpack.c.0.s8 %v949
        %v951 = vlaneseq
        %v952 = vshrl.u32 %v951, 7
        %v953 = vsub.s32 %v950, %v952
        %v954 = vrot.slane %v946, %v953
        %v956 = vunpack.c.l.s4 1983009808
        %v957 = vunpack.c.0.s8 %v956
        %v958 = vlaneseq
        %v959 = vshrl.u32 %v958, 7
        %v960 = vsub.s32 %v957, %v959
        %v961 = vrot.slane %v947, %v960
        %v962 = vcombine.low %v938, %v944
        %v963 = vcombine.high %v938, %v944
        %v965 = vunpack.c.l.s4 1983009808
        %v966 = vunpack.c.0.s8 %v965
        %v967 = vlaneseq
        %v968 = vshrl.u32 %v967, 7
        %v969 = vsub.s32 %v966, %v968
        %v970 = vrot.slane %v962, %v969
        %v972 = vunpack.c.l.s4 1983009808
        %v973 = vunpack.c.0.s8 %v972
        %v974 = vlaneseq
        %v975 = vshrl.u32 %v974, 7
        %v976 = vsub.s32 %v973, %v975
        %v977 = vrot.slane %v963, %v976
        %v978 = vcombine.low %v954, %v970
        %v979 = vcombine.high %v954, %v970
        %v981 = vunpack.c.l.s4 1934713408
        %v982 = vunpack.c.0.s8 %v981
        %v983 = vlaneseq
        %v984 = vshrl.u32 %v983, 7
        %v985 = vsub.s32 %v982, %v984
        %v986 = vrot.slane %v978, %v985
        %v988 = vunpack.c.l.s4 1934713408
        %v989 = vunpack.c.0.s8 %v988
        %v990 = vlaneseq
        %v991 = vshrl.u32 %v990, 7
        %v992 = vsub.s32 %v989, %v991
        %v993 = vrot.slane %v979, %v992
        %v994 = vcombine.low %v961, %v977
        %v995 = vcombine.high %v961, %v977
        %v997 = vunpack.c.l.s4 1934713408
        %v998 = vunpack.c.0.s8 %v997
        %v999 = vlaneseq
        %v1000 = vshrl.u32 %v999, 7
        %v1001 = vsub.s32 %v998, %v1000
        %v1002 = vrot.slane %v994, %v1001
        %v1004 = vunpack.c.l.s4 1934713408
        %v1005 = vunpack.c.0.s8 %v1004
        %v1006 = vlaneseq
        %v1007 = vshrl.u32 %v1006, 7
        %v1008 = vsub.s32 %v1005, %v1007
        %v1009 = vrot.slane %v995, %v1008
        %v1010 = vcombine.high %v986, 0.0
        %v1011 = vcombine.high %v993, 0.0
        %v1012 = vcombine.high %v1002, 0.0
        %v1013 = vcombine.high %v1009, 0.0
        %v1014 = vcombine.low %v986, %v993
        %v1016 = vunpack.c.l.s4 1983009808
        %v1017 = vunpack.c.0.s8 %v1016
        %v1018 = vlaneseq
        %v1019 = vshrl.u32 %v1018, 7
        %v1020 = vsub.s32 %v1017, %v1019
        %v1021 = vrot.slane %v1014, %v1020
        %v1022 = vcombine.low %v1010, %v1011
        %v1024 = vunpack.c.l.s4 1983009808
        %v1025 = vunpack.c.0.s8 %v1024
        %v1026 = vlaneseq
        %v1027 = vshrl.u32 %v1026, 7
        %v1028 = vsub.s32 %v1025, %v1027
        %v1029 = vrot.slane %v1022, %v1028
        %v1030 = vcombine.low %v1002, %v1009
        %v1032 = vunpack.c.l.s4 1983009808
        %v1033 = vunpack.c.0.s8 %v1032
        %v1034 = vlaneseq
        %v1035 = vshrl.u32 %v1034, 7
        %v1036 = vsub.s32 %v1033, %v1035
        %v1037 = vrot.slane %v1030, %v1036
        %v1038 = vcombine.low %v1012, %v1013
        %v1040 = vunpack.c.l.s4 1983009808
        %v1041 = vunpack.c.0.s8 %v1040
        %v1042 = vlaneseq
        %v1043 = vshrl.u32 %v1042, 7
        %v1044 = vsub.s32 %v1041, %v1043
        %v1045 = vrot.slane %v1038, %v1044
        %v1046 = vcombine.low %v1021, %v1029
        %v1047 = vcombine.high %v1021, %v1029
        %v1049 = vunpack.c.l.s4 1934713408
        %v1050 = vunpack.c.0.s8 %v1049
        %v1051 = vlaneseq
        %v1052 = vshrl.u32 %v1051, 7
        %v1053 = vsub.s32 %v1050, %v1052
        %v1054 = vrot.slane %v1046, %v1053
        %v1056 = vunpack.c.l.s4 1934713408
        %v1057 = vunpack.c.0.s8 %v1056
        %v1058 = vlaneseq
        %v1059 = vshrl.u32 %v1058, 7
        %v1060 = vsub.s32 %v1057, %v1059
        %v1061 = vrot.slane %v1047, %v1060
        %v1062 = vcombine.low %v1037, %v1045
        %v1063 = vcombine.high %v1037, %v1045
        %v1065 = vunpack.c.l.s4 1934713408
        %v1066 = vunpack.c.0.s8 %v1065
        %v1067 = vlaneseq
        %v1068 = vshrl.u32 %v1067, 7
        %v1069 = vsub.s32 %v1066, %v1068
        %v1070 = vrot.slane %v1062, %v1069
        %v1072 = vunpack.c.l.s4 1934713408
        %v1073 = vunpack.c.0.s8 %v1072
        %v1074 = vlaneseq
        %v1075 = vshrl.u32 %v1074, 7
        %v1076 = vsub.s32 %v1073, %v1075
        %v1077 = vrot.slane %v1063, %v1076
        %v1078 = vcombine.low %v1054, %v1070
        %v1079 = vcombine.high %v1054, %v1070
        %v1080 = vcombine.low %v1061, %v1077
        %v1081 = vcombine.high %v1061, %v1077
        %v1082 = vpack.c.bf16 %v1078, %v1078
        %v1083 = vpack.c.bf16 %v1079, %v1079
        %v1084 = vpack.c.bf16 %v1080, %v1080
        %v1085 = vpack.c.bf16 %v1081, %v1081
        %1086 = vrot.lane.b32.xlu0 %v781, 96
        %v1087 = vpop.permute.xlu0 %1086
        %1088 = vrot.lane.b32.xlu0 %v938, 96
        %v1089 = vpop.permute.xlu0 %1088
        %1090 = vrot.lane.b32.xlu0 %v941, 96
        %v1091 = vpop.permute.xlu0 %1090
        %1092 = vrot.lane.b32.xlu0 %v944, 96
        %v1093 = vpop.permute.xlu0 %1092
        %v1098 = vcombine.low %v1087, %v1091
        %v1099 = vcombine.high %v1087, %v1091
        %v1101 = vunpack.c.l.s4 1983009808
        %v1102 = vunpack.c.0.s8 %v1101
        %v1103 = vlaneseq
        %v1104 = vshrl.u32 %v1103, 7
        %v1105 = vsub.s32 %v1102, %v1104
        %v1106 = vrot.slane %v1098, %v1105
        %v1108 = vunpack.c.l.s4 1983009808
        %v1109 = vunpack.c.0.s8 %v1108
        %v1110 = vlaneseq
        %v1111 = vshrl.u32 %v1110, 7
        %v1112 = vsub.s32 %v1109, %v1111
        %v1113 = vrot.slane %v1099, %v1112
        %v1114 = vcombine.low %v1089, %v1093
        %v1115 = vcombine.high %v1089, %v1093
        %v1117 = vunpack.c.l.s4 1983009808
        %v1118 = vunpack.c.0.s8 %v1117
        %v1119 = vlaneseq
        %v1120 = vshrl.u32 %v1119, 7
        %v1121 = vsub.s32 %v1118, %v1120
        %v1122 = vrot.slane %v1114, %v1121
        %v1124 = vunpack.c.l.s4 1983009808
        %v1125 = vunpack.c.0.s8 %v1124
        %v1126 = vlaneseq
        %v1127 = vshrl.u32 %v1126, 7
        %v1128 = vsub.s32 %v1125, %v1127
        %v1129 = vrot.slane %v1115, %v1128
        %v1130 = vcombine.low %v1106, %v1122
        %v1131 = vcombine.high %v1106, %v1122
        %v1133 = vunpack.c.l.s4 1934713408
        %v1134 = vunpack.c.0.s8 %v1133
        %v1135 = vlaneseq
        %v1136 = vshrl.u32 %v1135, 7
        %v1137 = vsub.s32 %v1134, %v1136
        %v1138 = vrot.slane %v1130, %v1137
        %v1140 = vunpack.c.l.s4 1934713408
        %v1141 = vunpack.c.0.s8 %v1140
        %v1142 = vlaneseq
        %v1143 = vshrl.u32 %v1142, 7
        %v1144 = vsub.s32 %v1141, %v1143
        %v1145 = vrot.slane %v1131, %v1144
        %v1146 = vcombine.low %v1113, %v1129
        %v1147 = vcombine.high %v1113, %v1129
        %v1149 = vunpack.c.l.s4 1934713408
        %v1150 = vunpack.c.0.s8 %v1149
        %v1151 = vlaneseq
        %v1152 = vshrl.u32 %v1151, 7
        %v1153 = vsub.s32 %v1150, %v1152
        %v1154 = vrot.slane %v1146, %v1153
        %v1156 = vunpack.c.l.s4 1934713408
        %v1157 = vunpack.c.0.s8 %v1156
        %v1158 = vlaneseq
        %v1159 = vshrl.u32 %v1158, 7
        %v1160 = vsub.s32 %v1157, %v1159
        %v1161 = vrot.slane %v1147, %v1160
        %v1162 = vcombine.high %v1138, 0.0
        %v1163 = vcombine.high %v1145, 0.0
        %v1164 = vcombine.high %v1154, 0.0
        %v1165 = vcombine.high %v1161, 0.0
        %v1166 = vcombine.low %v1138, %v1145
        %v1168 = vunpack.c.l.s4 1983009808
        %v1169 = vunpack.c.0.s8 %v1168
        %v1170 = vlaneseq
        %v1171 = vshrl.u32 %v1170, 7
        %v1172 = vsub.s32 %v1169, %v1171
        %v1173 = vrot.slane %v1166, %v1172
        %v1174 = vcombine.low %v1162, %v1163
        %v1176 = vunpack.c.l.s4 1983009808
        %v1177 = vunpack.c.0.s8 %v1176
        %v1178 = vlaneseq
        %v1179 = vshrl.u32 %v1178, 7
        %v1180 = vsub.s32 %v1177, %v1179
        %v1181 = vrot.slane %v1174, %v1180
        %v1182 = vcombine.low %v1154, %v1161
        %v1184 = vunpack.c.l.s4 1983009808
        %v1185 = vunpack.c.0.s8 %v1184
        %v1186 = vlaneseq
        %v1187 = vshrl.u32 %v1186, 7
        %v1188 = vsub.s32 %v1185, %v1187
        %v1189 = vrot.slane %v1182, %v1188
        %v1190 = vcombine.low %v1164, %v1165
        %v1192 = vunpack.c.l.s4 1983009808
        %v1193 = vunpack.c.0.s8 %v1192
        %v1194 = vlaneseq
        %v1195 = vshrl.u32 %v1194, 7
        %v1196 = vsub.s32 %v1193, %v1195
        %v1197 = vrot.slane %v1190, %v1196
        %v1198 = vcombine.low %v1173, %v1181
        %v1199 = vcombine.high %v1173, %v1181
        %v1201 = vunpack.c.l.s4 1934713408
        %v1202 = vunpack.c.0.s8 %v1201
        %v1203 = vlaneseq
        %v1204 = vshrl.u32 %v1203, 7
        %v1205 = vsub.s32 %v1202, %v1204
        %v1206 = vrot.slane %v1198, %v1205
        %v1208 = vunpack.c.l.s4 1934713408
        %v1209 = vunpack.c.0.s8 %v1208
        %v1210 = vlaneseq
        %v1211 = vshrl.u32 %v1210, 7
        %v1212 = vsub.s32 %v1209, %v1211
        %v1213 = vrot.slane %v1199, %v1212
        %v1214 = vcombine.low %v1189, %v1197
        %v1215 = vcombine.high %v1189, %v1197
        %v1217 = vunpack.c.l.s4 1934713408
        %v1218 = vunpack.c.0.s8 %v1217
        %v1219 = vlaneseq
        %v1220 = vshrl.u32 %v1219, 7
        %v1221 = vsub.s32 %v1218, %v1220
        %v1222 = vrot.slane %v1214, %v1221
        %v1224 = vunpack.c.l.s4 1934713408
        %v1225 = vunpack.c.0.s8 %v1224
        %v1226 = vlaneseq
        %v1227 = vshrl.u32 %v1226, 7
        %v1228 = vsub.s32 %v1225, %v1227
        %v1229 = vrot.slane %v1215, %v1228
        %v1230 = vcombine.low %v1206, %v1222
        %v1231 = vcombine.high %v1206, %v1222
        %v1232 = vcombine.low %v1213, %v1229
        %v1233 = vcombine.high %v1213, %v1229
        %v1234 = vpack.c.bf16 %v1230, %v1230
        %v1235 = vpack.c.bf16 %v1231, %v1231
        %v1236 = vpack.c.bf16 %v1232, %v1232
        %v1237 = vpack.c.bf16 %v1233, %v1233
        %vm1238 = vcmask 64512
        %v1240 = vsel %vm1238, %v932, 0
        %v1243 = vsel %vm1238, %v1082, 0
        %1245 = vmatprep.subr.bf16.mxu0 0
        %1246 = vmatpush1.bf16.xpose.msra.mxu0 %v1243
        %1247 = vmatprep.subr.bf16.mxu0 0
        %1248 = vmatpush1.bf16.xpose.msra.mxu0 0
        %1249 = vmatprep.subr.bf16.mxu0 0
        %1250 = vmatpush1.bf16.xpose.msra.mxu0 0
        %1251 = vmatprep.subr.bf16.mxu0 0
        %1252 = vmatpush1.bf16.xpose.msra.mxu0 0
        %1253 = vmatprep.subr.bf16.mxu0 0
        %1254 = vmatpush1.bf16.xpose.msra.mxu0 0
        %1255 = vmatprep.subr.bf16.mxu0 0
        %1256 = vmatpush1.bf16.xpose.msra.mxu0 0
        %1257 = vmatprep.subr.bf16.mxu0 0
        %1258 = vmatpush1.bf16.xpose.msra.mxu0 0
        %1259 = vmatprep.subr.bf16.mxu0 0
        %1260 = vmatpush1.bf16.xpose.msra.mxu0 0
        %1261 = vmatprep.subr.bf16.mxu0 0
        %1262 = vmatpush1.bf16.xpose.msra.mxu0 0
        %1263 = vmatprep.subr.bf16.mxu0 0
        %1264 = vmatpush1.bf16.xpose.msra.mxu0 0
        %1265 = vmatprep.subr.bf16.mxu0 0
        %1266 = vmatpush1.bf16.xpose.msra.mxu0 0
        %1267 = vmatprep.subr.bf16.mxu0 0
        %1268 = vmatpush1.bf16.xpose.msra.mxu0 0
        %1269 = vmatprep.subr.bf16.mxu0 0
        %1270 = vmatpush1.bf16.xpose.msra.mxu0 0
        %1271 = vmatprep.subr.bf16.mxu0 0
        %1272 = vmatpush1.bf16.xpose.msra.mxu0 0
        %1273 = vmatprep.subr.bf16.mxu0 0
        %1274 = vmatpush1.bf16.xpose.msra.mxu0 0
        %1275 = vmatprep.subr.bf16.mxu0 0
        %1276 = vmatpush1.bf16.xpose.msra.mxu0 0
        %1277 = vmatprep.mubr.bf16.mxu0 0
        %1278 = vmatmul.mubr.bf16.gmra.mrb[0].mxu0 %v1240
        %v1279 = vpop.f32.mrb[0].mxu0
        %v1280 = vadd.f32 0.0, %v1279
        %v1281 = vpop.f32.mrb[0].mxu0
        %v1282 = vpop.f32.mrb[0].mxu0
        %v1283 = vpop.f32.mrb[0].mxu0
        %1284 = vdwg.mxu0
        %v1286 = vsel %vm1238, %v933, 0
        %v1289 = vsel %vm1238, %v1083, 0
        %1291 = vmatprep.subr.bf16.mxu0 0
        %1292 = vmatpush1.bf16.xpose.msra.mxu0 %v1289
        %1293 = vmatprep.subr.bf16.mxu0 0
        %1294 = vmatpush1.bf16.xpose.msra.mxu0 0
        %1295 = vmatprep.subr.bf16.mxu0 0
        %1296 = vmatpush1.bf16.xpose.msra.mxu0 0
        %1297 = vmatprep.subr.bf16.mxu0 0
        %1298 = vmatpush1.bf16.xpose.msra.mxu0 0
        %1299 = vmatprep.subr.bf16.mxu0 0
        %1300 = vmatpush1.bf16.xpose.msra.mxu0 0
        %1301 = vmatprep.subr.bf16.mxu0 0
        %1302 = vmatpush1.bf16.xpose.msra.mxu0 0
        %1303 = vmatprep.subr.bf16.mxu0 0
        %1304 = vmatpush1.bf16.xpose.msra.mxu0 0
        %1305 = vmatprep.subr.bf16.mxu0 0
        %1306 = vmatpush1.bf16.xpose.msra.mxu0 0
        %1307 = vmatprep.subr.bf16.mxu0 0
        %1308 = vmatpush1.bf16.xpose.msra.mxu0 0
        %1309 = vmatprep.subr.bf16.mxu0 0
        %1310 = vmatpush1.bf16.xpose.msra.mxu0 0
        %1311 = vmatprep.subr.bf16.mxu0 0
        %1312 = vmatpush1.bf16.xpose.msra.mxu0 0
        %1313 = vmatprep.subr.bf16.mxu0 0
        %1314 = vmatpush1.bf16.xpose.msra.mxu0 0
        %1315 = vmatprep.subr.bf16.mxu0 0
        %1316 = vmatpush1.bf16.xpose.msra.mxu0 0
        %1317 = vmatprep.subr.bf16.mxu0 0
        %1318 = vmatpush1.bf16.xpose.msra.mxu0 0
        %1319 = vmatprep.subr.bf16.mxu0 0
        %1320 = vmatpush1.bf16.xpose.msra.mxu0 0
        %1321 = vmatprep.subr.bf16.mxu0 0
        %1322 = vmatpush1.bf16.xpose.msra.mxu0 0
        %1323 = vmatprep.mubr.bf16.mxu0 0
        %1324 = vmatmul.mubr.bf16.gmra.mrb[0].mxu0 %v1286
        %v1325 = vpop.f32.mrb[0].mxu0
        %v1326 = vadd.f32 0.0, %v1325
        %v1327 = vpop.f32.mrb[0].mxu0
        %v1328 = vpop.f32.mrb[0].mxu0
        %v1329 = vpop.f32.mrb[0].mxu0
        %1330 = vdwg.mxu0
        %v1332 = vsel %vm1238, %v934, 0
        %v1335 = vsel %vm1238, %v1084, 0
        %1337 = vmatprep.subr.bf16.mxu0 0
        %1338 = vmatpush1.bf16.xpose.msra.mxu0 %v1335
        %1339 = vmatprep.subr.bf16.mxu0 0
        %1340 = vmatpush1.bf16.xpose.msra.mxu0 0
        %1341 = vmatprep.subr.bf16.mxu0 0
        %1342 = vmatpush1.bf16.xpose.msra.mxu0 0
        %1343 = vmatprep.subr.bf16.mxu0 0
        %1344 = vmatpush1.bf16.xpose.msra.mxu0 0
        %1345 = vmatprep.subr.bf16.mxu0 0
        %1346 = vmatpush1.bf16.xpose.msra.mxu0 0
        %1347 = vmatprep.subr.bf16.mxu0 0
        %1348 = vmatpush1.bf16.xpose.msra.mxu0 0
        %1349 = vmatprep.subr.bf16.mxu0 0
        %1350 = vmatpush1.bf16.xpose.msra.mxu0 0
        %1351 = vmatprep.subr.bf16.mxu0 0
        %1352 = vmatpush1.bf16.xpose.msra.mxu0 0
        %1353 = vmatprep.subr.bf16.mxu0 0
        %1354 = vmatpush1.bf16.xpose.msra.mxu0 0
        %1355 = vmatprep.subr.bf16.mxu0 0
        %1356 = vmatpush1.bf16.xpose.msra.mxu0 0
        %1357 = vmatprep.subr.bf16.mxu0 0
        %1358 = vmatpush1.bf16.xpose.msra.mxu0 0
        %1359 = vmatprep.subr.bf16.mxu0 0
        %1360 = vmatpush1.bf16.xpose.msra.mxu0 0
        %1361 = vmatprep.subr.bf16.mxu0 0
        %1362 = vmatpush1.bf16.xpose.msra.mxu0 0
        %1363 = vmatprep.subr.bf16.mxu0 0
        %1364 = vmatpush1.bf16.xpose.msra.mxu0 0
        %1365 = vmatprep.subr.bf16.mxu0 0
        %1366 = vmatpush1.bf16.xpose.msra.mxu0 0
        %1367 = vmatprep.subr.bf16.mxu0 0
        %1368 = vmatpush1.bf16.xpose.msra.mxu0 0
        %1369 = vmatprep.mubr.bf16.mxu0 0
        %1370 = vmatmul.mubr.bf16.gmra.mrb[0].mxu0 %v1332
        %v1371 = vpop.f32.mrb[0].mxu0
        %v1372 = vadd.f32 0.0, %v1371
        %v1373 = vpop.f32.mrb[0].mxu0
        %v1374 = vpop.f32.mrb[0].mxu0
        %v1375 = vpop.f32.mrb[0].mxu0
        %1376 = vdwg.mxu0
        %v1378 = vsel %vm1238, %v935, 0
        %v1381 = vsel %vm1238, %v1085, 0
        %1383 = vmatprep.subr.bf16.mxu0 0
        %1384 = vmatpush1.bf16.xpose.msra.mxu0 %v1381
        %1385 = vmatprep.subr.bf16.mxu0 0
        %1386 = vmatpush1.bf16.xpose.msra.mxu0 0
        %1387 = vmatprep.subr.bf16.mxu0 0
        %1388 = vmatpush1.bf16.xpose.msra.mxu0 0
        %1389 = vmatprep.subr.bf16.mxu0 0
        %1390 = vmatpush1.bf16.xpose.msra.mxu0 0
        %1391 = vmatprep.subr.bf16.mxu0 0
        %1392 = vmatpush1.bf16.xpose.msra.mxu0 0
        %1393 = vmatprep.subr.bf16.mxu0 0
        %1394 = vmatpush1.bf16.xpose.msra.mxu0 0
        %1395 = vmatprep.subr.bf16.mxu0 0
        %1396 = vmatpush1.bf16.xpose.msra.mxu0 0
        %1397 = vmatprep.subr.bf16.mxu0 0
        %1398 = vmatpush1.bf16.xpose.msra.mxu0 0
        %1399 = vmatprep.subr.bf16.mxu0 0
        %1400 = vmatpush1.bf16.xpose.msra.mxu0 0
        %1401 = vmatprep.subr.bf16.mxu0 0
        %1402 = vmatpush1.bf16.xpose.msra.mxu0 0
        %1403 = vmatprep.subr.bf16.mxu0 0
        %1404 = vmatpush1.bf16.xpose.msra.mxu0 0
        %1405 = vmatprep.subr.bf16.mxu0 0
        %1406 = vmatpush1.bf16.xpose.msra.mxu0 0
        %1407 = vmatprep.subr.bf16.mxu0 0
        %1408 = vmatpush1.bf16.xpose.msra.mxu0 0
        %1409 = vmatprep.subr.bf16.mxu0 0
        %1410 = vmatpush1.bf16.xpose.msra.mxu0 0
        %1411 = vmatprep.subr.bf16.mxu0 0
        %1412 = vmatpush1.bf16.xpose.msra.mxu0 0
        %1413 = vmatprep.subr.bf16.mxu0 0
        %1414 = vmatpush1.bf16.xpose.msra.mxu0 0
        %1415 = vmatprep.mubr.bf16.mxu0 0
        %1416 = vmatmul.mubr.bf16.gmra.mrb[0].mxu0 %v1378
        %v1417 = vpop.f32.mrb[0].mxu0
        %v1418 = vadd.f32 0.0, %v1417
        %v1419 = vpop.f32.mrb[0].mxu0
        %v1420 = vpop.f32.mrb[0].mxu0
        %v1421 = vpop.f32.mrb[0].mxu0
        %1422 = vdwg.mxu0
        %v1423 = vsel %vm1238, %v1280, -inf
        %1424 = vmax.xlane.f32.xlu0 %v1423
        %v1425 = vpop.xlane.xlu0 %1424
        %v1426 = vsel %vm1238, %v1326, -inf
        %1427 = vmax.xlane.f32.xlu0 %v1426
        %v1428 = vpop.xlane.xlu0 %1427
        %v1429 = vsel %vm1238, %v1372, -inf
        %1430 = vmax.xlane.f32.xlu0 %v1429
        %v1431 = vpop.xlane.xlu0 %1430
        %v1432 = vsel %vm1238, %v1418, -inf
        %1433 = vmax.xlane.f32.xlu0 %v1432
        %v1434 = vpop.xlane.xlu0 %1433
        %v1435 = vsub.f32 %v1280, %v1425
        %v1436 = vsub.f32 %v1326, %v1428
        %v1437 = vsub.f32 %v1372, %v1431
        %v1438 = vsub.f32 %v1418, %v1434
        %v1439 = vmul.f32 %v1435, 1.442695
        %v1440 = vpow.pop %v1439
        %v1441 = vmul.f32 %v1436, 1.442695
        %v1442 = vpow.pop %v1441
        %v1443 = vmul.f32 %v1437, 1.442695
        %v1444 = vpow.pop %v1443
        %v1445 = vmul.f32 %v1438, 1.442695
        %v1446 = vpow.pop %v1445
        %v1447 = vsel %vm1238, %v1440, 0.0
        %1448 = vadd.xlane.f32.xlu0 %v1447
        %v1449 = vpop.xlane.xlu0 %1448
        %v1450 = vsel %vm1238, %v1442, 0.0
        %1451 = vadd.xlane.f32.xlu0 %v1450
        %v1452 = vpop.xlane.xlu0 %1451
        %v1453 = vsel %vm1238, %v1444, 0.0
        %1454 = vadd.xlane.f32.xlu0 %v1453
        %v1455 = vpop.xlane.xlu0 %1454
        %v1456 = vsel %vm1238, %v1446, 0.0
        %1457 = vadd.xlane.f32.xlu0 %v1456
        %v1458 = vpop.xlane.xlu0 %1457
        %v1459 = vrcp.pop %v1449
        %v1460 = vrcp.pop %v1452
        %v1461 = vrcp.pop %v1455
        %v1462 = vrcp.pop %v1458
        %v1463 = vmul.f32 %v1440, %v1459
        %v1464 = vmul.f32 %v1442, %v1460
        %v1465 = vmul.f32 %v1444, %v1461
        %v1466 = vmul.f32 %v1446, %v1462
        %v1467 = vpack.c.bf16 %v1463, %v1463
        %v1468 = vpack.c.bf16 %v1464, %v1464
        %v1469 = vpack.c.bf16 %v1465, %v1465
        %v1470 = vpack.c.bf16 %v1466, %v1466
        %v1472 = vsel %vm1238, %v1467, 0
        %vm1474 = vcmask 1043456
        %v1476 = vsel %vm1474, %v1234, 0
        %1478 = vmatprep.subr.bf16.mxu0 0
        %1479 = vmatpush1.bf16.msra.mxu0 %v1476
        %1480 = vmatprep.subr.bf16.mxu0 0
        %1481 = vmatpush1.bf16.msra.mxu0 0
        %1482 = vmatprep.subr.bf16.mxu0 0
        %1483 = vmatpush1.bf16.msra.mxu0 0
        %1484 = vmatprep.subr.bf16.mxu0 0
        %1485 = vmatpush1.bf16.msra.mxu0 0
        %1486 = vmatprep.subr.bf16.mxu0 0
        %1487 = vmatpush1.bf16.msra.mxu0 0
        %1488 = vmatprep.subr.bf16.mxu0 0
        %1489 = vmatpush1.bf16.msra.mxu0 0
        %1490 = vmatprep.subr.bf16.mxu0 0
        %1491 = vmatpush1.bf16.msra.mxu0 0
        %1492 = vmatprep.subr.bf16.mxu0 0
        %1493 = vmatpush1.bf16.msra.mxu0 0
        %1494 = vmatprep.subr.bf16.mxu0 0
        %1495 = vmatpush1.bf16.msra.mxu0 0
        %1496 = vmatprep.subr.bf16.mxu0 0
        %1497 = vmatpush1.bf16.msra.mxu0 0
        %1498 = vmatprep.subr.bf16.mxu0 0
        %1499 = vmatpush1.bf16.msra.mxu0 0
        %1500 = vmatprep.subr.bf16.mxu0 0
        %1501 = vmatpush1.bf16.msra.mxu0 0
        %1502 = vmatprep.subr.bf16.mxu0 0
        %1503 = vmatpush1.bf16.msra.mxu0 0
        %1504 = vmatprep.subr.bf16.mxu0 0
        %1505 = vmatpush1.bf16.msra.mxu0 0
        %1506 = vmatprep.subr.bf16.mxu0 0
        %1507 = vmatpush1.bf16.msra.mxu0 0
        %1508 = vmatprep.subr.bf16.mxu0 0
        %1509 = vmatpush1.bf16.msra.mxu0 0
        %1510 = vmatprep.mubr.bf16.mxu0 0
        %1511 = vmatmul.mubr.bf16.gmra.mrb[0].mxu0 %v1472
        %v1512 = vpop.f32.mrb[0].mxu0
        %v1513 = vadd.f32 0.0, %v1512
        %v1514 = vpop.f32.mrb[0].mxu0
        %v1515 = vpop.f32.mrb[0].mxu0
        %v1516 = vpop.f32.mrb[0].mxu0
        %1517 = vdwg.mxu0
        %v1519 = vsel %vm1238, %v1468, 0
        %v1522 = vsel %vm1474, %v1235, 0
        %1524 = vmatprep.subr.bf16.mxu0 0
        %1525 = vmatpush1.bf16.msra.mxu0 %v1522
        %1526 = vmatprep.subr.bf16.mxu0 0
        %1527 = vmatpush1.bf16.msra.mxu0 0
        %1528 = vmatprep.subr.bf16.mxu0 0
        %1529 = vmatpush1.bf16.msra.mxu0 0
        %1530 = vmatprep.subr.bf16.mxu0 0
        %1531 = vmatpush1.bf16.msra.mxu0 0
        %1532 = vmatprep.subr.bf16.mxu0 0
        %1533 = vmatpush1.bf16.msra.mxu0 0
        %1534 = vmatprep.subr.bf16.mxu0 0
        %1535 = vmatpush1.bf16.msra.mxu0 0
        %1536 = vmatprep.subr.bf16.mxu0 0
        %1537 = vmatpush1.bf16.msra.mxu0 0
        %1538 = vmatprep.subr.bf16.mxu0 0
        %1539 = vmatpush1.bf16.msra.mxu0 0
        %1540 = vmatprep.subr.bf16.mxu0 0
        %1541 = vmatpush1.bf16.msra.mxu0 0
        %1542 = vmatprep.subr.bf16.mxu0 0
        %1543 = vmatpush1.bf16.msra.mxu0 0
        %1544 = vmatprep.subr.bf16.mxu0 0
        %1545 = vmatpush1.bf16.msra.mxu0 0
        %1546 = vmatprep.subr.bf16.mxu0 0
        %1547 = vmatpush1.bf16.msra.mxu0 0
        %1548 = vmatprep.subr.bf16.mxu0 0
        %1549 = vmatpush1.bf16.msra.mxu0 0
        %1550 = vmatprep.subr.bf16.mxu0 0
        %1551 = vmatpush1.bf16.msra.mxu0 0
        %1552 = vmatprep.subr.bf16.mxu0 0
        %1553 = vmatpush1.bf16.msra.mxu0 0
        %1554 = vmatprep.subr.bf16.mxu0 0
        %1555 = vmatpush1.bf16.msra.mxu0 0
        %1556 = vmatprep.mubr.bf16.mxu0 0
        %1557 = vmatmul.mubr.bf16.gmra.mrb[0].mxu0 %v1519
        %v1558 = vpop.f32.mrb[0].mxu0
        %v1559 = vadd.f32 0.0, %v1558
        %v1560 = vpop.f32.mrb[0].mxu0
        %v1561 = vpop.f32.mrb[0].mxu0
        %v1562 = vpop.f32.mrb[0].mxu0
        %1563 = vdwg.mxu0
        %v1565 = vsel %vm1238, %v1469, 0
        %v1568 = vsel %vm1474, %v1236, 0
        %1570 = vmatprep.subr.bf16.mxu0 0
        %1571 = vmatpush1.bf16.msra.mxu0 %v1568
        %1572 = vmatprep.subr.bf16.mxu0 0
        %1573 = vmatpush1.bf16.msra.mxu0 0
        %1574 = vmatprep.subr.bf16.mxu0 0
        %1575 = vmatpush1.bf16.msra.mxu0 0
        %1576 = vmatprep.subr.bf16.mxu0 0
        %1577 = vmatpush1.bf16.msra.mxu0 0
        %1578 = vmatprep.subr.bf16.mxu0 0
        %1579 = vmatpush1.bf16.msra.mxu0 0
        %1580 = vmatprep.subr.bf16.mxu0 0
        %1581 = vmatpush1.bf16.msra.mxu0 0
        %1582 = vmatprep.subr.bf16.mxu0 0
        %1583 = vmatpush1.bf16.msra.mxu0 0
        %1584 = vmatprep.subr.bf16.mxu0 0
        %1585 = vmatpush1.bf16.msra.mxu0 0
        %1586 = vmatprep.subr.bf16.mxu0 0
        %1587 = vmatpush1.bf16.msra.mxu0 0
        %1588 = vmatprep.subr.bf16.mxu0 0
        %1589 = vmatpush1.bf16.msra.mxu0 0
        %1590 = vmatprep.subr.bf16.mxu0 0
        %1591 = vmatpush1.bf16.msra.mxu0 0
        %1592 = vmatprep.subr.bf16.mxu0 0
        %1593 = vmatpush1.bf16.msra.mxu0 0
        %1594 = vmatprep.subr.bf16.mxu0 0
        %1595 = vmatpush1.bf16.msra.mxu0 0
        %1596 = vmatprep.subr.bf16.mxu0 0
        %1597 = vmatpush1.bf16.msra.mxu0 0
        %1598 = vmatprep.subr.bf16.mxu0 0
        %1599 = vmatpush1.bf16.msra.mxu0 0
        %1600 = vmatprep.subr.bf16.mxu0 0
        %1601 = vmatpush1.bf16.msra.mxu0 0
        %1602 = vmatprep.mubr.bf16.mxu0 0
        %1603 = vmatmul.mubr.bf16.gmra.mrb[0].mxu0 %v1565
        %v1604 = vpop.f32.mrb[0].mxu0
        %v1605 = vadd.f32 0.0, %v1604
        %v1606 = vpop.f32.mrb[0].mxu0
        %v1607 = vpop.f32.mrb[0].mxu0
        %v1608 = vpop.f32.mrb[0].mxu0
        %1609 = vdwg.mxu0
        %v1611 = vsel %vm1238, %v1470, 0
        %v1614 = vsel %vm1474, %v1237, 0
        %1616 = vmatprep.subr.bf16.mxu0 0
        %1617 = vmatpush1.bf16.msra.mxu0 %v1614
        %1618 = vmatprep.subr.bf16.mxu0 0
        %1619 = vmatpush1.bf16.msra.mxu0 0
        %1620 = vmatprep.subr.bf16.mxu0 0
        %1621 = vmatpush1.bf16.msra.mxu0 0
        %1622 = vmatprep.subr.bf16.mxu0 0
        %1623 = vmatpush1.bf16.msra.mxu0 0
        %1624 = vmatprep.subr.bf16.mxu0 0
        %1625 = vmatpush1.bf16.msra.mxu0 0
        %1626 = vmatprep.subr.bf16.mxu0 0
        %1627 = vmatpush1.bf16.msra.mxu0 0
        %1628 = vmatprep.subr.bf16.mxu0 0
        %1629 = vmatpush1.bf16.msra.mxu0 0
        %1630 = vmatprep.subr.bf16.mxu0 0
        %1631 = vmatpush1.bf16.msra.mxu0 0
        %1632 = vmatprep.subr.bf16.mxu0 0
        %1633 = vmatpush1.bf16.msra.mxu0 0
        %1634 = vmatprep.subr.bf16.mxu0 0
        %1635 = vmatpush1.bf16.msra.mxu0 0
        %1636 = vmatprep.subr.bf16.mxu0 0
        %1637 = vmatpush1.bf16.msra.mxu0 0
        %1638 = vmatprep.subr.bf16.mxu0 0
        %1639 = vmatpush1.bf16.msra.mxu0 0
        %1640 = vmatprep.subr.bf16.mxu0 0
        %1641 = vmatpush1.bf16.msra.mxu0 0
        %1642 = vmatprep.subr.bf16.mxu0 0
        %1643 = vmatpush1.bf16.msra.mxu0 0
        %1644 = vmatprep.subr.bf16.mxu0 0
        %1645 = vmatpush1.bf16.msra.mxu0 0
        %1646 = vmatprep.subr.bf16.mxu0 0
        %1647 = vmatpush1.bf16.msra.mxu0 0
        %1648 = vmatprep.mubr.bf16.mxu0 0
        %1649 = vmatmul.mubr.bf16.gmra.mrb[0].mxu0 %v1611
        %v1650 = vpop.f32.mrb[0].mxu0
        %v1651 = vadd.f32 0.0, %v1650
        %v1652 = vpop.f32.mrb[0].mxu0
        %v1653 = vpop.f32.mrb[0].mxu0
        %v1654 = vpop.f32.mrb[0].mxu0
        %1655 = vdwg.mxu0
        %v1656 = vcombine.low %v1513, %v1605
        %v1657 = vcombine.high %v1513, %v1605
        %v1659 = vunpack.c.l.s4 1983009808
        %v1660 = vunpack.c.0.s8 %v1659
        %v1661 = vlaneseq
        %v1662 = vshrl.u32 %v1661, 7
        %v1663 = vsub.s32 %v1660, %v1662
        %v1664 = vrot.slane %v1656, %v1663
        %v1666 = vunpack.c.l.s4 1983009808
        %v1667 = vunpack.c.0.s8 %v1666
        %v1668 = vlaneseq
        %v1669 = vshrl.u32 %v1668, 7
        %v1670 = vsub.s32 %v1667, %v1669
        %v1671 = vrot.slane %v1657, %v1670
        %v1672 = vcombine.low %v1559, %v1651
        %v1673 = vcombine.high %v1559, %v1651
        %v1675 = vunpack.c.l.s4 1983009808
        %v1676 = vunpack.c.0.s8 %v1675
        %v1677 = vlaneseq
        %v1678 = vshrl.u32 %v1677, 7
        %v1679 = vsub.s32 %v1676, %v1678
        %v1680 = vrot.slane %v1672, %v1679
        %v1682 = vunpack.c.l.s4 1983009808
        %v1683 = vunpack.c.0.s8 %v1682
        %v1684 = vlaneseq
        %v1685 = vshrl.u32 %v1684, 7
        %v1686 = vsub.s32 %v1683, %v1685
        %v1687 = vrot.slane %v1673, %v1686
        %v1688 = vcombine.low %v1664, %v1680
        %v1689 = vcombine.high %v1664, %v1680
        %v1691 = vunpack.c.l.s4 1934713408
        %v1692 = vunpack.c.0.s8 %v1691
        %v1693 = vlaneseq
        %v1694 = vshrl.u32 %v1693, 7
        %v1695 = vsub.s32 %v1692, %v1694
        %v1696 = vrot.slane %v1688, %v1695
        %v1698 = vunpack.c.l.s4 1934713408
        %v1699 = vunpack.c.0.s8 %v1698
        %v1700 = vlaneseq
        %v1701 = vshrl.u32 %v1700, 7
        %v1702 = vsub.s32 %v1699, %v1701
        %v1703 = vrot.slane %v1689, %v1702
        %v1704 = vcombine.low %v1671, %v1687
        %v1705 = vcombine.high %v1671, %v1687
        %v1707 = vunpack.c.l.s4 1934713408
        %v1708 = vunpack.c.0.s8 %v1707
        %v1709 = vlaneseq
        %v1710 = vshrl.u32 %v1709, 7
        %v1711 = vsub.s32 %v1708, %v1710
        %v1712 = vrot.slane %v1704, %v1711
        %v1714 = vunpack.c.l.s4 1934713408
        %v1715 = vunpack.c.0.s8 %v1714
        %v1716 = vlaneseq
        %v1717 = vshrl.u32 %v1716, 7
        %v1718 = vsub.s32 %v1715, %v1717
        %v1719 = vrot.slane %v1705, %v1718
        %v1720 = vcombine.high %v1696, 0.0
        %v1721 = vcombine.high %v1703, 0.0
        %v1722 = vcombine.high %v1712, 0.0
        %v1723 = vcombine.high %v1719, 0.0
        %v1724 = vcombine.low %v1696, %v1703
        %v1726 = vunpack.c.l.s4 1983009808
        %v1727 = vunpack.c.0.s8 %v1726
        %v1728 = vlaneseq
        %v1729 = vshrl.u32 %v1728, 7
        %v1730 = vsub.s32 %v1727, %v1729
        %v1731 = vrot.slane %v1724, %v1730
        %v1732 = vcombine.low %v1720, %v1721
        %v1734 = vunpack.c.l.s4 1983009808
        %v1735 = vunpack.c.0.s8 %v1734
        %v1736 = vlaneseq
        %v1737 = vshrl.u32 %v1736, 7
        %v1738 = vsub.s32 %v1735, %v1737
        %v1739 = vrot.slane %v1732, %v1738
        %v1740 = vcombine.low %v1712, %v1719
        %v1742 = vunpack.c.l.s4 1983009808
        %v1743 = vunpack.c.0.s8 %v1742
        %v1744 = vlaneseq
        %v1745 = vshrl.u32 %v1744, 7
        %v1746 = vsub.s32 %v1743, %v1745
        %v1747 = vrot.slane %v1740, %v1746
        %v1748 = vcombine.low %v1722, %v1723
        %v1750 = vunpack.c.l.s4 1983009808
        %v1751 = vunpack.c.0.s8 %v1750
        %v1752 = vlaneseq
        %v1753 = vshrl.u32 %v1752, 7
        %v1754 = vsub.s32 %v1751, %v1753
        %v1755 = vrot.slane %v1748, %v1754
        %v1756 = vcombine.low %v1731, %v1739
        %v1757 = vcombine.high %v1731, %v1739
        %v1759 = vunpack.c.l.s4 1934713408
        %v1760 = vunpack.c.0.s8 %v1759
        %v1761 = vlaneseq
        %v1762 = vshrl.u32 %v1761, 7
        %v1763 = vsub.s32 %v1760, %v1762
        %v1764 = vrot.slane %v1756, %v1763
        %v1766 = vunpack.c.l.s4 1934713408
        %v1767 = vunpack.c.0.s8 %v1766
        %v1768 = vlaneseq
        %v1769 = vshrl.u32 %v1768, 7
        %v1770 = vsub.s32 %v1767, %v1769
        %v1771 = vrot.slane %v1757, %v1770
        %v1772 = vcombine.low %v1747, %v1755
        %v1773 = vcombine.high %v1747, %v1755
        %v1775 = vunpack.c.l.s4 1934713408
        %v1776 = vunpack.c.0.s8 %v1775
        %v1777 = vlaneseq
        %v1778 = vshrl.u32 %v1777, 7
        %v1779 = vsub.s32 %v1776, %v1778
        %v1780 = vrot.slane %v1772, %v1779
        %v1782 = vunpack.c.l.s4 1934713408
        %v1783 = vunpack.c.0.s8 %v1782
        %v1784 = vlaneseq
        %v1785 = vshrl.u32 %v1784, 7
        %v1786 = vsub.s32 %v1783, %v1785
        %v1787 = vrot.slane %v1773, %v1786
        %v1788 = vcombine.low %v1764, %v1780
        %v1789 = vcombine.high %v1764, %v1780
        %v1790 = vcombine.low %v1771, %v1787
        %v1791 = vcombine.high %v1771, %v1787
        %1793 = vrot.lane.b32.xlu0 %v1789, 8
        %v1794 = vpop.permute.xlu0 %1793
        %1797 = vrot.lane.b32.xlu0 %v1790, 16
        %v1798 = vpop.permute.xlu0 %1797
        %1801 = vrot.lane.b32.xlu0 %v1791, 24
        %v1802 = vpop.permute.xlu0 %1801
        %v1804 = vsel %vm1238, %v1788, %v1794
        %vm1805 = vcmask 130048
        %v1806 = vsel %vm1805, %v1804, %v1798
        %vm1807 = vcmask 195584
        %v1808 = vsel %vm1807, %v1806, %v1802
        %v1809 = vadd.f32 %v1808, %v588
        %v1810 = vsel %vm618, %v1809, 0.0
        %1811 = vadd.xlane.f32.xlu0 %v1810
        %v1812 = vpop.xlane.xlu0 %1811
        %v1813 = vmul.f32 %v1812, %v622
        %v1814 = vsub.f32 %v1809, %v1813
        %v1815 = vmul.f32 %v1814, %v1814
        %v1816 = vsel %vm618, %v1815, 0.0
        %1817 = vadd.xlane.f32.xlu0 %v1816
        %v1818 = vpop.xlane.xlu0 %1817
        %v1819 = vmul.f32 %v1818, %v622
        %v1820 = vadd.f32 %v1819, 1e-05
        %v1821 = vrsqrt.pop %v1820
        %v1822 = vmul.f32 %v1814, %v1821
        %v1824 = vlaneseq
        %v1825 = vshrl.u32 %v1824, 7
        %v1826 = vsub.s32 0, %v1825
        %v1827 = vrot.slane %v602, %v1826
        %v1829 = vmul.f32 %v1822, %v1827
        %v1831 = vlaneseq
        %v1832 = vshrl.u32 %v1831, 7
        %v1833 = vsub.s32 0, %v1832
        %v1834 = vrot.slane %v603, %v1833
        %v1836 = vadd.f32 %v1829, %v1834
        %v1837 = vpack.c.bf16 %v1836, %v1836
        %v1839 = vlaneseq
        %v1840 = vshrl.u32 %v1839, 7
        %v1841 = vsub.s32 0, %v1840
        %v1842 = vrot.slane %v608, %v1841
        %v1848 = vunpack.c.l.b16 %v604
        %v1849 = vunpack.c.l.b16 %v605
        %v1850 = vunpack.c.l.b16 %v606
        %v1851 = vunpack.c.l.b16 %v607
        %v1852 = vpack.c.b16 %v1849, %v1848
        %v1853 = vpack.c.b16 %v1851, %v1850
        %v1857 = vsel %vm618, %v1837, 0
        %1859 = vmatprep.subr.bf16.mxu0 0
        %1860 = vmatpush1.bf16.msra.mxu0 %v1852
        %1861 = vmatprep.subr.bf16.mxu0 0
        %1862 = vmatpush1.bf16.msra.mxu0 %v1853
        %1863 = vmatprep.subr.bf16.mxu0 0
        %1864 = vmatpush1.bf16.msra.mxu0 0
        %1865 = vmatprep.subr.bf16.mxu0 0
        %1866 = vmatpush1.bf16.msra.mxu0 0
        %1867 = vmatprep.subr.bf16.mxu0 0
        %1868 = vmatpush1.bf16.msra.mxu0 0
        %1869 = vmatprep.subr.bf16.mxu0 0
        %1870 = vmatpush1.bf16.msra.mxu0 0
        %1871 = vmatprep.subr.bf16.mxu0 0
        %1872 = vmatpush1.bf16.msra.mxu0 0
        %1873 = vmatprep.subr.bf16.mxu0 0
        %1874 = vmatpush1.bf16.msra.mxu0 0
        %1875 = vmatprep.subr.bf16.mxu0 0
        %1876 = vmatpush1.bf16.msra.mxu0 0
        %1877 = vmatprep.subr.bf16.mxu0 0
        %1878 = vmatpush1.bf16.msra.mxu0 0
        %1879 = vmatprep.subr.bf16.mxu0 0
        %1880 = vmatpush1.bf16.msra.mxu0 0
        %1881 = vmatprep.subr.bf16.mxu0 0
        %1882 = vmatpush1.bf16.msra.mxu0 0
        %1883 = vmatprep.subr.bf16.mxu0 0
        %1884 = vmatpush1.bf16.msra.mxu0 0
        %1885 = vmatprep.subr.bf16.mxu0 0
        %1886 = vmatpush1.bf16.msra.mxu0 0
        %1887 = vmatprep.subr.bf16.mxu0 0
        %1888 = vmatpush1.bf16.msra.mxu0 0
        %1889 = vmatprep.subr.bf16.mxu0 0
        %1890 = vmatpush1.bf16.msra.mxu0 0
        %1891 = vmatprep.mubr.bf16.mxu0 0
        %1892 = vmatmul.mubr.bf16.gmra.mrb[0].mxu0 %v1857
        %v1893 = vpop.f32.mrb[0].mxu0
        %v1894 = vadd.f32 %v1842, %v1893
        %v1895 = vpop.f32.mrb[0].mxu0
        %v1896 = vpop.f32.mrb[0].mxu0
        %v1897 = vpop.f32.mrb[0].mxu0
        %1898 = vdwg.mxu0
        %v1899 = vmul.f32 %v1894, 0.5
        %v1900 = vmul.f32 %v1894, 0.70710677
        %v1901 = verf.f32.pop %v1900
        %v1902 = vadd.f32 %v1901, 1.0
        %v1903 = vmul.f32 %v1899, %v1902
        %v1904 = vpack.c.bf16 %v1903, %v1903
        %v1906 = vlaneseq
        %v1907 = vshrl.u32 %v1906, 7
        %v1908 = vsub.s32 0, %v1907
        %v1909 = vrot.slane %v617, %v1908
        %v1919 = vunpack.c.l.b16 %v609
        %v1920 = vunpack.c.l.b16 %v610
        %v1921 = vunpack.c.l.b16 %v611
        %v1922 = vunpack.c.l.b16 %v612
        %v1923 = vunpack.c.l.b16 %v613
        %v1924 = vunpack.c.l.b16 %v614
        %v1925 = vunpack.c.l.b16 %v615
        %v1926 = vunpack.c.l.b16 %v616
        %v1927 = vpack.c.b16 %v1920, %v1919
        %v1928 = vpack.c.b16 %v1922, %v1921
        %v1929 = vpack.c.b16 %v1924, %v1923
        %v1930 = vpack.c.b16 %v1926, %v1925
        %vm1935 = vcmask 523264
        %v1937 = vsel %vm1935, %v1904, 0
        %1939 = vmatprep.subr.bf16.mxu0 0
        %1940 = vmatpush1.bf16.msra.mxu0 %v1927
        %1941 = vmatprep.subr.bf16.mxu0 0
        %1942 = vmatpush1.bf16.msra.mxu0 %v1928
        %1943 = vmatprep.subr.bf16.mxu0 0
        %1944 = vmatpush1.bf16.msra.mxu0 %v1929
        %1945 = vmatprep.subr.bf16.mxu0 0
        %1946 = vmatpush1.bf16.msra.mxu0 %v1930
        %1947 = vmatprep.subr.bf16.mxu0 0
        %1948 = vmatpush1.bf16.msra.mxu0 0
        %1949 = vmatprep.subr.bf16.mxu0 0
        %1950 = vmatpush1.bf16.msra.mxu0 0
        %1951 = vmatprep.subr.bf16.mxu0 0
        %1952 = vmatpush1.bf16.msra.mxu0 0
        %1953 = vmatprep.subr.bf16.mxu0 0
        %1954 = vmatpush1.bf16.msra.mxu0 0
        %1955 = vmatprep.subr.bf16.mxu0 0
        %1956 = vmatpush1.bf16.msra.mxu0 0
        %1957 = vmatprep.subr.bf16.mxu0 0
        %1958 = vmatpush1.bf16.msra.mxu0 0
        %1959 = vmatprep.subr.bf16.mxu0 0
        %1960 = vmatpush1.bf16.msra.mxu0 0
        %1961 = vmatprep.subr.bf16.mxu0 0
        %1962 = vmatpush1.bf16.msra.mxu0 0
        %1963 = vmatprep.subr.bf16.mxu0 0
        %1964 = vmatpush1.bf16.msra.mxu0 0
        %1965 = vmatprep.subr.bf16.mxu0 0
        %1966 = vmatpush1.bf16.msra.mxu0 0
        %1967 = vmatprep.subr.bf16.mxu0 0
        %1968 = vmatpush1.bf16.msra.mxu0 0
        %1969 = vmatprep.subr.bf16.mxu0 0
        %1970 = vmatpush1.bf16.msra.mxu0 0
        %1971 = vmatprep.mubr.bf16.mxu0 0
        %1972 = vmatmul.mubr.bf16.gmra.mrb[0].mxu0 %v1937
        %v1973 = vpop.f32.mrb[0].mxu0
        %v1974 = vadd.f32 %v1909, %v1973
        %v1975 = vpop.f32.mrb[0].mxu0
        %v1976 = vpop.f32.mrb[0].mxu0
        %v1977 = vpop.f32.mrb[0].mxu0
        %1978 = vdwg.mxu0
        %v1979 = vadd.f32 %v1974, %v1809
        %1980 = vst.msk [vmem:[%s586] sm:$0xff] %vm618, %v1979
        %p1981 = scmp.lt.s32.totalorder %s33, 1
        %s1982 = scalar_select %p1981, %s33, 1
        %p1983 = scmp.lt.s32.totalorder %s34, 0
        %s1984 = scalar_select %p1983, %s34, 0
        %s1985 = sadd.s32 %s1984, %s1982
        %s1986 = smul.addr %s1985, 8
        %s1987 = scalar_lea.vmem %s14, %s1986
        // Predicated region
        $region101: #{transformer_forward.2} parent=75 // pred_check
          %p1988 = pneg %p367
        $region102: #{transformer_forward.2} parent=75 // pred_check_branch
          %1990 = sbr.rel (%p1988) target = $region104
        $region103: #{transformer_forward.2} parent=75 // pred_region
          _
        $region104: #{transformer_forward.2} parent=75 // pred_fallthru
          _
      $region76: #{transformer_forward.2} parent=5 // pred_fallthru
        _
      %p1991 = scmp.le.s32.totalorder 2, %s24
      // Predicated region
      $region105: #{transformer_forward.2} parent=5 // pred_check
        %p1992 = pneg %p1991
      $region106: #{transformer_forward.2} parent=5 // pred_check_branch
        %1994 = sbr.rel (%p1992) target = $region108
      $region107: #{transformer_forward.2} parent=5 // pred_region
        %s1995 = ssub.s32 %s24, 2
        // Predicated region
        $region109: #{transformer_forward.2} parent=107 // pred_check
          %p1996 = pneg %p373
        $region110: #{transformer_forward.2} parent=107 // pred_check_branch
          %1998 = sbr.rel (%p1996) target = $region112
        $region111: #{transformer_forward.2} parent=107 // pred_region
          %p1999 = scmp.lt.s32.totalorder %s35, 1
          %s2000 = scalar_select %p1999, %s35, 1
          %p2001 = scmp.lt.s32.totalorder %s36, 0
          %s2002 = scalar_select %p2001, %s36, 0
          %s2003 = sadd.s32 %s2002, %s2000
          %s2004 = smul.addr %s2003, 8
          %s2005 = scalar_lea.vmem %s14, %s2004
        $region112: #{transformer_forward.2} parent=107 // pred_fallthru
          _
      $region108: #{transformer_forward.2} parent=5 // pred_fallthru
        _
    $region6: #{transformer_forward.2} parent=1 // loop_footer
      %s28 = sadd.s32 1, %s24
    $region7: #{transformer_forward.2} parent=1 // loop_footer_branch
      %23 = sbr.rel target = $region3
    $region8: #{transformer_forward.2} parent=1 // loop_exit
      _
    %2006 = vsyncpa [#allocation3], 1
    %s2007 = scalar_lea.sflag [#allocation3], 1
    %2008 = vsyncpa %s2007, 1
    %2009 = vsyncpa [#allocation5], 1
    %2010 = vsyncpa [#allocation8], 1
    %2011 = vsyncpa [#allocation11], 1

// kernel: transformer_forward.3
$region0: #{transformer_forward.3}
  #allocation0 [shape = 'u32[]', space=smem, size = 0x4, offset = 0x4, fixed_abs, tag = 'smem constant byte address 0x4 - core index']
  #allocation1 [shape = 'u32[144,128]{1,0:T(1,128)}', space=vmem, size = 0x12000, scoped, tag = 'internal scratch']
  %s0 = inlined_call_operand.vmem [shape: f32[2,8,32], index: 0, kind: input, shape index: {}, may-alias: {0,1}]
  %s1 = inlined_call_operand.vmem [shape: f32[2,8,32], index: 1, kind: input, shape index: {}, may-alias: {0,1}]
  %s2 = inlined_call_operand.vmem [shape: f32[1,32], index: 2, kind: input, shape index: {}]
  %s3 = inlined_call_operand.vmem [shape: f32[1,32], index: 3, kind: input, shape index: {}]
  %s4 = inlined_call_operand.vmem [shape: bf16[32,32], index: 4, kind: input, shape index: {}]
  %s5 = inlined_call_operand.vmem [shape: f32[1,32], index: 5, kind: input, shape index: {}]
  %s6 = inlined_call_operand.vmem [shape: bf16[32,64], index: 6, kind: input, shape index: {}]
  %s7 = inlined_call_operand.vmem [shape: f32[1,64], index: 7, kind: input, shape index: {}]
  %s8 = inlined_call_operand.vmem [shape: f32[1,32], index: 8, kind: input, shape index: {}]
  %s9 = inlined_call_operand.vmem [shape: f32[1,32], index: 9, kind: input, shape index: {}]
  %s10 = inlined_call_operand.vmem [shape: bf16[32,64], index: 10, kind: input, shape index: {}]
  %s11 = inlined_call_operand.vmem [shape: f32[1,64], index: 11, kind: input, shape index: {}]
  %s12 = inlined_call_operand.vmem [shape: bf16[64,32], index: 12, kind: input, shape index: {}]
  %s13 = inlined_call_operand.vmem [shape: f32[1,32], index: 13, kind: input, shape index: {}]
  %s14 = inlined_call_operand.hbm [shape: f32[2,8,32], index: 14, kind: output, shape index: {}]
  %s15 = sld [smem:[#allocation0]]
  $region89: #{transformer_forward.3} parent=0
    _
  %s17 = ssub.s32 1, %s15
  %s18 = scalar_select 0, %s17, %s15
  $region1: #{transformer_forward.3} parent=0
    #allocation2 [shape = 'u8[8192]{0}', space=vmem, size = 0x2000, scoped, tag = 'output window, operand 0']
    #allocation3 [shape = 's32[2]{0}', space=sflag, size = 0x8, scoped, tag = 'scoped memory for transformer_forward.3']
    %19 = vsyncpa [#allocation3], 0
    %s20 = scalar_lea.sflag [#allocation3], 1
    %21 = vsyncpa %s20, 0
    loop: start=0, step=1, limit=4
    $region2: #{transformer_forward.3} parent=1 // loop_pre_header
      _
    $region3: #{transformer_forward.3} parent=1 // loop_header
      %s23 = sphi 0, %s27
      %p24 = scmp.ge.s32.totalorder %s23, 4
      %s30 = sphi 0, %s42
      %s31 = sphi 0, %s38
      %s32 = sphi 0, %s30
      %s33 = sphi 0, %s31
      %s34 = sphi 0, %s32
      %s35 = sphi 0, %s33
      %s47 = sphi 0, %s49
      %s50 = sphi 0, %s47
      %s51 = sphi 0, %s50
      %s67 = sphi 0, %s51
      %s73 = sphi 0, %s75
      %s76 = sphi 0, %s73
      %s77 = sphi 0, %s76
      %s93 = sphi 0, %s77
      %s97 = sphi 0, %s97
      %s99 = sphi 0, %s97
      %s100 = sphi 0, %s99
      %s114 = sphi 0, %s100
      %s118 = sphi 0, %s118
      %s120 = sphi 0, %s118
      %s121 = sphi 0, %s120
      %s135 = sphi 0, %s121
      %s139 = sphi 0, %s139
      %s141 = sphi 0, %s139
      %s142 = sphi 0, %s141
      %s156 = sphi 0, %s142
      %s160 = sphi 0, %s160
      %s162 = sphi 0, %s160
      %s163 = sphi 0, %s162
      %s177 = sphi 0, %s163
      %s181 = sphi 0, %s181
      %s183 = sphi 0, %s181
      %s184 = sphi 0, %s183
      %s198 = sphi 0, %s184
      %s202 = sphi 0, %s202
      %s204 = sphi 0, %s202
      %s205 = sphi 0, %s204
      %s219 = sphi 0, %s205
      %s223 = sphi 0, %s223
      %s225 = sphi 0, %s223
      %s226 = sphi 0, %s225
      %s240 = sphi 0, %s226
      %s244 = sphi 0, %s244
      %s246 = sphi 0, %s244
      %s247 = sphi 0, %s246
      %s261 = sphi 0, %s247
      %s265 = sphi 0, %s265
      %s267 = sphi 0, %s265
      %s268 = sphi 0, %s267
      %s282 = sphi 0, %s268
      %s286 = sphi 0, %s286
      %s288 = sphi 0, %s286
      %s289 = sphi 0, %s288
      %s303 = sphi 0, %s289
      %s307 = sphi 0, %s307
      %s309 = sphi 0, %s307
      %s310 = sphi 0, %s309
      %s324 = sphi 0, %s310
      %s328 = sphi 0, %s328
      %s330 = sphi 0, %s328
      %s331 = sphi 0, %s330
      %s345 = sphi 0, %s331
      %s353 = sphi 0, %s355
      %s356 = sphi 0, %s353
      %s357 = sphi 0, %s356
      %s373 = sphi 0, %s357
    $region4: #{transformer_forward.3} parent=1 // loop_header_branch
      %26 = sbr.rel (%p24) target = $region8
    $region5: #{transformer_forward.3} parent=1 // loop_body
      %s28 = ssub.s32 %s23, 1
      %s29 = ssub.s32 %s23, 2
      %s36 = sadd.s32 1, %s31
      %p37 = scmp.ge.s32.totalorder %s36, 1
      %s38 = scalar_select %p37, 0, %s36
      %s39 = sadd.s32 1, %s30
      %s40 = scalar_select %p37, %s39, %s30
      %p41 = scmp.ge.s32.totalorder %s40, 2
      %s42 = scalar_select %p41, 0, %s40
      %s43 = ssub.s32 %s30, %s42
      %s44 = ssub.s32 %s31, %s38
      %s45 = sor.u32 %s43, %s44
      %p46 = scmp.eq.s32.totalorder %s45, 0
      %s48 = sadd.s32 %s47, 1
      %s49 = scalar_select %p46, %s47, %s48
      %p52 = pneg %p46
      %p53 = scmp.eq.s32.totalorder %s23, 1
      %p54 = por %p52, %p53
      %p55 = scmp.ne.s32.totalorder %s47, %s50
      %p56 = scmp.eq.s32.totalorder %s23, 0
      %p57 = por %p55, %p56
      %p58 = scmp.ne.s32.totalorder %s47, %s50
      %p59 = scmp.eq.s32.totalorder %s28, 1
      %p60 = por %p58, %p59
      %p61 = scmp.ne.s32.totalorder %s50, %s51
      %p62 = scmp.eq.s32.totalorder %s28, 0
      %p63 = por %p61, %p62
      %p64 = scmp.ne.s32.totalorder %s50, %s51
      %p65 = scmp.eq.s32.totalorder %s29, 1
      %p66 = por %p64, %p65
      %p68 = scmp.ne.s32.totalorder %s51, %s67
      %p69 = scmp.eq.s32.totalorder %s29, 0
      %p70 = por %p68, %p69
      %s71 = ssub.s32 %s30, %s42
      %p72 = scmp.eq.s32.totalorder %s71, 0
      %s74 = sadd.s32 %s73, 1
      %s75 = scalar_select %p72, %s73, %s74
      %p78 = pneg %p72
      %p79 = scmp.eq.s32.totalorder %s23, 1
      %p80 = por %p78, %p79
      %p81 = scmp.ne.s32.totalorder %s73, %s76
      %p82 = scmp.eq.s32.totalorder %s23, 0
      %p83 = por %p81, %p82
      %p84 = scmp.ne.s32.totalorder %s73, %s76
      %p85 = scmp.eq.s32.totalorder %s28, 1
      %p86 = por %p84, %p85
      %p87 = scmp.ne.s32.totalorder %s76, %s77
      %p88 = scmp.eq.s32.totalorder %s28, 0
      %p89 = por %p87, %p88
      %p90 = scmp.ne.s32.totalorder %s76, %s77
      %p91 = scmp.eq.s32.totalorder %s29, 1
      %p92 = por %p90, %p91
      %p94 = scmp.ne.s32.totalorder %s77, %s93
      %p95 = scmp.eq.s32.totalorder %s29, 0
      %p96 = por %p94, %p95
      %s98 = sadd.s32 %s97, 1
      %p101 = scmp.eq.s32.totalorder %s23, 1
      %p102 = scmp.ne.s32.totalorder %s97, %s99
      %p103 = scmp.eq.s32.totalorder %s23, 0
      %p104 = por %p102, %p103
      %p105 = scmp.ne.s32.totalorder %s97, %s99
      %p106 = scmp.eq.s32.totalorder %s28, 1
      %p107 = por %p105, %p106
      %p108 = scmp.ne.s32.totalorder %s99, %s100
      %p109 = scmp.eq.s32.totalorder %s28, 0
      %p110 = por %p108, %p109
      %p111 = scmp.ne.s32.totalorder %s99, %s100
      %p112 = scmp.eq.s32.totalorder %s29, 1
      %p113 = por %p111, %p112
      %p115 = scmp.ne.s32.totalorder %s100, %s114
      %p116 = scmp.eq.s32.totalorder %s29, 0
      %p117 = por %p115, %p116
      %s119 = sadd.s32 %s118, 1
      %p122 = scmp.eq.s32.totalorder %s23, 1
      %p123 = scmp.ne.s32.totalorder %s118, %s120
      %p124 = scmp.eq.s32.totalorder %s23, 0
      %p125 = por %p123, %p124
      %p126 = scmp.ne.s32.totalorder %s118, %s120
      %p127 = scmp.eq.s32.totalorder %s28, 1
      %p128 = por %p126, %p127
      %p129 = scmp.ne.s32.totalorder %s120, %s121
      %p130 = scmp.eq.s32.totalorder %s28, 0
      %p131 = por %p129, %p130
      %p132 = scmp.ne.s32.totalorder %s120, %s121
      %p133 = scmp.eq.s32.totalorder %s29, 1
      %p134 = por %p132, %p133
      %p136 = scmp.ne.s32.totalorder %s121, %s135
      %p137 = scmp.eq.s32.totalorder %s29, 0
      %p138 = por %p136, %p137
      %s140 = sadd.s32 %s139, 1
      %p143 = scmp.eq.s32.totalorder %s23, 1
      %p144 = scmp.ne.s32.totalorder %s139, %s141
      %p145 = scmp.eq.s32.totalorder %s23, 0
      %p146 = por %p144, %p145
      %p147 = scmp.ne.s32.totalorder %s139, %s141
      %p148 = scmp.eq.s32.totalorder %s28, 1
      %p149 = por %p147, %p148
      %p150 = scmp.ne.s32.totalorder %s141, %s142
      %p151 = scmp.eq.s32.totalorder %s28, 0
      %p152 = por %p150, %p151
      %p153 = scmp.ne.s32.totalorder %s141, %s142
      %p154 = scmp.eq.s32.totalorder %s29, 1
      %p155 = por %p153, %p154
      %p157 = scmp.ne.s32.totalorder %s142, %s156
      %p158 = scmp.eq.s32.totalorder %s29, 0
      %p159 = por %p157, %p158
      %s161 = sadd.s32 %s160, 1
      %p164 = scmp.eq.s32.totalorder %s23, 1
      %p165 = scmp.ne.s32.totalorder %s160, %s162
      %p166 = scmp.eq.s32.totalorder %s23, 0
      %p167 = por %p165, %p166
      %p168 = scmp.ne.s32.totalorder %s160, %s162
      %p169 = scmp.eq.s32.totalorder %s28, 1
      %p170 = por %p168, %p169
      %p171 = scmp.ne.s32.totalorder %s162, %s163
      %p172 = scmp.eq.s32.totalorder %s28, 0
      %p173 = por %p171, %p172
      %p174 = scmp.ne.s32.totalorder %s162, %s163
      %p175 = scmp.eq.s32.totalorder %s29, 1
      %p176 = por %p174, %p175
      %p178 = scmp.ne.s32.totalorder %s163, %s177
      %p179 = scmp.eq.s32.totalorder %s29, 0
      %p180 = por %p178, %p179
      %s182 = sadd.s32 %s181, 1
      %p185 = scmp.eq.s32.totalorder %s23, 1
      %p186 = scmp.ne.s32.totalorder %s181, %s183
      %p187 = scmp.eq.s32.totalorder %s23, 0
      %p188 = por %p186, %p187
      %p189 = scmp.ne.s32.totalorder %s181, %s183
      %p190 = scmp.eq.s32.totalorder %s28, 1
      %p191 = por %p189, %p190
      %p192 = scmp.ne.s32.totalorder %s183, %s184
      %p193 = scmp.eq.s32.totalorder %s28, 0
      %p194 = por %p192, %p193
      %p195 = scmp.ne.s32.totalorder %s183, %s184
      %p196 = scmp.eq.s32.totalorder %s29, 1
      %p197 = por %p195, %p196
      %p199 = scmp.ne.s32.totalorder %s184, %s198
      %p200 = scmp.eq.s32.totalorder %s29, 0
      %p201 = por %p199, %p200
      %s203 = sadd.s32 %s202, 1
      %p206 = scmp.eq.s32.totalorder %s23, 1
      %p207 = scmp.ne.s32.totalorder %s202, %s204
      %p208 = scmp.eq.s32.totalorder %s23, 0
      %p209 = por %p207, %p208
      %p210 = scmp.ne.s32.totalorder %s202, %s204
      %p211 = scmp.eq.s32.totalorder %s28, 1
      %p212 = por %p210, %p211
      %p213 = scmp.ne.s32.totalorder %s204, %s205
      %p214 = scmp.eq.s32.totalorder %s28, 0
      %p215 = por %p213, %p214
      %p216 = scmp.ne.s32.totalorder %s204, %s205
      %p217 = scmp.eq.s32.totalorder %s29, 1
      %p218 = por %p216, %p217
      %p220 = scmp.ne.s32.totalorder %s205, %s219
      %p221 = scmp.eq.s32.totalorder %s29, 0
      %p222 = por %p220, %p221
      %s224 = sadd.s32 %s223, 1
      %p227 = scmp.eq.s32.totalorder %s23, 1
      %p228 = scmp.ne.s32.totalorder %s223, %s225
      %p229 = scmp.eq.s32.totalorder %s23, 0
      %p230 = por %p228, %p229
      %p231 = scmp.ne.s32.totalorder %s223, %s225
      %p232 = scmp.eq.s32.totalorder %s28, 1
      %p233 = por %p231, %p232
      %p234 = scmp.ne.s32.totalorder %s225, %s226
      %p235 = scmp.eq.s32.totalorder %s28, 0
      %p236 = por %p234, %p235
      %p237 = scmp.ne.s32.totalorder %s225, %s226
      %p238 = scmp.eq.s32.totalorder %s29, 1
      %p239 = por %p237, %p238
      %p241 = scmp.ne.s32.totalorder %s226, %s240
      %p242 = scmp.eq.s32.totalorder %s29, 0
      %p243 = por %p241, %p242
      %s245 = sadd.s32 %s244, 1
      %p248 = scmp.eq.s32.totalorder %s23, 1
      %p249 = scmp.ne.s32.totalorder %s244, %s246
      %p250 = scmp.eq.s32.totalorder %s23, 0
      %p251 = por %p249, %p250
      %p252 = scmp.ne.s32.totalorder %s244, %s246
      %p253 = scmp.eq.s32.totalorder %s28, 1
      %p254 = por %p252, %p253
      %p255 = scmp.ne.s32.totalorder %s246, %s247
      %p256 = scmp.eq.s32.totalorder %s28, 0
      %p257 = por %p255, %p256
      %p258 = scmp.ne.s32.totalorder %s246, %s247
      %p259 = scmp.eq.s32.totalorder %s29, 1
      %p260 = por %p258, %p259
      %p262 = scmp.ne.s32.totalorder %s247, %s261
      %p263 = scmp.eq.s32.totalorder %s29, 0
      %p264 = por %p262, %p263
      %s266 = sadd.s32 %s265, 1
      %p269 = scmp.eq.s32.totalorder %s23, 1
      %p270 = scmp.ne.s32.totalorder %s265, %s267
      %p271 = scmp.eq.s32.totalorder %s23, 0
      %p272 = por %p270, %p271
      %p273 = scmp.ne.s32.totalorder %s265, %s267
      %p274 = scmp.eq.s32.totalorder %s28, 1
      %p275 = por %p273, %p274
      %p276 = scmp.ne.s32.totalorder %s267, %s268
      %p277 = scmp.eq.s32.totalorder %s28, 0
      %p278 = por %p276, %p277
      %p279 = scmp.ne.s32.totalorder %s267, %s268
      %p280 = scmp.eq.s32.totalorder %s29, 1
      %p281 = por %p279, %p280
      %p283 = scmp.ne.s32.totalorder %s268, %s282
      %p284 = scmp.eq.s32.totalorder %s29, 0
      %p285 = por %p283, %p284
      %s287 = sadd.s32 %s286, 1
      %p290 = scmp.eq.s32.totalorder %s23, 1
      %p291 = scmp.ne.s32.totalorder %s286, %s288
      %p292 = scmp.eq.s32.totalorder %s23, 0
      %p293 = por %p291, %p292
      %p294 = scmp.ne.s32.totalorder %s286, %s288
      %p295 = scmp.eq.s32.totalorder %s28, 1
      %p296 = por %p294, %p295
      %p297 = scmp.ne.s32.totalorder %s288, %s289
      %p298 = scmp.eq.s32.totalorder %s28, 0
      %p299 = por %p297, %p298
      %p300 = scmp.ne.s32.totalorder %s288, %s289
      %p301 = scmp.eq.s32.totalorder %s29, 1
      %p302 = por %p300, %p301
      %p304 = scmp.ne.s32.totalorder %s289, %s303
      %p305 = scmp.eq.s32.totalorder %s29, 0
      %p306 = por %p304, %p305
      %s308 = sadd.s32 %s307, 1
      %p311 = scmp.eq.s32.totalorder %s23, 1
      %p312 = scmp.ne.s32.totalorder %s307, %s309
      %p313 = scmp.eq.s32.totalorder %s23, 0
      %p314 = por %p312, %p313
      %p315 = scmp.ne.s32.totalorder %s307, %s309
      %p316 = scmp.eq.s32.totalorder %s28, 1
      %p317 = por %p315, %p316
      %p318 = scmp.ne.s32.totalorder %s309, %s310
      %p319 = scmp.eq.s32.totalorder %s28, 0
      %p320 = por %p318, %p319
      %p321 = scmp.ne.s32.totalorder %s309, %s310
      %p322 = scmp.eq.s32.totalorder %s29, 1
      %p323 = por %p321, %p322
      %p325 = scmp.ne.s32.totalorder %s310, %s324
      %p326 = scmp.eq.s32.totalorder %s29, 0
      %p327 = por %p325, %p326
      %s329 = sadd.s32 %s328, 1
      %p332 = scmp.eq.s32.totalorder %s23, 1
      %p333 = scmp.ne.s32.totalorder %s328, %s330
      %p334 = scmp.eq.s32.totalorder %s23, 0
      %p335 = por %p333, %p334
      %p336 = scmp.ne.s32.totalorder %s328, %s330
      %p337 = scmp.eq.s32.totalorder %s28, 1
      %p338 = por %p336, %p337
      %p339 = scmp.ne.s32.totalorder %s330, %s331
      %p340 = scmp.eq.s32.totalorder %s28, 0
      %p341 = por %p339, %p340
      %p342 = scmp.ne.s32.totalorder %s330, %s331
      %p343 = scmp.eq.s32.totalorder %s29, 1
      %p344 = por %p342, %p343
      %p346 = scmp.ne.s32.totalorder %s331, %s345
      %p347 = scmp.eq.s32.totalorder %s29, 0
      %p348 = por %p346, %p347
      %s349 = ssub.s32 %s30, %s42
      %s350 = ssub.s32 %s31, %s38
      %s351 = sor.u32 %s349, %s350
      %p352 = scmp.eq.s32.totalorder %s351, 0
      %s354 = sadd.s32 %s353, 1
      %s355 = scalar_select %p352, %s353, %s354
      %p358 = pneg %p352
      %p359 = scmp.eq.s32.totalorder %s23, 1
      %p360 = por %p358, %p359
      %p361 = scmp.ne.s32.totalorder %s353, %s356
      %p362 = scmp.eq.s32.totalorder %s23, 0
      %p363 = por %p361, %p362
      %p364 = scmp.ne.s32.totalorder %s353, %s356
      %p365 = scmp.eq.s32.totalorder %s28, 1
      %p366 = por %p364, %p365
      %p367 = scmp.ne.s32.totalorder %s356, %s357
      %p368 = scmp.eq.s32.totalorder %s28, 0
      %p369 = por %p367, %p368
      %p370 = scmp.ne.s32.totalorder %s356, %s357
      %p371 = scmp.eq.s32.totalorder %s29, 1
      %p372 = por %p370, %p371
      %p374 = scmp.ne.s32.totalorder %s357, %s373
      %p375 = scmp.eq.s32.totalorder %s29, 0
      %p376 = por %p374, %p375
      %p377 = scmp.le.s32.totalorder 1, %s23
      %p378 = scmp.lt.s32.totalorder %s23, 3
      %p379 = pnand %p377, %p378
      %p380 = pneg %p379
      // Predicated region
      $region9: #{transformer_forward.3} parent=5 // pred_check
        _
      $region10: #{transformer_forward.3} parent=5 // pred_check_branch
        %382 = sbr.rel (%p379) target = $region12
      $region11: #{transformer_forward.3} parent=5 // pred_region
        %s383 = ssub.s32 %s23, 1
        // Predicated region
        $region13: #{transformer_forward.3} parent=11 // pred_check
          %p384 = pneg %p110
        $region14: #{transformer_forward.3} parent=11 // pred_check_branch
          %386 = sbr.rel (%p384) target = $region16
        $region15: #{transformer_forward.3} parent=11 // pred_region
          _
        $region16: #{transformer_forward.3} parent=11 // pred_fallthru
          _
        // Predicated region
        $region17: #{transformer_forward.3} parent=11 // pred_check
          %p387 = pneg %p131
        $region18: #{transformer_forward.3} parent=11 // pred_check_branch
          %389 = sbr.rel (%p387) target = $region20
        $region19: #{transformer_forward.3} parent=11 // pred_region
          _
        $region20: #{transformer_forward.3} parent=11 // pred_fallthru
          _
        // Predicated region
        $region21: #{transformer_forward.3} parent=11 // pred_check
          %p390 = pneg %p152
        $region22: #{transformer_forward.3} parent=11 // pred_check_branch
          %392 = sbr.rel (%p390) target = $region24
        $region23: #{transformer_forward.3} parent=11 // pred_region
          _
        $region24: #{transformer_forward.3} parent=11 // pred_fallthru
          _
        // Predicated region
        $region25: #{transformer_forward.3} parent=11 // pred_check
          %p393 = pneg %p173
        $region26: #{transformer_forward.3} parent=11 // pred_check_branch
          %395 = sbr.rel (%p393) target = $region28
        $region27: #{transformer_forward.3} parent=11 // pred_region
          _
        $region28: #{transformer_forward.3} parent=11 // pred_fallthru
          _
        // Predicated region
        $region29: #{transformer_forward.3} parent=11 // pred_check
          %p396 = pneg %p194
        $region30: #{transformer_forward.3} parent=11 // pred_check_branch
          %398 = sbr.rel (%p396) target = $region32
        $region31: #{transformer_forward.3} parent=11 // pred_region
          _
        $region32: #{transformer_forward.3} parent=11 // pred_fallthru
          _
        // Predicated region
        $region33: #{transformer_forward.3} parent=11 // pred_check
          %p399 = pneg %p215
        $region34: #{transformer_forward.3} parent=11 // pred_check_branch
          %401 = sbr.rel (%p399) target = $region36
        $region35: #{transformer_forward.3} parent=11 // pred_region
          _
        $region36: #{transformer_forward.3} parent=11 // pred_fallthru
          _
        // Predicated region
        $region37: #{transformer_forward.3} parent=11 // pred_check
          %p402 = pneg %p236
        $region38: #{transformer_forward.3} parent=11 // pred_check_branch
          %404 = sbr.rel (%p402) target = $region40
        $region39: #{transformer_forward.3} parent=11 // pred_region
          _
        $region40: #{transformer_forward.3} parent=11 // pred_fallthru
          _
        // Predicated region
        $region41: #{transformer_forward.3} parent=11 // pred_check
          %p405 = pneg %p257
        $region42: #{transformer_forward.3} parent=11 // pred_check_branch
          %407 = sbr.rel (%p405) target = $region44
        $region43: #{transformer_forward.3} parent=11 // pred_region
          _
        $region44: #{transformer_forward.3} parent=11 // pred_fallthru
          _
        // Predicated region
        $region45: #{transformer_forward.3} parent=11 // pred_check
          %p408 = pneg %p278
        $region46: #{transformer_forward.3} parent=11 // pred_check_branch
          %410 = sbr.rel (%p408) target = $region48
        $region47: #{transformer_forward.3} parent=11 // pred_region
          _
        $region48: #{transformer_forward.3} parent=11 // pred_fallthru
          _
        // Predicated region
        $region49: #{transformer_forward.3} parent=11 // pred_check
          %p411 = pneg %p299
        $region50: #{transformer_forward.3} parent=11 // pred_check_branch
          %413 = sbr.rel (%p411) target = $region52
        $region51: #{transformer_forward.3} parent=11 // pred_region
          _
        $region52: #{transformer_forward.3} parent=11 // pred_fallthru
          _
        // Predicated region
        $region53: #{transformer_forward.3} parent=11 // pred_check
          %p414 = pneg %p320
        $region54: #{transformer_forward.3} parent=11 // pred_check_branch
          %416 = sbr.rel (%p414) target = $region56
        $region55: #{transformer_forward.3} parent=11 // pred_region
          _
        $region56: #{transformer_forward.3} parent=11 // pred_fallthru
          _
        // Predicated region
        $region57: #{transformer_forward.3} parent=11 // pred_check
          %p417 = pneg %p341
        $region58: #{transformer_forward.3} parent=11 // pred_check_branch
          %419 = sbr.rel (%p417) target = $region60
        $region59: #{transformer_forward.3} parent=11 // pred_region
          _
        $region60: #{transformer_forward.3} parent=11 // pred_fallthru
          _
      $region12: #{transformer_forward.3} parent=5 // pred_fallthru
        _
      %p420 = scmp.lt.s32.totalorder %s23, 2
      // Predicated region
      $region61: #{transformer_forward.3} parent=5 // pred_check
        %p421 = pneg %p420
      $region62: #{transformer_forward.3} parent=5 // pred_check_branch
        %423 = sbr.rel (%p421) target = $region64
      $region63: #{transformer_forward.3} parent=5 // pred_region
        // Predicated region
        $region65: #{transformer_forward.3} parent=63 // pred_check
          %p424 = pneg %p57
        $region66: #{transformer_forward.3} parent=63 // pred_check_branch
          %426 = sbr.rel (%p424) target = $region68
        $region67: #{transformer_forward.3} parent=63 // pred_region
          %p427 = scmp.lt.s32.totalorder %s30, 1
          %s428 = scalar_select %p427, %s30, 1
          %p429 = scmp.lt.s32.totalorder %s31, 0
          %s430 = scalar_select %p429, %s31, 0
          %s431 = sadd.s32 %s430, %s428
          %s432 = smul.addr %s431, 8
          %s433 = scalar_lea.vmem %s0, %s432
        $region68: #{transformer_forward.3} parent=63 // pred_fallthru
          _
        // Predicated region
        $region69: #{transformer_forward.3} parent=63 // pred_check
          %p434 = pneg %p83
        $region70: #{transformer_forward.3} parent=63 // pred_check_branch
          %436 = sbr.rel (%p434) target = $region72
        $region71: #{transformer_forward.3} parent=63 // pred_region
          %p437 = scmp.lt.s32.totalorder %s30, 1
          %s438 = scalar_select %p437, %s30, 1
          %s439 = smul.addr %s438, 8
          %s440 = scalar_lea.vmem %s1, %s439
        $region72: #{transformer_forward.3} parent=63 // pred_fallthru
          _
      $region64: #{transformer_forward.3} parent=5 // pred_fallthru
        _
      %p441 = scmp.le.s32.totalorder 1, %s23
      %p442 = scmp.lt.s32.totalorder %s23, 3
      %p443 = pnand %p441, %p442
      %p444 = pneg %p443
      // Predicated region
      $region73: #{transformer_forward.3} parent=5 // pred_check
        _
      $region74: #{transformer_forward.3} parent=5 // pred_check_branch
        %446 = sbr.rel (%p443) target = $region76
      $region75: #{transformer_forward.3} parent=5 // pred_region
        %s447 = ssub.s32 %s23, 1
        %p448 = scmp.lt.s32.totalorder %s32, 1
        %s449 = scalar_select %p448, %s32, 1
        %p450 = scmp.lt.s32.totalorder %s33, 0
        %s451 = scalar_select %p450, %s33, 0
        %s452 = sadd.s32 %s451, %s449
        %s453 = smul.addr %s452, 8
        %s454 = scalar_lea.vmem %s0, %s453
        %p455 = pneg %p63
        %p456 = pneg %p60
        %p457 = scmp.lt.s32.totalorder %s32, 1
        %s458 = scalar_select %p457, %s32, 1
        %s459 = smul.addr %s458, 8
        %s460 = scalar_lea.vmem %s1, %s459
        %p461 = pneg %p89
        %p462 = pneg %p86
        %p463 = pneg %p110
        %p464 = pneg %p107
        %p465 = pneg %p131
        %p466 = pneg %p128
        %p467 = pneg %p152
        %p468 = pneg %p149
        %p469 = pneg %p173
        %p470 = pneg %p170
        %p471 = pneg %p194
        %p472 = pneg %p191
        %p473 = pneg %p215
        %p474 = pneg %p212
        %p475 = pneg %p236
        %p476 = pneg %p233
        %p477 = pneg %p257
        %p478 = pneg %p254
        %p479 = pneg %p278
        %p480 = pneg %p275
        %p481 = pneg %p299
        %p482 = pneg %p296
        %p483 = pneg %p320
        %p484 = pneg %p317
        %p485 = pneg %p341
        %p486 = pneg %p338
        %p487 = pneg %p369
        %p488 = pneg %p366
        %s489 = sand.u32 %s356, 1
        %s490 = scalar_lea.sflag [#allocation3], %s489
        %s491 = sand.u32 %s356, 1
        %s492 = smul.addr %s491, 8
        %s493 = scalar_lea.vmem [#allocation2], %s492
        %p494 = scmp.lt.s32.totalorder %s32, 1
        %s495 = scalar_select %p494, %s32, 1
        %p496 = scmp.lt.s32.totalorder %s33, 0
        %s497 = scalar_select %p496, %s33, 0
        %s498 = sadd.s32 %s497, %s495
        %s499 = smul.addr %s498, 8
        %s500 = scalar_lea.vmem %s0, %s499
        %p501 = scmp.lt.s32.totalorder %s32, 1
        %s502 = scalar_select %p501, %s32, 1
        %s503 = smul.addr %s502, 8
        %s504 = scalar_lea.vmem %s1, %s503
        %v506 = vld [vmem:[%s500] sm:$0xff]
        %v507 = vld [vmem:[%s504] sm:$0xff]
        %v508 = vld [vmem:[%s2] sm:$0x1]
        %v509 = vld [vmem:[%s3] sm:$0x1]
        %v510 = vld [vmem:[%s4] sm:$0xf]
        %v511 = vld [vmem:[%s4 + $0x4] sm:$0xf]
        %v512 = vld [vmem:[%s4 + $0x8] sm:$0xf]
        %v513 = vld [vmem:[%s4 + $0xc] sm:$0xf]
        %v514 = vld [vmem:[%s5] sm:$0x1]
        %v515 = vld [vmem:[%s6] sm:$0xf]
        %v516 = vld [vmem:[%s6 + $0x4] sm:$0xf]
        %v517 = vld [vmem:[%s6 + $0x8] sm:$0xf]
        %v518 = vld [vmem:[%s6 + $0xc] sm:$0xf]
        %v519 = vld [vmem:[%s7] sm:$0x1]
        %v520 = vld [vmem:[%s8] sm:$0x1]
        %v521 = vld [vmem:[%s9] sm:$0x1]
        %v522 = vld [vmem:[%s10] sm:$0xf]
        %v523 = vld [vmem:[%s10 + $0x4] sm:$0xf]
        %v524 = vld [vmem:[%s10 + $0x8] sm:$0xf]
        %v525 = vld [vmem:[%s10 + $0xc] sm:$0xf]
        %v526 = vld [vmem:[%s11] sm:$0x1]
        %v527 = vld [vmem:[%s12] sm:$0xf]
        %v528 = vld [vmem:[%s12 + $0x4] sm:$0xf]
        %v529 = vld [vmem:[%s12 + $0x8] sm:$0xf]
        %v530 = vld [vmem:[%s12 + $0xc] sm:$0xf]
        %v531 = vld [vmem:[%s12 + $0x10] sm:$0xf]
        %v532 = vld [vmem:[%s12 + $0x14] sm:$0xf]
        %v533 = vld [vmem:[%s12 + $0x18] sm:$0xf]
        %v534 = vld [vmem:[%s12 + $0x1c] sm:$0xf]
        %v535 = vld [vmem:[%s13] sm:$0x1]
        %vm536 = vcmask 261120
        %v537 = vsel %vm536, %v506, 0.0
        %538 = vadd.xlane.f32.xlu0 %v537
        %v539 = vpop.xlane.xlu0 %538
        %v540 = vrcp.pop 32.0
        %v541 = vmul.f32 %v539, %v540
        %v542 = vsub.f32 %v506, %v541
        %v543 = vmul.f32 %v542, %v542
        %v544 = vsel %vm536, %v543, 0.0
        %545 = vadd.xlane.f32.xlu0 %v544
        %v546 = vpop.xlane.xlu0 %545
        %v547 = vmul.f32 %v546, %v540
        %v548 = vadd.f32 %v547, 1e-05
        %v549 = vrsqrt.pop %v548
        %v550 = vmul.f32 %v542, %v549
        %v552 = vlaneseq
        %v553 = vshrl.u32 %v552, 7
        %v554 = vsub.s32 0, %v553
        %v555 = vrot.slane %v508, %v554
        %v557 = vmul.f32 %v550, %v555
        %v559 = vlaneseq
        %v560 = vshrl.u32 %v559, 7
        %v561 = vsub.s32 0, %v560
        %v562 = vrot.slane %v509, %v561
        %v564 = vadd.f32 %v557, %v562
        %v565 = vsel %vm536, %v507, 0.0
        %566 = vadd.xlane.f32.xlu0 %v565
        %v567 = vpop.xlane.xlu0 %566
        %v568 = vmul.f32 %v567, %v540
        %v569 = vsub.f32 %v507, %v568
        %v570 = vmul.f32 %v569, %v569
        %v571 = vsel %vm536, %v570, 0.0
        %572 = vadd.xlane.f32.xlu0 %v571
        %v573 = vpop.xlane.xlu0 %572
        %v574 = vmul.f32 %v573, %v540
        %v575 = vadd.f32 %v574, 1e-05
        %v576 = vrsqrt.pop %v575
        %v577 = vmul.f32 %v569, %v576
        %v578 = vmul.f32 %v577, %v555
        %v579 = vadd.f32 %v578, %v562
        %v580 = vpack.c.bf16 %v564, %v564
        %v582 = vlaneseq
        %v583 = vshrl.u32 %v582, 7
        %v584 = vsub.s32 0, %v583
        %v585 = vrot.slane %v514, %v584
        %v591 = vunpack.c.l.b16 %v510
        %v592 = vunpack.c.l.b16 %v511
        %v593 = vunpack.c.l.b16 %v512
        %v594 = vunpack.c.l.b16 %v513
        %v595 = vpack.c.b16 %v592, %v591
        %v596 = vpack.c.b16 %v594, %v593
        %v600 = vsel %vm536, %v580, 0
        %602 = vmatprep.subr.bf16.mxu0 0
        %603 = vmatpush1.bf16.msra.mxu0 %v595
        %604 = vmatprep.subr.bf16.mxu0 0
        %605 = vmatpush1.bf16.msra.mxu0 %v596
        %606 = vmatprep.subr.bf16.mxu0 0
        %607 = vmatpush1.bf16.msra.mxu0 0
        %608 = vmatprep.subr.bf16.mxu0 0
        %609 = vmatpush1.bf16.msra.mxu0 0
        %610 = vmatprep.subr.bf16.mxu0 0
        %611 = vmatpush1.bf16.msra.mxu0 0
        %612 = vmatprep.subr.bf16.mxu0 0
        %613 = vmatpush1.bf16.msra.mxu0 0
        %614 = vmatprep.subr.bf16.mxu0 0
        %615 = vmatpush1.bf16.msra.mxu0 0
        %616 = vmatprep.subr.bf16.mxu0 0
        %617 = vmatpush1.bf16.msra.mxu0 0
        %618 = vmatprep.subr.bf16.mxu0 0
        %619 = vmatpush1.bf16.msra.mxu0 0
        %620 = vmatprep.subr.bf16.mxu0 0
        %621 = vmatpush1.bf16.msra.mxu0 0
        %622 = vmatprep.subr.bf16.mxu0 0
        %623 = vmatpush1.bf16.msra.mxu0 0
        %624 = vmatprep.subr.bf16.mxu0 0
        %625 = vmatpush1.bf16.msra.mxu0 0
        %626 = vmatprep.subr.bf16.mxu0 0
        %627 = vmatpush1.bf16.msra.mxu0 0
        %628 = vmatprep.subr.bf16.mxu0 0
        %629 = vmatpush1.bf16.msra.mxu0 0
        %630 = vmatprep.subr.bf16.mxu0 0
        %631 = vmatpush1.bf16.msra.mxu0 0
        %632 = vmatprep.subr.bf16.mxu0 0
        %633 = vmatpush1.bf16.msra.mxu0 0
        %634 = vmatprep.mubr.bf16.mxu0 0
        %635 = vmatmul.mubr.bf16.gmra.mrb[0].mxu0 %v600
        %v636 = vpop.f32.mrb[0].mxu0
        %v637 = vadd.f32 %v585, %v636
        %v638 = vpop.f32.mrb[0].mxu0
        %v639 = vpop.f32.mrb[0].mxu0
        %v640 = vpop.f32.mrb[0].mxu0
        %641 = vdwg.mxu0
        %v642 = vpack.c.bf16 %v579, %v579
        %v644 = vlaneseq
        %v645 = vshrl.u32 %v644, 7
        %v646 = vsub.s32 0, %v645
        %v647 = vrot.slane %v519, %v646
        %v653 = vunpack.c.l.b16 %v515
        %v654 = vunpack.c.l.b16 %v516
        %v655 = vunpack.c.l.b16 %v517
        %v656 = vunpack.c.l.b16 %v518
        %v657 = vpack.c.b16 %v654, %v653
        %v658 = vpack.c.b16 %v656, %v655
        %v662 = vsel %vm536, %v642, 0
        %664 = vmatprep.subr.bf16.mxu0 0
        %665 = vmatpush1.bf16.msra.mxu0 %v657
        %666 = vmatprep.subr.bf16.mxu0 0
        %667 = vmatpush1.bf16.msra.mxu0 %v658
        %668 = vmatprep.subr.bf16.mxu0 0
        %669 = vmatpush1.bf16.msra.mxu0 0
        %670 = vmatprep.subr.bf16.mxu0 0
        %671 = vmatpush1.bf16.msra.mxu0 0
        %672 = vmatprep.subr.bf16.mxu0 0
        %673 = vmatpush1.bf16.msra.mxu0 0
        %674 = vmatprep.subr.bf16.mxu0 0
        %675 = vmatpush1.bf16.msra.mxu0 0
        %676 = vmatprep.subr.bf16.mxu0 0
        %677 = vmatpush1.bf16.msra.mxu0 0
        %678 = vmatprep.subr.bf16.mxu0 0
        %679 = vmatpush1.bf16.msra.mxu0 0
        %680 = vmatprep.subr.bf16.mxu0 0
        %681 = vmatpush1.bf16.msra.mxu0 0
        %682 = vmatprep.subr.bf16.mxu0 0
        %683 = vmatpush1.bf16.msra.mxu0 0
        %684 = vmatprep.subr.bf16.mxu0 0
        %685 = vmatpush1.bf16.msra.mxu0 0
        %686 = vmatprep.subr.bf16.mxu0 0
        %687 = vmatpush1.bf16.msra.mxu0 0
        %688 = vmatprep.subr.bf16.mxu0 0
        %689 = vmatpush1.bf16.msra.mxu0 0
        %690 = vmatprep.subr.bf16.mxu0 0
        %691 = vmatpush1.bf16.msra.mxu0 0
        %692 = vmatprep.subr.bf16.mxu0 0
        %693 = vmatpush1.bf16.msra.mxu0 0
        %694 = vmatprep.subr.bf16.mxu0 0
        %695 = vmatpush1.bf16.msra.mxu0 0
        %696 = vmatprep.mubr.bf16.mxu0 0
        %697 = vmatmul.mubr.bf16.gmra.mrb[0].mxu0 %v662
        %v698 = vpop.f32.mrb[0].mxu0
        %v699 = vadd.f32 %v647, %v698
        %v700 = vpop.f32.mrb[0].mxu0
        %v701 = vpop.f32.mrb[0].mxu0
        %v702 = vpop.f32.mrb[0].mxu0
        %703 = vdwg.mxu0
        %705 = vrot.lane.b32.xlu0 %v637, 120
        %v706 = vpop.permute.xlu0 %705
        %708 = vrot.lane.b32.xlu0 %v637, 112
        %v709 = vpop.permute.xlu0 %708
        %711 = vrot.lane.b32.xlu0 %v637, 104
        %v712 = vpop.permute.xlu0 %711
        %v714 = vcombine.low %v637, %v709
        %v715 = vcombine.high %v637, %v709
        %v717 = vunpack.c.l.s4 1983009808
        %v718 = vunpack.c.0.s8 %v717
        %v719 = vlaneseq
        %v720 = vshrl.u32 %v719, 7
        %v721 = vsub.s32 %v718, %v720
        %v722 = vrot.slane %v714, %v721
        %v724 = vunpack.c.l.s4 1983009808
        %v725 = vunpack.c.0.s8 %v724
        %v726 = vlaneseq
        %v727 = vshrl.u32 %v726, 7
        %v728 = vsub.s32 %v725, %v727
        %v729 = vrot.slane %v715, %v728
        %v730 = vcombine.low %v706, %v712
        %v731 = vcombine.high %v706, %v712
        %v733 = vunpack.c.l.s4 1983009808
        %v734 = vunpack.c.0.s8 %v733
        %v735 = vlaneseq
        %v736 = vshrl.u32 %v735, 7
        %v737 = vsub.s32 %v734, %v736
        %v738 = vrot.slane %v730, %v737
        %v740 = vunpack.c.l.s4 1983009808
        %v741 = vunpack.c.0.s8 %v740
        %v742 = vlaneseq
        %v743 = vshrl.u32 %v742, 7
        %v744 = vsub.s32 %v741, %v743
        %v745 = vrot.slane %v731, %v744
        %v746 = vcombine.low %v722, %v738
        %v747 = vcombine.high %v722, %v738
        %v749 = vunpack.c.l.s4 1934713408
        %v750 = vunpack.c.0.s8 %v749
        %v751 = vlaneseq
        %v752 = vshrl.u32 %v751, 7
        %v753 = vsub.s32 %v750, %v752
        %v754 = vrot.slane %v746, %v753
        %v756 = vunpack.c.l.s4 1934713408
        %v757 = vunpack.c.0.s8 %v756
        %v758 = vlaneseq
        %v759 = vshrl.u32 %v758, 7
        %v760 = vsub.s32 %v757, %v759
        %v761 = vrot.slane %v747, %v760
        %v762 = vcombine.low %v729, %v745
        %v763 = vcombine.high %v729, %v745
        %v765 = vunpack.c.l.s4 1934713408
        %v766 = vunpack.c.0.s8 %v765
        %v767 = vlaneseq
        %v768 = vshrl.u32 %v767, 7
        %v769 = vsub.s32 %v766, %v768
        %v770 = vrot.slane %v762, %v769
        %v772 = vunpack.c.l.s4 1934713408
        %v773 = vunpack.c.0.s8 %v772
        %v774 = vlaneseq
        %v775 = vshrl.u32 %v774, 7
        %v776 = vsub.s32 %v773, %v775
        %v777 = vrot.slane %v763, %v776
        %v778 = vcombine.high %v754, 0.0
        %v779 = vcombine.high %v761, 0.0
        %v780 = vcombine.high %v770, 0.0
        %v781 = vcombine.high %v777, 0.0
        %v782 = vcombine.low %v754, %v761
        %v784 = vunpack.c.l.s4 1983009808
        %v785 = vunpack.c.0.s8 %v784
        %v786 = vlaneseq
        %v787 = vshrl.u32 %v786, 7
        %v788 = vsub.s32 %v785, %v787
        %v789 = vrot.slane %v782, %v788
        %v790 = vcombine.low %v778, %v779
        %v792 = vunpack.c.l.s4 1983009808
        %v793 = vunpack.c.0.s8 %v792
        %v794 = vlaneseq
        %v795 = vshrl.u32 %v794, 7
        %v796 = vsub.s32 %v793, %v795
        %v797 = vrot.slane %v790, %v796
        %v798 = vcombine.low %v770, %v777
        %v800 = vunpack.c.l.s4 1983009808
        %v801 = vunpack.c.0.s8 %v800
        %v802 = vlaneseq
        %v803 = vshrl.u32 %v802, 7
        %v804 = vsub.s32 %v801, %v803
        %v805 = vrot.slane %v798, %v804
        %v806 = vcombine.low %v780, %v781
        %v808 = vunpack.c.l.s4 1983009808
        %v809 = vunpack.c.0.s8 %v808
        %v810 = vlaneseq
        %v811 = vshrl.u32 %v810, 7
        %v812 = vsub.s32 %v809, %v811
        %v813 = vrot.slane %v806, %v812
        %v814 = vcombine.low %v789, %v797
        %v815 = vcombine.high %v789, %v797
        %v817 = vunpack.c.l.s4 1934713408
        %v818 = vunpack.c.0.s8 %v817
        %v819 = vlaneseq
        %v820 = vshrl.u32 %v819, 7
        %v821 = vsub.s32 %v818, %v820
        %v822 = vrot.slane %v814, %v821
        %v824 = vunpack.c.l.s4 1934713408
        %v825 = vunpack.c.0.s8 %v824
        %v826 = vlaneseq
        %v827 = vshrl.u32 %v826, 7
        %v828 = vsub.s32 %v825, %v827
        %v829 = vrot.slane %v815, %v828
        %v830 = vcombine.low %v805, %v813
        %v831 = vcombine.high %v805, %v813
        %v833 = vunpack.c.l.s4 1934713408
        %v834 = vunpack.c.0.s8 %v833
        %v835 = vlaneseq
        %v836 = vshrl.u32 %v835, 7
        %v837 = vsub.s32 %v834, %v836
        %v838 = vrot.slane %v830, %v837
        %v840 = vunpack.c.l.s4 1934713408
        %v841 = vunpack.c.0.s8 %v840
        %v842 = vlaneseq
        %v843 = vshrl.u32 %v842, 7
        %v844 = vsub.s32 %v841, %v843
        %v845 = vrot.slane %v831, %v844
        %v846 = vcombine.low %v822, %v838
        %v847 = vcombine.high %v822, %v838
        %v848 = vcombine.low %v829, %v845
        %v849 = vcombine.high %v829, %v845
        %v850 = vpack.c.bf16 %v846, %v846
        %v851 = vpack.c.bf16 %v847, %v847
        %v852 = vpack.c.bf16 %v848, %v848
        %v853 = vpack.c.bf16 %v849, %v849
        %855 = vrot.lane.b32.xlu0 %v699, 120
        %v856 = vpop.permute.xlu0 %855
        %858 = vrot.lane.b32.xlu0 %v699, 112
        %v859 = vpop.permute.xlu0 %858
        %861 = vrot.lane.b32.xlu0 %v699, 104
        %v862 = vpop.permute.xlu0 %861
        %v864 = vcombine.low %v699, %v859
        %v865 = vcombine.high %v699, %v859
        %v867 = vunpack.c.l.s4 1983009808
        %v868 = vunpack.c.0.s8 %v867
        %v869 = vlaneseq
        %v870 = vshrl.u32 %v869, 7
        %v871 = vsub.s32 %v868, %v870
        %v872 = vrot.slane %v864, %v871
        %v874 = vunpack.c.l.s4 1983009808
        %v875 = vunpack.c.0.s8 %v874
        %v876 = vlaneseq
        %v877 = vshrl.u32 %v876, 7
        %v878 = vsub.s32 %v875, %v877
        %v879 = vrot.slane %v865, %v878
        %v880 = vcombine.low %v856, %v862
        %v881 = vcombine.high %v856, %v862
        %v883 = vunpack.c.l.s4 1983009808
        %v884 = vunpack.c.0.s8 %v883
        %v885 = vlaneseq
        %v886 = vshrl.u32 %v885, 7
        %v887 = vsub.s32 %v884, %v886
        %v888 = vrot.slane %v880, %v887
        %v890 = vunpack.c.l.s4 1983009808
        %v891 = vunpack.c.0.s8 %v890
        %v892 = vlaneseq
        %v893 = vshrl.u32 %v892, 7
        %v894 = vsub.s32 %v891, %v893
        %v895 = vrot.slane %v881, %v894
        %v896 = vcombine.low %v872, %v888
        %v897 = vcombine.high %v872, %v888
        %v899 = vunpack.c.l.s4 1934713408
        %v900 = vunpack.c.0.s8 %v899
        %v901 = vlaneseq
        %v902 = vshrl.u32 %v901, 7
        %v903 = vsub.s32 %v900, %v902
        %v904 = vrot.slane %v896, %v903
        %v906 = vunpack.c.l.s4 1934713408
        %v907 = vunpack.c.0.s8 %v906
        %v908 = vlaneseq
        %v909 = vshrl.u32 %v908, 7
        %v910 = vsub.s32 %v907, %v909
        %v911 = vrot.slane %v897, %v910
        %v912 = vcombine.low %v879, %v895
        %v913 = vcombine.high %v879, %v895
        %v915 = vunpack.c.l.s4 1934713408
        %v916 = vunpack.c.0.s8 %v915
        %v917 = vlaneseq
        %v918 = vshrl.u32 %v917, 7
        %v919 = vsub.s32 %v916, %v918
        %v920 = vrot.slane %v912, %v919
        %v922 = vunpack.c.l.s4 1934713408
        %v923 = vunpack.c.0.s8 %v922
        %v924 = vlaneseq
        %v925 = vshrl.u32 %v924, 7
        %v926 = vsub.s32 %v923, %v925
        %v927 = vrot.slane %v913, %v926
        %v928 = vcombine.high %v904, 0.0
        %v929 = vcombine.high %v911, 0.0
        %v930 = vcombine.high %v920, 0.0
        %v931 = vcombine.high %v927, 0.0
        %v932 = vcombine.low %v904, %v911
        %v934 = vunpack.c.l.s4 1983009808
        %v935 = vunpack.c.0.s8 %v934
        %v936 = vlaneseq
        %v937 = vshrl.u32 %v936, 7
        %v938 = vsub.s32 %v935, %v937
        %v939 = vrot.slane %v932, %v938
        %v940 = vcombine.low %v928, %v929
        %v942 = vunpack.c.l.s4 1983009808
        %v943 = vunpack.c.0.s8 %v942
        %v944 = vlaneseq
        %v945 = vshrl.u32 %v944, 7
        %v946 = vsub.s32 %v943, %v945
        %v947 = vrot.slane %v940, %v946
        %v948 = vcombine.low %v920, %v927
        %v950 = vunpack.c.l.s4 1983009808
        %v951 = vunpack.c.0.s8 %v950
        %v952 = vlaneseq
        %v953 = vshrl.u32 %v952, 7
        %v954 = vsub.s32 %v951, %v953
        %v955 = vrot.slane %v948, %v954
        %v956 = vcombine.low %v930, %v931
        %v958 = vunpack.c.l.s4 1983009808
        %v959 = vunpack.c.0.s8 %v958
        %v960 = vlaneseq
        %v961 = vshrl.u32 %v960, 7
        %v962 = vsub.s32 %v959, %v961
        %v963 = vrot.slane %v956, %v962
        %v964 = vcombine.low %v939, %v947
        %v965 = vcombine.high %v939, %v947
        %v967 = vunpack.c.l.s4 1934713408
        %v968 = vunpack.c.0.s8 %v967
        %v969 = vlaneseq
        %v970 = vshrl.u32 %v969, 7
        %v971 = vsub.s32 %v968, %v970
        %v972 = vrot.slane %v964, %v971
        %v974 = vunpack.c.l.s4 1934713408
        %v975 = vunpack.c.0.s8 %v974
        %v976 = vlaneseq
        %v977 = vshrl.u32 %v976, 7
        %v978 = vsub.s32 %v975, %v977
        %v979 = vrot.slane %v965, %v978
        %v980 = vcombine.low %v955, %v963
        %v981 = vcombine.high %v955, %v963
        %v983 = vunpack.c.l.s4 1934713408
        %v984 = vunpack.c.0.s8 %v983
        %v985 = vlaneseq
        %v986 = vshrl.u32 %v985, 7
        %v987 = vsub.s32 %v984, %v986
        %v988 = vrot.slane %v980, %v987
        %v990 = vunpack.c.l.s4 1934713408
        %v991 = vunpack.c.0.s8 %v990
        %v992 = vlaneseq
        %v993 = vshrl.u32 %v992, 7
        %v994 = vsub.s32 %v991, %v993
        %v995 = vrot.slane %v981, %v994
        %v996 = vcombine.low %v972, %v988
        %v997 = vcombine.high %v972, %v988
        %v998 = vcombine.low %v979, %v995
        %v999 = vcombine.high %v979, %v995
        %v1000 = vpack.c.bf16 %v996, %v996
        %v1001 = vpack.c.bf16 %v997, %v997
        %v1002 = vpack.c.bf16 %v998, %v998
        %v1003 = vpack.c.bf16 %v999, %v999
        %1004 = vrot.lane.b32.xlu0 %v699, 96
        %v1005 = vpop.permute.xlu0 %1004
        %1006 = vrot.lane.b32.xlu0 %v856, 96
        %v1007 = vpop.permute.xlu0 %1006
        %1008 = vrot.lane.b32.xlu0 %v859, 96
        %v1009 = vpop.permute.xlu0 %1008
        %1010 = vrot.lane.b32.xlu0 %v862, 96
        %v1011 = vpop.permute.xlu0 %1010
        %v1016 = vcombine.low %v1005, %v1009
        %v1017 = vcombine.high %v1005, %v1009
        %v1019 = vunpack.c.l.s4 1983009808
        %v1020 = vunpack.c.0.s8 %v1019
        %v1021 = vlaneseq
        %v1022 = vshrl.u32 %v1021, 7
        %v1023 = vsub.s32 %v1020, %v1022
        %v1024 = vrot.slane %v1016, %v1023
        %v1026 = vunpack.c.l.s4 1983009808
        %v1027 = vunpack.c.0.s8 %v1026
        %v1028 = vlaneseq
        %v1029 = vshrl.u32 %v1028, 7
        %v1030 = vsub.s32 %v1027, %v1029
        %v1031 = vrot.slane %v1017, %v1030
        %v1032 = vcombine.low %v1007, %v1011
        %v1033 = vcombine.high %v1007, %v1011
        %v1035 = vunpack.c.l.s4 1983009808
        %v1036 = vunpack.c.0.s8 %v1035
        %v1037 = vlaneseq
        %v1038 = vshrl.u32 %v1037, 7
        %v1039 = vsub.s32 %v1036, %v1038
        %v1040 = vrot.slane %v1032, %v1039
        %v1042 = vunpack.c.l.s4 1983009808
        %v1043 = vunpack.c.0.s8 %v1042
        %v1044 = vlaneseq
        %v1045 = vshrl.u32 %v1044, 7
        %v1046 = vsub.s32 %v1043, %v1045
        %v1047 = vrot.slane %v1033, %v1046
        %v1048 = vcombine.low %v1024, %v1040
        %v1049 = vcombine.high %v1024, %v1040
        %v1051 = vunpack.c.l.s4 1934713408
        %v1052 = vunpack.c.0.s8 %v1051
        %v1053 = vlaneseq
        %v1054 = vshrl.u32 %v1053, 7
        %v1055 = vsub.s32 %v1052, %v1054
        %v1056 = vrot.slane %v1048, %v1055
        %v1058 = vunpack.c.l.s4 1934713408
        %v1059 = vunpack.c.0.s8 %v1058
        %v1060 = vlaneseq
        %v1061 = vshrl.u32 %v1060, 7
        %v1062 = vsub.s32 %v1059, %v1061
        %v1063 = vrot.slane %v1049, %v1062
        %v1064 = vcombine.low %v1031, %v1047
        %v1065 = vcombine.high %v1031, %v1047
        %v1067 = vunpack.c.l.s4 1934713408
        %v1068 = vunpack.c.0.s8 %v1067
        %v1069 = vlaneseq
        %v1070 = vshrl.u32 %v1069, 7
        %v1071 = vsub.s32 %v1068, %v1070
        %v1072 = vrot.slane %v1064, %v1071
        %v1074 = vunpack.c.l.s4 1934713408
        %v1075 = vunpack.c.0.s8 %v1074
        %v1076 = vlaneseq
        %v1077 = vshrl.u32 %v1076, 7
        %v1078 = vsub.s32 %v1075, %v1077
        %v1079 = vrot.slane %v1065, %v1078
        %v1080 = vcombine.high %v1056, 0.0
        %v1081 = vcombine.high %v1063, 0.0
        %v1082 = vcombine.high %v1072, 0.0
        %v1083 = vcombine.high %v1079, 0.0
        %v1084 = vcombine.low %v1056, %v1063
        %v1086 = vunpack.c.l.s4 1983009808
        %v1087 = vunpack.c.0.s8 %v1086
        %v1088 = vlaneseq
        %v1089 = vshrl.u32 %v1088, 7
        %v1090 = vsub.s32 %v1087, %v1089
        %v1091 = vrot.slane %v1084, %v1090
        %v1092 = vcombine.low %v1080, %v1081
        %v1094 = vunpack.c.l.s4 1983009808
        %v1095 = vunpack.c.0.s8 %v1094
        %v1096 = vlaneseq
        %v1097 = vshrl.u32 %v1096, 7
        %v1098 = vsub.s32 %v1095, %v1097
        %v1099 = vrot.slane %v1092, %v1098
        %v1100 = vcombine.low %v1072, %v1079
        %v1102 = vunpack.c.l.s4 1983009808
        %v1103 = vunpack.c.0.s8 %v1102
        %v1104 = vlaneseq
        %v1105 = vshrl.u32 %v1104, 7
        %v1106 = vsub.s32 %v1103, %v1105
        %v1107 = vrot.slane %v1100, %v1106
        %v1108 = vcombine.low %v1082, %v1083
        %v1110 = vunpack.c.l.s4 1983009808
        %v1111 = vunpack.c.0.s8 %v1110
        %v1112 = vlaneseq
        %v1113 = vshrl.u32 %v1112, 7
        %v1114 = vsub.s32 %v1111, %v1113
        %v1115 = vrot.slane %v1108, %v1114
        %v1116 = vcombine.low %v1091, %v1099
        %v1117 = vcombine.high %v1091, %v1099
        %v1119 = vunpack.c.l.s4 1934713408
        %v1120 = vunpack.c.0.s8 %v1119
        %v1121 = vlaneseq
        %v1122 = vshrl.u32 %v1121, 7
        %v1123 = vsub.s32 %v1120, %v1122
        %v1124 = vrot.slane %v1116, %v1123
        %v1126 = vunpack.c.l.s4 1934713408
        %v1127 = vunpack.c.0.s8 %v1126
        %v1128 = vlaneseq
        %v1129 = vshrl.u32 %v1128, 7
        %v1130 = vsub.s32 %v1127, %v1129
        %v1131 = vrot.slane %v1117, %v1130
        %v1132 = vcombine.low %v1107, %v1115
        %v1133 = vcombine.high %v1107, %v1115
        %v1135 = vunpack.c.l.s4 1934713408
        %v1136 = vunpack.c.0.s8 %v1135
        %v1137 = vlaneseq
        %v1138 = vshrl.u32 %v1137, 7
        %v1139 = vsub.s32 %v1136, %v1138
        %v1140 = vrot.slane %v1132, %v1139
        %v1142 = vunpack.c.l.s4 1934713408
        %v1143 = vunpack.c.0.s8 %v1142
        %v1144 = vlaneseq
        %v1145 = vshrl.u32 %v1144, 7
        %v1146 = vsub.s32 %v1143, %v1145
        %v1147 = vrot.slane %v1133, %v1146
        %v1148 = vcombine.low %v1124, %v1140
        %v1149 = vcombine.high %v1124, %v1140
        %v1150 = vcombine.low %v1131, %v1147
        %v1151 = vcombine.high %v1131, %v1147
        %v1152 = vpack.c.bf16 %v1148, %v1148
        %v1153 = vpack.c.bf16 %v1149, %v1149
        %v1154 = vpack.c.bf16 %v1150, %v1150
        %v1155 = vpack.c.bf16 %v1151, %v1151
        %vm1156 = vcmask 64512
        %v1158 = vsel %vm1156, %v850, 0
        %v1161 = vsel %vm1156, %v1000, 0
        %1163 = vmatprep.subr.bf16.mxu0 0
        %1164 = vmatpush1.bf16.xpose.msra.mxu0 %v1161
        %1165 = vmatprep.subr.bf16.mxu0 0
        %1166 = vmatpush1.bf16.xpose.msra.mxu0 0
        %1167 = vmatprep.subr.bf16.mxu0 0
        %1168 = vmatpush1.bf16.xpose.msra.mxu0 0
        %1169 = vmatprep.subr.bf16.mxu0 0
        %1170 = vmatpush1.bf16.xpose.msra.mxu0 0
        %1171 = vmatprep.subr.bf16.mxu0 0
        %1172 = vmatpush1.bf16.xpose.msra.mxu0 0
        %1173 = vmatprep.subr.bf16.mxu0 0
        %1174 = vmatpush1.bf16.xpose.msra.mxu0 0
        %1175 = vmatprep.subr.bf16.mxu0 0
        %1176 = vmatpush1.bf16.xpose.msra.mxu0 0
        %1177 = vmatprep.subr.bf16.mxu0 0
        %1178 = vmatpush1.bf16.xpose.msra.mxu0 0
        %1179 = vmatprep.subr.bf16.mxu0 0
        %1180 = vmatpush1.bf16.xpose.msra.mxu0 0
        %1181 = vmatprep.subr.bf16.mxu0 0
        %1182 = vmatpush1.bf16.xpose.msra.mxu0 0
        %1183 = vmatprep.subr.bf16.mxu0 0
        %1184 = vmatpush1.bf16.xpose.msra.mxu0 0
        %1185 = vmatprep.subr.bf16.mxu0 0
        %1186 = vmatpush1.bf16.xpose.msra.mxu0 0
        %1187 = vmatprep.subr.bf16.mxu0 0
        %1188 = vmatpush1.bf16.xpose.msra.mxu0 0
        %1189 = vmatprep.subr.bf16.mxu0 0
        %1190 = vmatpush1.bf16.xpose.msra.mxu0 0
        %1191 = vmatprep.subr.bf16.mxu0 0
        %1192 = vmatpush1.bf16.xpose.msra.mxu0 0
        %1193 = vmatprep.subr.bf16.mxu0 0
        %1194 = vmatpush1.bf16.xpose.msra.mxu0 0
        %1195 = vmatprep.mubr.bf16.mxu0 0
        %1196 = vmatmul.mubr.bf16.gmra.mrb[0].mxu0 %v1158
        %v1197 = vpop.f32.mrb[0].mxu0
        %v1198 = vadd.f32 0.0, %v1197
        %v1199 = vpop.f32.mrb[0].mxu0
        %v1200 = vpop.f32.mrb[0].mxu0
        %v1201 = vpop.f32.mrb[0].mxu0
        %1202 = vdwg.mxu0
        %v1204 = vsel %vm1156, %v851, 0
        %v1207 = vsel %vm1156, %v1001, 0
        %1209 = vmatprep.subr.bf16.mxu0 0
        %1210 = vmatpush1.bf16.xpose.msra.mxu0 %v1207
        %1211 = vmatprep.subr.bf16.mxu0 0
        %1212 = vmatpush1.bf16.xpose.msra.mxu0 0
        %1213 = vmatprep.subr.bf16.mxu0 0
        %1214 = vmatpush1.bf16.xpose.msra.mxu0 0
        %1215 = vmatprep.subr.bf16.mxu0 0
        %1216 = vmatpush1.bf16.xpose.msra.mxu0 0
        %1217 = vmatprep.subr.bf16.mxu0 0
        %1218 = vmatpush1.bf16.xpose.msra.mxu0 0
        %1219 = vmatprep.subr.bf16.mxu0 0
        %1220 = vmatpush1.bf16.xpose.msra.mxu0 0
        %1221 = vmatprep.subr.bf16.mxu0 0
        %1222 = vmatpush1.bf16.xpose.msra.mxu0 0
        %1223 = vmatprep.subr.bf16.mxu0 0
        %1224 = vmatpush1.bf16.xpose.msra.mxu0 0
        %1225 = vmatprep.subr.bf16.mxu0 0
        %1226 = vmatpush1.bf16.xpose.msra.mxu0 0
        %1227 = vmatprep.subr.bf16.mxu0 0
        %1228 = vmatpush1.bf16.xpose.msra.mxu0 0
        %1229 = vmatprep.subr.bf16.mxu0 0
        %1230 = vmatpush1.bf16.xpose.msra.mxu0 0
        %1231 = vmatprep.subr.bf16.mxu0 0
        %1232 = vmatpush1.bf16.xpose.msra.mxu0 0
        %1233 = vmatprep.subr.bf16.mxu0 0
        %1234 = vmatpush1.bf16.xpose.msra.mxu0 0
        %1235 = vmatprep.subr.bf16.mxu0 0
        %1236 = vmatpush1.bf16.xpose.msra.mxu0 0
        %1237 = vmatprep.subr.bf16.mxu0 0
        %1238 = vmatpush1.bf16.xpose.msra.mxu0 0
        %1239 = vmatprep.subr.bf16.mxu0 0
        %1240 = vmatpush1.bf16.xpose.msra.mxu0 0
        %1241 = vmatprep.mubr.bf16.mxu0 0
        %1242 = vmatmul.mubr.bf16.gmra.mrb[0].mxu0 %v1204
        %v1243 = vpop.f32.mrb[0].mxu0
        %v1244 = vadd.f32 0.0, %v1243
        %v1245 = vpop.f32.mrb[0].mxu0
        %v1246 = vpop.f32.mrb[0].mxu0
        %v1247 = vpop.f32.mrb[0].mxu0
        %1248 = vdwg.mxu0
        %v1250 = vsel %vm1156, %v852, 0
        %v1253 = vsel %vm1156, %v1002, 0
        %1255 = vmatprep.subr.bf16.mxu0 0
        %1256 = vmatpush1.bf16.xpose.msra.mxu0 %v1253
        %1257 = vmatprep.subr.bf16.mxu0 0
        %1258 = vmatpush1.bf16.xpose.msra.mxu0 0
        %1259 = vmatprep.subr.bf16.mxu0 0
        %1260 = vmatpush1.bf16.xpose.msra.mxu0 0
        %1261 = vmatprep.subr.bf16.mxu0 0
        %1262 = vmatpush1.bf16.xpose.msra.mxu0 0
        %1263 = vmatprep.subr.bf16.mxu0 0
        %1264 = vmatpush1.bf16.xpose.msra.mxu0 0
        %1265 = vmatprep.subr.bf16.mxu0 0
        %1266 = vmatpush1.bf16.xpose.msra.mxu0 0
        %1267 = vmatprep.subr.bf16.mxu0 0
        %1268 = vmatpush1.bf16.xpose.msra.mxu0 0
        %1269 = vmatprep.subr.bf16.mxu0 0
        %1270 = vmatpush1.bf16.xpose.msra.mxu0 0
        %1271 = vmatprep.subr.bf16.mxu0 0
        %1272 = vmatpush1.bf16.xpose.msra.mxu0 0
        %1273 = vmatprep.subr.bf16.mxu0 0
        %1274 = vmatpush1.bf16.xpose.msra.mxu0 0
        %1275 = vmatprep.subr.bf16.mxu0 0
        %1276 = vmatpush1.bf16.xpose.msra.mxu0 0
        %1277 = vmatprep.subr.bf16.mxu0 0
        %1278 = vmatpush1.bf16.xpose.msra.mxu0 0
        %1279 = vmatprep.subr.bf16.mxu0 0
        %1280 = vmatpush1.bf16.xpose.msra.mxu0 0
        %1281 = vmatprep.subr.bf16.mxu0 0
        %1282 = vmatpush1.bf16.xpose.msra.mxu0 0
        %1283 = vmatprep.subr.bf16.mxu0 0
        %1284 = vmatpush1.bf16.xpose.msra.mxu0 0
        %1285 = vmatprep.subr.bf16.mxu0 0
        %1286 = vmatpush1.bf16.xpose.msra.mxu0 0
        %1287 = vmatprep.mubr.bf16.mxu0 0
        %1288 = vmatmul.mubr.bf16.gmra.mrb[0].mxu0 %v1250
        %v1289 = vpop.f32.mrb[0].mxu0
        %v1290 = vadd.f32 0.0, %v1289
        %v1291 = vpop.f32.mrb[0].mxu0
        %v1292 = vpop.f32.mrb[0].mxu0
        %v1293 = vpop.f32.mrb[0].mxu0
        %1294 = vdwg.mxu0
        %v1296 = vsel %vm1156, %v853, 0
        %v1299 = vsel %vm1156, %v1003, 0
        %1301 = vmatprep.subr.bf16.mxu0 0
        %1302 = vmatpush1.bf16.xpose.msra.mxu0 %v1299
        %1303 = vmatprep.subr.bf16.mxu0 0
        %1304 = vmatpush1.bf16.xpose.msra.mxu0 0
        %1305 = vmatprep.subr.bf16.mxu0 0
        %1306 = vmatpush1.bf16.xpose.msra.mxu0 0
        %1307 = vmatprep.subr.bf16.mxu0 0
        %1308 = vmatpush1.bf16.xpose.msra.mxu0 0
        %1309 = vmatprep.subr.bf16.mxu0 0
        %1310 = vmatpush1.bf16.xpose.msra.mxu0 0
        %1311 = vmatprep.subr.bf16.mxu0 0
        %1312 = vmatpush1.bf16.xpose.msra.mxu0 0
        %1313 = vmatprep.subr.bf16.mxu0 0
        %1314 = vmatpush1.bf16.xpose.msra.mxu0 0
        %1315 = vmatprep.subr.bf16.mxu0 0
        %1316 = vmatpush1.bf16.xpose.msra.mxu0 0
        %1317 = vmatprep.subr.bf16.mxu0 0
        %1318 = vmatpush1.bf16.xpose.msra.mxu0 0
        %1319 = vmatprep.subr.bf16.mxu0 0
        %1320 = vmatpush1.bf16.xpose.msra.mxu0 0
        %1321 = vmatprep.subr.bf16.mxu0 0
        %1322 = vmatpush1.bf16.xpose.msra.mxu0 0
        %1323 = vmatprep.subr.bf16.mxu0 0
        %1324 = vmatpush1.bf16.xpose.msra.mxu0 0
        %1325 = vmatprep.subr.bf16.mxu0 0
        %1326 = vmatpush1.bf16.xpose.msra.mxu0 0
        %1327 = vmatprep.subr.bf16.mxu0 0
        %1328 = vmatpush1.bf16.xpose.msra.mxu0 0
        %1329 = vmatprep.subr.bf16.mxu0 0
        %1330 = vmatpush1.bf16.xpose.msra.mxu0 0
        %1331 = vmatprep.subr.bf16.mxu0 0
        %1332 = vmatpush1.bf16.xpose.msra.mxu0 0
        %1333 = vmatprep.mubr.bf16.mxu0 0
        %1334 = vmatmul.mubr.bf16.gmra.mrb[0].mxu0 %v1296
        %v1335 = vpop.f32.mrb[0].mxu0
        %v1336 = vadd.f32 0.0, %v1335
        %v1337 = vpop.f32.mrb[0].mxu0
        %v1338 = vpop.f32.mrb[0].mxu0
        %v1339 = vpop.f32.mrb[0].mxu0
        %1340 = vdwg.mxu0
        %v1341 = vsel %vm1156, %v1198, -inf
        %1342 = vmax.xlane.f32.xlu0 %v1341
        %v1343 = vpop.xlane.xlu0 %1342
        %v1344 = vsel %vm1156, %v1244, -inf
        %1345 = vmax.xlane.f32.xlu0 %v1344
        %v1346 = vpop.xlane.xlu0 %1345
        %v1347 = vsel %vm1156, %v1290, -inf
        %1348 = vmax.xlane.f32.xlu0 %v1347
        %v1349 = vpop.xlane.xlu0 %1348
        %v1350 = vsel %vm1156, %v1336, -inf
        %1351 = vmax.xlane.f32.xlu0 %v1350
        %v1352 = vpop.xlane.xlu0 %1351
        %v1353 = vsub.f32 %v1198, %v1343
        %v1354 = vsub.f32 %v1244, %v1346
        %v1355 = vsub.f32 %v1290, %v1349
        %v1356 = vsub.f32 %v1336, %v1352
        %v1357 = vmul.f32 %v1353, 1.442695
        %v1358 = vpow.pop %v1357
        %v1359 = vmul.f32 %v1354, 1.442695
        %v1360 = vpow.pop %v1359
        %v1361 = vmul.f32 %v1355, 1.442695
        %v1362 = vpow.pop %v1361
        %v1363 = vmul.f32 %v1356, 1.442695
        %v1364 = vpow.pop %v1363
        %v1365 = vsel %vm1156, %v1358, 0.0
        %1366 = vadd.xlane.f32.xlu0 %v1365
        %v1367 = vpop.xlane.xlu0 %1366
        %v1368 = vsel %vm1156, %v1360, 0.0
        %1369 = vadd.xlane.f32.xlu0 %v1368
        %v1370 = vpop.xlane.xlu0 %1369
        %v1371 = vsel %vm1156, %v1362, 0.0
        %1372 = vadd.xlane.f32.xlu0 %v1371
        %v1373 = vpop.xlane.xlu0 %1372
        %v1374 = vsel %vm1156, %v1364, 0.0
        %1375 = vadd.xlane.f32.xlu0 %v1374
        %v1376 = vpop.xlane.xlu0 %1375
        %v1377 = vrcp.pop %v1367
        %v1378 = vrcp.pop %v1370
        %v1379 = vrcp.pop %v1373
        %v1380 = vrcp.pop %v1376
        %v1381 = vmul.f32 %v1358, %v1377
        %v1382 = vmul.f32 %v1360, %v1378
        %v1383 = vmul.f32 %v1362, %v1379
        %v1384 = vmul.f32 %v1364, %v1380
        %v1385 = vpack.c.bf16 %v1381, %v1381
        %v1386 = vpack.c.bf16 %v1382, %v1382
        %v1387 = vpack.c.bf16 %v1383, %v1383
        %v1388 = vpack.c.bf16 %v1384, %v1384
        %v1390 = vsel %vm1156, %v1385, 0
        %vm1392 = vcmask 1043456
        %v1394 = vsel %vm1392, %v1152, 0
        %1396 = vmatprep.subr.bf16.mxu0 0
        %1397 = vmatpush1.bf16.msra.mxu0 %v1394
        %1398 = vmatprep.subr.bf16.mxu0 0
        %1399 = vmatpush1.bf16.msra.mxu0 0
        %1400 = vmatprep.subr.bf16.mxu0 0
        %1401 = vmatpush1.bf16.msra.mxu0 0
        %1402 = vmatprep.subr.bf16.mxu0 0
        %1403 = vmatpush1.bf16.msra.mxu0 0
        %1404 = vmatprep.subr.bf16.mxu0 0
        %1405 = vmatpush1.bf16.msra.mxu0 0
        %1406 = vmatprep.subr.bf16.mxu0 0
        %1407 = vmatpush1.bf16.msra.mxu0 0
        %1408 = vmatprep.subr.bf16.mxu0 0
        %1409 = vmatpush1.bf16.msra.mxu0 0
        %1410 = vmatprep.subr.bf16.mxu0 0
        %1411 = vmatpush1.bf16.msra.mxu0 0
        %1412 = vmatprep.subr.bf16.mxu0 0
        %1413 = vmatpush1.bf16.msra.mxu0 0
        %1414 = vmatprep.subr.bf16.mxu0 0
        %1415 = vmatpush1.bf16.msra.mxu0 0
        %1416 = vmatprep.subr.bf16.mxu0 0
        %1417 = vmatpush1.bf16.msra.mxu0 0
        %1418 = vmatprep.subr.bf16.mxu0 0
        %1419 = vmatpush1.bf16.msra.mxu0 0
        %1420 = vmatprep.subr.bf16.mxu0 0
        %1421 = vmatpush1.bf16.msra.mxu0 0
        %1422 = vmatprep.subr.bf16.mxu0 0
        %1423 = vmatpush1.bf16.msra.mxu0 0
        %1424 = vmatprep.subr.bf16.mxu0 0
        %1425 = vmatpush1.bf16.msra.mxu0 0
        %1426 = vmatprep.subr.bf16.mxu0 0
        %1427 = vmatpush1.bf16.msra.mxu0 0
        %1428 = vmatprep.mubr.bf16.mxu0 0
        %1429 = vmatmul.mubr.bf16.gmra.mrb[0].mxu0 %v1390
        %v1430 = vpop.f32.mrb[0].mxu0
        %v1431 = vadd.f32 0.0, %v1430
        %v1432 = vpop.f32.mrb[0].mxu0
        %v1433 = vpop.f32.mrb[0].mxu0
        %v1434 = vpop.f32.mrb[0].mxu0
        %1435 = vdwg.mxu0
        %v1437 = vsel %vm1156, %v1386, 0
        %v1440 = vsel %vm1392, %v1153, 0
        %1442 = vmatprep.subr.bf16.mxu0 0
        %1443 = vmatpush1.bf16.msra.mxu0 %v1440
        %1444 = vmatprep.subr.bf16.mxu0 0
        %1445 = vmatpush1.bf16.msra.mxu0 0
        %1446 = vmatprep.subr.bf16.mxu0 0
        %1447 = vmatpush1.bf16.msra.mxu0 0
        %1448 = vmatprep.subr.bf16.mxu0 0
        %1449 = vmatpush1.bf16.msra.mxu0 0
        %1450 = vmatprep.subr.bf16.mxu0 0
        %1451 = vmatpush1.bf16.msra.mxu0 0
        %1452 = vmatprep.subr.bf16.mxu0 0
        %1453 = vmatpush1.bf16.msra.mxu0 0
        %1454 = vmatprep.subr.bf16.mxu0 0
        %1455 = vmatpush1.bf16.msra.mxu0 0
        %1456 = vmatprep.subr.bf16.mxu0 0
        %1457 = vmatpush1.bf16.msra.mxu0 0
        %1458 = vmatprep.subr.bf16.mxu0 0
        %1459 = vmatpush1.bf16.msra.mxu0 0
        %1460 = vmatprep.subr.bf16.mxu0 0
        %1461 = vmatpush1.bf16.msra.mxu0 0
        %1462 = vmatprep.subr.bf16.mxu0 0
        %1463 = vmatpush1.bf16.msra.mxu0 0
        %1464 = vmatprep.subr.bf16.mxu0 0
        %1465 = vmatpush1.bf16.msra.mxu0 0
        %1466 = vmatprep.subr.bf16.mxu0 0
        %1467 = vmatpush1.bf16.msra.mxu0 0
        %1468 = vmatprep.subr.bf16.mxu0 0
        %1469 = vmatpush1.bf16.msra.mxu0 0
        %1470 = vmatprep.subr.bf16.mxu0 0
        %1471 = vmatpush1.bf16.msra.mxu0 0
        %1472 = vmatprep.subr.bf16.mxu0 0
        %1473 = vmatpush1.bf16.msra.mxu0 0
        %1474 = vmatprep.mubr.bf16.mxu0 0
        %1475 = vmatmul.mubr.bf16.gmra.mrb[0].mxu0 %v1437
        %v1476 = vpop.f32.mrb[0].mxu0
        %v1477 = vadd.f32 0.0, %v1476
        %v1478 = vpop.f32.mrb[0].mxu0
        %v1479 = vpop.f32.mrb[0].mxu0
        %v1480 = vpop.f32.mrb[0].mxu0
        %1481 = vdwg.mxu0
        %v1483 = vsel %vm1156, %v1387, 0
        %v1486 = vsel %vm1392, %v1154, 0
        %1488 = vmatprep.subr.bf16.mxu0 0
        %1489 = vmatpush1.bf16.msra.mxu0 %v1486
        %1490 = vmatprep.subr.bf16.mxu0 0
        %1491 = vmatpush1.bf16.msra.mxu0 0
        %1492 = vmatprep.subr.bf16.mxu0 0
        %1493 = vmatpush1.bf16.msra.mxu0 0
        %1494 = vmatprep.subr.bf16.mxu0 0
        %1495 = vmatpush1.bf16.msra.mxu0 0
        %1496 = vmatprep.subr.bf16.mxu0 0
        %1497 = vmatpush1.bf16.msra.mxu0 0
        %1498 = vmatprep.subr.bf16.mxu0 0
        %1499 = vmatpush1.bf16.msra.mxu0 0
        %1500 = vmatprep.subr.bf16.mxu0 0
        %1501 = vmatpush1.bf16.msra.mxu0 0
        %1502 = vmatprep.subr.bf16.mxu0 0
        %1503 = vmatpush1.bf16.msra.mxu0 0
        %1504 = vmatprep.subr.bf16.mxu0 0
        %1505 = vmatpush1.bf16.msra.mxu0 0
        %1506 = vmatprep.subr.bf16.mxu0 0
        %1507 = vmatpush1.bf16.msra.mxu0 0
        %1508 = vmatprep.subr.bf16.mxu0 0
        %1509 = vmatpush1.bf16.msra.mxu0 0
        %1510 = vmatprep.subr.bf16.mxu0 0
        %1511 = vmatpush1.bf16.msra.mxu0 0
        %1512 = vmatprep.subr.bf16.mxu0 0
        %1513 = vmatpush1.bf16.msra.mxu0 0
        %1514 = vmatprep.subr.bf16.mxu0 0
        %1515 = vmatpush1.bf16.msra.mxu0 0
        %1516 = vmatprep.subr.bf16.mxu0 0
        %1517 = vmatpush1.bf16.msra.mxu0 0
        %1518 = vmatprep.subr.bf16.mxu0 0
        %1519 = vmatpush1.bf16.msra.mxu0 0
        %1520 = vmatprep.mubr.bf16.mxu0 0
        %1521 = vmatmul.mubr.bf16.gmra.mrb[0].mxu0 %v1483
        %v1522 = vpop.f32.mrb[0].mxu0
        %v1523 = vadd.f32 0.0, %v1522
        %v1524 = vpop.f32.mrb[0].mxu0
        %v1525 = vpop.f32.mrb[0].mxu0
        %v1526 = vpop.f32.mrb[0].mxu0
        %1527 = vdwg.mxu0
        %v1529 = vsel %vm1156, %v1388, 0
        %v1532 = vsel %vm1392, %v1155, 0
        %1534 = vmatprep.subr.bf16.mxu0 0
        %1535 = vmatpush1.bf16.msra.mxu0 %v1532
        %1536 = vmatprep.subr.bf16.mxu0 0
        %1537 = vmatpush1.bf16.msra.mxu0 0
        %1538 = vmatprep.subr.bf16.mxu0 0
        %1539 = vmatpush1.bf16.msra.mxu0 0
        %1540 = vmatprep.subr.bf16.mxu0 0
        %1541 = vmatpush1.bf16.msra.mxu0 0
        %1542 = vmatprep.subr.bf16.mxu0 0
        %1543 = vmatpush1.bf16.msra.mxu0 0
        %1544 = vmatprep.subr.bf16.mxu0 0
        %1545 = vmatpush1.bf16.msra.mxu0 0
        %1546 = vmatprep.subr.bf16.mxu0 0
        %1547 = vmatpush1.bf16.msra.mxu0 0
        %1548 = vmatprep.subr.bf16.mxu0 0
        %1549 = vmatpush1.bf16.msra.mxu0 0
        %1550 = vmatprep.subr.bf16.mxu0 0
        %1551 = vmatpush1.bf16.msra.mxu0 0
        %1552 = vmatprep.subr.bf16.mxu0 0
        %1553 = vmatpush1.bf16.msra.mxu0 0
        %1554 = vmatprep.subr.bf16.mxu0 0
        %1555 = vmatpush1.bf16.msra.mxu0 0
        %1556 = vmatprep.subr.bf16.mxu0 0
        %1557 = vmatpush1.bf16.msra.mxu0 0
        %1558 = vmatprep.subr.bf16.mxu0 0
        %1559 = vmatpush1.bf16.msra.mxu0 0
        %1560 = vmatprep.subr.bf16.mxu0 0
        %1561 = vmatpush1.bf16.msra.mxu0 0
        %1562 = vmatprep.subr.bf16.mxu0 0
        %1563 = vmatpush1.bf16.msra.mxu0 0
        %1564 = vmatprep.subr.bf16.mxu0 0
        %1565 = vmatpush1.bf16.msra.mxu0 0
        %1566 = vmatprep.mubr.bf16.mxu0 0
        %1567 = vmatmul.mubr.bf16.gmra.mrb[0].mxu0 %v1529
        %v1568 = vpop.f32.mrb[0].mxu0
        %v1569 = vadd.f32 0.0, %v1568
        %v1570 = vpop.f32.mrb[0].mxu0
        %v1571 = vpop.f32.mrb[0].mxu0
        %v1572 = vpop.f32.mrb[0].mxu0
        %1573 = vdwg.mxu0
        %v1574 = vcombine.low %v1431, %v1523
        %v1575 = vcombine.high %v1431, %v1523
        %v1577 = vunpack.c.l.s4 1983009808
        %v1578 = vunpack.c.0.s8 %v1577
        %v1579 = vlaneseq
        %v1580 = vshrl.u32 %v1579, 7
        %v1581 = vsub.s32 %v1578, %v1580
        %v1582 = vrot.slane %v1574, %v1581
        %v1584 = vunpack.c.l.s4 1983009808
        %v1585 = vunpack.c.0.s8 %v1584
        %v1586 = vlaneseq
        %v1587 = vshrl.u32 %v1586, 7
        %v1588 = vsub.s32 %v1585, %v1587
        %v1589 = vrot.slane %v1575, %v1588
        %v1590 = vcombine.low %v1477, %v1569
        %v1591 = vcombine.high %v1477, %v1569
        %v1593 = vunpack.c.l.s4 1983009808
        %v1594 = vunpack.c.0.s8 %v1593
        %v1595 = vlaneseq
        %v1596 = vshrl.u32 %v1595, 7
        %v1597 = vsub.s32 %v1594, %v1596
        %v1598 = vrot.slane %v1590, %v1597
        %v1600 = vunpack.c.l.s4 1983009808
        %v1601 = vunpack.c.0.s8 %v1600
        %v1602 = vlaneseq
        %v1603 = vshrl.u32 %v1602, 7
        %v1604 = vsub.s32 %v1601, %v1603
        %v1605 = vrot.slane %v1591, %v1604
        %v1606 = vcombine.low %v1582, %v1598
        %v1607 = vcombine.high %v1582, %v1598
        %v1609 = vunpack.c.l.s4 1934713408
        %v1610 = vunpack.c.0.s8 %v1609
        %v1611 = vlaneseq
        %v1612 = vshrl.u32 %v1611, 7
        %v1613 = vsub.s32 %v1610, %v1612
        %v1614 = vrot.slane %v1606, %v1613
        %v1616 = vunpack.c.l.s4 1934713408
        %v1617 = vunpack.c.0.s8 %v1616
        %v1618 = vlaneseq
        %v1619 = vshrl.u32 %v1618, 7
        %v1620 = vsub.s32 %v1617, %v1619
        %v1621 = vrot.slane %v1607, %v1620
        %v1622 = vcombine.low %v1589, %v1605
        %v1623 = vcombine.high %v1589, %v1605
        %v1625 = vunpack.c.l.s4 1934713408
        %v1626 = vunpack.c.0.s8 %v1625
        %v1627 = vlaneseq
        %v1628 = vshrl.u32 %v1627, 7
        %v1629 = vsub.s32 %v1626, %v1628
        %v1630 = vrot.slane %v1622, %v1629
        %v1632 = vunpack.c.l.s4 1934713408
        %v1633 = vunpack.c.0.s8 %v1632
        %v1634 = vlaneseq
        %v1635 = vshrl.u32 %v1634, 7
        %v1636 = vsub.s32 %v1633, %v1635
        %v1637 = vrot.slane %v1623, %v1636
        %v1638 = vcombine.high %v1614, 0.0
        %v1639 = vcombine.high %v1621, 0.0
        %v1640 = vcombine.high %v1630, 0.0
        %v1641 = vcombine.high %v1637, 0.0
        %v1642 = vcombine.low %v1614, %v1621
        %v1644 = vunpack.c.l.s4 1983009808
        %v1645 = vunpack.c.0.s8 %v1644
        %v1646 = vlaneseq
        %v1647 = vshrl.u32 %v1646, 7
        %v1648 = vsub.s32 %v1645, %v1647
        %v1649 = vrot.slane %v1642, %v1648
        %v1650 = vcombine.low %v1638, %v1639
        %v1652 = vunpack.c.l.s4 1983009808
        %v1653 = vunpack.c.0.s8 %v1652
        %v1654 = vlaneseq
        %v1655 = vshrl.u32 %v1654, 7
        %v1656 = vsub.s32 %v1653, %v1655
        %v1657 = vrot.slane %v1650, %v1656
        %v1658 = vcombine.low %v1630, %v1637
        %v1660 = vunpack.c.l.s4 1983009808
        %v1661 = vunpack.c.0.s8 %v1660
        %v1662 = vlaneseq
        %v1663 = vshrl.u32 %v1662, 7
        %v1664 = vsub.s32 %v1661, %v1663
        %v1665 = vrot.slane %v1658, %v1664
        %v1666 = vcombine.low %v1640, %v1641
        %v1668 = vunpack.c.l.s4 1983009808
        %v1669 = vunpack.c.0.s8 %v1668
        %v1670 = vlaneseq
        %v1671 = vshrl.u32 %v1670, 7
        %v1672 = vsub.s32 %v1669, %v1671
        %v1673 = vrot.slane %v1666, %v1672
        %v1674 = vcombine.low %v1649, %v1657
        %v1675 = vcombine.high %v1649, %v1657
        %v1677 = vunpack.c.l.s4 1934713408
        %v1678 = vunpack.c.0.s8 %v1677
        %v1679 = vlaneseq
        %v1680 = vshrl.u32 %v1679, 7
        %v1681 = vsub.s32 %v1678, %v1680
        %v1682 = vrot.slane %v1674, %v1681
        %v1684 = vunpack.c.l.s4 1934713408
        %v1685 = vunpack.c.0.s8 %v1684
        %v1686 = vlaneseq
        %v1687 = vshrl.u32 %v1686, 7
        %v1688 = vsub.s32 %v1685, %v1687
        %v1689 = vrot.slane %v1675, %v1688
        %v1690 = vcombine.low %v1665, %v1673
        %v1691 = vcombine.high %v1665, %v1673
        %v1693 = vunpack.c.l.s4 1934713408
        %v1694 = vunpack.c.0.s8 %v1693
        %v1695 = vlaneseq
        %v1696 = vshrl.u32 %v1695, 7
        %v1697 = vsub.s32 %v1694, %v1696
        %v1698 = vrot.slane %v1690, %v1697
        %v1700 = vunpack.c.l.s4 1934713408
        %v1701 = vunpack.c.0.s8 %v1700
        %v1702 = vlaneseq
        %v1703 = vshrl.u32 %v1702, 7
        %v1704 = vsub.s32 %v1701, %v1703
        %v1705 = vrot.slane %v1691, %v1704
        %v1706 = vcombine.low %v1682, %v1698
        %v1707 = vcombine.high %v1682, %v1698
        %v1708 = vcombine.low %v1689, %v1705
        %v1709 = vcombine.high %v1689, %v1705
        %1711 = vrot.lane.b32.xlu0 %v1707, 8
        %v1712 = vpop.permute.xlu0 %1711
        %1715 = vrot.lane.b32.xlu0 %v1708, 16
        %v1716 = vpop.permute.xlu0 %1715
        %1719 = vrot.lane.b32.xlu0 %v1709, 24
        %v1720 = vpop.permute.xlu0 %1719
        %v1722 = vsel %vm1156, %v1706, %v1712
        %vm1723 = vcmask 130048
        %v1724 = vsel %vm1723, %v1722, %v1716
        %vm1725 = vcmask 195584
        %v1726 = vsel %vm1725, %v1724, %v1720
        %v1727 = vadd.f32 %v1726, %v506
        %v1728 = vsel %vm536, %v1727, 0.0
        %1729 = vadd.xlane.f32.xlu0 %v1728
        %v1730 = vpop.xlane.xlu0 %1729
        %v1731 = vmul.f32 %v1730, %v540
        %v1732 = vsub.f32 %v1727, %v1731
        %v1733 = vmul.f32 %v1732, %v1732
        %v1734 = vsel %vm536, %v1733, 0.0
        %1735 = vadd.xlane.f32.xlu0 %v1734
        %v1736 = vpop.xlane.xlu0 %1735
        %v1737 = vmul.f32 %v1736, %v540
        %v1738 = vadd.f32 %v1737, 1e-05
        %v1739 = vrsqrt.pop %v1738
        %v1740 = vmul.f32 %v1732, %v1739
        %v1742 = vlaneseq
        %v1743 = vshrl.u32 %v1742, 7
        %v1744 = vsub.s32 0, %v1743
        %v1745 = vrot.slane %v520, %v1744
        %v1747 = vmul.f32 %v1740, %v1745
        %v1749 = vlaneseq
        %v1750 = vshrl.u32 %v1749, 7
        %v1751 = vsub.s32 0, %v1750
        %v1752 = vrot.slane %v521, %v1751
        %v1754 = vadd.f32 %v1747, %v1752
        %v1755 = vpack.c.bf16 %v1754, %v1754
        %v1757 = vlaneseq
        %v1758 = vshrl.u32 %v1757, 7
        %v1759 = vsub.s32 0, %v1758
        %v1760 = vrot.slane %v526, %v1759
        %v1766 = vunpack.c.l.b16 %v522
        %v1767 = vunpack.c.l.b16 %v523
        %v1768 = vunpack.c.l.b16 %v524
        %v1769 = vunpack.c.l.b16 %v525
        %v1770 = vpack.c.b16 %v1767, %v1766
        %v1771 = vpack.c.b16 %v1769, %v1768
        %v1775 = vsel %vm536, %v1755, 0
        %1777 = vmatprep.subr.bf16.mxu0 0
        %1778 = vmatpush1.bf16.msra.mxu0 %v1770
        %1779 = vmatprep.subr.bf16.mxu0 0
        %1780 = vmatpush1.bf16.msra.mxu0 %v1771
        %1781 = vmatprep.subr.bf16.mxu0 0
        %1782 = vmatpush1.bf16.msra.mxu0 0
        %1783 = vmatprep.subr.bf16.mxu0 0
        %1784 = vmatpush1.bf16.msra.mxu0 0
        %1785 = vmatprep.subr.bf16.mxu0 0
        %1786 = vmatpush1.bf16.msra.mxu0 0
        %1787 = vmatprep.subr.bf16.mxu0 0
        %1788 = vmatpush1.bf16.msra.mxu0 0
        %1789 = vmatprep.subr.bf16.mxu0 0
        %1790 = vmatpush1.bf16.msra.mxu0 0
        %1791 = vmatprep.subr.bf16.mxu0 0
        %1792 = vmatpush1.bf16.msra.mxu0 0
        %1793 = vmatprep.subr.bf16.mxu0 0
        %1794 = vmatpush1.bf16.msra.mxu0 0
        %1795 = vmatprep.subr.bf16.mxu0 0
        %1796 = vmatpush1.bf16.msra.mxu0 0
        %1797 = vmatprep.subr.bf16.mxu0 0
        %1798 = vmatpush1.bf16.msra.mxu0 0
        %1799 = vmatprep.subr.bf16.mxu0 0
        %1800 = vmatpush1.bf16.msra.mxu0 0
        %1801 = vmatprep.subr.bf16.mxu0 0
        %1802 = vmatpush1.bf16.msra.mxu0 0
        %1803 = vmatprep.subr.bf16.mxu0 0
        %1804 = vmatpush1.bf16.msra.mxu0 0
        %1805 = vmatprep.subr.bf16.mxu0 0
        %1806 = vmatpush1.bf16.msra.mxu0 0
        %1807 = vmatprep.subr.bf16.mxu0 0
        %1808 = vmatpush1.bf16.msra.mxu0 0
        %1809 = vmatprep.mubr.bf16.mxu0 0
        %1810 = vmatmul.mubr.bf16.gmra.mrb[0].mxu0 %v1775
        %v1811 = vpop.f32.mrb[0].mxu0
        %v1812 = vadd.f32 %v1760, %v1811
        %v1813 = vpop.f32.mrb[0].mxu0
        %v1814 = vpop.f32.mrb[0].mxu0
        %v1815 = vpop.f32.mrb[0].mxu0
        %1816 = vdwg.mxu0
        %v1817 = vmul.f32 %v1812, 0.5
        %v1818 = vmul.f32 %v1812, 0.70710677
        %v1819 = verf.f32.pop %v1818
        %v1820 = vadd.f32 %v1819, 1.0
        %v1821 = vmul.f32 %v1817, %v1820
        %v1822 = vpack.c.bf16 %v1821, %v1821
        %v1824 = vlaneseq
        %v1825 = vshrl.u32 %v1824, 7
        %v1826 = vsub.s32 0, %v1825
        %v1827 = vrot.slane %v535, %v1826
        %v1837 = vunpack.c.l.b16 %v527
        %v1838 = vunpack.c.l.b16 %v528
        %v1839 = vunpack.c.l.b16 %v529
        %v1840 = vunpack.c.l.b16 %v530
        %v1841 = vunpack.c.l.b16 %v531
        %v1842 = vunpack.c.l.b16 %v532
        %v1843 = vunpack.c.l.b16 %v533
        %v1844 = vunpack.c.l.b16 %v534
        %v1845 = vpack.c.b16 %v1838, %v1837
        %v1846 = vpack.c.b16 %v1840, %v1839
        %v1847 = vpack.c.b16 %v1842, %v1841
        %v1848 = vpack.c.b16 %v1844, %v1843
        %vm1853 = vcmask 523264
        %v1855 = vsel %vm1853, %v1822, 0
        %1857 = vmatprep.subr.bf16.mxu0 0
        %1858 = vmatpush1.bf16.msra.mxu0 %v1845
        %1859 = vmatprep.subr.bf16.mxu0 0
        %1860 = vmatpush1.bf16.msra.mxu0 %v1846
        %1861 = vmatprep.subr.bf16.mxu0 0
        %1862 = vmatpush1.bf16.msra.mxu0 %v1847
        %1863 = vmatprep.subr.bf16.mxu0 0
        %1864 = vmatpush1.bf16.msra.mxu0 %v1848
        %1865 = vmatprep.subr.bf16.mxu0 0
        %1866 = vmatpush1.bf16.msra.mxu0 0
        %1867 = vmatprep.subr.bf16.mxu0 0
        %1868 = vmatpush1.bf16.msra.mxu0 0
        %1869 = vmatprep.subr.bf16.mxu0 0
        %1870 = vmatpush1.bf16.msra.mxu0 0
        %1871 = vmatprep.subr.bf16.mxu0 0
        %1872 = vmatpush1.bf16.msra.mxu0 0
        %1873 = vmatprep.subr.bf16.mxu0 0
        %1874 = vmatpush1.bf16.msra.mxu0 0
        %1875 = vmatprep.subr.bf16.mxu0 0
        %1876 = vmatpush1.bf16.msra.mxu0 0
        %1877 = vmatprep.subr.bf16.mxu0 0
        %1878 = vmatpush1.bf16.msra.mxu0 0
        %1879 = vmatprep.subr.bf16.mxu0 0
        %1880 = vmatpush1.bf16.msra.mxu0 0
        %1881 = vmatprep.subr.bf16.mxu0 0
        %1882 = vmatpush1.bf16.msra.mxu0 0
        %1883 = vmatprep.subr.bf16.mxu0 0
        %1884 = vmatpush1.bf16.msra.mxu0 0
        %1885 = vmatprep.subr.bf16.mxu0 0
        %1886 = vmatpush1.bf16.msra.mxu0 0
        %1887 = vmatprep.subr.bf16.mxu0 0
        %1888 = vmatpush1.bf16.msra.mxu0 0
        %1889 = vmatprep.mubr.bf16.mxu0 0
        %1890 = vmatmul.mubr.bf16.gmra.mrb[0].mxu0 %v1855
        %v1891 = vpop.f32.mrb[0].mxu0
        %v1892 = vadd.f32 %v1827, %v1891
        %v1893 = vpop.f32.mrb[0].mxu0
        %v1894 = vpop.f32.mrb[0].mxu0
        %v1895 = vpop.f32.mrb[0].mxu0
        %1896 = vdwg.mxu0
        %v1897 = vadd.f32 %v1892, %v1727
        %1898 = vst.msk [vmem:[%s493] sm:$0xff] %vm536, %v1897
        %s1899 = sand.u32 %s356, 1
        %s1900 = scalar_lea.sflag [#allocation3], %s1899
        %s1901 = sand.u32 %s356, 1
        %s1902 = smul.addr %s1901, 8
        %s1903 = scalar_lea.vmem [#allocation2], %s1902
        // Predicated region
        $region77: #{transformer_forward.3} parent=75 // pred_check
          %p1904 = pneg %p366
        $region78: #{transformer_forward.3} parent=75 // pred_check_branch
          %1906 = sbr.rel (%p1904) target = $region80
        $region79: #{transformer_forward.3} parent=75 // pred_region
          %s1908 = ssub.s32 128, 128
          %1909 = vsyncadd %s1900, %s1908
          %s1910 = sadd.s32 %s33, %s32
          %s1911 = smul.addr %s1910, 128
          %s1912 = scalar_lea.hbm %s14, %s1911
          %s1914 = sshll.u32 %s1903, 4
          %s1915 = int_to_ptr.vmem [resolvable:$true] %s1914
          %1917 = dma.vmem_to_hbm [thread:$0]  %s1915, 128, %s1912, %s1900
        $region80: #{transformer_forward.3} parent=75 // pred_fallthru
          _
      $region76: #{transformer_forward.3} parent=5 // pred_fallthru
        _
      %p1918 = scmp.le.s32.totalorder 2, %s23
      // Predicated region
      $region81: #{transformer_forward.3} parent=5 // pred_check
        %p1919 = pneg %p1918
      $region82: #{transformer_forward.3} parent=5 // pred_check_branch
        %1921 = sbr.rel (%p1919) target = $region84
      $region83: #{transformer_forward.3} parent=5 // pred_region
        %s1922 = ssub.s32 %s23, 2
        // Predicated region
        $region85: #{transformer_forward.3} parent=83 // pred_check
          %p1923 = pneg %p372
        $region86: #{transformer_forward.3} parent=83 // pred_check_branch
          %1925 = sbr.rel (%p1923) target = $region88
        $region87: #{transformer_forward.3} parent=83 // pred_region
          %s1926 = sand.u32 %s357, 1
          %s1927 = scalar_lea.sflag [#allocation3], %s1926
          %s1928 = sand.u32 %s357, 1
          %s1929 = smul.addr %s1928, 8
          %s1930 = scalar_lea.vmem [#allocation2], %s1929
          %1931 = dma.done %s1927, 128
        $region88: #{transformer_forward.3} parent=83 // pred_fallthru
          _
      $region84: #{transformer_forward.3} parent=5 // pred_fallthru
        _
    $region6: #{transformer_forward.3} parent=1 // loop_footer
      %s27 = sadd.s32 1, %s23
    $region7: #{transformer_forward.3} parent=1 // loop_footer_branch
      %22 = sbr.rel target = $region3
    $region8: #{transformer_forward.3} parent=1 // loop_exit
      _
    %1932 = vsyncpa [#allocation3], 1
    %s1933 = scalar_lea.sflag [#allocation3], 1
    %1934 = vsyncpa %s1933, 1

</llo_original>
